<compile_context>
chip_gen: v7x
topology: tpu7x:2x2x1
jax: 0.10.0
libtpu: 0.0.40
codegen_flags: <defaults>
</compile_context>

<pallas_src>
import jax
import jax.numpy as jnp
from jax.experimental import pallas as pl
from jax.experimental.pallas import tpu as pltpu

F32 = jnp.float32
BF16 = jnp.bfloat16

HIDDEN = 128          # LSTM hidden size
LATENT = 512          # encoder latent / linear1 output
LIN2 = 256
CONV_CH = 64
RADAR_LEN = 241
L1 = (RADAR_LEN - 3) // 2 + 1   # 120
L2 = (L1 - 3) // 2 + 1          # 59
FLAT = CONV_CH * L2             # 3776
OUT_DIM = 2

VMEM = pl.BlockSpec(memory_space=pltpu.MemorySpace.VMEM)
ANY = pl.BlockSpec(memory_space=pl.ANY)


# ----------------------------------------------------------------------------
# Fused Pallas kernel
# ----------------------------------------------------------------------------
def _fused_kernel(rs_ref, pos_ref, h_ref, c_ref,
                  w1k_ref, b1_ref, w2c_ref, b2_ref,
                  w1p_hbm, bl1_ref,
                  w2a_ref, w2b_ref, bl2_ref,
                  w3_ref, bl3_ref,
                  wih_ref, whh_ref, blstm_ref,
                  wout_ref, bout_ref,
                  act_ref, hn_ref, cn_ref,
                  w1p_vmem, y2_s, dma_sem):
    # Kick off the big linear1 weight DMA first so it overlaps the conv stage.
    w1p_copy = pltpu.make_async_copy(w1p_hbm, w1p_vmem, dma_sem)
    w1p_copy.start()

    # ---- conv1: Conv1d(1,64,k=3,s=2)+ReLU on pre-strided patches rs[m, j] = radar[4m+j]
    rs = rs_ref[...]                      # (59, 7) f32
    w1k = w1k_ref[...]                    # (3, 64)   [k, cout]
    b1 = b1_ref[...]                      # (1, 64)
    # rows of relu(conv1) at output positions 2m, 2m+1, 2m+2 (what conv2 consumes)
    h0 = jnp.maximum(jnp.dot(rs[:, 0:3], w1k, preferred_element_type=F32) + b1, 0.0)
    h1 = jnp.maximum(jnp.dot(rs[:, 2:5], w1k, preferred_element_type=F32) + b1, 0.0)
    h2 = jnp.maximum(jnp.dot(rs[:, 4:7], w1k, preferred_element_type=F32) + b1, 0.0)

    # ---- conv2: Conv1d(64,64,k=3,s=2)+ReLU as three (59,64)@(64,64) matmuls ----
    y2 = jnp.dot(h0, w2c_ref[0:CONV_CH, :], preferred_element_type=F32)
    y2 = y2 + jnp.dot(h1, w2c_ref[CONV_CH:2 * CONV_CH, :], preferred_element_type=F32)
    y2 = y2 + jnp.dot(h2, w2c_ref[2 * CONV_CH:3 * CONV_CH, :], preferred_element_type=F32)
    y2 = jnp.maximum(y2 + b2_ref[...], 0.0)                  # (59, 64)  (L, C) layout
    y2_s[...] = y2

    # ---- linear1 + ReLU: GEMV against the l-major permuted bf16 weight slab.
    # latent = b + sum_l y2[l, :] @ W1p[l*64:(l+1)*64, :]  (no in-kernel flatten needed)
    w1p_copy.wait()
    lat = bl1_ref[...]                                       # (1, 512) f32
    for l in range(L2):
        row = y2_s[l:l + 1, :].astype(BF16)                  # (1, 64)
        blk = w1p_vmem[l * CONV_CH:(l + 1) * CONV_CH, :]     # (64, 512) bf16
        lat = lat + jnp.dot(row, blk, preferred_element_type=F32)
    latent = jnp.maximum(lat, 0.0)                           # (1, 512)

    # ---- ActorLatent tail: cat+linear2+ReLU, linear3+ReLU, LSTM cell, output head ----
    # cat((latent, pos), -1) @ W2^T  ==  latent @ W2a + pos @ W2b
    x = jnp.dot(latent.astype(BF16), w2a_ref[...], preferred_element_type=F32)
    x = x + jnp.dot(pos_ref[...], w2b_ref[...], preferred_element_type=F32)
    x = jnp.maximum(x + bl2_ref[...], 0.0)                   # (1, 256)

    x = jnp.dot(x.astype(BF16), w3_ref[...], preferred_element_type=F32)
    x = jnp.maximum(x + bl3_ref[...], 0.0)                   # (1, 128)

    # single-step LSTM cell (PyTorch gate order: i, f, g, o)
    h = h_ref[...]
    c = c_ref[...]
    gates = (jnp.dot(x.astype(BF16), wih_ref[...], preferred_element_type=F32)
             + jnp.dot(h.astype(BF16), whh_ref[...], preferred_element_type=F32)
             + blstm_ref[...])                               # (1, 512)
    i = jax.nn.sigmoid(gates[:, 0 * HIDDEN:1 * HIDDEN])
    f = jax.nn.sigmoid(gates[:, 1 * HIDDEN:2 * HIDDEN])
    g = jnp.tanh(gates[:, 2 * HIDDEN:3 * HIDDEN])
    o = jax.nn.sigmoid(gates[:, 3 * HIDDEN:4 * HIDDEN])
    c_new = f * c + i * g
    h_new = o * jnp.tanh(c_new)

    # output head: sigmoid on col 0 (linear vel), tanh on col 1 (angular vel)
    y = jnp.dot(h_new, wout_ref[...], preferred_element_type=F32) + bout_ref[...]
    lin_act = jax.nn.sigmoid(y[:, 0:1])
    ang_act = jnp.tanh(y[:, 1:2])

    act_ref[...] = jnp.concatenate([lin_act, ang_act], axis=1)
    hn_ref[...] = h_new
    cn_ref[...] = c_new


def _fused_forward(prep, rs, pos, h, c):
    out_shapes = (
        jax.ShapeDtypeStruct((1, OUT_DIM), F32),
        jax.ShapeDtypeStruct((1, HIDDEN), F32),
        jax.ShapeDtypeStruct((1, HIDDEN), F32),
    )
    return pl.pallas_call(
        _fused_kernel,
        out_shape=out_shapes,
        in_specs=[VMEM] * 8 + [ANY] + [VMEM] * 11,
        out_specs=(VMEM, VMEM, VMEM),
        scratch_shapes=[
            pltpu.VMEM((FLAT, LATENT), BF16),   # linear1 weight landing buffer (~3.9 MB)
            pltpu.VMEM((L2, CONV_CH), F32),     # conv2 output
            pltpu.SemaphoreType.DMA,
        ],
        compiler_params=pltpu.CompilerParams(vmem_limit_bytes=32 * 1024 * 1024),
    )(rs, pos, h, c,
      prep["w1k"], prep["b1"], prep["w2c"], prep["b2"],
      prep["w1p"], prep["bl1"],
      prep["w2a"], prep["w2b"], prep["bl2"],
      prep["w3"], prep["bl3"],
      prep["wih"], prep["whh"], prep["blstm"],
      prep["wout"], prep["bout"])


# ----------------------------------------------------------------------------
# Forward wrapper (only tiny per-call glue: strided radar patches + reshapes)
# ----------------------------------------------------------------------------
@jax.jit
def actor_radar_forward(prep, radar, pos, hn, cn):
    radar = radar.astype(F32)
    # conv1 im2col patches via 7 strided slices (no gather): rs[m, j] = radar[4*m + j]
    stop = 4 * (L2 - 1) + 1
    rs = jnp.stack([radar[j:j + stop:4] for j in range(7)], axis=1)   # (59, 7)
    pos2 = pos.reshape(1, OUT_DIM).astype(F32)
    h = hn.reshape(1, HIDDEN).astype(F32)
    c = cn.reshape(1, HIDDEN).astype(F32)
    act, h_new, c_new = _fused_forward(prep, rs, pos2, h, c)
    return act, h_new.reshape(1, 1, HIDDEN), c_new.reshape(1, 1, HIDDEN)


# ----------------------------------------------------------------------------
# One-time parameter layout prep (transposes, splits, bf16 casts, flatten permutation)
# ----------------------------------------------------------------------------
def prepare_params(params):
    # linear1 weight: torch flatten is channel-major (index c*59 + l); permute rows so
    # the kernel can consume conv2's (L, C) output row-chunks directly (index l*64 + c).
    w1t = params["lin1_w"].T                                   # (3776, 512), rows = c*59 + l
    w1p = (w1t.reshape(CONV_CH, L2, LATENT)                    # [c, l, :]
              .transpose(1, 0, 2)                              # [l, c, :]
              .reshape(FLAT, LATENT))                          # rows = l*64 + c
    w2 = params["lin2_w"].T                                    # (514, 256)
    return {
        "w1k": params["conv1_w"][:, 0, :].T.astype(F32),       # (3, 64)   [k, cout]
        "b1": params["conv1_b"].reshape(1, CONV_CH).astype(F32),
        "w2c": jnp.transpose(params["conv2_w"], (2, 1, 0))
                  .reshape(3 * CONV_CH, CONV_CH).astype(F32),  # (192, 64) rows = k*64 + cin
        "b2": params["conv2_b"].reshape(1, CONV_CH).astype(F32),
        "w1p": w1p.astype(BF16),                               # (3776, 512) bf16
        "bl1": params["lin1_b"].reshape(1, LATENT).astype(F32),
        "w2a": w2[:LATENT].astype(BF16),                       # (512, 256)
        "w2b": w2[LATENT:].astype(F32),                        # (2, 256)
        "bl2": params["lin2_b"].reshape(1, LIN2).astype(F32),
        "w3": params["lin3_w"].T.astype(BF16),                 # (256, 128)
        "bl3": params["lin3_b"].reshape(1, HIDDEN).astype(F32),
        "wih": params["lstm_w_ih"].T.astype(BF16),             # (128, 512)
        "whh": params["lstm_w_hh"].T.astype(BF16),             # (128, 512)
        "blstm": (params["lstm_b_ih"] + params["lstm_b_hh"]).reshape(1, 4 * HIDDEN).astype(F32),
        "wout": params["out_w"].T.astype(F32),                 # (128, 2)
        "bout": params["out_b"].reshape(1, OUT_DIM).astype(F32),
    }


# ----------------------------------------------------------------------------
# Deterministic parameter init (synthetic; no checkpoint loading)
# ----------------------------------------------------------------------------
def init_params(key):
    ks = jax.random.split(key, 16)
    n = lambda k, shape, s=0.05: (s * jax.random.normal(k, shape)).astype(F32)
    return {
        # encoder (substitute RadarEncoder)
        "conv1_w": n(ks[0], (CONV_CH, 1, 3)),
        "conv1_b": n(ks[1], (CONV_CH,)),
        "conv2_w": n(ks[2], (CONV_CH, CONV_CH, 3)),
        "conv2_b": n(ks[3], (CONV_CH,)),
        "lin1_w": n(ks[4], (LATENT, FLAT), 0.01),
        "lin1_b": n(ks[5], (LATENT,)),
        # ActorLatent
        "lin2_w": n(ks[6], (LIN2, LATENT + 2)),
        "lin2_b": n(ks[7], (LIN2,)),
        "lin3_w": n(ks[8], (HIDDEN, LIN2)),
        "lin3_b": n(ks[9], (HIDDEN,)),
        "lstm_w_ih": n(ks[10], (4 * HIDDEN, HIDDEN)),
        "lstm_w_hh": n(ks[11], (4 * HIDDEN, HIDDEN)),
        "lstm_b_ih": n(ks[12], (4 * HIDDEN,)),
        "lstm_b_hh": n(ks[13], (4 * HIDDEN,)),
        "out_w": n(ks[14], (OUT_DIM, HIDDEN)),
        "out_b": n(ks[15], (OUT_DIM,)),
    }


if __name__ == "__main__":
    key = jax.random.PRNGKey(0)
    k_radar, k_pos, k_h, k_c, k_params = jax.random.split(key, 5)

    radar = jax.random.uniform(k_radar, (RADAR_LEN,), dtype=F32)          # (241,)
    pos = jax.random.uniform(k_pos, (2,), dtype=F32)                      # (2,)
    hn = 0.1 * jax.random.normal(k_h, (1, 1, HIDDEN), dtype=F32)          # (1, 1, 128)
    cn = 0.1 * jax.random.normal(k_c, (1, 1, HIDDEN), dtype=F32)          # (1, 1, 128)

    params = init_params(k_params)
    prep = prepare_params(params)       # one-time weight layout prep (not per step)

    action, hn_out, cn_out = actor_radar_forward(prep, radar, pos, hn, cn)
    jax.block_until_ready((action, hn_out, cn_out))

    assert action.shape == (1, OUT_DIM)
    assert hn_out.shape == (1, 1, HIDDEN) and cn_out.shape == (1, 1, HIDDEN)
    print("KERNEL_OK")
</pallas_src>

<mosaic_0001>
module attributes {stable_mosaic.version = 11 : i64} {
  func.func @_fused_kernel(%arg0: memref<59x7xf32, #tpu.memory_space<vmem>>, %arg1: memref<1x2xf32, #tpu.memory_space<vmem>>, %arg2: memref<1x128xf32, #tpu.memory_space<vmem>>, %arg3: memref<1x128xf32, #tpu.memory_space<vmem>>, %arg4: memref<3x64xf32, #tpu.memory_space<vmem>>, %arg5: memref<1x64xf32, #tpu.memory_space<vmem>>, %arg6: memref<192x64xf32, #tpu.memory_space<vmem>>, %arg7: memref<1x64xf32, #tpu.memory_space<vmem>>, %arg8: memref<3776x512xbf16, #tpu.memory_space<any>>, %arg9: memref<1x512xf32, #tpu.memory_space<vmem>>, %arg10: memref<512x256xbf16, #tpu.memory_space<vmem>>, %arg11: memref<2x256xf32, #tpu.memory_space<vmem>>, %arg12: memref<1x256xf32, #tpu.memory_space<vmem>>, %arg13: memref<256x128xbf16, #tpu.memory_space<vmem>>, %arg14: memref<1x128xf32, #tpu.memory_space<vmem>>, %arg15: memref<128x512xbf16, #tpu.memory_space<vmem>>, %arg16: memref<128x512xbf16, #tpu.memory_space<vmem>>, %arg17: memref<1x512xf32, #tpu.memory_space<vmem>>, %arg18: memref<128x2xf32, #tpu.memory_space<vmem>>, %arg19: memref<1x2xf32, #tpu.memory_space<vmem>>, %arg20: memref<1x2xf32, #tpu.memory_space<vmem>>, %arg21: memref<1x128xf32, #tpu.memory_space<vmem>>, %arg22: memref<1x128xf32, #tpu.memory_space<vmem>>, %arg23: memref<3776x512xbf16, #tpu.memory_space<vmem>>, %arg24: memref<59x64xf32, #tpu.memory_space<vmem>>, %arg25: memref<!tpu.dma_semaphore, #tpu.memory_space<semaphore_mem>>) attributes {dimension_semantics = [], scalar_prefetch = 0 : i64, scratch_operands = 3 : i64, tpu.core_type = #tpu.core_type<tc>} {
    tpu.enqueue_dma source(%arg8 : memref<3776x512xbf16, #tpu.memory_space<any>>) target(%arg23 : memref<3776x512xbf16, #tpu.memory_space<vmem>>) target_semaphore(%arg25 : memref<!tpu.dma_semaphore, #tpu.memory_space<semaphore_mem>>)
    %c0 = arith.constant 0 : index
    %c0_0 = arith.constant 0 : index
    %0 = vector.load %arg0[%c0, %c0_0] : memref<59x7xf32, #tpu.memory_space<vmem>>, vector<59x7xf32>
    %c0_1 = arith.constant 0 : index
    %c0_2 = arith.constant 0 : index
    %1 = vector.load %arg4[%c0_1, %c0_2] : memref<3x64xf32, #tpu.memory_space<vmem>>, vector<3x64xf32>
    %c0_3 = arith.constant 0 : index
    %c0_4 = arith.constant 0 : index
    %2 = vector.load %arg5[%c0_3, %c0_4] : memref<1x64xf32, #tpu.memory_space<vmem>>, vector<1x64xf32>
    %3 = vector.extract_strided_slice %0 {offsets = [0, 0], sizes = [59, 3], strides = [1, 1]} : vector<59x7xf32> to vector<59x3xf32>
    %cst = arith.constant dense<0.000000e+00> : vector<59x64xf32>
    %4 = tpu.matmul %3, %1, %cst {dimension_numbers = #tpu.dot_dimension_numbers<[1], [0], [0], [1], [0, 0, 1, 1], [], []>} : vector<59x3xf32>, vector<3x64xf32>, vector<59x64xf32> -> vector<59x64xf32>
    %5 = vector.broadcast %2 : vector<1x64xf32> to vector<59x64xf32>
    %6 = arith.addf %4, %5 : vector<59x64xf32>
    %cst_5 = arith.constant 0.000000e+00 : f32
    %7 = vector.broadcast %cst_5 : f32 to vector<59x64xf32>
    %8 = arith.maximumf %6, %7 : vector<59x64xf32>
    %9 = vector.extract_strided_slice %0 {offsets = [0, 2], sizes = [59, 3], strides = [1, 1]} : vector<59x7xf32> to vector<59x3xf32>
    %cst_6 = arith.constant dense<0.000000e+00> : vector<59x64xf32>
    %10 = tpu.matmul %9, %1, %cst_6 {dimension_numbers = #tpu.dot_dimension_numbers<[1], [0], [0], [1], [0, 0, 1, 1], [], []>} : vector<59x3xf32>, vector<3x64xf32>, vector<59x64xf32> -> vector<59x64xf32>
    %11 = vector.broadcast %2 : vector<1x64xf32> to vector<59x64xf32>
    %12 = arith.addf %10, %11 : vector<59x64xf32>
    %cst_7 = arith.constant 0.000000e+00 : f32
    %13 = vector.broadcast %cst_7 : f32 to vector<59x64xf32>
    %14 = arith.maximumf %12, %13 : vector<59x64xf32>
    %15 = vector.extract_strided_slice %0 {offsets = [0, 4], sizes = [59, 3], strides = [1, 1]} : vector<59x7xf32> to vector<59x3xf32>
    %cst_8 = arith.constant dense<0.000000e+00> : vector<59x64xf32>
    %16 = tpu.matmul %15, %1, %cst_8 {dimension_numbers = #tpu.dot_dimension_numbers<[1], [0], [0], [1], [0, 0, 1, 1], [], []>} : vector<59x3xf32>, vector<3x64xf32>, vector<59x64xf32> -> vector<59x64xf32>
    %17 = vector.broadcast %2 : vector<1x64xf32> to vector<59x64xf32>
    %18 = arith.addf %16, %17 : vector<59x64xf32>
    %cst_9 = arith.constant 0.000000e+00 : f32
    %19 = vector.broadcast %cst_9 : f32 to vector<59x64xf32>
    %20 = arith.maximumf %18, %19 : vector<59x64xf32>
    %c0_10 = arith.constant 0 : index
    %c0_11 = arith.constant 0 : index
    %21 = vector.load %arg6[%c0_10, %c0_11] : memref<192x64xf32, #tpu.memory_space<vmem>>, vector<64x64xf32>
    %cst_12 = arith.constant dense<0.000000e+00> : vector<59x64xf32>
    %22 = tpu.matmul %8, %21, %cst_12 {dimension_numbers = #tpu.dot_dimension_numbers<[1], [0], [0], [1], [0, 0, 1, 1], [], []>} : vector<59x64xf32>, vector<64x64xf32>, vector<59x64xf32> -> vector<59x64xf32>
    %c64 = arith.constant 64 : index
    %c0_13 = arith.constant 0 : index
    %23 = vector.load %arg6[%c64, %c0_13] : memref<192x64xf32, #tpu.memory_space<vmem>>, vector<64x64xf32>
    %cst_14 = arith.constant dense<0.000000e+00> : vector<59x64xf32>
    %24 = tpu.matmul %14, %23, %cst_14 {dimension_numbers = #tpu.dot_dimension_numbers<[1], [0], [0], [1], [0, 0, 1, 1], [], []>} : vector<59x64xf32>, vector<64x64xf32>, vector<59x64xf32> -> vector<59x64xf32>
    %25 = arith.addf %22, %24 : vector<59x64xf32>
    %c128 = arith.constant 128 : index
    %c0_15 = arith.constant 0 : index
    %26 = vector.load %arg6[%c128, %c0_15] : memref<192x64xf32, #tpu.memory_space<vmem>>, vector<64x64xf32>
    %cst_16 = arith.constant dense<0.000000e+00> : vector<59x64xf32>
    %27 = tpu.matmul %20, %26, %cst_16 {dimension_numbers = #tpu.dot_dimension_numbers<[1], [0], [0], [1], [0, 0, 1, 1], [], []>} : vector<59x64xf32>, vector<64x64xf32>, vector<59x64xf32> -> vector<59x64xf32>
    %28 = arith.addf %25, %27 : vector<59x64xf32>
    %c0_17 = arith.constant 0 : index
    %c0_18 = arith.constant 0 : index
    %29 = vector.load %arg7[%c0_17, %c0_18] : memref<1x64xf32, #tpu.memory_space<vmem>>, vector<1x64xf32>
    %30 = vector.broadcast %29 : vector<1x64xf32> to vector<59x64xf32>
    %31 = arith.addf %28, %30 : vector<59x64xf32>
    %cst_19 = arith.constant 0.000000e+00 : f32
    %32 = vector.broadcast %cst_19 : f32 to vector<59x64xf32>
    %33 = arith.maximumf %31, %32 : vector<59x64xf32>
    %c0_20 = arith.constant 0 : index
    %c0_21 = arith.constant 0 : index
    %34 = vector.load %arg24[%c0_20, %c0_21] : memref<59x64xf32, #tpu.memory_space<vmem>>, vector<59x64xf32>
    tpu.vector_store %arg24[%c0_20, %c0_21], %33 {strides = array<i32>} : memref<59x64xf32, #tpu.memory_space<vmem>>, vector<59x64xf32>,
    tpu.wait_dma2 semaphore(%arg25 : memref<!tpu.dma_semaphore, #tpu.memory_space<semaphore_mem>>) src(%arg8 : memref<3776x512xbf16, #tpu.memory_space<any>>) dst(%arg23 : memref<3776x512xbf16, #tpu.memory_space<vmem>>)
    %c0_22 = arith.constant 0 : index
    %c0_23 = arith.constant 0 : index
    %35 = vector.load %arg9[%c0_22, %c0_23] : memref<1x512xf32, #tpu.memory_space<vmem>>, vector<1x512xf32>
    %c0_24 = arith.constant 0 : index
    %c0_25 = arith.constant 0 : index
    %36 = vector.load %arg24[%c0_24, %c0_25] : memref<59x64xf32, #tpu.memory_space<vmem>>, vector<1x64xf32>
    %37 = arith.truncf %36 : vector<1x64xf32> to vector<1x64xbf16>
    %c0_26 = arith.constant 0 : index
    %c0_27 = arith.constant 0 : index
    %38 = vector.load %arg23[%c0_26, %c0_27] : memref<3776x512xbf16, #tpu.memory_space<vmem>>, vector<64x512xbf16>
    %cst_28 = arith.constant dense<0.000000e+00> : vector<1x512xf32>
    %39 = tpu.matmul %37, %38, %cst_28 {dimension_numbers = #tpu.dot_dimension_numbers<[1], [0], [0], [1], [0, 0, 1, 1], [], []>} : vector<1x64xbf16>, vector<64x512xbf16>, vector<1x512xf32> -> vector<1x512xf32>
    %40 = arith.addf %35, %39 : vector<1x512xf32>
    %c1 = arith.constant 1 : index
    %c0_29 = arith.constant 0 : index
    %41 = vector.load %arg24[%c1, %c0_29] : memref<59x64xf32, #tpu.memory_space<vmem>>, vector<1x64xf32>
    %42 = arith.truncf %41 : vector<1x64xf32> to vector<1x64xbf16>
    %c64_30 = arith.constant 64 : index
    %c0_31 = arith.constant 0 : index
    %43 = vector.load %arg23[%c64_30, %c0_31] : memref<3776x512xbf16, #tpu.memory_space<vmem>>, vector<64x512xbf16>
    %cst_32 = arith.constant dense<0.000000e+00> : vector<1x512xf32>
    %44 = tpu.matmul %42, %43, %cst_32 {dimension_numbers = #tpu.dot_dimension_numbers<[1], [0], [0], [1], [0, 0, 1, 1], [], []>} : vector<1x64xbf16>, vector<64x512xbf16>, vector<1x512xf32> -> vector<1x512xf32>
    %45 = arith.addf %40, %44 : vector<1x512xf32>
    %c2 = arith.constant 2 : index
    %c0_33 = arith.constant 0 : index
    %46 = vector.load %arg24[%c2, %c0_33] : memref<59x64xf32, #tpu.memory_space<vmem>>, vector<1x64xf32>
    %47 = arith.truncf %46 : vector<1x64xf32> to vector<1x64xbf16>
    %c128_34 = arith.constant 128 : index
    %c0_35 = arith.constant 0 : index
    %48 = vector.load %arg23[%c128_34, %c0_35] : memref<3776x512xbf16, #tpu.memory_space<vmem>>, vector<64x512xbf16>
    %cst_36 = arith.constant dense<0.000000e+00> : vector<1x512xf32>
    %49 = tpu.matmul %47, %48, %cst_36 {dimension_numbers = #tpu.dot_dimension_numbers<[1], [0], [0], [1], [0, 0, 1, 1], [], []>} : vector<1x64xbf16>, vector<64x512xbf16>, vector<1x512xf32> -> vector<1x512xf32>
    %50 = arith.addf %45, %49 : vector<1x512xf32>
    %c3 = arith.constant 3 : index
    %c0_37 = arith.constant 0 : index
    %51 = vector.load %arg24[%c3, %c0_37] : memref<59x64xf32, #tpu.memory_space<vmem>>, vector<1x64xf32>
    %52 = arith.truncf %51 : vector<1x64xf32> to vector<1x64xbf16>
    %c192 = arith.constant 192 : index
    %c0_38 = arith.constant 0 : index
    %53 = vector.load %arg23[%c192, %c0_38] : memref<3776x512xbf16, #tpu.memory_space<vmem>>, vector<64x512xbf16>
    %cst_39 = arith.constant dense<0.000000e+00> : vector<1x512xf32>
    %54 = tpu.matmul %52, %53, %cst_39 {dimension_numbers = #tpu.dot_dimension_numbers<[1], [0], [0], [1], [0, 0, 1, 1], [], []>} : vector<1x64xbf16>, vector<64x512xbf16>, vector<1x512xf32> -> vector<1x512xf32>
    %55 = arith.addf %50, %54 : vector<1x512xf32>
    %c4 = arith.constant 4 : index
    %c0_40 = arith.constant 0 : index
    %56 = vector.load %arg24[%c4, %c0_40] : memref<59x64xf32, #tpu.memory_space<vmem>>, vector<1x64xf32>
    %57 = arith.truncf %56 : vector<1x64xf32> to vector<1x64xbf16>
    %c256 = arith.constant 256 : index
    %c0_41 = arith.constant 0 : index
    %58 = vector.load %arg23[%c256, %c0_41] : memref<3776x512xbf16, #tpu.memory_space<vmem>>, vector<64x512xbf16>
    %cst_42 = arith.constant dense<0.000000e+00> : vector<1x512xf32>
    %59 = tpu.matmul %57, %58, %cst_42 {dimension_numbers = #tpu.dot_dimension_numbers<[1], [0], [0], [1], [0, 0, 1, 1], [], []>} : vector<1x64xbf16>, vector<64x512xbf16>, vector<1x512xf32> -> vector<1x512xf32>
    %60 = arith.addf %55, %59 : vector<1x512xf32>
    %c5 = arith.constant 5 : index
    %c0_43 = arith.constant 0 : index
    %61 = vector.load %arg24[%c5, %c0_43] : memref<59x64xf32, #tpu.memory_space<vmem>>, vector<1x64xf32>
    %62 = arith.truncf %61 : vector<1x64xf32> to vector<1x64xbf16>
    %c320 = arith.constant 320 : index
    %c0_44 = arith.constant 0 : index
    %63 = vector.load %arg23[%c320, %c0_44] : memref<3776x512xbf16, #tpu.memory_space<vmem>>, vector<64x512xbf16>
    %cst_45 = arith.constant dense<0.000000e+00> : vector<1x512xf32>
    %64 = tpu.matmul %62, %63, %cst_45 {dimension_numbers = #tpu.dot_dimension_numbers<[1], [0], [0], [1], [0, 0, 1, 1], [], []>} : vector<1x64xbf16>, vector<64x512xbf16>, vector<1x512xf32> -> vector<1x512xf32>
    %65 = arith.addf %60, %64 : vector<1x512xf32>
    %c6 = arith.constant 6 : index
    %c0_46 = arith.constant 0 : index
    %66 = vector.load %arg24[%c6, %c0_46] : memref<59x64xf32, #tpu.memory_space<vmem>>, vector<1x64xf32>
    %67 = arith.truncf %66 : vector<1x64xf32> to vector<1x64xbf16>
    %c384 = arith.constant 384 : index
    %c0_47 = arith.constant 0 : index
    %68 = vector.load %arg23[%c384, %c0_47] : memref<3776x512xbf16, #tpu.memory_space<vmem>>, vector<64x512xbf16>
    %cst_48 = arith.constant dense<0.000000e+00> : vector<1x512xf32>
    %69 = tpu.matmul %67, %68, %cst_48 {dimension_numbers = #tpu.dot_dimension_numbers<[1], [0], [0], [1], [0, 0, 1, 1], [], []>} : vector<1x64xbf16>, vector<64x512xbf16>, vector<1x512xf32> -> vector<1x512xf32>
    %70 = arith.addf %65, %69 : vector<1x512xf32>
    %c7 = arith.constant 7 : index
    %c0_49 = arith.constant 0 : index
    %71 = vector.load %arg24[%c7, %c0_49] : memref<59x64xf32, #tpu.memory_space<vmem>>, vector<1x64xf32>
    %72 = arith.truncf %71 : vector<1x64xf32> to vector<1x64xbf16>
    %c448 = arith.constant 448 : index
    %c0_50 = arith.constant 0 : index
    %73 = vector.load %arg23[%c448, %c0_50] : memref<3776x512xbf16, #tpu.memory_space<vmem>>, vector<64x512xbf16>
    %cst_51 = arith.constant dense<0.000000e+00> : vector<1x512xf32>
    %74 = tpu.matmul %72, %73, %cst_51 {dimension_numbers = #tpu.dot_dimension_numbers<[1], [0], [0], [1], [0, 0, 1, 1], [], []>} : vector<1x64xbf16>, vector<64x512xbf16>, vector<1x512xf32> -> vector<1x512xf32>
    %75 = arith.addf %70, %74 : vector<1x512xf32>
    %c8 = arith.constant 8 : index
    %c0_52 = arith.constant 0 : index
    %76 = vector.load %arg24[%c8, %c0_52] : memref<59x64xf32, #tpu.memory_space<vmem>>, vector<1x64xf32>
    %77 = arith.truncf %76 : vector<1x64xf32> to vector<1x64xbf16>
    %c512 = arith.constant 512 : index
    %c0_53 = arith.constant 0 : index
    %78 = vector.load %arg23[%c512, %c0_53] : memref<3776x512xbf16, #tpu.memory_space<vmem>>, vector<64x512xbf16>
    %cst_54 = arith.constant dense<0.000000e+00> : vector<1x512xf32>
    %79 = tpu.matmul %77, %78, %cst_54 {dimension_numbers = #tpu.dot_dimension_numbers<[1], [0], [0], [1], [0, 0, 1, 1], [], []>} : vector<1x64xbf16>, vector<64x512xbf16>, vector<1x512xf32> -> vector<1x512xf32>
    %80 = arith.addf %75, %79 : vector<1x512xf32>
    %c9 = arith.constant 9 : index
    %c0_55 = arith.constant 0 : index
    %81 = vector.load %arg24[%c9, %c0_55] : memref<59x64xf32, #tpu.memory_space<vmem>>, vector<1x64xf32>
    %82 = arith.truncf %81 : vector<1x64xf32> to vector<1x64xbf16>
    %c576 = arith.constant 576 : index
    %c0_56 = arith.constant 0 : index
    %83 = vector.load %arg23[%c576, %c0_56] : memref<3776x512xbf16, #tpu.memory_space<vmem>>, vector<64x512xbf16>
    %cst_57 = arith.constant dense<0.000000e+00> : vector<1x512xf32>
    %84 = tpu.matmul %82, %83, %cst_57 {dimension_numbers = #tpu.dot_dimension_numbers<[1], [0], [0], [1], [0, 0, 1, 1], [], []>} : vector<1x64xbf16>, vector<64x512xbf16>, vector<1x512xf32> -> vector<1x512xf32>
    %85 = arith.addf %80, %84 : vector<1x512xf32>
    %c10 = arith.constant 10 : index
    %c0_58 = arith.constant 0 : index
    %86 = vector.load %arg24[%c10, %c0_58] : memref<59x64xf32, #tpu.memory_space<vmem>>, vector<1x64xf32>
    %87 = arith.truncf %86 : vector<1x64xf32> to vector<1x64xbf16>
    %c640 = arith.constant 640 : index
    %c0_59 = arith.constant 0 : index
    %88 = vector.load %arg23[%c640, %c0_59] : memref<3776x512xbf16, #tpu.memory_space<vmem>>, vector<64x512xbf16>
    %cst_60 = arith.constant dense<0.000000e+00> : vector<1x512xf32>
    %89 = tpu.matmul %87, %88, %cst_60 {dimension_numbers = #tpu.dot_dimension_numbers<[1], [0], [0], [1], [0, 0, 1, 1], [], []>} : vector<1x64xbf16>, vector<64x512xbf16>, vector<1x512xf32> -> vector<1x512xf32>
    %90 = arith.addf %85, %89 : vector<1x512xf32>
    %c11 = arith.constant 11 : index
    %c0_61 = arith.constant 0 : index
    %91 = vector.load %arg24[%c11, %c0_61] : memref<59x64xf32, #tpu.memory_space<vmem>>, vector<1x64xf32>
    %92 = arith.truncf %91 : vector<1x64xf32> to vector<1x64xbf16>
    %c704 = arith.constant 704 : index
    %c0_62 = arith.constant 0 : index
    %93 = vector.load %arg23[%c704, %c0_62] : memref<3776x512xbf16, #tpu.memory_space<vmem>>, vector<64x512xbf16>
    %cst_63 = arith.constant dense<0.000000e+00> : vector<1x512xf32>
    %94 = tpu.matmul %92, %93, %cst_63 {dimension_numbers = #tpu.dot_dimension_numbers<[1], [0], [0], [1], [0, 0, 1, 1], [], []>} : vector<1x64xbf16>, vector<64x512xbf16>, vector<1x512xf32> -> vector<1x512xf32>
    %95 = arith.addf %90, %94 : vector<1x512xf32>
    %c12 = arith.constant 12 : index
    %c0_64 = arith.constant 0 : index
    %96 = vector.load %arg24[%c12, %c0_64] : memref<59x64xf32, #tpu.memory_space<vmem>>, vector<1x64xf32>
    %97 = arith.truncf %96 : vector<1x64xf32> to vector<1x64xbf16>
    %c768 = arith.constant 768 : index
    %c0_65 = arith.constant 0 : index
    %98 = vector.load %arg23[%c768, %c0_65] : memref<3776x512xbf16, #tpu.memory_space<vmem>>, vector<64x512xbf16>
    %cst_66 = arith.constant dense<0.000000e+00> : vector<1x512xf32>
    %99 = tpu.matmul %97, %98, %cst_66 {dimension_numbers = #tpu.dot_dimension_numbers<[1], [0], [0], [1], [0, 0, 1, 1], [], []>} : vector<1x64xbf16>, vector<64x512xbf16>, vector<1x512xf32> -> vector<1x512xf32>
    %100 = arith.addf %95, %99 : vector<1x512xf32>
    %c13 = arith.constant 13 : index
    %c0_67 = arith.constant 0 : index
    %101 = vector.load %arg24[%c13, %c0_67] : memref<59x64xf32, #tpu.memory_space<vmem>>, vector<1x64xf32>
    %102 = arith.truncf %101 : vector<1x64xf32> to vector<1x64xbf16>
    %c832 = arith.constant 832 : index
    %c0_68 = arith.constant 0 : index
    %103 = vector.load %arg23[%c832, %c0_68] : memref<3776x512xbf16, #tpu.memory_space<vmem>>, vector<64x512xbf16>
    %cst_69 = arith.constant dense<0.000000e+00> : vector<1x512xf32>
    %104 = tpu.matmul %102, %103, %cst_69 {dimension_numbers = #tpu.dot_dimension_numbers<[1], [0], [0], [1], [0, 0, 1, 1], [], []>} : vector<1x64xbf16>, vector<64x512xbf16>, vector<1x512xf32> -> vector<1x512xf32>
    %105 = arith.addf %100, %104 : vector<1x512xf32>
    %c14 = arith.constant 14 : index
    %c0_70 = arith.constant 0 : index
    %106 = vector.load %arg24[%c14, %c0_70] : memref<59x64xf32, #tpu.memory_space<vmem>>, vector<1x64xf32>
    %107 = arith.truncf %106 : vector<1x64xf32> to vector<1x64xbf16>
    %c896 = arith.constant 896 : index
    %c0_71 = arith.constant 0 : index
    %108 = vector.load %arg23[%c896, %c0_71] : memref<3776x512xbf16, #tpu.memory_space<vmem>>, vector<64x512xbf16>
    %cst_72 = arith.constant dense<0.000000e+00> : vector<1x512xf32>
    %109 = tpu.matmul %107, %108, %cst_72 {dimension_numbers = #tpu.dot_dimension_numbers<[1], [0], [0], [1], [0, 0, 1, 1], [], []>} : vector<1x64xbf16>, vector<64x512xbf16>, vector<1x512xf32> -> vector<1x512xf32>
    %110 = arith.addf %105, %109 : vector<1x512xf32>
    %c15 = arith.constant 15 : index
    %c0_73 = arith.constant 0 : index
    %111 = vector.load %arg24[%c15, %c0_73] : memref<59x64xf32, #tpu.memory_space<vmem>>, vector<1x64xf32>
    %112 = arith.truncf %111 : vector<1x64xf32> to vector<1x64xbf16>
    %c960 = arith.constant 960 : index
    %c0_74 = arith.constant 0 : index
    %113 = vector.load %arg23[%c960, %c0_74] : memref<3776x512xbf16, #tpu.memory_space<vmem>>, vector<64x512xbf16>
    %cst_75 = arith.constant dense<0.000000e+00> : vector<1x512xf32>
    %114 = tpu.matmul %112, %113, %cst_75 {dimension_numbers = #tpu.dot_dimension_numbers<[1], [0], [0], [1], [0, 0, 1, 1], [], []>} : vector<1x64xbf16>, vector<64x512xbf16>, vector<1x512xf32> -> vector<1x512xf32>
    %115 = arith.addf %110, %114 : vector<1x512xf32>
    %c16 = arith.constant 16 : index
    %c0_76 = arith.constant 0 : index
    %116 = vector.load %arg24[%c16, %c0_76] : memref<59x64xf32, #tpu.memory_space<vmem>>, vector<1x64xf32>
    %117 = arith.truncf %116 : vector<1x64xf32> to vector<1x64xbf16>
    %c1024 = arith.constant 1024 : index
    %c0_77 = arith.constant 0 : index
    %118 = vector.load %arg23[%c1024, %c0_77] : memref<3776x512xbf16, #tpu.memory_space<vmem>>, vector<64x512xbf16>
    %cst_78 = arith.constant dense<0.000000e+00> : vector<1x512xf32>
    %119 = tpu.matmul %117, %118, %cst_78 {dimension_numbers = #tpu.dot_dimension_numbers<[1], [0], [0], [1], [0, 0, 1, 1], [], []>} : vector<1x64xbf16>, vector<64x512xbf16>, vector<1x512xf32> -> vector<1x512xf32>
    %120 = arith.addf %115, %119 : vector<1x512xf32>
    %c17 = arith.constant 17 : index
    %c0_79 = arith.constant 0 : index
    %121 = vector.load %arg24[%c17, %c0_79] : memref<59x64xf32, #tpu.memory_space<vmem>>, vector<1x64xf32>
    %122 = arith.truncf %121 : vector<1x64xf32> to vector<1x64xbf16>
    %c1088 = arith.constant 1088 : index
    %c0_80 = arith.constant 0 : index
    %123 = vector.load %arg23[%c1088, %c0_80] : memref<3776x512xbf16, #tpu.memory_space<vmem>>, vector<64x512xbf16>
    %cst_81 = arith.constant dense<0.000000e+00> : vector<1x512xf32>
    %124 = tpu.matmul %122, %123, %cst_81 {dimension_numbers = #tpu.dot_dimension_numbers<[1], [0], [0], [1], [0, 0, 1, 1], [], []>} : vector<1x64xbf16>, vector<64x512xbf16>, vector<1x512xf32> -> vector<1x512xf32>
    %125 = arith.addf %120, %124 : vector<1x512xf32>
    %c18 = arith.constant 18 : index
    %c0_82 = arith.constant 0 : index
    %126 = vector.load %arg24[%c18, %c0_82] : memref<59x64xf32, #tpu.memory_space<vmem>>, vector<1x64xf32>
    %127 = arith.truncf %126 : vector<1x64xf32> to vector<1x64xbf16>
    %c1152 = arith.constant 1152 : index
    %c0_83 = arith.constant 0 : index
    %128 = vector.load %arg23[%c1152, %c0_83] : memref<3776x512xbf16, #tpu.memory_space<vmem>>, vector<64x512xbf16>
    %cst_84 = arith.constant dense<0.000000e+00> : vector<1x512xf32>
    %129 = tpu.matmul %127, %128, %cst_84 {dimension_numbers = #tpu.dot_dimension_numbers<[1], [0], [0], [1], [0, 0, 1, 1], [], []>} : vector<1x64xbf16>, vector<64x512xbf16>, vector<1x512xf32> -> vector<1x512xf32>
    %130 = arith.addf %125, %129 : vector<1x512xf32>
    %c19 = arith.constant 19 : index
    %c0_85 = arith.constant 0 : index
    %131 = vector.load %arg24[%c19, %c0_85] : memref<59x64xf32, #tpu.memory_space<vmem>>, vector<1x64xf32>
    %132 = arith.truncf %131 : vector<1x64xf32> to vector<1x64xbf16>
    %c1216 = arith.constant 1216 : index
    %c0_86 = arith.constant 0 : index
    %133 = vector.load %arg23[%c1216, %c0_86] : memref<3776x512xbf16, #tpu.memory_space<vmem>>, vector<64x512xbf16>
    %cst_87 = arith.constant dense<0.000000e+00> : vector<1x512xf32>
    %134 = tpu.matmul %132, %133, %cst_87 {dimension_numbers = #tpu.dot_dimension_numbers<[1], [0], [0], [1], [0, 0, 1, 1], [], []>} : vector<1x64xbf16>, vector<64x512xbf16>, vector<1x512xf32> -> vector<1x512xf32>
    %135 = arith.addf %130, %134 : vector<1x512xf32>
    %c20 = arith.constant 20 : index
    %c0_88 = arith.constant 0 : index
    %136 = vector.load %arg24[%c20, %c0_88] : memref<59x64xf32, #tpu.memory_space<vmem>>, vector<1x64xf32>
    %137 = arith.truncf %136 : vector<1x64xf32> to vector<1x64xbf16>
    %c1280 = arith.constant 1280 : index
    %c0_89 = arith.constant 0 : index
    %138 = vector.load %arg23[%c1280, %c0_89] : memref<3776x512xbf16, #tpu.memory_space<vmem>>, vector<64x512xbf16>
    %cst_90 = arith.constant dense<0.000000e+00> : vector<1x512xf32>
    %139 = tpu.matmul %137, %138, %cst_90 {dimension_numbers = #tpu.dot_dimension_numbers<[1], [0], [0], [1], [0, 0, 1, 1], [], []>} : vector<1x64xbf16>, vector<64x512xbf16>, vector<1x512xf32> -> vector<1x512xf32>
    %140 = arith.addf %135, %139 : vector<1x512xf32>
    %c21 = arith.constant 21 : index
    %c0_91 = arith.constant 0 : index
    %141 = vector.load %arg24[%c21, %c0_91] : memref<59x64xf32, #tpu.memory_space<vmem>>, vector<1x64xf32>
    %142 = arith.truncf %141 : vector<1x64xf32> to vector<1x64xbf16>
    %c1344 = arith.constant 1344 : index
    %c0_92 = arith.constant 0 : index
    %143 = vector.load %arg23[%c1344, %c0_92] : memref<3776x512xbf16, #tpu.memory_space<vmem>>, vector<64x512xbf16>
    %cst_93 = arith.constant dense<0.000000e+00> : vector<1x512xf32>
    %144 = tpu.matmul %142, %143, %cst_93 {dimension_numbers = #tpu.dot_dimension_numbers<[1], [0], [0], [1], [0, 0, 1, 1], [], []>} : vector<1x64xbf16>, vector<64x512xbf16>, vector<1x512xf32> -> vector<1x512xf32>
    %145 = arith.addf %140, %144 : vector<1x512xf32>
    %c22 = arith.constant 22 : index
    %c0_94 = arith.constant 0 : index
    %146 = vector.load %arg24[%c22, %c0_94] : memref<59x64xf32, #tpu.memory_space<vmem>>, vector<1x64xf32>
    %147 = arith.truncf %146 : vector<1x64xf32> to vector<1x64xbf16>
    %c1408 = arith.constant 1408 : index
    %c0_95 = arith.constant 0 : index
    %148 = vector.load %arg23[%c1408, %c0_95] : memref<3776x512xbf16, #tpu.memory_space<vmem>>, vector<64x512xbf16>
    %cst_96 = arith.constant dense<0.000000e+00> : vector<1x512xf32>
    %149 = tpu.matmul %147, %148, %cst_96 {dimension_numbers = #tpu.dot_dimension_numbers<[1], [0], [0], [1], [0, 0, 1, 1], [], []>} : vector<1x64xbf16>, vector<64x512xbf16>, vector<1x512xf32> -> vector<1x512xf32>
    %150 = arith.addf %145, %149 : vector<1x512xf32>
    %c23 = arith.constant 23 : index
    %c0_97 = arith.constant 0 : index
    %151 = vector.load %arg24[%c23, %c0_97] : memref<59x64xf32, #tpu.memory_space<vmem>>, vector<1x64xf32>
    %152 = arith.truncf %151 : vector<1x64xf32> to vector<1x64xbf16>
    %c1472 = arith.constant 1472 : index
    %c0_98 = arith.constant 0 : index
    %153 = vector.load %arg23[%c1472, %c0_98] : memref<3776x512xbf16, #tpu.memory_space<vmem>>, vector<64x512xbf16>
    %cst_99 = arith.constant dense<0.000000e+00> : vector<1x512xf32>
    %154 = tpu.matmul %152, %153, %cst_99 {dimension_numbers = #tpu.dot_dimension_numbers<[1], [0], [0], [1], [0, 0, 1, 1], [], []>} : vector<1x64xbf16>, vector<64x512xbf16>, vector<1x512xf32> -> vector<1x512xf32>
    %155 = arith.addf %150, %154 : vector<1x512xf32>
    %c24 = arith.constant 24 : index
    %c0_100 = arith.constant 0 : index
    %156 = vector.load %arg24[%c24, %c0_100] : memref<59x64xf32, #tpu.memory_space<vmem>>, vector<1x64xf32>
    %157 = arith.truncf %156 : vector<1x64xf32> to vector<1x64xbf16>
    %c1536 = arith.constant 1536 : index
    %c0_101 = arith.constant 0 : index
    %158 = vector.load %arg23[%c1536, %c0_101] : memref<3776x512xbf16, #tpu.memory_space<vmem>>, vector<64x512xbf16>
    %cst_102 = arith.constant dense<0.000000e+00> : vector<1x512xf32>
    %159 = tpu.matmul %157, %158, %cst_102 {dimension_numbers = #tpu.dot_dimension_numbers<[1], [0], [0], [1], [0, 0, 1, 1], [], []>} : vector<1x64xbf16>, vector<64x512xbf16>, vector<1x512xf32> -> vector<1x512xf32>
    %160 = arith.addf %155, %159 : vector<1x512xf32>
    %c25 = arith.constant 25 : index
    %c0_103 = arith.constant 0 : index
    %161 = vector.load %arg24[%c25, %c0_103] : memref<59x64xf32, #tpu.memory_space<vmem>>, vector<1x64xf32>
    %162 = arith.truncf %161 : vector<1x64xf32> to vector<1x64xbf16>
    %c1600 = arith.constant 1600 : index
    %c0_104 = arith.constant 0 : index
    %163 = vector.load %arg23[%c1600, %c0_104] : memref<3776x512xbf16, #tpu.memory_space<vmem>>, vector<64x512xbf16>
    %cst_105 = arith.constant dense<0.000000e+00> : vector<1x512xf32>
    %164 = tpu.matmul %162, %163, %cst_105 {dimension_numbers = #tpu.dot_dimension_numbers<[1], [0], [0], [1], [0, 0, 1, 1], [], []>} : vector<1x64xbf16>, vector<64x512xbf16>, vector<1x512xf32> -> vector<1x512xf32>
    %165 = arith.addf %160, %164 : vector<1x512xf32>
    %c26 = arith.constant 26 : index
    %c0_106 = arith.constant 0 : index
    %166 = vector.load %arg24[%c26, %c0_106] : memref<59x64xf32, #tpu.memory_space<vmem>>, vector<1x64xf32>
    %167 = arith.truncf %166 : vector<1x64xf32> to vector<1x64xbf16>
    %c1664 = arith.constant 1664 : index
    %c0_107 = arith.constant 0 : index
    %168 = vector.load %arg23[%c1664, %c0_107] : memref<3776x512xbf16, #tpu.memory_space<vmem>>, vector<64x512xbf16>
    %cst_108 = arith.constant dense<0.000000e+00> : vector<1x512xf32>
    %169 = tpu.matmul %167, %168, %cst_108 {dimension_numbers = #tpu.dot_dimension_numbers<[1], [0], [0], [1], [0, 0, 1, 1], [], []>} : vector<1x64xbf16>, vector<64x512xbf16>, vector<1x512xf32> -> vector<1x512xf32>
    %170 = arith.addf %165, %169 : vector<1x512xf32>
    %c27 = arith.constant 27 : index
    %c0_109 = arith.constant 0 : index
    %171 = vector.load %arg24[%c27, %c0_109] : memref<59x64xf32, #tpu.memory_space<vmem>>, vector<1x64xf32>
    %172 = arith.truncf %171 : vector<1x64xf32> to vector<1x64xbf16>
    %c1728 = arith.constant 1728 : index
    %c0_110 = arith.constant 0 : index
    %173 = vector.load %arg23[%c1728, %c0_110] : memref<3776x512xbf16, #tpu.memory_space<vmem>>, vector<64x512xbf16>
    %cst_111 = arith.constant dense<0.000000e+00> : vector<1x512xf32>
    %174 = tpu.matmul %172, %173, %cst_111 {dimension_numbers = #tpu.dot_dimension_numbers<[1], [0], [0], [1], [0, 0, 1, 1], [], []>} : vector<1x64xbf16>, vector<64x512xbf16>, vector<1x512xf32> -> vector<1x512xf32>
    %175 = arith.addf %170, %174 : vector<1x512xf32>
    %c28 = arith.constant 28 : index
    %c0_112 = arith.constant 0 : index
    %176 = vector.load %arg24[%c28, %c0_112] : memref<59x64xf32, #tpu.memory_space<vmem>>, vector<1x64xf32>
    %177 = arith.truncf %176 : vector<1x64xf32> to vector<1x64xbf16>
    %c1792 = arith.constant 1792 : index
    %c0_113 = arith.constant 0 : index
    %178 = vector.load %arg23[%c1792, %c0_113] : memref<3776x512xbf16, #tpu.memory_space<vmem>>, vector<64x512xbf16>
    %cst_114 = arith.constant dense<0.000000e+00> : vector<1x512xf32>
    %179 = tpu.matmul %177, %178, %cst_114 {dimension_numbers = #tpu.dot_dimension_numbers<[1], [0], [0], [1], [0, 0, 1, 1], [], []>} : vector<1x64xbf16>, vector<64x512xbf16>, vector<1x512xf32> -> vector<1x512xf32>
    %180 = arith.addf %175, %179 : vector<1x512xf32>
    %c29 = arith.constant 29 : index
    %c0_115 = arith.constant 0 : index
    %181 = vector.load %arg24[%c29, %c0_115] : memref<59x64xf32, #tpu.memory_space<vmem>>, vector<1x64xf32>
    %182 = arith.truncf %181 : vector<1x64xf32> to vector<1x64xbf16>
    %c1856 = arith.constant 1856 : index
    %c0_116 = arith.constant 0 : index
    %183 = vector.load %arg23[%c1856, %c0_116] : memref<3776x512xbf16, #tpu.memory_space<vmem>>, vector<64x512xbf16>
    %cst_117 = arith.constant dense<0.000000e+00> : vector<1x512xf32>
    %184 = tpu.matmul %182, %183, %cst_117 {dimension_numbers = #tpu.dot_dimension_numbers<[1], [0], [0], [1], [0, 0, 1, 1], [], []>} : vector<1x64xbf16>, vector<64x512xbf16>, vector<1x512xf32> -> vector<1x512xf32>
    %185 = arith.addf %180, %184 : vector<1x512xf32>
    %c30 = arith.constant 30 : index
    %c0_118 = arith.constant 0 : index
    %186 = vector.load %arg24[%c30, %c0_118] : memref<59x64xf32, #tpu.memory_space<vmem>>, vector<1x64xf32>
    %187 = arith.truncf %186 : vector<1x64xf32> to vector<1x64xbf16>
    %c1920 = arith.constant 1920 : index
    %c0_119 = arith.constant 0 : index
    %188 = vector.load %arg23[%c1920, %c0_119] : memref<3776x512xbf16, #tpu.memory_space<vmem>>, vector<64x512xbf16>
    %cst_120 = arith.constant dense<0.000000e+00> : vector<1x512xf32>
    %189 = tpu.matmul %187, %188, %cst_120 {dimension_numbers = #tpu.dot_dimension_numbers<[1], [0], [0], [1], [0, 0, 1, 1], [], []>} : vector<1x64xbf16>, vector<64x512xbf16>, vector<1x512xf32> -> vector<1x512xf32>
    %190 = arith.addf %185, %189 : vector<1x512xf32>
    %c31 = arith.constant 31 : index
    %c0_121 = arith.constant 0 : index
    %191 = vector.load %arg24[%c31, %c0_121] : memref<59x64xf32, #tpu.memory_space<vmem>>, vector<1x64xf32>
    %192 = arith.truncf %191 : vector<1x64xf32> to vector<1x64xbf16>
    %c1984 = arith.constant 1984 : index
    %c0_122 = arith.constant 0 : index
    %193 = vector.load %arg23[%c1984, %c0_122] : memref<3776x512xbf16, #tpu.memory_space<vmem>>, vector<64x512xbf16>
    %cst_123 = arith.constant dense<0.000000e+00> : vector<1x512xf32>
    %194 = tpu.matmul %192, %193, %cst_123 {dimension_numbers = #tpu.dot_dimension_numbers<[1], [0], [0], [1], [0, 0, 1, 1], [], []>} : vector<1x64xbf16>, vector<64x512xbf16>, vector<1x512xf32> -> vector<1x512xf32>
    %195 = arith.addf %190, %194 : vector<1x512xf32>
    %c32 = arith.constant 32 : index
    %c0_124 = arith.constant 0 : index
    %196 = vector.load %arg24[%c32, %c0_124] : memref<59x64xf32, #tpu.memory_space<vmem>>, vector<1x64xf32>
    %197 = arith.truncf %196 : vector<1x64xf32> to vector<1x64xbf16>
    %c2048 = arith.constant 2048 : index
    %c0_125 = arith.constant 0 : index
    %198 = vector.load %arg23[%c2048, %c0_125] : memref<3776x512xbf16, #tpu.memory_space<vmem>>, vector<64x512xbf16>
    %cst_126 = arith.constant dense<0.000000e+00> : vector<1x512xf32>
    %199 = tpu.matmul %197, %198, %cst_126 {dimension_numbers = #tpu.dot_dimension_numbers<[1], [0], [0], [1], [0, 0, 1, 1], [], []>} : vector<1x64xbf16>, vector<64x512xbf16>, vector<1x512xf32> -> vector<1x512xf32>
    %200 = arith.addf %195, %199 : vector<1x512xf32>
    %c33 = arith.constant 33 : index
    %c0_127 = arith.constant 0 : index
    %201 = vector.load %arg24[%c33, %c0_127] : memref<59x64xf32, #tpu.memory_space<vmem>>, vector<1x64xf32>
    %202 = arith.truncf %201 : vector<1x64xf32> to vector<1x64xbf16>
    %c2112 = arith.constant 2112 : index
    %c0_128 = arith.constant 0 : index
    %203 = vector.load %arg23[%c2112, %c0_128] : memref<3776x512xbf16, #tpu.memory_space<vmem>>, vector<64x512xbf16>
    %cst_129 = arith.constant dense<0.000000e+00> : vector<1x512xf32>
    %204 = tpu.matmul %202, %203, %cst_129 {dimension_numbers = #tpu.dot_dimension_numbers<[1], [0], [0], [1], [0, 0, 1, 1], [], []>} : vector<1x64xbf16>, vector<64x512xbf16>, vector<1x512xf32> -> vector<1x512xf32>
    %205 = arith.addf %200, %204 : vector<1x512xf32>
    %c34 = arith.constant 34 : index
    %c0_130 = arith.constant 0 : index
    %206 = vector.load %arg24[%c34, %c0_130] : memref<59x64xf32, #tpu.memory_space<vmem>>, vector<1x64xf32>
    %207 = arith.truncf %206 : vector<1x64xf32> to vector<1x64xbf16>
    %c2176 = arith.constant 2176 : index
    %c0_131 = arith.constant 0 : index
    %208 = vector.load %arg23[%c2176, %c0_131] : memref<3776x512xbf16, #tpu.memory_space<vmem>>, vector<64x512xbf16>
    %cst_132 = arith.constant dense<0.000000e+00> : vector<1x512xf32>
    %209 = tpu.matmul %207, %208, %cst_132 {dimension_numbers = #tpu.dot_dimension_numbers<[1], [0], [0], [1], [0, 0, 1, 1], [], []>} : vector<1x64xbf16>, vector<64x512xbf16>, vector<1x512xf32> -> vector<1x512xf32>
    %210 = arith.addf %205, %209 : vector<1x512xf32>
    %c35 = arith.constant 35 : index
    %c0_133 = arith.constant 0 : index
    %211 = vector.load %arg24[%c35, %c0_133] : memref<59x64xf32, #tpu.memory_space<vmem>>, vector<1x64xf32>
    %212 = arith.truncf %211 : vector<1x64xf32> to vector<1x64xbf16>
    %c2240 = arith.constant 2240 : index
    %c0_134 = arith.constant 0 : index
    %213 = vector.load %arg23[%c2240, %c0_134] : memref<3776x512xbf16, #tpu.memory_space<vmem>>, vector<64x512xbf16>
    %cst_135 = arith.constant dense<0.000000e+00> : vector<1x512xf32>
    %214 = tpu.matmul %212, %213, %cst_135 {dimension_numbers = #tpu.dot_dimension_numbers<[1], [0], [0], [1], [0, 0, 1, 1], [], []>} : vector<1x64xbf16>, vector<64x512xbf16>, vector<1x512xf32> -> vector<1x512xf32>
    %215 = arith.addf %210, %214 : vector<1x512xf32>
    %c36 = arith.constant 36 : index
    %c0_136 = arith.constant 0 : index
    %216 = vector.load %arg24[%c36, %c0_136] : memref<59x64xf32, #tpu.memory_space<vmem>>, vector<1x64xf32>
    %217 = arith.truncf %216 : vector<1x64xf32> to vector<1x64xbf16>
    %c2304 = arith.constant 2304 : index
    %c0_137 = arith.constant 0 : index
    %218 = vector.load %arg23[%c2304, %c0_137] : memref<3776x512xbf16, #tpu.memory_space<vmem>>, vector<64x512xbf16>
    %cst_138 = arith.constant dense<0.000000e+00> : vector<1x512xf32>
    %219 = tpu.matmul %217, %218, %cst_138 {dimension_numbers = #tpu.dot_dimension_numbers<[1], [0], [0], [1], [0, 0, 1, 1], [], []>} : vector<1x64xbf16>, vector<64x512xbf16>, vector<1x512xf32> -> vector<1x512xf32>
    %220 = arith.addf %215, %219 : vector<1x512xf32>
    %c37 = arith.constant 37 : index
    %c0_139 = arith.constant 0 : index
    %221 = vector.load %arg24[%c37, %c0_139] : memref<59x64xf32, #tpu.memory_space<vmem>>, vector<1x64xf32>
    %222 = arith.truncf %221 : vector<1x64xf32> to vector<1x64xbf16>
    %c2368 = arith.constant 2368 : index
    %c0_140 = arith.constant 0 : index
    %223 = vector.load %arg23[%c2368, %c0_140] : memref<3776x512xbf16, #tpu.memory_space<vmem>>, vector<64x512xbf16>
    %cst_141 = arith.constant dense<0.000000e+00> : vector<1x512xf32>
    %224 = tpu.matmul %222, %223, %cst_141 {dimension_numbers = #tpu.dot_dimension_numbers<[1], [0], [0], [1], [0, 0, 1, 1], [], []>} : vector<1x64xbf16>, vector<64x512xbf16>, vector<1x512xf32> -> vector<1x512xf32>
    %225 = arith.addf %220, %224 : vector<1x512xf32>
    %c38 = arith.constant 38 : index
    %c0_142 = arith.constant 0 : index
    %226 = vector.load %arg24[%c38, %c0_142] : memref<59x64xf32, #tpu.memory_space<vmem>>, vector<1x64xf32>
    %227 = arith.truncf %226 : vector<1x64xf32> to vector<1x64xbf16>
    %c2432 = arith.constant 2432 : index
    %c0_143 = arith.constant 0 : index
    %228 = vector.load %arg23[%c2432, %c0_143] : memref<3776x512xbf16, #tpu.memory_space<vmem>>, vector<64x512xbf16>
    %cst_144 = arith.constant dense<0.000000e+00> : vector<1x512xf32>
    %229 = tpu.matmul %227, %228, %cst_144 {dimension_numbers = #tpu.dot_dimension_numbers<[1], [0], [0], [1], [0, 0, 1, 1], [], []>} : vector<1x64xbf16>, vector<64x512xbf16>, vector<1x512xf32> -> vector<1x512xf32>
    %230 = arith.addf %225, %229 : vector<1x512xf32>
    %c39 = arith.constant 39 : index
    %c0_145 = arith.constant 0 : index
    %231 = vector.load %arg24[%c39, %c0_145] : memref<59x64xf32, #tpu.memory_space<vmem>>, vector<1x64xf32>
    %232 = arith.truncf %231 : vector<1x64xf32> to vector<1x64xbf16>
    %c2496 = arith.constant 2496 : index
    %c0_146 = arith.constant 0 : index
    %233 = vector.load %arg23[%c2496, %c0_146] : memref<3776x512xbf16, #tpu.memory_space<vmem>>, vector<64x512xbf16>
    %cst_147 = arith.constant dense<0.000000e+00> : vector<1x512xf32>
    %234 = tpu.matmul %232, %233, %cst_147 {dimension_numbers = #tpu.dot_dimension_numbers<[1], [0], [0], [1], [0, 0, 1, 1], [], []>} : vector<1x64xbf16>, vector<64x512xbf16>, vector<1x512xf32> -> vector<1x512xf32>
    %235 = arith.addf %230, %234 : vector<1x512xf32>
    %c40 = arith.constant 40 : index
    %c0_148 = arith.constant 0 : index
    %236 = vector.load %arg24[%c40, %c0_148] : memref<59x64xf32, #tpu.memory_space<vmem>>, vector<1x64xf32>
    %237 = arith.truncf %236 : vector<1x64xf32> to vector<1x64xbf16>
    %c2560 = arith.constant 2560 : index
    %c0_149 = arith.constant 0 : index
    %238 = vector.load %arg23[%c2560, %c0_149] : memref<3776x512xbf16, #tpu.memory_space<vmem>>, vector<64x512xbf16>
    %cst_150 = arith.constant dense<0.000000e+00> : vector<1x512xf32>
    %239 = tpu.matmul %237, %238, %cst_150 {dimension_numbers = #tpu.dot_dimension_numbers<[1], [0], [0], [1], [0, 0, 1, 1], [], []>} : vector<1x64xbf16>, vector<64x512xbf16>, vector<1x512xf32> -> vector<1x512xf32>
    %240 = arith.addf %235, %239 : vector<1x512xf32>
    %c41 = arith.constant 41 : index
    %c0_151 = arith.constant 0 : index
    %241 = vector.load %arg24[%c41, %c0_151] : memref<59x64xf32, #tpu.memory_space<vmem>>, vector<1x64xf32>
    %242 = arith.truncf %241 : vector<1x64xf32> to vector<1x64xbf16>
    %c2624 = arith.constant 2624 : index
    %c0_152 = arith.constant 0 : index
    %243 = vector.load %arg23[%c2624, %c0_152] : memref<3776x512xbf16, #tpu.memory_space<vmem>>, vector<64x512xbf16>
    %cst_153 = arith.constant dense<0.000000e+00> : vector<1x512xf32>
    %244 = tpu.matmul %242, %243, %cst_153 {dimension_numbers = #tpu.dot_dimension_numbers<[1], [0], [0], [1], [0, 0, 1, 1], [], []>} : vector<1x64xbf16>, vector<64x512xbf16>, vector<1x512xf32> -> vector<1x512xf32>
    %245 = arith.addf %240, %244 : vector<1x512xf32>
    %c42 = arith.constant 42 : index
    %c0_154 = arith.constant 0 : index
    %246 = vector.load %arg24[%c42, %c0_154] : memref<59x64xf32, #tpu.memory_space<vmem>>, vector<1x64xf32>
    %247 = arith.truncf %246 : vector<1x64xf32> to vector<1x64xbf16>
    %c2688 = arith.constant 2688 : index
    %c0_155 = arith.constant 0 : index
    %248 = vector.load %arg23[%c2688, %c0_155] : memref<3776x512xbf16, #tpu.memory_space<vmem>>, vector<64x512xbf16>
    %cst_156 = arith.constant dense<0.000000e+00> : vector<1x512xf32>
    %249 = tpu.matmul %247, %248, %cst_156 {dimension_numbers = #tpu.dot_dimension_numbers<[1], [0], [0], [1], [0, 0, 1, 1], [], []>} : vector<1x64xbf16>, vector<64x512xbf16>, vector<1x512xf32> -> vector<1x512xf32>
    %250 = arith.addf %245, %249 : vector<1x512xf32>
    %c43 = arith.constant 43 : index
    %c0_157 = arith.constant 0 : index
    %251 = vector.load %arg24[%c43, %c0_157] : memref<59x64xf32, #tpu.memory_space<vmem>>, vector<1x64xf32>
    %252 = arith.truncf %251 : vector<1x64xf32> to vector<1x64xbf16>
    %c2752 = arith.constant 2752 : index
    %c0_158 = arith.constant 0 : index
    %253 = vector.load %arg23[%c2752, %c0_158] : memref<3776x512xbf16, #tpu.memory_space<vmem>>, vector<64x512xbf16>
    %cst_159 = arith.constant dense<0.000000e+00> : vector<1x512xf32>
    %254 = tpu.matmul %252, %253, %cst_159 {dimension_numbers = #tpu.dot_dimension_numbers<[1], [0], [0], [1], [0, 0, 1, 1], [], []>} : vector<1x64xbf16>, vector<64x512xbf16>, vector<1x512xf32> -> vector<1x512xf32>
    %255 = arith.addf %250, %254 : vector<1x512xf32>
    %c44 = arith.constant 44 : index
    %c0_160 = arith.constant 0 : index
    %256 = vector.load %arg24[%c44, %c0_160] : memref<59x64xf32, #tpu.memory_space<vmem>>, vector<1x64xf32>
    %257 = arith.truncf %256 : vector<1x64xf32> to vector<1x64xbf16>
    %c2816 = arith.constant 2816 : index
    %c0_161 = arith.constant 0 : index
    %258 = vector.load %arg23[%c2816, %c0_161] : memref<3776x512xbf16, #tpu.memory_space<vmem>>, vector<64x512xbf16>
    %cst_162 = arith.constant dense<0.000000e+00> : vector<1x512xf32>
    %259 = tpu.matmul %257, %258, %cst_162 {dimension_numbers = #tpu.dot_dimension_numbers<[1], [0], [0], [1], [0, 0, 1, 1], [], []>} : vector<1x64xbf16>, vector<64x512xbf16>, vector<1x512xf32> -> vector<1x512xf32>
    %260 = arith.addf %255, %259 : vector<1x512xf32>
    %c45 = arith.constant 45 : index
    %c0_163 = arith.constant 0 : index
    %261 = vector.load %arg24[%c45, %c0_163] : memref<59x64xf32, #tpu.memory_space<vmem>>, vector<1x64xf32>
    %262 = arith.truncf %261 : vector<1x64xf32> to vector<1x64xbf16>
    %c2880 = arith.constant 2880 : index
    %c0_164 = arith.constant 0 : index
    %263 = vector.load %arg23[%c2880, %c0_164] : memref<3776x512xbf16, #tpu.memory_space<vmem>>, vector<64x512xbf16>
    %cst_165 = arith.constant dense<0.000000e+00> : vector<1x512xf32>
    %264 = tpu.matmul %262, %263, %cst_165 {dimension_numbers = #tpu.dot_dimension_numbers<[1], [0], [0], [1], [0, 0, 1, 1], [], []>} : vector<1x64xbf16>, vector<64x512xbf16>, vector<1x512xf32> -> vector<1x512xf32>
    %265 = arith.addf %260, %264 : vector<1x512xf32>
    %c46 = arith.constant 46 : index
    %c0_166 = arith.constant 0 : index
    %266 = vector.load %arg24[%c46, %c0_166] : memref<59x64xf32, #tpu.memory_space<vmem>>, vector<1x64xf32>
    %267 = arith.truncf %266 : vector<1x64xf32> to vector<1x64xbf16>
    %c2944 = arith.constant 2944 : index
    %c0_167 = arith.constant 0 : index
    %268 = vector.load %arg23[%c2944, %c0_167] : memref<3776x512xbf16, #tpu.memory_space<vmem>>, vector<64x512xbf16>
    %cst_168 = arith.constant dense<0.000000e+00> : vector<1x512xf32>
    %269 = tpu.matmul %267, %268, %cst_168 {dimension_numbers = #tpu.dot_dimension_numbers<[1], [0], [0], [1], [0, 0, 1, 1], [], []>} : vector<1x64xbf16>, vector<64x512xbf16>, vector<1x512xf32> -> vector<1x512xf32>
    %270 = arith.addf %265, %269 : vector<1x512xf32>
    %c47 = arith.constant 47 : index
    %c0_169 = arith.constant 0 : index
    %271 = vector.load %arg24[%c47, %c0_169] : memref<59x64xf32, #tpu.memory_space<vmem>>, vector<1x64xf32>
    %272 = arith.truncf %271 : vector<1x64xf32> to vector<1x64xbf16>
    %c3008 = arith.constant 3008 : index
    %c0_170 = arith.constant 0 : index
    %273 = vector.load %arg23[%c3008, %c0_170] : memref<3776x512xbf16, #tpu.memory_space<vmem>>, vector<64x512xbf16>
    %cst_171 = arith.constant dense<0.000000e+00> : vector<1x512xf32>
    %274 = tpu.matmul %272, %273, %cst_171 {dimension_numbers = #tpu.dot_dimension_numbers<[1], [0], [0], [1], [0, 0, 1, 1], [], []>} : vector<1x64xbf16>, vector<64x512xbf16>, vector<1x512xf32> -> vector<1x512xf32>
    %275 = arith.addf %270, %274 : vector<1x512xf32>
    %c48 = arith.constant 48 : index
    %c0_172 = arith.constant 0 : index
    %276 = vector.load %arg24[%c48, %c0_172] : memref<59x64xf32, #tpu.memory_space<vmem>>, vector<1x64xf32>
    %277 = arith.truncf %276 : vector<1x64xf32> to vector<1x64xbf16>
    %c3072 = arith.constant 3072 : index
    %c0_173 = arith.constant 0 : index
    %278 = vector.load %arg23[%c3072, %c0_173] : memref<3776x512xbf16, #tpu.memory_space<vmem>>, vector<64x512xbf16>
    %cst_174 = arith.constant dense<0.000000e+00> : vector<1x512xf32>
    %279 = tpu.matmul %277, %278, %cst_174 {dimension_numbers = #tpu.dot_dimension_numbers<[1], [0], [0], [1], [0, 0, 1, 1], [], []>} : vector<1x64xbf16>, vector<64x512xbf16>, vector<1x512xf32> -> vector<1x512xf32>
    %280 = arith.addf %275, %279 : vector<1x512xf32>
    %c49 = arith.constant 49 : index
    %c0_175 = arith.constant 0 : index
    %281 = vector.load %arg24[%c49, %c0_175] : memref<59x64xf32, #tpu.memory_space<vmem>>, vector<1x64xf32>
    %282 = arith.truncf %281 : vector<1x64xf32> to vector<1x64xbf16>
    %c3136 = arith.constant 3136 : index
    %c0_176 = arith.constant 0 : index
    %283 = vector.load %arg23[%c3136, %c0_176] : memref<3776x512xbf16, #tpu.memory_space<vmem>>, vector<64x512xbf16>
    %cst_177 = arith.constant dense<0.000000e+00> : vector<1x512xf32>
    %284 = tpu.matmul %282, %283, %cst_177 {dimension_numbers = #tpu.dot_dimension_numbers<[1], [0], [0], [1], [0, 0, 1, 1], [], []>} : vector<1x64xbf16>, vector<64x512xbf16>, vector<1x512xf32> -> vector<1x512xf32>
    %285 = arith.addf %280, %284 : vector<1x512xf32>
    %c50 = arith.constant 50 : index
    %c0_178 = arith.constant 0 : index
    %286 = vector.load %arg24[%c50, %c0_178] : memref<59x64xf32, #tpu.memory_space<vmem>>, vector<1x64xf32>
    %287 = arith.truncf %286 : vector<1x64xf32> to vector<1x64xbf16>
    %c3200 = arith.constant 3200 : index
    %c0_179 = arith.constant 0 : index
    %288 = vector.load %arg23[%c3200, %c0_179] : memref<3776x512xbf16, #tpu.memory_space<vmem>>, vector<64x512xbf16>
    %cst_180 = arith.constant dense<0.000000e+00> : vector<1x512xf32>
    %289 = tpu.matmul %287, %288, %cst_180 {dimension_numbers = #tpu.dot_dimension_numbers<[1], [0], [0], [1], [0, 0, 1, 1], [], []>} : vector<1x64xbf16>, vector<64x512xbf16>, vector<1x512xf32> -> vector<1x512xf32>
    %290 = arith.addf %285, %289 : vector<1x512xf32>
    %c51 = arith.constant 51 : index
    %c0_181 = arith.constant 0 : index
    %291 = vector.load %arg24[%c51, %c0_181] : memref<59x64xf32, #tpu.memory_space<vmem>>, vector<1x64xf32>
    %292 = arith.truncf %291 : vector<1x64xf32> to vector<1x64xbf16>
    %c3264 = arith.constant 3264 : index
    %c0_182 = arith.constant 0 : index
    %293 = vector.load %arg23[%c3264, %c0_182] : memref<3776x512xbf16, #tpu.memory_space<vmem>>, vector<64x512xbf16>
    %cst_183 = arith.constant dense<0.000000e+00> : vector<1x512xf32>
    %294 = tpu.matmul %292, %293, %cst_183 {dimension_numbers = #tpu.dot_dimension_numbers<[1], [0], [0], [1], [0, 0, 1, 1], [], []>} : vector<1x64xbf16>, vector<64x512xbf16>, vector<1x512xf32> -> vector<1x512xf32>
    %295 = arith.addf %290, %294 : vector<1x512xf32>
    %c52 = arith.constant 52 : index
    %c0_184 = arith.constant 0 : index
    %296 = vector.load %arg24[%c52, %c0_184] : memref<59x64xf32, #tpu.memory_space<vmem>>, vector<1x64xf32>
    %297 = arith.truncf %296 : vector<1x64xf32> to vector<1x64xbf16>
    %c3328 = arith.constant 3328 : index
    %c0_185 = arith.constant 0 : index
    %298 = vector.load %arg23[%c3328, %c0_185] : memref<3776x512xbf16, #tpu.memory_space<vmem>>, vector<64x512xbf16>
    %cst_186 = arith.constant dense<0.000000e+00> : vector<1x512xf32>
    %299 = tpu.matmul %297, %298, %cst_186 {dimension_numbers = #tpu.dot_dimension_numbers<[1], [0], [0], [1], [0, 0, 1, 1], [], []>} : vector<1x64xbf16>, vector<64x512xbf16>, vector<1x512xf32> -> vector<1x512xf32>
    %300 = arith.addf %295, %299 : vector<1x512xf32>
    %c53 = arith.constant 53 : index
    %c0_187 = arith.constant 0 : index
    %301 = vector.load %arg24[%c53, %c0_187] : memref<59x64xf32, #tpu.memory_space<vmem>>, vector<1x64xf32>
    %302 = arith.truncf %301 : vector<1x64xf32> to vector<1x64xbf16>
    %c3392 = arith.constant 3392 : index
    %c0_188 = arith.constant 0 : index
    %303 = vector.load %arg23[%c3392, %c0_188] : memref<3776x512xbf16, #tpu.memory_space<vmem>>, vector<64x512xbf16>
    %cst_189 = arith.constant dense<0.000000e+00> : vector<1x512xf32>
    %304 = tpu.matmul %302, %303, %cst_189 {dimension_numbers = #tpu.dot_dimension_numbers<[1], [0], [0], [1], [0, 0, 1, 1], [], []>} : vector<1x64xbf16>, vector<64x512xbf16>, vector<1x512xf32> -> vector<1x512xf32>
    %305 = arith.addf %300, %304 : vector<1x512xf32>
    %c54 = arith.constant 54 : index
    %c0_190 = arith.constant 0 : index
    %306 = vector.load %arg24[%c54, %c0_190] : memref<59x64xf32, #tpu.memory_space<vmem>>, vector<1x64xf32>
    %307 = arith.truncf %306 : vector<1x64xf32> to vector<1x64xbf16>
    %c3456 = arith.constant 3456 : index
    %c0_191 = arith.constant 0 : index
    %308 = vector.load %arg23[%c3456, %c0_191] : memref<3776x512xbf16, #tpu.memory_space<vmem>>, vector<64x512xbf16>
    %cst_192 = arith.constant dense<0.000000e+00> : vector<1x512xf32>
    %309 = tpu.matmul %307, %308, %cst_192 {dimension_numbers = #tpu.dot_dimension_numbers<[1], [0], [0], [1], [0, 0, 1, 1], [], []>} : vector<1x64xbf16>, vector<64x512xbf16>, vector<1x512xf32> -> vector<1x512xf32>
    %310 = arith.addf %305, %309 : vector<1x512xf32>
    %c55 = arith.constant 55 : index
    %c0_193 = arith.constant 0 : index
    %311 = vector.load %arg24[%c55, %c0_193] : memref<59x64xf32, #tpu.memory_space<vmem>>, vector<1x64xf32>
    %312 = arith.truncf %311 : vector<1x64xf32> to vector<1x64xbf16>
    %c3520 = arith.constant 3520 : index
    %c0_194 = arith.constant 0 : index
    %313 = vector.load %arg23[%c3520, %c0_194] : memref<3776x512xbf16, #tpu.memory_space<vmem>>, vector<64x512xbf16>
    %cst_195 = arith.constant dense<0.000000e+00> : vector<1x512xf32>
    %314 = tpu.matmul %312, %313, %cst_195 {dimension_numbers = #tpu.dot_dimension_numbers<[1], [0], [0], [1], [0, 0, 1, 1], [], []>} : vector<1x64xbf16>, vector<64x512xbf16>, vector<1x512xf32> -> vector<1x512xf32>
    %315 = arith.addf %310, %314 : vector<1x512xf32>
    %c56 = arith.constant 56 : index
    %c0_196 = arith.constant 0 : index
    %316 = vector.load %arg24[%c56, %c0_196] : memref<59x64xf32, #tpu.memory_space<vmem>>, vector<1x64xf32>
    %317 = arith.truncf %316 : vector<1x64xf32> to vector<1x64xbf16>
    %c3584 = arith.constant 3584 : index
    %c0_197 = arith.constant 0 : index
    %318 = vector.load %arg23[%c3584, %c0_197] : memref<3776x512xbf16, #tpu.memory_space<vmem>>, vector<64x512xbf16>
    %cst_198 = arith.constant dense<0.000000e+00> : vector<1x512xf32>
    %319 = tpu.matmul %317, %318, %cst_198 {dimension_numbers = #tpu.dot_dimension_numbers<[1], [0], [0], [1], [0, 0, 1, 1], [], []>} : vector<1x64xbf16>, vector<64x512xbf16>, vector<1x512xf32> -> vector<1x512xf32>
    %320 = arith.addf %315, %319 : vector<1x512xf32>
    %c57 = arith.constant 57 : index
    %c0_199 = arith.constant 0 : index
    %321 = vector.load %arg24[%c57, %c0_199] : memref<59x64xf32, #tpu.memory_space<vmem>>, vector<1x64xf32>
    %322 = arith.truncf %321 : vector<1x64xf32> to vector<1x64xbf16>
    %c3648 = arith.constant 3648 : index
    %c0_200 = arith.constant 0 : index
    %323 = vector.load %arg23[%c3648, %c0_200] : memref<3776x512xbf16, #tpu.memory_space<vmem>>, vector<64x512xbf16>
    %cst_201 = arith.constant dense<0.000000e+00> : vector<1x512xf32>
    %324 = tpu.matmul %322, %323, %cst_201 {dimension_numbers = #tpu.dot_dimension_numbers<[1], [0], [0], [1], [0, 0, 1, 1], [], []>} : vector<1x64xbf16>, vector<64x512xbf16>, vector<1x512xf32> -> vector<1x512xf32>
    %325 = arith.addf %320, %324 : vector<1x512xf32>
    %c58 = arith.constant 58 : index
    %c0_202 = arith.constant 0 : index
    %326 = vector.load %arg24[%c58, %c0_202] : memref<59x64xf32, #tpu.memory_space<vmem>>, vector<1x64xf32>
    %327 = arith.truncf %326 : vector<1x64xf32> to vector<1x64xbf16>
    %c3712 = arith.constant 3712 : index
    %c0_203 = arith.constant 0 : index
    %328 = vector.load %arg23[%c3712, %c0_203] : memref<3776x512xbf16, #tpu.memory_space<vmem>>, vector<64x512xbf16>
    %cst_204 = arith.constant dense<0.000000e+00> : vector<1x512xf32>
    %329 = tpu.matmul %327, %328, %cst_204 {dimension_numbers = #tpu.dot_dimension_numbers<[1], [0], [0], [1], [0, 0, 1, 1], [], []>} : vector<1x64xbf16>, vector<64x512xbf16>, vector<1x512xf32> -> vector<1x512xf32>
    %330 = arith.addf %325, %329 : vector<1x512xf32>
    %cst_205 = arith.constant 0.000000e+00 : f32
    %331 = vector.broadcast %cst_205 : f32 to vector<1x512xf32>
    %332 = arith.maximumf %330, %331 : vector<1x512xf32>
    %333 = arith.truncf %332 : vector<1x512xf32> to vector<1x512xbf16>
    %c0_206 = arith.constant 0 : index
    %c0_207 = arith.constant 0 : index
    %334 = vector.load %arg10[%c0_206, %c0_207] : memref<512x256xbf16, #tpu.memory_space<vmem>>, vector<512x256xbf16>
    %cst_208 = arith.constant dense<0.000000e+00> : vector<1x256xf32>
    %335 = tpu.matmul %333, %334, %cst_208 {dimension_numbers = #tpu.dot_dimension_numbers<[1], [0], [0], [1], [0, 0, 1, 1], [], []>} : vector<1x512xbf16>, vector<512x256xbf16>, vector<1x256xf32> -> vector<1x256xf32>
    %c0_209 = arith.constant 0 : index
    %c0_210 = arith.constant 0 : index
    %336 = vector.load %arg1[%c0_209, %c0_210] : memref<1x2xf32, #tpu.memory_space<vmem>>, vector<1x2xf32>
    %c0_211 = arith.constant 0 : index
    %c0_212 = arith.constant 0 : index
    %337 = vector.load %arg11[%c0_211, %c0_212] : memref<2x256xf32, #tpu.memory_space<vmem>>, vector<2x256xf32>
    %cst_213 = arith.constant dense<0.000000e+00> : vector<1x256xf32>
    %338 = tpu.matmul %336, %337, %cst_213 {dimension_numbers = #tpu.dot_dimension_numbers<[1], [0], [0], [1], [0, 0, 1, 1], [], []>} : vector<1x2xf32>, vector<2x256xf32>, vector<1x256xf32> -> vector<1x256xf32>
    %339 = arith.addf %335, %338 : vector<1x256xf32>
    %c0_214 = arith.constant 0 : index
    %c0_215 = arith.constant 0 : index
    %340 = vector.load %arg12[%c0_214, %c0_215] : memref<1x256xf32, #tpu.memory_space<vmem>>, vector<1x256xf32>
    %341 = arith.addf %339, %340 : vector<1x256xf32>
    %cst_216 = arith.constant 0.000000e+00 : f32
    %342 = vector.broadcast %cst_216 : f32 to vector<1x256xf32>
    %343 = arith.maximumf %341, %342 : vector<1x256xf32>
    %344 = arith.truncf %343 : vector<1x256xf32> to vector<1x256xbf16>
    %c0_217 = arith.constant 0 : index
    %c0_218 = arith.constant 0 : index
    %345 = vector.load %arg13[%c0_217, %c0_218] : memref<256x128xbf16, #tpu.memory_space<vmem>>, vector<256x128xbf16>
    %cst_219 = arith.constant dense<0.000000e+00> : vector<1x128xf32>
    %346 = tpu.matmul %344, %345, %cst_219 {dimension_numbers = #tpu.dot_dimension_numbers<[1], [0], [0], [1], [0, 0, 1, 1], [], []>} : vector<1x256xbf16>, vector<256x128xbf16>, vector<1x128xf32> -> vector<1x128xf32>
    %c0_220 = arith.constant 0 : index
    %c0_221 = arith.constant 0 : index
    %347 = vector.load %arg14[%c0_220, %c0_221] : memref<1x128xf32, #tpu.memory_space<vmem>>, vector<1x128xf32>
    %348 = arith.addf %346, %347 : vector<1x128xf32>
    %cst_222 = arith.constant 0.000000e+00 : f32
    %349 = vector.broadcast %cst_222 : f32 to vector<1x128xf32>
    %350 = arith.maximumf %348, %349 : vector<1x128xf32>
    %c0_223 = arith.constant 0 : index
    %c0_224 = arith.constant 0 : index
    %351 = vector.load %arg2[%c0_223, %c0_224] : memref<1x128xf32, #tpu.memory_space<vmem>>, vector<1x128xf32>
    %c0_225 = arith.constant 0 : index
    %c0_226 = arith.constant 0 : index
    %352 = vector.load %arg3[%c0_225, %c0_226] : memref<1x128xf32, #tpu.memory_space<vmem>>, vector<1x128xf32>
    %353 = arith.truncf %350 : vector<1x128xf32> to vector<1x128xbf16>
    %c0_227 = arith.constant 0 : index
    %c0_228 = arith.constant 0 : index
    %354 = vector.load %arg15[%c0_227, %c0_228] : memref<128x512xbf16, #tpu.memory_space<vmem>>, vector<128x512xbf16>
    %cst_229 = arith.constant dense<0.000000e+00> : vector<1x512xf32>
    %355 = tpu.matmul %353, %354, %cst_229 {dimension_numbers = #tpu.dot_dimension_numbers<[1], [0], [0], [1], [0, 0, 1, 1], [], []>} : vector<1x128xbf16>, vector<128x512xbf16>, vector<1x512xf32> -> vector<1x512xf32>
    %356 = arith.truncf %351 : vector<1x128xf32> to vector<1x128xbf16>
    %c0_230 = arith.constant 0 : index
    %c0_231 = arith.constant 0 : index
    %357 = vector.load %arg16[%c0_230, %c0_231] : memref<128x512xbf16, #tpu.memory_space<vmem>>, vector<128x512xbf16>
    %cst_232 = arith.constant dense<0.000000e+00> : vector<1x512xf32>
    %358 = tpu.matmul %356, %357, %cst_232 {dimension_numbers = #tpu.dot_dimension_numbers<[1], [0], [0], [1], [0, 0, 1, 1], [], []>} : vector<1x128xbf16>, vector<128x512xbf16>, vector<1x512xf32> -> vector<1x512xf32>
    %359 = arith.addf %355, %358 : vector<1x512xf32>
    %c0_233 = arith.constant 0 : index
    %c0_234 = arith.constant 0 : index
    %360 = vector.load %arg17[%c0_233, %c0_234] : memref<1x512xf32, #tpu.memory_space<vmem>>, vector<1x512xf32>
    %361 = arith.addf %359, %360 : vector<1x512xf32>
    %362 = vector.extract_strided_slice %361 {offsets = [0, 0], sizes = [1, 128], strides = [1, 1]} : vector<1x512xf32> to vector<1x128xf32>
    %363 = arith.negf %362 : vector<1x128xf32>
    %364 = math.exp %363 : vector<1x128xf32>
    %cst_235 = arith.constant 1.000000e+00 : f32
    %365 = vector.broadcast %cst_235 : f32 to vector<1x128xf32>
    %366 = arith.addf %365, %364 : vector<1x128xf32>
    %367 = arith.divf %365, %366 : vector<1x128xf32>
    %368 = vector.extract_strided_slice %361 {offsets = [0, 128], sizes = [1, 128], strides = [1, 1]} : vector<1x512xf32> to vector<1x128xf32>
    %369 = arith.negf %368 : vector<1x128xf32>
    %370 = math.exp %369 : vector<1x128xf32>
    %cst_236 = arith.constant 1.000000e+00 : f32
    %371 = vector.broadcast %cst_236 : f32 to vector<1x128xf32>
    %372 = arith.addf %371, %370 : vector<1x128xf32>
    %373 = arith.divf %371, %372 : vector<1x128xf32>
    %374 = vector.extract_strided_slice %361 {offsets = [0, 256], sizes = [1, 128], strides = [1, 1]} : vector<1x512xf32> to vector<1x128xf32>
    %375 = math.tanh %374 : vector<1x128xf32>
    %376 = vector.extract_strided_slice %361 {offsets = [0, 384], sizes = [1, 128], strides = [1, 1]} : vector<1x512xf32> to vector<1x128xf32>
    %377 = arith.negf %376 : vector<1x128xf32>
    %378 = math.exp %377 : vector<1x128xf32>
    %cst_237 = arith.constant 1.000000e+00 : f32
    %379 = vector.broadcast %cst_237 : f32 to vector<1x128xf32>
    %380 = arith.addf %379, %378 : vector<1x128xf32>
    %381 = arith.divf %379, %380 : vector<1x128xf32>
    %382 = arith.mulf %373, %352 : vector<1x128xf32>
    %383 = arith.mulf %367, %375 : vector<1x128xf32>
    %384 = arith.addf %382, %383 : vector<1x128xf32>
    %385 = math.tanh %384 : vector<1x128xf32>
    %386 = arith.mulf %381, %385 : vector<1x128xf32>
    %c0_238 = arith.constant 0 : index
    %c0_239 = arith.constant 0 : index
    %387 = vector.load %arg18[%c0_238, %c0_239] : memref<128x2xf32, #tpu.memory_space<vmem>>, vector<128x2xf32>
    %cst_240 = arith.constant dense<0.000000e+00> : vector<1x2xf32>
    %388 = tpu.matmul %386, %387, %cst_240 {dimension_numbers = #tpu.dot_dimension_numbers<[1], [0], [0], [1], [0, 0, 1, 1], [], []>} : vector<1x128xf32>, vector<128x2xf32>, vector<1x2xf32> -> vector<1x2xf32>
    %c0_241 = arith.constant 0 : index
    %c0_242 = arith.constant 0 : index
    %389 = vector.load %arg19[%c0_241, %c0_242] : memref<1x2xf32, #tpu.memory_space<vmem>>, vector<1x2xf32>
    %390 = arith.addf %388, %389 : vector<1x2xf32>
    %391 = vector.extract_strided_slice %390 {offsets = [0, 0], sizes = [1, 1], strides = [1, 1]} : vector<1x2xf32> to vector<1x1xf32>
    %392 = arith.negf %391 : vector<1x1xf32>
    %393 = math.exp %392 : vector<1x1xf32>
    %cst_243 = arith.constant 1.000000e+00 : f32
    %394 = vector.broadcast %cst_243 : f32 to vector<1x1xf32>
    %395 = arith.addf %394, %393 : vector<1x1xf32>
    %396 = arith.divf %394, %395 : vector<1x1xf32>
    %397 = vector.extract_strided_slice %390 {offsets = [0, 1], sizes = [1, 1], strides = [1, 1]} : vector<1x2xf32> to vector<1x1xf32>
    %398 = math.tanh %397 : vector<1x1xf32>
    %399 = tpu.concatenate %396, %398 in 1 : vector<1x1xf32>, vector<1x1xf32> -> vector<1x2xf32>
    %c0_244 = arith.constant 0 : index
    %c0_245 = arith.constant 0 : index
    %400 = vector.load %arg20[%c0_244, %c0_245] : memref<1x2xf32, #tpu.memory_space<vmem>>, vector<1x2xf32>
    tpu.vector_store %arg20[%c0_244, %c0_245], %399 {strides = array<i32>} : memref<1x2xf32, #tpu.memory_space<vmem>>, vector<1x2xf32>,
    %c0_246 = arith.constant 0 : index
    %c0_247 = arith.constant 0 : index
    %401 = vector.load %arg21[%c0_246, %c0_247] : memref<1x128xf32, #tpu.memory_space<vmem>>, vector<1x128xf32>
    tpu.vector_store %arg21[%c0_246, %c0_247], %386 {strides = array<i32>} : memref<1x128xf32, #tpu.memory_space<vmem>>, vector<1x128xf32>,
    %c0_248 = arith.constant 0 : index
    %c0_249 = arith.constant 0 : index
    %402 = vector.load %arg22[%c0_248, %c0_249] : memref<1x128xf32, #tpu.memory_space<vmem>>, vector<1x128xf32>
    tpu.vector_store %arg22[%c0_248, %c0_249], %384 {strides = array<i32>} : memref<1x128xf32, #tpu.memory_space<vmem>>, vector<1x128xf32>,
    return
  }
}

</mosaic_0001>

<llo_original>
// kernel: actor_radar_forward.1
$region0: #{actor_radar_forward.1}
  #allocation0 [shape = 'u32[]', space=smem, size = 0x4, offset = 0x4, fixed_abs, tag = 'smem constant byte address 0x4 - core index']
  #allocation1 [shape = 'u32[144,128]{1,0:T(1,128)}', space=vmem, size = 0x12000, scoped, tag = 'internal scratch']
  #allocation2 [shape = 'bf16[3776,512]{1,0:T(16,128)(2,1)}', space=vmem, size = 0x3b0000, scoped, tag = 'scratch operand']
  #allocation3 [shape = 'f32[59,64]{1,0:T(8,128)}', space=vmem, size = 0x8000, scoped, tag = 'scratch operand']
  #allocation4 [shape = 's32[1]{0}', space=sflag, size = 0x4, scoped, tag = 'scratch operand']
  #allocation35 [shape = 's32[]', space=sflag, size = 0x4, offset = 0, fixed_abs, tag = 'sflag constant byte address 0x0 - dummy sync flag']
  %s0 = inlined_call_operand.vmem [shape: f32[59,7], index: 0, kind: input, shape index: {}]
  %s1 = inlined_call_operand.hbm [shape: f32[1,2], index: 1, kind: input, shape index: {}]
  %s2 = inlined_call_operand.hbm [shape: f32[1,128], index: 2, kind: input, shape index: {}]
  %s3 = inlined_call_operand.hbm [shape: f32[1,128], index: 3, kind: input, shape index: {}]
  %s4 = inlined_call_operand.hbm [shape: f32[3,64], index: 4, kind: input, shape index: {}]
  %s5 = inlined_call_operand.hbm [shape: f32[1,64], index: 5, kind: input, shape index: {}]
  %s6 = inlined_call_operand.vmem [shape: f32[192,64], index: 6, kind: input, shape index: {}]
  %s7 = inlined_call_operand.hbm [shape: f32[1,64], index: 7, kind: input, shape index: {}]
  %s8 = inlined_call_operand.hbm [shape: bf16[3776,512], index: 8, kind: input, shape index: {}]
  %s9 = inlined_call_operand.hbm [shape: f32[1,512], index: 9, kind: input, shape index: {}]
  %s10 = inlined_call_operand.hbm [shape: bf16[512,256], index: 10, kind: input, shape index: {}]
  %s11 = inlined_call_operand.hbm [shape: f32[2,256], index: 11, kind: input, shape index: {}]
  %s12 = inlined_call_operand.hbm [shape: f32[1,256], index: 12, kind: input, shape index: {}]
  %s13 = inlined_call_operand.hbm [shape: bf16[256,128], index: 13, kind: input, shape index: {}]
  %s14 = inlined_call_operand.hbm [shape: f32[1,128], index: 14, kind: input, shape index: {}]
  %s15 = inlined_call_operand.hbm [shape: bf16[128,512], index: 15, kind: input, shape index: {}]
  %s16 = inlined_call_operand.hbm [shape: bf16[128,512], index: 16, kind: input, shape index: {}]
  %s17 = inlined_call_operand.hbm [shape: f32[1,512], index: 17, kind: input, shape index: {}]
  %s18 = inlined_call_operand.vmem [shape: f32[128,2], index: 18, kind: input, shape index: {}]
  %s19 = inlined_call_operand.hbm [shape: f32[1,2], index: 19, kind: input, shape index: {}]
  %s20 = inlined_call_operand.hbm [shape: f32[1,2], index: 20, kind: output, shape index: {0}]
  %s21 = inlined_call_operand.hbm [shape: f32[1,128], index: 21, kind: output, shape index: {1}]
  %s22 = inlined_call_operand.hbm [shape: f32[1,128], index: 22, kind: output, shape index: {2}]
  %23 = xla_tuple %s20, %s21, %s22
  %s24 = sld [smem:[#allocation0]]
  $region166: #{actor_radar_forward.1} parent=0
    _
  %s26 = ssub.s32 1, %s24
  %s27 = scalar_select 0, %s26, %s24
  $region1: #{actor_radar_forward.1} parent=0
    #allocation5 [shape = 'u8[512]{0}', space=vmem, size = 0x400, scoped, tag = 'input window, operand 1, single buffered']
    #allocation6 [shape = 's32[1]{0}', space=sflag, size = 0x4, scoped, tag = 'scoped memory for actor_radar_forward.1']
    #allocation7 [shape = 's32[1]{0}', space=sflag, size = 0x4, scoped, tag = 'scoped memory for actor_radar_forward.1']
    #allocation8 [shape = 'u8[512]{0}', space=vmem, size = 0x400, scoped, tag = 'input window, operand 2, single buffered']
    #allocation9 [shape = 's32[1]{0}', space=sflag, size = 0x4, scoped, tag = 'scoped memory for actor_radar_forward.1']
    #allocation10 [shape = 'u8[512]{0}', space=vmem, size = 0x400, scoped, tag = 'input window, operand 3, single buffered']
    #allocation11 [shape = 'u8[2048]{0}', space=vmem, size = 0x800, scoped, tag = 'input window, operand 4, single buffered']
    #allocation12 [shape = 's32[1]{0}', space=sflag, size = 0x4, scoped, tag = 'scoped memory for actor_radar_forward.1']
    #allocation13 [shape = 'u8[512]{0}', space=vmem, size = 0x400, scoped, tag = 'input window, operand 5, single buffered']
    #allocation14 [shape = 'u8[512]{0}', space=vmem, size = 0x400, scoped, tag = 'input window, operand 7, single buffered']
    #allocation15 [shape = 's32[1]{0}', space=sflag, size = 0x4, scoped, tag = 'scoped memory for actor_radar_forward.1']
    #allocation16 [shape = 'u8[2048]{0}', space=vmem, size = 0x800, scoped, tag = 'input window, operand 9, single buffered']
    #allocation17 [shape = 'u8[262144]{0}', space=vmem, size = 0x40000, scoped, tag = 'input window, operand 10, single buffered']
    #allocation18 [shape = 's32[1]{0}', space=sflag, size = 0x4, scoped, tag = 'scoped memory for actor_radar_forward.1']
    #allocation19 [shape = 'u8[2048]{0}', space=vmem, size = 0x800, scoped, tag = 'input window, operand 11, single buffered']
    #allocation20 [shape = 'u8[1024]{0}', space=vmem, size = 0x400, scoped, tag = 'input window, operand 12, single buffered']
    #allocation21 [shape = 's32[1]{0}', space=sflag, size = 0x4, scoped, tag = 'scoped memory for actor_radar_forward.1']
    #allocation22 [shape = 'u8[65536]{0}', space=vmem, size = 0x10000, scoped, tag = 'input window, operand 13, single buffered']
    #allocation23 [shape = 'u8[512]{0}', space=vmem, size = 0x400, scoped, tag = 'input window, operand 14, single buffered']
    #allocation24 [shape = 's32[1]{0}', space=sflag, size = 0x4, scoped, tag = 'scoped memory for actor_radar_forward.1']
    #allocation25 [shape = 'u8[131072]{0}', space=vmem, size = 0x20000, scoped, tag = 'input window, operand 15, single buffered']
    #allocation26 [shape = 'u8[131072]{0}', space=vmem, size = 0x20000, scoped, tag = 'input window, operand 16, single buffered']
    #allocation27 [shape = 's32[1]{0}', space=sflag, size = 0x4, scoped, tag = 'scoped memory for actor_radar_forward.1']
    #allocation28 [shape = 'u8[2048]{0}', space=vmem, size = 0x800, scoped, tag = 'input window, operand 17, single buffered']
    #allocation29 [shape = 'u8[512]{0}', space=vmem, size = 0x400, scoped, tag = 'input window, operand 19, single buffered']
    #allocation30 [shape = 's32[1]{0}', space=sflag, size = 0x4, scoped, tag = 'scoped memory for actor_radar_forward.1']
    #allocation31 [shape = 'u8[512]{0}', space=vmem, size = 0x400, scoped, tag = 'output window, operand 0, single buffered']
    #allocation32 [shape = 'u8[512]{0}', space=vmem, size = 0x400, scoped, tag = 'output window, operand 1, single buffered']
    #allocation33 [shape = 's32[1]{0}', space=sflag, size = 0x4, scoped, tag = 'scoped memory for actor_radar_forward.1']
    #allocation34 [shape = 'u8[512]{0}', space=vmem, size = 0x400, scoped, tag = 'output window, operand 2, single buffered']
    #allocation36 [shape = 'u32[9]{0}', space=smem, size = 0x24, scoped, tag = 'DMA stride descriptor']
    %28 = vsyncpa [#allocation6], 0
    %29 = vsyncpa [#allocation9], 0
    %30 = vsyncpa [#allocation12], 0
    %31 = vsyncpa [#allocation15], 0
    %32 = vsyncpa [#allocation18], 0
    %33 = vsyncpa [#allocation21], 0
    %34 = vsyncpa [#allocation24], 0
    %35 = vsyncpa [#allocation27], 0
    %36 = vsyncpa [#allocation30], 0
    %37 = vsyncpa [#allocation7], 0
    %38 = vsyncpa [#allocation33], 0
    // Predicated region
    $region2: #{actor_radar_forward.1} parent=1 // pred_check
      _
    $region3: #{actor_radar_forward.1} parent=1 // pred_check_branch
      %40 = sbr.rel (0) target = $region5
    $region4: #{actor_radar_forward.1} parent=1 // pred_region
      _
    $region5: #{actor_radar_forward.1} parent=1 // pred_fallthru
      _
    // Predicated region
    $region6: #{actor_radar_forward.1} parent=1 // pred_check
      _
    $region7: #{actor_radar_forward.1} parent=1 // pred_check_branch
      %42 = sbr.rel (0) target = $region9
    $region8: #{actor_radar_forward.1} parent=1 // pred_region
      %s44 = ssub.s32 16, 16
      %45 = vsyncadd [#allocation6], %s44
      %s47 = sshll.u32 [#allocation5], 4
      %s48 = int_to_ptr.vmem [resolvable:$true] %s47
      %50 = dma.hbm_to_vmem [thread:$0]  %s1, 16, %s48, [#allocation6]
    $region9: #{actor_radar_forward.1} parent=1 // pred_fallthru
      _
    // Predicated region
    $region10: #{actor_radar_forward.1} parent=1 // pred_check
      _
    $region11: #{actor_radar_forward.1} parent=1 // pred_check_branch
      %52 = sbr.rel (0) target = $region13
    $region12: #{actor_radar_forward.1} parent=1 // pred_region
      %s54 = ssub.s32 16, 16
      %55 = vsyncadd [#allocation9], %s54
      %s57 = sshll.u32 [#allocation8], 4
      %s58 = int_to_ptr.vmem [resolvable:$true] %s57
      %60 = dma.hbm_to_vmem [thread:$0]  %s2, 16, %s58, [#allocation9]
    $region13: #{actor_radar_forward.1} parent=1 // pred_fallthru
      _
    // Predicated region
    $region14: #{actor_radar_forward.1} parent=1 // pred_check
      _
    $region15: #{actor_radar_forward.1} parent=1 // pred_check_branch
      %62 = sbr.rel (0) target = $region17
    $region16: #{actor_radar_forward.1} parent=1 // pred_region
      %s64 = ssub.s32 16, 16
      %65 = vsyncadd [#allocation9], %s64
      %s67 = sshll.u32 [#allocation10], 4
      %s68 = int_to_ptr.vmem [resolvable:$true] %s67
      %70 = dma.hbm_to_vmem [thread:$0]  %s3, 16, %s68, [#allocation9]
    $region17: #{actor_radar_forward.1} parent=1 // pred_fallthru
      _
    // Predicated region
    $region18: #{actor_radar_forward.1} parent=1 // pred_check
      _
    $region19: #{actor_radar_forward.1} parent=1 // pred_check_branch
      %72 = sbr.rel (0) target = $region21
    $region20: #{actor_radar_forward.1} parent=1 // pred_region
      %s74 = ssub.s32 64, 64
      %75 = vsyncadd [#allocation12], %s74
      %s77 = sshll.u32 [#allocation11], 4
      %s78 = int_to_ptr.vmem [resolvable:$true] %s77
      %80 = dma.hbm_to_vmem [thread:$0]  %s4, 64, %s78, [#allocation12]
    $region21: #{actor_radar_forward.1} parent=1 // pred_fallthru
      _
    // Predicated region
    $region22: #{actor_radar_forward.1} parent=1 // pred_check
      _
    $region23: #{actor_radar_forward.1} parent=1 // pred_check_branch
      %82 = sbr.rel (0) target = $region25
    $region24: #{actor_radar_forward.1} parent=1 // pred_region
      %s84 = ssub.s32 16, 16
      %85 = vsyncadd [#allocation12], %s84
      %s87 = sshll.u32 [#allocation13], 4
      %s88 = int_to_ptr.vmem [resolvable:$true] %s87
      %90 = dma.hbm_to_vmem [thread:$0]  %s5, 16, %s88, [#allocation12]
    $region25: #{actor_radar_forward.1} parent=1 // pred_fallthru
      _
    // Predicated region
    $region26: #{actor_radar_forward.1} parent=1 // pred_check
      _
    $region27: #{actor_radar_forward.1} parent=1 // pred_check_branch
      %92 = sbr.rel (0) target = $region29
    $region28: #{actor_radar_forward.1} parent=1 // pred_region
      _
    $region29: #{actor_radar_forward.1} parent=1 // pred_fallthru
      _
    // Predicated region
    $region30: #{actor_radar_forward.1} parent=1 // pred_check
      _
    $region31: #{actor_radar_forward.1} parent=1 // pred_check_branch
      %94 = sbr.rel (0) target = $region33
    $region32: #{actor_radar_forward.1} parent=1 // pred_region
      %s96 = ssub.s32 16, 16
      %97 = vsyncadd [#allocation15], %s96
      %s99 = sshll.u32 [#allocation14], 4
      %s100 = int_to_ptr.vmem [resolvable:$true] %s99
      %102 = dma.hbm_to_vmem [thread:$0]  %s7, 16, %s100, [#allocation15]
    $region33: #{actor_radar_forward.1} parent=1 // pred_fallthru
      _
    // Predicated region
    $region34: #{actor_radar_forward.1} parent=1 // pred_check
      _
    $region35: #{actor_radar_forward.1} parent=1 // pred_check_branch
      %104 = sbr.rel (0) target = $region37
    $region36: #{actor_radar_forward.1} parent=1 // pred_region
      %s106 = ssub.s32 64, 64
      %107 = vsyncadd [#allocation15], %s106
      %s109 = sshll.u32 [#allocation16], 4
      %s110 = int_to_ptr.vmem [resolvable:$true] %s109
      %112 = dma.hbm_to_vmem [thread:$0]  %s9, 64, %s110, [#allocation15]
    $region37: #{actor_radar_forward.1} parent=1 // pred_fallthru
      _
    // Predicated region
    $region38: #{actor_radar_forward.1} parent=1 // pred_check
      _
    $region39: #{actor_radar_forward.1} parent=1 // pred_check_branch
      %114 = sbr.rel (0) target = $region41
    $region40: #{actor_radar_forward.1} parent=1 // pred_region
      %s116 = ssub.s32 8192, 8192
      %117 = vsyncadd [#allocation18], %s116
      %s118 = sshll.u32 [#allocation17], 4
      %s119 = int_to_ptr.vmem [resolvable:$true] %s118
      %124 = dma.hbm_to_vmem [thread:$0]  %s10, 8192, %s119, [#allocation18], 128, 128, 8
    $region41: #{actor_radar_forward.1} parent=1 // pred_fallthru
      _
    // Predicated region
    $region42: #{actor_radar_forward.1} parent=1 // pred_check
      _
    $region43: #{actor_radar_forward.1} parent=1 // pred_check_branch
      %126 = sbr.rel (0) target = $region45
    $region44: #{actor_radar_forward.1} parent=1 // pred_region
      %s128 = ssub.s32 64, 64
      %129 = vsyncadd [#allocation18], %s128
      %s131 = sshll.u32 [#allocation19], 4
      %s132 = int_to_ptr.vmem [resolvable:$true] %s131
      %134 = dma.hbm_to_vmem [thread:$0]  %s11, 64, %s132, [#allocation18]
    $region45: #{actor_radar_forward.1} parent=1 // pred_fallthru
      _
    // Predicated region
    $region46: #{actor_radar_forward.1} parent=1 // pred_check
      _
    $region47: #{actor_radar_forward.1} parent=1 // pred_check_branch
      %136 = sbr.rel (0) target = $region49
    $region48: #{actor_radar_forward.1} parent=1 // pred_region
      %s138 = ssub.s32 32, 32
      %139 = vsyncadd [#allocation21], %s138
      %s141 = sshll.u32 [#allocation20], 4
      %s142 = int_to_ptr.vmem [resolvable:$true] %s141
      %144 = dma.hbm_to_vmem [thread:$0]  %s12, 32, %s142, [#allocation21]
    $region49: #{actor_radar_forward.1} parent=1 // pred_fallthru
      _
    // Predicated region
    $region50: #{actor_radar_forward.1} parent=1 // pred_check
      _
    $region51: #{actor_radar_forward.1} parent=1 // pred_check_branch
      %146 = sbr.rel (0) target = $region53
    $region52: #{actor_radar_forward.1} parent=1 // pred_region
      %s148 = ssub.s32 2048, 2048
      %149 = vsyncadd [#allocation21], %s148
      %s150 = sshll.u32 [#allocation22], 4
      %s151 = int_to_ptr.vmem [resolvable:$true] %s150
      %156 = dma.hbm_to_vmem [thread:$0]  %s13, 2048, %s151, [#allocation21], 64, 64, 4
    $region53: #{actor_radar_forward.1} parent=1 // pred_fallthru
      _
    // Predicated region
    $region54: #{actor_radar_forward.1} parent=1 // pred_check
      _
    $region55: #{actor_radar_forward.1} parent=1 // pred_check_branch
      %158 = sbr.rel (0) target = $region57
    $region56: #{actor_radar_forward.1} parent=1 // pred_region
      %s160 = ssub.s32 16, 16
      %161 = vsyncadd [#allocation24], %s160
      %s163 = sshll.u32 [#allocation23], 4
      %s164 = int_to_ptr.vmem [resolvable:$true] %s163
      %166 = dma.hbm_to_vmem [thread:$0]  %s14, 16, %s164, [#allocation24]
    $region57: #{actor_radar_forward.1} parent=1 // pred_fallthru
      _
    // Predicated region
    $region58: #{actor_radar_forward.1} parent=1 // pred_check
      _
    $region59: #{actor_radar_forward.1} parent=1 // pred_check_branch
      %168 = sbr.rel (0) target = $region61
    $region60: #{actor_radar_forward.1} parent=1 // pred_region
      %s170 = ssub.s32 4096, 4096
      %171 = vsyncadd [#allocation24], %s170
      %s172 = sshll.u32 [#allocation25], 4
      %s173 = int_to_ptr.vmem [resolvable:$true] %s172
      %178 = dma.hbm_to_vmem [thread:$0]  %s15, 4096, %s173, [#allocation24], 256, 256, 16
    $region61: #{actor_radar_forward.1} parent=1 // pred_fallthru
      _
    // Predicated region
    $region62: #{actor_radar_forward.1} parent=1 // pred_check
      _
    $region63: #{actor_radar_forward.1} parent=1 // pred_check_branch
      %180 = sbr.rel (0) target = $region65
    $region64: #{actor_radar_forward.1} parent=1 // pred_region
      %s182 = ssub.s32 4096, 4096
      %183 = vsyncadd [#allocation27], %s182
      %s184 = sshll.u32 [#allocation26], 4
      %s185 = int_to_ptr.vmem [resolvable:$true] %s184
      %190 = dma.hbm_to_vmem [thread:$0]  %s16, 4096, %s185, [#allocation27], 256, 256, 16
    $region65: #{actor_radar_forward.1} parent=1 // pred_fallthru
      _
    // Predicated region
    $region66: #{actor_radar_forward.1} parent=1 // pred_check
      _
    $region67: #{actor_radar_forward.1} parent=1 // pred_check_branch
      %192 = sbr.rel (0) target = $region69
    $region68: #{actor_radar_forward.1} parent=1 // pred_region
      %s194 = ssub.s32 64, 64
      %195 = vsyncadd [#allocation27], %s194
      %s197 = sshll.u32 [#allocation28], 4
      %s198 = int_to_ptr.vmem [resolvable:$true] %s197
      %200 = dma.hbm_to_vmem [thread:$0]  %s17, 64, %s198, [#allocation27]
    $region69: #{actor_radar_forward.1} parent=1 // pred_fallthru
      _
    // Predicated region
    $region70: #{actor_radar_forward.1} parent=1 // pred_check
      _
    $region71: #{actor_radar_forward.1} parent=1 // pred_check_branch
      %202 = sbr.rel (0) target = $region73
    $region72: #{actor_radar_forward.1} parent=1 // pred_region
      _
    $region73: #{actor_radar_forward.1} parent=1 // pred_fallthru
      _
    // Predicated region
    $region74: #{actor_radar_forward.1} parent=1 // pred_check
      _
    $region75: #{actor_radar_forward.1} parent=1 // pred_check_branch
      %204 = sbr.rel (0) target = $region77
    $region76: #{actor_radar_forward.1} parent=1 // pred_region
      %s206 = ssub.s32 16, 16
      %207 = vsyncadd [#allocation30], %s206
      %s209 = sshll.u32 [#allocation29], 4
      %s210 = int_to_ptr.vmem [resolvable:$true] %s209
      %212 = dma.hbm_to_vmem [thread:$0]  %s19, 16, %s210, [#allocation30]
    $region77: #{actor_radar_forward.1} parent=1 // pred_fallthru
      _
    // Predicated region
    $region78: #{actor_radar_forward.1} parent=1 // pred_check
      _
    $region79: #{actor_radar_forward.1} parent=1 // pred_check_branch
      %214 = sbr.rel (0) target = $region81
    $region80: #{actor_radar_forward.1} parent=1 // pred_region
      %215 = dma.done [#allocation6], 16
    $region81: #{actor_radar_forward.1} parent=1 // pred_fallthru
      _
    // Predicated region
    $region82: #{actor_radar_forward.1} parent=1 // pred_check
      _
    $region83: #{actor_radar_forward.1} parent=1 // pred_check_branch
      %217 = sbr.rel (0) target = $region85
    $region84: #{actor_radar_forward.1} parent=1 // pred_region
      %218 = dma.done [#allocation9], 16
    $region85: #{actor_radar_forward.1} parent=1 // pred_fallthru
      _
    // Predicated region
    $region86: #{actor_radar_forward.1} parent=1 // pred_check
      _
    $region87: #{actor_radar_forward.1} parent=1 // pred_check_branch
      %220 = sbr.rel (0) target = $region89
    $region88: #{actor_radar_forward.1} parent=1 // pred_region
      %221 = dma.done [#allocation9], 16
    $region89: #{actor_radar_forward.1} parent=1 // pred_fallthru
      _
    // Predicated region
    $region90: #{actor_radar_forward.1} parent=1 // pred_check
      _
    $region91: #{actor_radar_forward.1} parent=1 // pred_check_branch
      %223 = sbr.rel (0) target = $region93
    $region92: #{actor_radar_forward.1} parent=1 // pred_region
      %224 = dma.done [#allocation12], 64
    $region93: #{actor_radar_forward.1} parent=1 // pred_fallthru
      _
    // Predicated region
    $region94: #{actor_radar_forward.1} parent=1 // pred_check
      _
    $region95: #{actor_radar_forward.1} parent=1 // pred_check_branch
      %226 = sbr.rel (0) target = $region97
    $region96: #{actor_radar_forward.1} parent=1 // pred_region
      %227 = dma.done [#allocation12], 16
    $region97: #{actor_radar_forward.1} parent=1 // pred_fallthru
      _
    // Predicated region
    $region98: #{actor_radar_forward.1} parent=1 // pred_check
      _
    $region99: #{actor_radar_forward.1} parent=1 // pred_check_branch
      %229 = sbr.rel (0) target = $region101
    $region100: #{actor_radar_forward.1} parent=1 // pred_region
      %230 = dma.done [#allocation15], 16
    $region101: #{actor_radar_forward.1} parent=1 // pred_fallthru
      _
    // Predicated region
    $region102: #{actor_radar_forward.1} parent=1 // pred_check
      _
    $region103: #{actor_radar_forward.1} parent=1 // pred_check_branch
      %232 = sbr.rel (0) target = $region105
    $region104: #{actor_radar_forward.1} parent=1 // pred_region
      %233 = dma.done [#allocation15], 64
    $region105: #{actor_radar_forward.1} parent=1 // pred_fallthru
      _
    // Predicated region
    $region106: #{actor_radar_forward.1} parent=1 // pred_check
      _
    $region107: #{actor_radar_forward.1} parent=1 // pred_check_branch
      %235 = sbr.rel (0) target = $region109
    $region108: #{actor_radar_forward.1} parent=1 // pred_region
      %236 = dma.done [#allocation18], 8192
    $region109: #{actor_radar_forward.1} parent=1 // pred_fallthru
      _
    // Predicated region
    $region110: #{actor_radar_forward.1} parent=1 // pred_check
      _
    $region111: #{actor_radar_forward.1} parent=1 // pred_check_branch
      %238 = sbr.rel (0) target = $region113
    $region112: #{actor_radar_forward.1} parent=1 // pred_region
      %239 = dma.done [#allocation18], 64
    $region113: #{actor_radar_forward.1} parent=1 // pred_fallthru
      _
    // Predicated region
    $region114: #{actor_radar_forward.1} parent=1 // pred_check
      _
    $region115: #{actor_radar_forward.1} parent=1 // pred_check_branch
      %241 = sbr.rel (0) target = $region117
    $region116: #{actor_radar_forward.1} parent=1 // pred_region
      %242 = dma.done [#allocation21], 32
    $region117: #{actor_radar_forward.1} parent=1 // pred_fallthru
      _
    // Predicated region
    $region118: #{actor_radar_forward.1} parent=1 // pred_check
      _
    $region119: #{actor_radar_forward.1} parent=1 // pred_check_branch
      %244 = sbr.rel (0) target = $region121
    $region120: #{actor_radar_forward.1} parent=1 // pred_region
      %245 = dma.done [#allocation21], 2048
    $region121: #{actor_radar_forward.1} parent=1 // pred_fallthru
      _
    // Predicated region
    $region122: #{actor_radar_forward.1} parent=1 // pred_check
      _
    $region123: #{actor_radar_forward.1} parent=1 // pred_check_branch
      %247 = sbr.rel (0) target = $region125
    $region124: #{actor_radar_forward.1} parent=1 // pred_region
      %248 = dma.done [#allocation24], 16
    $region125: #{actor_radar_forward.1} parent=1 // pred_fallthru
      _
    // Predicated region
    $region126: #{actor_radar_forward.1} parent=1 // pred_check
      _
    $region127: #{actor_radar_forward.1} parent=1 // pred_check_branch
      %250 = sbr.rel (0) target = $region129
    $region128: #{actor_radar_forward.1} parent=1 // pred_region
      %251 = dma.done [#allocation24], 4096
    $region129: #{actor_radar_forward.1} parent=1 // pred_fallthru
      _
    // Predicated region
    $region130: #{actor_radar_forward.1} parent=1 // pred_check
      _
    $region131: #{actor_radar_forward.1} parent=1 // pred_check_branch
      %253 = sbr.rel (0) target = $region133
    $region132: #{actor_radar_forward.1} parent=1 // pred_region
      %254 = dma.done [#allocation27], 4096
    $region133: #{actor_radar_forward.1} parent=1 // pred_fallthru
      _
    // Predicated region
    $region134: #{actor_radar_forward.1} parent=1 // pred_check
      _
    $region135: #{actor_radar_forward.1} parent=1 // pred_check_branch
      %256 = sbr.rel (0) target = $region137
    $region136: #{actor_radar_forward.1} parent=1 // pred_region
      %257 = dma.done [#allocation27], 64
    $region137: #{actor_radar_forward.1} parent=1 // pred_fallthru
      _
    // Predicated region
    $region138: #{actor_radar_forward.1} parent=1 // pred_check
      _
    $region139: #{actor_radar_forward.1} parent=1 // pred_check_branch
      %259 = sbr.rel (0) target = $region141
    $region140: #{actor_radar_forward.1} parent=1 // pred_region
      %260 = dma.done [#allocation30], 16
    $region141: #{actor_radar_forward.1} parent=1 // pred_fallthru
      _
    %s263 = sshll.u32 1, 14
    %s264 = sxor.u32 4294967295, %s263
    %s266 = sld [smem:[#allocation0]]
    %s267 = sadd.s32 2, %s266
    %s269 = sshll.u32 7, 26
    %s270 = sxor.u32 4294967295, %s269
    %s271 = sand.u32 0, %s270
    %s272 = sshll.u32 %s267, 26
    %s273 = sor.u32 %s271, %s272
    %s274 = sshll.u32 [#allocation2], 4
    %s275 = int_to_ptr.vmem [resolvable:$true] %s274
    %278 = sst [smem:[#allocation36]] 512
    %s279 = scalar_lea.smem [#allocation36], 1
    %280 = sst [smem:[%s279]] 512
    %s281 = scalar_lea.smem [#allocation36], 2
    %282 = sst [smem:[%s281]] 4
    %s283 = scalar_lea.smem [#allocation36], 3
    %284 = sst [smem:[%s283]] 64
    %s285 = scalar_lea.smem [#allocation36], 4
    %286 = sst [smem:[%s285]] 128
    %s287 = scalar_lea.smem [#allocation36], 5
    %288 = sst [smem:[%s287]] 2
    %s289 = scalar_lea.smem [#allocation36], 6
    %290 = sst [smem:[%s289]] 256
    %s291 = scalar_lea.smem [#allocation36], 7
    %292 = sst [smem:[%s291]] 64
    %s293 = scalar_lea.smem [#allocation36], 8
    %294 = sst [smem:[%s293]] 4
    %296 = dma.general %s8, 120832, %s275, [#allocation4], [#allocation35], [#allocation36], %s273, 0
    %v297 = vld [vmem:[%s0] sm:$0xff]
    %v298 = vld [vmem:[%s0 + $0x8] sm:$0xff]
    %v299 = vld [vmem:[%s0 + $0x10] sm:$0xff]
    %v300 = vld [vmem:[%s0 + $0x18] sm:$0xff]
    %v301 = vld [vmem:[%s0 + $0x20] sm:$0xff]
    %v302 = vld [vmem:[%s0 + $0x28] sm:$0xff]
    %v303 = vld [vmem:[%s0 + $0x30] sm:$0xff]
    %v304 = vld [vmem:[%s0 + $0x38] sm:$0x7]
    %v305 = vld [vmem:[#allocation11] sm:$0x7]
    %v306 = vld [vmem:[#allocation13] sm:$0x1]
    %v308 = vlaneseq
    %v309 = vshrl.u32 %v308, 7
    %v310 = vsub.s32 0, %v309
    %v311 = vrot.slane %v306, %v310
    %vm313 = vcmask 23552
    %v315 = vsel %vm313, %v297, 0
    %v318 = vsel %vm313, %v298, 0
    %v321 = vsel %vm313, %v299, 0
    %v324 = vsel %vm313, %v300, 0
    %v327 = vsel %vm313, %v301, 0
    %v330 = vsel %vm313, %v302, 0
    %v333 = vsel %vm313, %v303, 0
    %v336 = vsel %vm313, %v304, 0
    %vm338 = vcmask 1042432
    %v340 = vsel %vm338, %v305, 0
    %342 = vmatprep.subr.mxu0 0.0
    %343 = vmatpush1.msra.mxu0 %v340
    %344 = vmatprep.subr.mxu0 0.0
    %345 = vmatpush1.msra.mxu0 0.0
    %346 = vmatprep.subr.mxu0 0.0
    %347 = vmatpush1.msra.mxu0 0.0
    %348 = vmatprep.subr.mxu0 0.0
    %349 = vmatpush1.msra.mxu0 0.0
    %350 = vmatprep.subr.mxu0 0.0
    %351 = vmatpush1.msra.mxu0 0.0
    %352 = vmatprep.subr.mxu0 0.0
    %353 = vmatpush1.msra.mxu0 0.0
    %354 = vmatprep.subr.mxu0 0.0
    %355 = vmatpush1.msra.mxu0 0.0
    %356 = vmatprep.subr.mxu0 0.0
    %357 = vmatpush1.msra.mxu0 0.0
    %358 = vmatprep.subr.mxu0 0.0
    %359 = vmatpush1.msra.mxu0 0.0
    %360 = vmatprep.subr.mxu0 0.0
    %361 = vmatpush1.msra.mxu0 0.0
    %362 = vmatprep.subr.mxu0 0.0
    %363 = vmatpush1.msra.mxu0 0.0
    %364 = vmatprep.subr.mxu0 0.0
    %365 = vmatpush1.msra.mxu0 0.0
    %366 = vmatprep.subr.mxu0 0.0
    %367 = vmatpush1.msra.mxu0 0.0
    %368 = vmatprep.subr.mxu0 0.0
    %369 = vmatpush1.msra.mxu0 0.0
    %370 = vmatprep.subr.mxu0 0.0
    %371 = vmatpush1.msra.mxu0 0.0
    %372 = vmatprep.subr.mxu0 0.0
    %373 = vmatpush1.msra.mxu0 0.0
    %374 = vmatprep.subr.mxu0 0.0
    %375 = vmatpush1.msra.mxu0 0.0
    %376 = vmatprep.subr.mxu0 0.0
    %377 = vmatpush1.msra.mxu0 0.0
    %378 = vmatprep.subr.mxu0 0.0
    %379 = vmatpush1.msra.mxu0 0.0
    %380 = vmatprep.subr.mxu0 0.0
    %381 = vmatpush1.msra.mxu0 0.0
    %382 = vmatprep.subr.mxu0 0.0
    %383 = vmatpush1.msra.mxu0 0.0
    %384 = vmatprep.subr.mxu0 0.0
    %385 = vmatpush1.msra.mxu0 0.0
    %386 = vmatprep.subr.mxu0 0.0
    %387 = vmatpush1.msra.mxu0 0.0
    %388 = vmatprep.subr.mxu0 0.0
    %389 = vmatpush1.msra.mxu0 0.0
    %390 = vmatprep.subr.mxu0 0.0
    %391 = vmatpush1.msra.mxu0 0.0
    %392 = vmatprep.subr.mxu0 0.0
    %393 = vmatpush1.msra.mxu0 0.0
    %394 = vmatprep.subr.mxu0 0.0
    %395 = vmatpush1.msra.mxu0 0.0
    %396 = vmatprep.subr.mxu0 0.0
    %397 = vmatpush1.msra.mxu0 0.0
    %398 = vmatprep.subr.mxu0 0.0
    %399 = vmatpush1.msra.mxu0 0.0
    %400 = vmatprep.subr.mxu0 0.0
    %401 = vmatpush1.msra.mxu0 0.0
    %402 = vmatprep.subr.mxu0 0.0
    %403 = vmatpush1.msra.mxu0 0.0
    %404 = vmatprep.subr.mxu0 0.0
    %405 = vmatpush1.msra.mxu0 0.0
    %406 = vmatprep.mubr.f32.mxu0 0.0
    %407 = vmatmul.mubr.f32.gmra.mrb[0].mxu0 %v315
    %v408 = vpop.f32.mrb[0].mxu0
    %v409 = vadd.f32 %v311, %v408
    %v410 = vpop.f32.mrb[0].mxu0
    %411 = vmatprep.mubr.f32.mxu0 0.0
    %412 = vmatmul.mubr.f32.gmra.mrb[0].mxu0 %v318
    %v413 = vpop.f32.mrb[0].mxu0
    %v414 = vadd.f32 %v311, %v413
    %v415 = vpop.f32.mrb[0].mxu0
    %416 = vmatprep.mubr.f32.mxu0 0.0
    %417 = vmatmul.mubr.f32.gmra.mrb[0].mxu0 %v321
    %v418 = vpop.f32.mrb[0].mxu0
    %v419 = vadd.f32 %v311, %v418
    %v420 = vpop.f32.mrb[0].mxu0
    %421 = vmatprep.mubr.f32.mxu0 0.0
    %422 = vmatmul.mubr.f32.gmra.mrb[0].mxu0 %v324
    %v423 = vpop.f32.mrb[0].mxu0
    %v424 = vadd.f32 %v311, %v423
    %v425 = vpop.f32.mrb[0].mxu0
    %426 = vmatprep.mubr.f32.mxu0 0.0
    %427 = vmatmul.mubr.f32.gmra.mrb[0].mxu0 %v327
    %v428 = vpop.f32.mrb[0].mxu0
    %v429 = vadd.f32 %v311, %v428
    %v430 = vpop.f32.mrb[0].mxu0
    %431 = vmatprep.mubr.f32.mxu0 0.0
    %432 = vmatmul.mubr.f32.gmra.mrb[0].mxu0 %v330
    %v433 = vpop.f32.mrb[0].mxu0
    %v434 = vadd.f32 %v311, %v433
    %v435 = vpop.f32.mrb[0].mxu0
    %436 = vmatprep.mubr.f32.mxu0 0.0
    %437 = vmatmul.mubr.f32.gmra.mrb[0].mxu0 %v333
    %v438 = vpop.f32.mrb[0].mxu0
    %v439 = vadd.f32 %v311, %v438
    %v440 = vpop.f32.mrb[0].mxu0
    %441 = vmatprep.mubr.f32.mxu0 0.0
    %442 = vmatmul.mubr.f32.gmra.mrb[0].mxu0 %v336
    %v443 = vpop.f32.mrb[0].mxu0
    %v444 = vadd.f32 %v311, %v443
    %v445 = vpop.f32.mrb[0].mxu0
    %446 = vdwg.mxu0
    %v447 = vmax.f32 %v409, 0.0
    %v448 = vmax.f32 %v414, 0.0
    %v449 = vmax.f32 %v419, 0.0
    %v450 = vmax.f32 %v424, 0.0
    %v451 = vmax.f32 %v429, 0.0
    %v452 = vmax.f32 %v434, 0.0
    %v453 = vmax.f32 %v439, 0.0
    %v454 = vmax.f32 %v444, 0.0
    %455 = vrot.lane.b32.xlu0 %v297, 126
    %v456 = vpop.permute.xlu0 %455
    %457 = vrot.lane.b32.xlu0 %v298, 126
    %v458 = vpop.permute.xlu0 %457
    %459 = vrot.lane.b32.xlu0 %v299, 126
    %v460 = vpop.permute.xlu0 %459
    %461 = vrot.lane.b32.xlu0 %v300, 126
    %v462 = vpop.permute.xlu0 %461
    %463 = vrot.lane.b32.xlu0 %v301, 126
    %v464 = vpop.permute.xlu0 %463
    %465 = vrot.lane.b32.xlu0 %v302, 126
    %v466 = vpop.permute.xlu0 %465
    %467 = vrot.lane.b32.xlu0 %v303, 126
    %v468 = vpop.permute.xlu0 %467
    %469 = vrot.lane.b32.xlu0 %v304, 126
    %v470 = vpop.permute.xlu0 %469
    %v471 = vsel %vm313, %v456, 0
    %v473 = vsel %vm313, %v458, 0
    %v475 = vsel %vm313, %v460, 0
    %v477 = vsel %vm313, %v462, 0
    %v479 = vsel %vm313, %v464, 0
    %v481 = vsel %vm313, %v466, 0
    %v483 = vsel %vm313, %v468, 0
    %v485 = vsel %vm313, %v470, 0
    %487 = vmatprep.subr.mxu0 0.0
    %488 = vmatpush1.msra.mxu0 %v340
    %489 = vmatprep.subr.mxu0 0.0
    %490 = vmatpush1.msra.mxu0 0.0
    %491 = vmatprep.subr.mxu0 0.0
    %492 = vmatpush1.msra.mxu0 0.0
    %493 = vmatprep.subr.mxu0 0.0
    %494 = vmatpush1.msra.mxu0 0.0
    %495 = vmatprep.subr.mxu0 0.0
    %496 = vmatpush1.msra.mxu0 0.0
    %497 = vmatprep.subr.mxu0 0.0
    %498 = vmatpush1.msra.mxu0 0.0
    %499 = vmatprep.subr.mxu0 0.0
    %500 = vmatpush1.msra.mxu0 0.0
    %501 = vmatprep.subr.mxu0 0.0
    %502 = vmatpush1.msra.mxu0 0.0
    %503 = vmatprep.subr.mxu0 0.0
    %504 = vmatpush1.msra.mxu0 0.0
    %505 = vmatprep.subr.mxu0 0.0
    %506 = vmatpush1.msra.mxu0 0.0
    %507 = vmatprep.subr.mxu0 0.0
    %508 = vmatpush1.msra.mxu0 0.0
    %509 = vmatprep.subr.mxu0 0.0
    %510 = vmatpush1.msra.mxu0 0.0
    %511 = vmatprep.subr.mxu0 0.0
    %512 = vmatpush1.msra.mxu0 0.0
    %513 = vmatprep.subr.mxu0 0.0
    %514 = vmatpush1.msra.mxu0 0.0
    %515 = vmatprep.subr.mxu0 0.0
    %516 = vmatpush1.msra.mxu0 0.0
    %517 = vmatprep.subr.mxu0 0.0
    %518 = vmatpush1.msra.mxu0 0.0
    %519 = vmatprep.subr.mxu0 0.0
    %520 = vmatpush1.msra.mxu0 0.0
    %521 = vmatprep.subr.mxu0 0.0
    %522 = vmatpush1.msra.mxu0 0.0
    %523 = vmatprep.subr.mxu0 0.0
    %524 = vmatpush1.msra.mxu0 0.0
    %525 = vmatprep.subr.mxu0 0.0
    %526 = vmatpush1.msra.mxu0 0.0
    %527 = vmatprep.subr.mxu0 0.0
    %528 = vmatpush1.msra.mxu0 0.0
    %529 = vmatprep.subr.mxu0 0.0
    %530 = vmatpush1.msra.mxu0 0.0
    %531 = vmatprep.subr.mxu0 0.0
    %532 = vmatpush1.msra.mxu0 0.0
    %533 = vmatprep.subr.mxu0 0.0
    %534 = vmatpush1.msra.mxu0 0.0
    %535 = vmatprep.subr.mxu0 0.0
    %536 = vmatpush1.msra.mxu0 0.0
    %537 = vmatprep.subr.mxu0 0.0
    %538 = vmatpush1.msra.mxu0 0.0
    %539 = vmatprep.subr.mxu0 0.0
    %540 = vmatpush1.msra.mxu0 0.0
    %541 = vmatprep.subr.mxu0 0.0
    %542 = vmatpush1.msra.mxu0 0.0
    %543 = vmatprep.subr.mxu0 0.0
    %544 = vmatpush1.msra.mxu0 0.0
    %545 = vmatprep.subr.mxu0 0.0
    %546 = vmatpush1.msra.mxu0 0.0
    %547 = vmatprep.subr.mxu0 0.0
    %548 = vmatpush1.msra.mxu0 0.0
    %549 = vmatprep.subr.mxu0 0.0
    %550 = vmatpush1.msra.mxu0 0.0
    %551 = vmatprep.mubr.f32.mxu0 0.0
    %552 = vmatmul.mubr.f32.gmra.mrb[0].mxu0 %v471
    %v553 = vpop.f32.mrb[0].mxu0
    %v554 = vadd.f32 %v311, %v553
    %v555 = vpop.f32.mrb[0].mxu0
    %556 = vmatprep.mubr.f32.mxu0 0.0
    %557 = vmatmul.mubr.f32.gmra.mrb[0].mxu0 %v473
    %v558 = vpop.f32.mrb[0].mxu0
    %v559 = vadd.f32 %v311, %v558
    %v560 = vpop.f32.mrb[0].mxu0
    %561 = vmatprep.mubr.f32.mxu0 0.0
    %562 = vmatmul.mubr.f32.gmra.mrb[0].mxu0 %v475
    %v563 = vpop.f32.mrb[0].mxu0
    %v564 = vadd.f32 %v311, %v563
    %v565 = vpop.f32.mrb[0].mxu0
    %566 = vmatprep.mubr.f32.mxu0 0.0
    %567 = vmatmul.mubr.f32.gmra.mrb[0].mxu0 %v477
    %v568 = vpop.f32.mrb[0].mxu0
    %v569 = vadd.f32 %v311, %v568
    %v570 = vpop.f32.mrb[0].mxu0
    %571 = vmatprep.mubr.f32.mxu0 0.0
    %572 = vmatmul.mubr.f32.gmra.mrb[0].mxu0 %v479
    %v573 = vpop.f32.mrb[0].mxu0
    %v574 = vadd.f32 %v311, %v573
    %v575 = vpop.f32.mrb[0].mxu0
    %576 = vmatprep.mubr.f32.mxu0 0.0
    %577 = vmatmul.mubr.f32.gmra.mrb[0].mxu0 %v481
    %v578 = vpop.f32.mrb[0].mxu0
    %v579 = vadd.f32 %v311, %v578
    %v580 = vpop.f32.mrb[0].mxu0
    %581 = vmatprep.mubr.f32.mxu0 0.0
    %582 = vmatmul.mubr.f32.gmra.mrb[0].mxu0 %v483
    %v583 = vpop.f32.mrb[0].mxu0
    %v584 = vadd.f32 %v311, %v583
    %v585 = vpop.f32.mrb[0].mxu0
    %586 = vmatprep.mubr.f32.mxu0 0.0
    %587 = vmatmul.mubr.f32.gmra.mrb[0].mxu0 %v485
    %v588 = vpop.f32.mrb[0].mxu0
    %v589 = vadd.f32 %v311, %v588
    %v590 = vpop.f32.mrb[0].mxu0
    %591 = vdwg.mxu0
    %v592 = vmax.f32 %v554, 0.0
    %v593 = vmax.f32 %v559, 0.0
    %v594 = vmax.f32 %v564, 0.0
    %v595 = vmax.f32 %v569, 0.0
    %v596 = vmax.f32 %v574, 0.0
    %v597 = vmax.f32 %v579, 0.0
    %v598 = vmax.f32 %v584, 0.0
    %v599 = vmax.f32 %v589, 0.0
    %600 = vrot.lane.b32.xlu0 %v297, 124
    %v601 = vpop.permute.xlu0 %600
    %602 = vrot.lane.b32.xlu0 %v298, 124
    %v603 = vpop.permute.xlu0 %602
    %604 = vrot.lane.b32.xlu0 %v299, 124
    %v605 = vpop.permute.xlu0 %604
    %606 = vrot.lane.b32.xlu0 %v300, 124
    %v607 = vpop.permute.xlu0 %606
    %608 = vrot.lane.b32.xlu0 %v301, 124
    %v609 = vpop.permute.xlu0 %608
    %610 = vrot.lane.b32.xlu0 %v302, 124
    %v611 = vpop.permute.xlu0 %610
    %612 = vrot.lane.b32.xlu0 %v303, 124
    %v613 = vpop.permute.xlu0 %612
    %614 = vrot.lane.b32.xlu0 %v304, 124
    %v615 = vpop.permute.xlu0 %614
    %v616 = vsel %vm313, %v601, 0
    %v618 = vsel %vm313, %v603, 0
    %v620 = vsel %vm313, %v605, 0
    %v622 = vsel %vm313, %v607, 0
    %v624 = vsel %vm313, %v609, 0
    %v626 = vsel %vm313, %v611, 0
    %v628 = vsel %vm313, %v613, 0
    %v630 = vsel %vm313, %v615, 0
    %632 = vmatprep.subr.mxu0 0.0
    %633 = vmatpush1.msra.mxu0 %v340
    %634 = vmatprep.subr.mxu0 0.0
    %635 = vmatpush1.msra.mxu0 0.0
    %636 = vmatprep.subr.mxu0 0.0
    %637 = vmatpush1.msra.mxu0 0.0
    %638 = vmatprep.subr.mxu0 0.0
    %639 = vmatpush1.msra.mxu0 0.0
    %640 = vmatprep.subr.mxu0 0.0
    %641 = vmatpush1.msra.mxu0 0.0
    %642 = vmatprep.subr.mxu0 0.0
    %643 = vmatpush1.msra.mxu0 0.0
    %644 = vmatprep.subr.mxu0 0.0
    %645 = vmatpush1.msra.mxu0 0.0
    %646 = vmatprep.subr.mxu0 0.0
    %647 = vmatpush1.msra.mxu0 0.0
    %648 = vmatprep.subr.mxu0 0.0
    %649 = vmatpush1.msra.mxu0 0.0
    %650 = vmatprep.subr.mxu0 0.0
    %651 = vmatpush1.msra.mxu0 0.0
    %652 = vmatprep.subr.mxu0 0.0
    %653 = vmatpush1.msra.mxu0 0.0
    %654 = vmatprep.subr.mxu0 0.0
    %655 = vmatpush1.msra.mxu0 0.0
    %656 = vmatprep.subr.mxu0 0.0
    %657 = vmatpush1.msra.mxu0 0.0
    %658 = vmatprep.subr.mxu0 0.0
    %659 = vmatpush1.msra.mxu0 0.0
    %660 = vmatprep.subr.mxu0 0.0
    %661 = vmatpush1.msra.mxu0 0.0
    %662 = vmatprep.subr.mxu0 0.0
    %663 = vmatpush1.msra.mxu0 0.0
    %664 = vmatprep.subr.mxu0 0.0
    %665 = vmatpush1.msra.mxu0 0.0
    %666 = vmatprep.subr.mxu0 0.0
    %667 = vmatpush1.msra.mxu0 0.0
    %668 = vmatprep.subr.mxu0 0.0
    %669 = vmatpush1.msra.mxu0 0.0
    %670 = vmatprep.subr.mxu0 0.0
    %671 = vmatpush1.msra.mxu0 0.0
    %672 = vmatprep.subr.mxu0 0.0
    %673 = vmatpush1.msra.mxu0 0.0
    %674 = vmatprep.subr.mxu0 0.0
    %675 = vmatpush1.msra.mxu0 0.0
    %676 = vmatprep.subr.mxu0 0.0
    %677 = vmatpush1.msra.mxu0 0.0
    %678 = vmatprep.subr.mxu0 0.0
    %679 = vmatpush1.msra.mxu0 0.0
    %680 = vmatprep.subr.mxu0 0.0
    %681 = vmatpush1.msra.mxu0 0.0
    %682 = vmatprep.subr.mxu0 0.0
    %683 = vmatpush1.msra.mxu0 0.0
    %684 = vmatprep.subr.mxu0 0.0
    %685 = vmatpush1.msra.mxu0 0.0
    %686 = vmatprep.subr.mxu0 0.0
    %687 = vmatpush1.msra.mxu0 0.0
    %688 = vmatprep.subr.mxu0 0.0
    %689 = vmatpush1.msra.mxu0 0.0
    %690 = vmatprep.subr.mxu0 0.0
    %691 = vmatpush1.msra.mxu0 0.0
    %692 = vmatprep.subr.mxu0 0.0
    %693 = vmatpush1.msra.mxu0 0.0
    %694 = vmatprep.subr.mxu0 0.0
    %695 = vmatpush1.msra.mxu0 0.0
    %696 = vmatprep.mubr.f32.mxu0 0.0
    %697 = vmatmul.mubr.f32.gmra.mrb[0].mxu0 %v616
    %v698 = vpop.f32.mrb[0].mxu0
    %v699 = vadd.f32 %v311, %v698
    %v700 = vpop.f32.mrb[0].mxu0
    %701 = vmatprep.mubr.f32.mxu0 0.0
    %702 = vmatmul.mubr.f32.gmra.mrb[0].mxu0 %v618
    %v703 = vpop.f32.mrb[0].mxu0
    %v704 = vadd.f32 %v311, %v703
    %v705 = vpop.f32.mrb[0].mxu0
    %706 = vmatprep.mubr.f32.mxu0 0.0
    %707 = vmatmul.mubr.f32.gmra.mrb[0].mxu0 %v620
    %v708 = vpop.f32.mrb[0].mxu0
    %v709 = vadd.f32 %v311, %v708
    %v710 = vpop.f32.mrb[0].mxu0
    %711 = vmatprep.mubr.f32.mxu0 0.0
    %712 = vmatmul.mubr.f32.gmra.mrb[0].mxu0 %v622
    %v713 = vpop.f32.mrb[0].mxu0
    %v714 = vadd.f32 %v311, %v713
    %v715 = vpop.f32.mrb[0].mxu0
    %716 = vmatprep.mubr.f32.mxu0 0.0
    %717 = vmatmul.mubr.f32.gmra.mrb[0].mxu0 %v624
    %v718 = vpop.f32.mrb[0].mxu0
    %v719 = vadd.f32 %v311, %v718
    %v720 = vpop.f32.mrb[0].mxu0
    %721 = vmatprep.mubr.f32.mxu0 0.0
    %722 = vmatmul.mubr.f32.gmra.mrb[0].mxu0 %v626
    %v723 = vpop.f32.mrb[0].mxu0
    %v724 = vadd.f32 %v311, %v723
    %v725 = vpop.f32.mrb[0].mxu0
    %726 = vmatprep.mubr.f32.mxu0 0.0
    %727 = vmatmul.mubr.f32.gmra.mrb[0].mxu0 %v628
    %v728 = vpop.f32.mrb[0].mxu0
    %v729 = vadd.f32 %v311, %v728
    %v730 = vpop.f32.mrb[0].mxu0
    %731 = vmatprep.mubr.f32.mxu0 0.0
    %732 = vmatmul.mubr.f32.gmra.mrb[0].mxu0 %v630
    %v733 = vpop.f32.mrb[0].mxu0
    %v734 = vadd.f32 %v311, %v733
    %v735 = vpop.f32.mrb[0].mxu0
    %736 = vdwg.mxu0
    %v737 = vmax.f32 %v699, 0.0
    %v738 = vmax.f32 %v704, 0.0
    %v739 = vmax.f32 %v709, 0.0
    %v740 = vmax.f32 %v714, 0.0
    %v741 = vmax.f32 %v719, 0.0
    %v742 = vmax.f32 %v724, 0.0
    %v743 = vmax.f32 %v729, 0.0
    %v744 = vmax.f32 %v734, 0.0
    %v745 = vld [vmem:[%s6] sm:$0xff]
    %v746 = vld [vmem:[%s6 + $0x8] sm:$0xff]
    %v747 = vld [vmem:[%s6 + $0x10] sm:$0xff]
    %v748 = vld [vmem:[%s6 + $0x18] sm:$0xff]
    %v749 = vld [vmem:[%s6 + $0x20] sm:$0xff]
    %v750 = vld [vmem:[%s6 + $0x28] sm:$0xff]
    %v751 = vld [vmem:[%s6 + $0x30] sm:$0xff]
    %v752 = vld [vmem:[%s6 + $0x38] sm:$0xff]
    %v753 = vld [vmem:[%s6 + $0x40] sm:$0xff]
    %v754 = vld [vmem:[%s6 + $0x48] sm:$0xff]
    %v755 = vld [vmem:[%s6 + $0x50] sm:$0xff]
    %v756 = vld [vmem:[%s6 + $0x58] sm:$0xff]
    %v757 = vld [vmem:[%s6 + $0x60] sm:$0xff]
    %v758 = vld [vmem:[%s6 + $0x68] sm:$0xff]
    %v759 = vld [vmem:[%s6 + $0x70] sm:$0xff]
    %v760 = vld [vmem:[%s6 + $0x78] sm:$0xff]
    %vm761 = vcmask 523264
    %v763 = vsel %vm761, %v592, 0
    %v766 = vsel %vm761, %v593, 0
    %v769 = vsel %vm761, %v594, 0
    %v772 = vsel %vm761, %v595, 0
    %v775 = vsel %vm761, %v596, 0
    %v778 = vsel %vm761, %v597, 0
    %v781 = vsel %vm761, %v598, 0
    %v784 = vsel %vm761, %v599, 0
    %786 = vmatprep.subr.mxu0 0.0
    %787 = vmatpush1.msra.mxu0 %v753
    %788 = vmatprep.subr.mxu0 0.0
    %789 = vmatpush1.msra.mxu0 %v754
    %790 = vmatprep.subr.mxu0 0.0
    %791 = vmatpush1.msra.mxu0 %v755
    %792 = vmatprep.subr.mxu0 0.0
    %793 = vmatpush1.msra.mxu0 %v756
    %794 = vmatprep.subr.mxu0 0.0
    %795 = vmatpush1.msra.mxu0 %v757
    %796 = vmatprep.subr.mxu0 0.0
    %797 = vmatpush1.msra.mxu0 %v758
    %798 = vmatprep.subr.mxu0 0.0
    %799 = vmatpush1.msra.mxu0 %v759
    %800 = vmatprep.subr.mxu0 0.0
    %801 = vmatpush1.msra.mxu0 %v760
    %802 = vmatprep.subr.mxu0 0.0
    %803 = vmatpush1.msra.mxu0 0.0
    %804 = vmatprep.subr.mxu0 0.0
    %805 = vmatpush1.msra.mxu0 0.0
    %806 = vmatprep.subr.mxu0 0.0
    %807 = vmatpush1.msra.mxu0 0.0
    %808 = vmatprep.subr.mxu0 0.0
    %809 = vmatpush1.msra.mxu0 0.0
    %810 = vmatprep.subr.mxu0 0.0
    %811 = vmatpush1.msra.mxu0 0.0
    %812 = vmatprep.subr.mxu0 0.0
    %813 = vmatpush1.msra.mxu0 0.0
    %814 = vmatprep.subr.mxu0 0.0
    %815 = vmatpush1.msra.mxu0 0.0
    %816 = vmatprep.subr.mxu0 0.0
    %817 = vmatpush1.msra.mxu0 0.0
    %818 = vmatprep.subr.mxu0 0.0
    %819 = vmatpush1.msra.mxu0 0.0
    %820 = vmatprep.subr.mxu0 0.0
    %821 = vmatpush1.msra.mxu0 0.0
    %822 = vmatprep.subr.mxu0 0.0
    %823 = vmatpush1.msra.mxu0 0.0
    %824 = vmatprep.subr.mxu0 0.0
    %825 = vmatpush1.msra.mxu0 0.0
    %826 = vmatprep.subr.mxu0 0.0
    %827 = vmatpush1.msra.mxu0 0.0
    %828 = vmatprep.subr.mxu0 0.0
    %829 = vmatpush1.msra.mxu0 0.0
    %830 = vmatprep.subr.mxu0 0.0
    %831 = vmatpush1.msra.mxu0 0.0
    %832 = vmatprep.subr.mxu0 0.0
    %833 = vmatpush1.msra.mxu0 0.0
    %834 = vmatprep.subr.mxu0 0.0
    %835 = vmatpush1.msra.mxu0 0.0
    %836 = vmatprep.subr.mxu0 0.0
    %837 = vmatpush1.msra.mxu0 0.0
    %838 = vmatprep.subr.mxu0 0.0
    %839 = vmatpush1.msra.mxu0 0.0
    %840 = vmatprep.subr.mxu0 0.0
    %841 = vmatpush1.msra.mxu0 0.0
    %842 = vmatprep.subr.mxu0 0.0
    %843 = vmatpush1.msra.mxu0 0.0
    %844 = vmatprep.subr.mxu0 0.0
    %845 = vmatpush1.msra.mxu0 0.0
    %846 = vmatprep.subr.mxu0 0.0
    %847 = vmatpush1.msra.mxu0 0.0
    %848 = vmatprep.subr.mxu0 0.0
    %849 = vmatpush1.msra.mxu0 0.0
    %850 = vmatprep.mubr.f32.mxu0 0.0
    %851 = vmatmul.mubr.f32.gmra.mrb[0].mxu0 %v763
    %v852 = vpop.f32.mrb[0].mxu0
    %v853 = vadd.f32 0.0, %v852
    %v854 = vpop.f32.mrb[0].mxu0
    %855 = vmatprep.mubr.f32.mxu0 0.0
    %856 = vmatmul.mubr.f32.gmra.mrb[0].mxu0 %v766
    %v857 = vpop.f32.mrb[0].mxu0
    %v858 = vadd.f32 0.0, %v857
    %v859 = vpop.f32.mrb[0].mxu0
    %860 = vmatprep.mubr.f32.mxu0 0.0
    %861 = vmatmul.mubr.f32.gmra.mrb[0].mxu0 %v769
    %v862 = vpop.f32.mrb[0].mxu0
    %v863 = vadd.f32 0.0, %v862
    %v864 = vpop.f32.mrb[0].mxu0
    %865 = vmatprep.mubr.f32.mxu0 0.0
    %866 = vmatmul.mubr.f32.gmra.mrb[0].mxu0 %v772
    %v867 = vpop.f32.mrb[0].mxu0
    %v868 = vadd.f32 0.0, %v867
    %v869 = vpop.f32.mrb[0].mxu0
    %870 = vmatprep.mubr.f32.mxu0 0.0
    %871 = vmatmul.mubr.f32.gmra.mrb[0].mxu0 %v775
    %v872 = vpop.f32.mrb[0].mxu0
    %v873 = vadd.f32 0.0, %v872
    %v874 = vpop.f32.mrb[0].mxu0
    %875 = vmatprep.mubr.f32.mxu0 0.0
    %876 = vmatmul.mubr.f32.gmra.mrb[0].mxu0 %v778
    %v877 = vpop.f32.mrb[0].mxu0
    %v878 = vadd.f32 0.0, %v877
    %v879 = vpop.f32.mrb[0].mxu0
    %880 = vmatprep.mubr.f32.mxu0 0.0
    %881 = vmatmul.mubr.f32.gmra.mrb[0].mxu0 %v781
    %v882 = vpop.f32.mrb[0].mxu0
    %v883 = vadd.f32 0.0, %v882
    %v884 = vpop.f32.mrb[0].mxu0
    %885 = vmatprep.mubr.f32.mxu0 0.0
    %886 = vmatmul.mubr.f32.gmra.mrb[0].mxu0 %v784
    %v887 = vpop.f32.mrb[0].mxu0
    %v888 = vadd.f32 0.0, %v887
    %v889 = vpop.f32.mrb[0].mxu0
    %890 = vdwg.mxu0
    %v892 = vsel %vm761, %v447, 0
    %v895 = vsel %vm761, %v448, 0
    %v898 = vsel %vm761, %v449, 0
    %v901 = vsel %vm761, %v450, 0
    %v904 = vsel %vm761, %v451, 0
    %v907 = vsel %vm761, %v452, 0
    %v910 = vsel %vm761, %v453, 0
    %v913 = vsel %vm761, %v454, 0
    %915 = vmatprep.subr.mxu0 0.0
    %916 = vmatpush1.msra.mxu0 %v745
    %917 = vmatprep.subr.mxu0 0.0
    %918 = vmatpush1.msra.mxu0 %v746
    %919 = vmatprep.subr.mxu0 0.0
    %920 = vmatpush1.msra.mxu0 %v747
    %921 = vmatprep.subr.mxu0 0.0
    %922 = vmatpush1.msra.mxu0 %v748
    %923 = vmatprep.subr.mxu0 0.0
    %924 = vmatpush1.msra.mxu0 %v749
    %925 = vmatprep.subr.mxu0 0.0
    %926 = vmatpush1.msra.mxu0 %v750
    %927 = vmatprep.subr.mxu0 0.0
    %928 = vmatpush1.msra.mxu0 %v751
    %929 = vmatprep.subr.mxu0 0.0
    %930 = vmatpush1.msra.mxu0 %v752
    %931 = vmatprep.subr.mxu0 0.0
    %932 = vmatpush1.msra.mxu0 0.0
    %933 = vmatprep.subr.mxu0 0.0
    %934 = vmatpush1.msra.mxu0 0.0
    %935 = vmatprep.subr.mxu0 0.0
    %936 = vmatpush1.msra.mxu0 0.0
    %937 = vmatprep.subr.mxu0 0.0
    %938 = vmatpush1.msra.mxu0 0.0
    %939 = vmatprep.subr.mxu0 0.0
    %940 = vmatpush1.msra.mxu0 0.0
    %941 = vmatprep.subr.mxu0 0.0
    %942 = vmatpush1.msra.mxu0 0.0
    %943 = vmatprep.subr.mxu0 0.0
    %944 = vmatpush1.msra.mxu0 0.0
    %945 = vmatprep.subr.mxu0 0.0
    %946 = vmatpush1.msra.mxu0 0.0
    %947 = vmatprep.subr.mxu0 0.0
    %948 = vmatpush1.msra.mxu0 0.0
    %949 = vmatprep.subr.mxu0 0.0
    %950 = vmatpush1.msra.mxu0 0.0
    %951 = vmatprep.subr.mxu0 0.0
    %952 = vmatpush1.msra.mxu0 0.0
    %953 = vmatprep.subr.mxu0 0.0
    %954 = vmatpush1.msra.mxu0 0.0
    %955 = vmatprep.subr.mxu0 0.0
    %956 = vmatpush1.msra.mxu0 0.0
    %957 = vmatprep.subr.mxu0 0.0
    %958 = vmatpush1.msra.mxu0 0.0
    %959 = vmatprep.subr.mxu0 0.0
    %960 = vmatpush1.msra.mxu0 0.0
    %961 = vmatprep.subr.mxu0 0.0
    %962 = vmatpush1.msra.mxu0 0.0
    %963 = vmatprep.subr.mxu0 0.0
    %964 = vmatpush1.msra.mxu0 0.0
    %965 = vmatprep.subr.mxu0 0.0
    %966 = vmatpush1.msra.mxu0 0.0
    %967 = vmatprep.subr.mxu0 0.0
    %968 = vmatpush1.msra.mxu0 0.0
    %969 = vmatprep.subr.mxu0 0.0
    %970 = vmatpush1.msra.mxu0 0.0
    %971 = vmatprep.subr.mxu0 0.0
    %972 = vmatpush1.msra.mxu0 0.0
    %973 = vmatprep.subr.mxu0 0.0
    %974 = vmatpush1.msra.mxu0 0.0
    %975 = vmatprep.subr.mxu0 0.0
    %976 = vmatpush1.msra.mxu0 0.0
    %977 = vmatprep.subr.mxu0 0.0
    %978 = vmatpush1.msra.mxu0 0.0
    %979 = vmatprep.mubr.f32.mxu0 0.0
    %980 = vmatmul.mubr.f32.gmra.mrb[0].mxu0 %v892
    %v981 = vpop.f32.mrb[0].mxu0
    %v982 = vadd.f32 %v853, %v981
    %v983 = vpop.f32.mrb[0].mxu0
    %984 = vmatprep.mubr.f32.mxu0 0.0
    %985 = vmatmul.mubr.f32.gmra.mrb[0].mxu0 %v895
    %v986 = vpop.f32.mrb[0].mxu0
    %v987 = vadd.f32 %v858, %v986
    %v988 = vpop.f32.mrb[0].mxu0
    %989 = vmatprep.mubr.f32.mxu0 0.0
    %990 = vmatmul.mubr.f32.gmra.mrb[0].mxu0 %v898
    %v991 = vpop.f32.mrb[0].mxu0
    %v992 = vadd.f32 %v863, %v991
    %v993 = vpop.f32.mrb[0].mxu0
    %994 = vmatprep.mubr.f32.mxu0 0.0
    %995 = vmatmul.mubr.f32.gmra.mrb[0].mxu0 %v901
    %v996 = vpop.f32.mrb[0].mxu0
    %v997 = vadd.f32 %v868, %v996
    %v998 = vpop.f32.mrb[0].mxu0
    %999 = vmatprep.mubr.f32.mxu0 0.0
    %1000 = vmatmul.mubr.f32.gmra.mrb[0].mxu0 %v904
    %v1001 = vpop.f32.mrb[0].mxu0
    %v1002 = vadd.f32 %v873, %v1001
    %v1003 = vpop.f32.mrb[0].mxu0
    %1004 = vmatprep.mubr.f32.mxu0 0.0
    %1005 = vmatmul.mubr.f32.gmra.mrb[0].mxu0 %v907
    %v1006 = vpop.f32.mrb[0].mxu0
    %v1007 = vadd.f32 %v878, %v1006
    %v1008 = vpop.f32.mrb[0].mxu0
    %1009 = vmatprep.mubr.f32.mxu0 0.0
    %1010 = vmatmul.mubr.f32.gmra.mrb[0].mxu0 %v910
    %v1011 = vpop.f32.mrb[0].mxu0
    %v1012 = vadd.f32 %v883, %v1011
    %v1013 = vpop.f32.mrb[0].mxu0
    %1014 = vmatprep.mubr.f32.mxu0 0.0
    %1015 = vmatmul.mubr.f32.gmra.mrb[0].mxu0 %v913
    %v1016 = vpop.f32.mrb[0].mxu0
    %v1017 = vadd.f32 %v888, %v1016
    %v1018 = vpop.f32.mrb[0].mxu0
    %1019 = vdwg.mxu0
    %v1020 = vld [vmem:[%s6 + $0x80] sm:$0xff]
    %v1021 = vld [vmem:[%s6 + $0x88] sm:$0xff]
    %v1022 = vld [vmem:[%s6 + $0x90] sm:$0xff]
    %v1023 = vld [vmem:[%s6 + $0x98] sm:$0xff]
    %v1024 = vld [vmem:[%s6 + $0xa0] sm:$0xff]
    %v1025 = vld [vmem:[%s6 + $0xa8] sm:$0xff]
    %v1026 = vld [vmem:[%s6 + $0xb0] sm:$0xff]
    %v1027 = vld [vmem:[%s6 + $0xb8] sm:$0xff]
    %v1029 = vsel %vm761, %v737, 0
    %v1032 = vsel %vm761, %v738, 0
    %v1035 = vsel %vm761, %v739, 0
    %v1038 = vsel %vm761, %v740, 0
    %v1041 = vsel %vm761, %v741, 0
    %v1044 = vsel %vm761, %v742, 0
    %v1047 = vsel %vm761, %v743, 0
    %v1050 = vsel %vm761, %v744, 0
    %1052 = vmatprep.subr.mxu0 0.0
    %1053 = vmatpush1.msra.mxu0 %v1020
    %1054 = vmatprep.subr.mxu0 0.0
    %1055 = vmatpush1.msra.mxu0 %v1021
    %1056 = vmatprep.subr.mxu0 0.0
    %1057 = vmatpush1.msra.mxu0 %v1022
    %1058 = vmatprep.subr.mxu0 0.0
    %1059 = vmatpush1.msra.mxu0 %v1023
    %1060 = vmatprep.subr.mxu0 0.0
    %1061 = vmatpush1.msra.mxu0 %v1024
    %1062 = vmatprep.subr.mxu0 0.0
    %1063 = vmatpush1.msra.mxu0 %v1025
    %1064 = vmatprep.subr.mxu0 0.0
    %1065 = vmatpush1.msra.mxu0 %v1026
    %1066 = vmatprep.subr.mxu0 0.0
    %1067 = vmatpush1.msra.mxu0 %v1027
    %1068 = vmatprep.subr.mxu0 0.0
    %1069 = vmatpush1.msra.mxu0 0.0
    %1070 = vmatprep.subr.mxu0 0.0
    %1071 = vmatpush1.msra.mxu0 0.0
    %1072 = vmatprep.subr.mxu0 0.0
    %1073 = vmatpush1.msra.mxu0 0.0
    %1074 = vmatprep.subr.mxu0 0.0
    %1075 = vmatpush1.msra.mxu0 0.0
    %1076 = vmatprep.subr.mxu0 0.0
    %1077 = vmatpush1.msra.mxu0 0.0
    %1078 = vmatprep.subr.mxu0 0.0
    %1079 = vmatpush1.msra.mxu0 0.0
    %1080 = vmatprep.subr.mxu0 0.0
    %1081 = vmatpush1.msra.mxu0 0.0
    %1082 = vmatprep.subr.mxu0 0.0
    %1083 = vmatpush1.msra.mxu0 0.0
    %1084 = vmatprep.subr.mxu0 0.0
    %1085 = vmatpush1.msra.mxu0 0.0
    %1086 = vmatprep.subr.mxu0 0.0
    %1087 = vmatpush1.msra.mxu0 0.0
    %1088 = vmatprep.subr.mxu0 0.0
    %1089 = vmatpush1.msra.mxu0 0.0
    %1090 = vmatprep.subr.mxu0 0.0
    %1091 = vmatpush1.msra.mxu0 0.0
    %1092 = vmatprep.subr.mxu0 0.0
    %1093 = vmatpush1.msra.mxu0 0.0
    %1094 = vmatprep.subr.mxu0 0.0
    %1095 = vmatpush1.msra.mxu0 0.0
    %1096 = vmatprep.subr.mxu0 0.0
    %1097 = vmatpush1.msra.mxu0 0.0
    %1098 = vmatprep.subr.mxu0 0.0
    %1099 = vmatpush1.msra.mxu0 0.0
    %1100 = vmatprep.subr.mxu0 0.0
    %1101 = vmatpush1.msra.mxu0 0.0
    %1102 = vmatprep.subr.mxu0 0.0
    %1103 = vmatpush1.msra.mxu0 0.0
    %1104 = vmatprep.subr.mxu0 0.0
    %1105 = vmatpush1.msra.mxu0 0.0
    %1106 = vmatprep.subr.mxu0 0.0
    %1107 = vmatpush1.msra.mxu0 0.0
    %1108 = vmatprep.subr.mxu0 0.0
    %1109 = vmatpush1.msra.mxu0 0.0
    %1110 = vmatprep.subr.mxu0 0.0
    %1111 = vmatpush1.msra.mxu0 0.0
    %1112 = vmatprep.subr.mxu0 0.0
    %1113 = vmatpush1.msra.mxu0 0.0
    %1114 = vmatprep.subr.mxu0 0.0
    %1115 = vmatpush1.msra.mxu0 0.0
    %1116 = vmatprep.mubr.f32.mxu0 0.0
    %1117 = vmatmul.mubr.f32.gmra.mrb[0].mxu0 %v1029
    %v1118 = vpop.f32.mrb[0].mxu0
    %v1119 = vadd.f32 0.0, %v1118
    %v1120 = vpop.f32.mrb[0].mxu0
    %1121 = vmatprep.mubr.f32.mxu0 0.0
    %1122 = vmatmul.mubr.f32.gmra.mrb[0].mxu0 %v1032
    %v1123 = vpop.f32.mrb[0].mxu0
    %v1124 = vadd.f32 0.0, %v1123
    %v1125 = vpop.f32.mrb[0].mxu0
    %1126 = vmatprep.mubr.f32.mxu0 0.0
    %1127 = vmatmul.mubr.f32.gmra.mrb[0].mxu0 %v1035
    %v1128 = vpop.f32.mrb[0].mxu0
    %v1129 = vadd.f32 0.0, %v1128
    %v1130 = vpop.f32.mrb[0].mxu0
    %1131 = vmatprep.mubr.f32.mxu0 0.0
    %1132 = vmatmul.mubr.f32.gmra.mrb[0].mxu0 %v1038
    %v1133 = vpop.f32.mrb[0].mxu0
    %v1134 = vadd.f32 0.0, %v1133
    %v1135 = vpop.f32.mrb[0].mxu0
    %1136 = vmatprep.mubr.f32.mxu0 0.0
    %1137 = vmatmul.mubr.f32.gmra.mrb[0].mxu0 %v1041
    %v1138 = vpop.f32.mrb[0].mxu0
    %v1139 = vadd.f32 0.0, %v1138
    %v1140 = vpop.f32.mrb[0].mxu0
    %1141 = vmatprep.mubr.f32.mxu0 0.0
    %1142 = vmatmul.mubr.f32.gmra.mrb[0].mxu0 %v1044
    %v1143 = vpop.f32.mrb[0].mxu0
    %v1144 = vadd.f32 0.0, %v1143
    %v1145 = vpop.f32.mrb[0].mxu0
    %1146 = vmatprep.mubr.f32.mxu0 0.0
    %1147 = vmatmul.mubr.f32.gmra.mrb[0].mxu0 %v1047
    %v1148 = vpop.f32.mrb[0].mxu0
    %v1149 = vadd.f32 0.0, %v1148
    %v1150 = vpop.f32.mrb[0].mxu0
    %1151 = vmatprep.mubr.f32.mxu0 0.0
    %1152 = vmatmul.mubr.f32.gmra.mrb[0].mxu0 %v1050
    %v1153 = vpop.f32.mrb[0].mxu0
    %v1154 = vadd.f32 0.0, %v1153
    %v1155 = vpop.f32.mrb[0].mxu0
    %1156 = vdwg.mxu0
    %v1157 = vadd.f32 %v982, %v1119
    %v1158 = vadd.f32 %v987, %v1124
    %v1159 = vadd.f32 %v992, %v1129
    %v1160 = vadd.f32 %v997, %v1134
    %v1161 = vadd.f32 %v1002, %v1139
    %v1162 = vadd.f32 %v1007, %v1144
    %v1163 = vadd.f32 %v1012, %v1149
    %v1164 = vadd.f32 %v1017, %v1154
    %v1165 = vld [vmem:[#allocation14] sm:$0x1]
    %v1167 = vlaneseq
    %v1168 = vshrl.u32 %v1167, 7
    %v1169 = vsub.s32 0, %v1168
    %v1170 = vrot.slane %v1165, %v1169
    %v1172 = vadd.f32 %v1157, %v1170
    %v1173 = vadd.f32 %v1158, %v1170
    %v1174 = vadd.f32 %v1159, %v1170
    %v1175 = vadd.f32 %v1160, %v1170
    %v1176 = vadd.f32 %v1161, %v1170
    %v1177 = vadd.f32 %v1162, %v1170
    %v1178 = vadd.f32 %v1163, %v1170
    %v1179 = vadd.f32 %v1164, %v1170
    %v1180 = vmax.f32 %v1172, 0.0
    %v1181 = vmax.f32 %v1173, 0.0
    %v1182 = vmax.f32 %v1174, 0.0
    %v1183 = vmax.f32 %v1175, 0.0
    %v1184 = vmax.f32 %v1176, 0.0
    %v1185 = vmax.f32 %v1177, 0.0
    %v1186 = vmax.f32 %v1178, 0.0
    %v1187 = vmax.f32 %v1179, 0.0
    %1188 = vst.msk [vmem:[#allocation3] sm:$0xff] %vm761, %v1180
    %1189 = vst.msk [vmem:[#allocation3 + $0x8] sm:$0xff] %vm761, %v1181
    %1190 = vst.msk [vmem:[#allocation3 + $0x10] sm:$0xff] %vm761, %v1182
    %1191 = vst.msk [vmem:[#allocation3 + $0x18] sm:$0xff] %vm761, %v1183
    %1192 = vst.msk [vmem:[#allocation3 + $0x20] sm:$0xff] %vm761, %v1184
    %1193 = vst.msk [vmem:[#allocation3 + $0x28] sm:$0xff] %vm761, %v1185
    %1194 = vst.msk [vmem:[#allocation3 + $0x30] sm:$0xff] %vm761, %v1186
    %vm1195 = vcmask 518144
    %1196 = vst.msk [vmem:[#allocation3 + $0x38] sm:$0x7] %vm1195, %v1187
    %s1197 = smul.u32 4, 472
    %s1198 = smul.u32 %s1197, 4
    %s1199 = sshll.u32 %s1198, 4
    %1200 = dma.done [#allocation4], %s1199
    %v1201 = vld [vmem:[#allocation16] sm:$0xf]
    %v1202 = vld [vmem:[#allocation3] sm:$0x1]
    %v1203 = vpack.c.bf16 %v1202, %v1202
    %v1204 = vld [vmem:[#allocation2] sm:$0xff]
    %v1205 = vld [vmem:[#allocation2 + $0x8] sm:$0xff]
    %v1206 = vld [vmem:[#allocation2 + $0x10] sm:$0xff]
    %v1207 = vld [vmem:[#allocation2 + $0x18] sm:$0xff]
    %v1208 = vld [vmem:[#allocation2 + $0x20] sm:$0xff]
    %v1209 = vld [vmem:[#allocation2 + $0x28] sm:$0xff]
    %v1210 = vld [vmem:[#allocation2 + $0x30] sm:$0xff]
    %v1211 = vld [vmem:[#allocation2 + $0x38] sm:$0xff]
    %v1212 = vld [vmem:[#allocation2 + $0x40] sm:$0xff]
    %v1213 = vld [vmem:[#allocation2 + $0x48] sm:$0xff]
    %v1214 = vld [vmem:[#allocation2 + $0x50] sm:$0xff]
    %v1215 = vld [vmem:[#allocation2 + $0x58] sm:$0xff]
    %v1216 = vld [vmem:[#allocation2 + $0x60] sm:$0xff]
    %v1217 = vld [vmem:[#allocation2 + $0x68] sm:$0xff]
    %v1218 = vld [vmem:[#allocation2 + $0x70] sm:$0xff]
    %v1219 = vld [vmem:[#allocation2 + $0x78] sm:$0xff]
    %v1221 = vsel %vm761, %v1203, 0
    %1223 = vmatprep.subr.bf16.mxu0 %v1205
    %1224 = vmatpush1.bf16.msra.mxu0 %v1204
    %1225 = vmatprep.subr.bf16.mxu0 %v1209
    %1226 = vmatpush1.bf16.msra.mxu0 %v1208
    %1227 = vmatprep.subr.bf16.mxu0 %v1213
    %1228 = vmatpush1.bf16.msra.mxu0 %v1212
    %1229 = vmatprep.subr.bf16.mxu0 %v1217
    %1230 = vmatpush1.bf16.msra.mxu0 %v1216
    %1231 = vmatprep.subr.bf16.mxu0 0
    %1232 = vmatpush1.bf16.msra.mxu0 0
    %1233 = vmatprep.subr.bf16.mxu0 0
    %1234 = vmatpush1.bf16.msra.mxu0 0
    %1235 = vmatprep.subr.bf16.mxu0 0
    %1236 = vmatpush1.bf16.msra.mxu0 0
    %1237 = vmatprep.subr.bf16.mxu0 0
    %1238 = vmatpush1.bf16.msra.mxu0 0
    %1239 = vmatprep.subr.bf16.mxu0 0
    %1240 = vmatpush1.bf16.msra.mxu0 0
    %1241 = vmatprep.subr.bf16.mxu0 0
    %1242 = vmatpush1.bf16.msra.mxu0 0
    %1243 = vmatprep.subr.bf16.mxu0 0
    %1244 = vmatpush1.bf16.msra.mxu0 0
    %1245 = vmatprep.subr.bf16.mxu0 0
    %1246 = vmatpush1.bf16.msra.mxu0 0
    %1247 = vmatprep.subr.bf16.mxu0 0
    %1248 = vmatpush1.bf16.msra.mxu0 0
    %1249 = vmatprep.subr.bf16.mxu0 0
    %1250 = vmatpush1.bf16.msra.mxu0 0
    %1251 = vmatprep.subr.bf16.mxu0 0
    %1252 = vmatpush1.bf16.msra.mxu0 0
    %1253 = vmatprep.subr.bf16.mxu0 0
    %1254 = vmatpush1.bf16.msra.mxu0 0
    %1255 = vmatprep.mubr.bf16.mxu0 0
    %1256 = vmatmul.mubr.bf16.gmra.mrb[0].mxu0 %v1221
    %v1257 = vpop.f32.mrb[0].mxu0
    %v1258 = vadd.f32 0.0, %v1257
    %v1259 = vpop.f32.mrb[0].mxu0
    %v1260 = vadd.f32 0.0, %v1259
    %v1261 = vpop.f32.mrb[0].mxu0
    %v1262 = vpop.f32.mrb[0].mxu0
    %1263 = vdwg.mxu0
    %1264 = vmatprep.subr.bf16.mxu0 %v1207
    %1265 = vmatpush1.bf16.msra.mxu0 %v1206
    %1266 = vmatprep.subr.bf16.mxu0 %v1211
    %1267 = vmatpush1.bf16.msra.mxu0 %v1210
    %1268 = vmatprep.subr.bf16.mxu0 %v1215
    %1269 = vmatpush1.bf16.msra.mxu0 %v1214
    %1270 = vmatprep.subr.bf16.mxu0 %v1219
    %1271 = vmatpush1.bf16.msra.mxu0 %v1218
    %1272 = vmatprep.subr.bf16.mxu0 0
    %1273 = vmatpush1.bf16.msra.mxu0 0
    %1274 = vmatprep.subr.bf16.mxu0 0
    %1275 = vmatpush1.bf16.msra.mxu0 0
    %1276 = vmatprep.subr.bf16.mxu0 0
    %1277 = vmatpush1.bf16.msra.mxu0 0
    %1278 = vmatprep.subr.bf16.mxu0 0
    %1279 = vmatpush1.bf16.msra.mxu0 0
    %1280 = vmatprep.subr.bf16.mxu0 0
    %1281 = vmatpush1.bf16.msra.mxu0 0
    %1282 = vmatprep.subr.bf16.mxu0 0
    %1283 = vmatpush1.bf16.msra.mxu0 0
    %1284 = vmatprep.subr.bf16.mxu0 0
    %1285 = vmatpush1.bf16.msra.mxu0 0
    %1286 = vmatprep.subr.bf16.mxu0 0
    %1287 = vmatpush1.bf16.msra.mxu0 0
    %1288 = vmatprep.subr.bf16.mxu0 0
    %1289 = vmatpush1.bf16.msra.mxu0 0
    %1290 = vmatprep.subr.bf16.mxu0 0
    %1291 = vmatpush1.bf16.msra.mxu0 0
    %1292 = vmatprep.subr.bf16.mxu0 0
    %1293 = vmatpush1.bf16.msra.mxu0 0
    %1294 = vmatprep.subr.bf16.mxu0 0
    %1295 = vmatpush1.bf16.msra.mxu0 0
    %1296 = vmatprep.mubr.bf16.mxu0 0
    %1297 = vmatmul.mubr.bf16.gmra.mrb[0].mxu0 %v1221
    %v1298 = vpop.f32.mrb[0].mxu0
    %v1299 = vadd.f32 0.0, %v1298
    %v1300 = vpop.f32.mrb[0].mxu0
    %v1301 = vadd.f32 0.0, %v1300
    %v1302 = vpop.f32.mrb[0].mxu0
    %v1303 = vpop.f32.mrb[0].mxu0
    %1304 = vdwg.mxu0
    %v1309 = vcombine.low %v1258, %v1260
    %v1310 = vcombine.low %v1299, %v1301
    %v1312 = vunpack.c.l.s4 1966171168
    %v1313 = vunpack.c.0.s8 %v1312
    %v1314 = vlaneseq
    %v1315 = vshrl.u32 %v1314, 7
    %v1316 = vsub.s32 %v1313, %v1315
    %v1317 = vrot.slane %v1309, %v1316
    %v1319 = vunpack.c.l.s4 1966171168
    %v1320 = vunpack.c.0.s8 %v1319
    %v1321 = vlaneseq
    %v1322 = vshrl.u32 %v1321, 7
    %v1323 = vsub.s32 %v1320, %v1322
    %v1324 = vrot.slane %v1310, %v1323
    %v1325 = vcombine.low %v1317, %v1324
    %v1327 = vunpack.c.l.s4 1966171168
    %v1328 = vunpack.c.0.s8 %v1327
    %v1329 = vlaneseq
    %v1330 = vshrl.u32 %v1329, 7
    %v1331 = vsub.s32 %v1328, %v1330
    %v1332 = vrot.slane %v1325, %v1331
    %v1334 = vadd.f32 %v1201, %v1332
    %v1335 = vld [vmem:[#allocation3 + $0x1] sm:$0x1]
    %v1336 = vpack.c.bf16 %v1335, %v1335
    %v1337 = vld [vmem:[#allocation2 + $0x80] sm:$0xff]
    %v1338 = vld [vmem:[#allocation2 + $0x88] sm:$0xff]
    %v1339 = vld [vmem:[#allocation2 + $0x90] sm:$0xff]
    %v1340 = vld [vmem:[#allocation2 + $0x98] sm:$0xff]
    %v1341 = vld [vmem:[#allocation2 + $0xa0] sm:$0xff]
    %v1342 = vld [vmem:[#allocation2 + $0xa8] sm:$0xff]
    %v1343 = vld [vmem:[#allocation2 + $0xb0] sm:$0xff]
    %v1344 = vld [vmem:[#allocation2 + $0xb8] sm:$0xff]
    %v1345 = vld [vmem:[#allocation2 + $0xc0] sm:$0xff]
    %v1346 = vld [vmem:[#allocation2 + $0xc8] sm:$0xff]
    %v1347 = vld [vmem:[#allocation2 + $0xd0] sm:$0xff]
    %v1348 = vld [vmem:[#allocation2 + $0xd8] sm:$0xff]
    %v1349 = vld [vmem:[#allocation2 + $0xe0] sm:$0xff]
    %v1350 = vld [vmem:[#allocation2 + $0xe8] sm:$0xff]
    %v1351 = vld [vmem:[#allocation2 + $0xf0] sm:$0xff]
    %v1352 = vld [vmem:[#allocation2 + $0xf8] sm:$0xff]
    %v1354 = vsel %vm761, %v1336, 0
    %1356 = vmatprep.subr.bf16.mxu0 %v1338
    %1357 = vmatpush1.bf16.msra.mxu0 %v1337
    %1358 = vmatprep.subr.bf16.mxu0 %v1342
    %1359 = vmatpush1.bf16.msra.mxu0 %v1341
    %1360 = vmatprep.subr.bf16.mxu0 %v1346
    %1361 = vmatpush1.bf16.msra.mxu0 %v1345
    %1362 = vmatprep.subr.bf16.mxu0 %v1350
    %1363 = vmatpush1.bf16.msra.mxu0 %v1349
    %1364 = vmatprep.subr.bf16.mxu0 0
    %1365 = vmatpush1.bf16.msra.mxu0 0
    %1366 = vmatprep.subr.bf16.mxu0 0
    %1367 = vmatpush1.bf16.msra.mxu0 0
    %1368 = vmatprep.subr.bf16.mxu0 0
    %1369 = vmatpush1.bf16.msra.mxu0 0
    %1370 = vmatprep.subr.bf16.mxu0 0
    %1371 = vmatpush1.bf16.msra.mxu0 0
    %1372 = vmatprep.subr.bf16.mxu0 0
    %1373 = vmatpush1.bf16.msra.mxu0 0
    %1374 = vmatprep.subr.bf16.mxu0 0
    %1375 = vmatpush1.bf16.msra.mxu0 0
    %1376 = vmatprep.subr.bf16.mxu0 0
    %1377 = vmatpush1.bf16.msra.mxu0 0
    %1378 = vmatprep.subr.bf16.mxu0 0
    %1379 = vmatpush1.bf16.msra.mxu0 0
    %1380 = vmatprep.subr.bf16.mxu0 0
    %1381 = vmatpush1.bf16.msra.mxu0 0
    %1382 = vmatprep.subr.bf16.mxu0 0
    %1383 = vmatpush1.bf16.msra.mxu0 0
    %1384 = vmatprep.subr.bf16.mxu0 0
    %1385 = vmatpush1.bf16.msra.mxu0 0
    %1386 = vmatprep.subr.bf16.mxu0 0
    %1387 = vmatpush1.bf16.msra.mxu0 0
    %1388 = vmatprep.mubr.bf16.mxu0 0
    %1389 = vmatmul.mubr.bf16.gmra.mrb[0].mxu0 %v1354
    %v1390 = vpop.f32.mrb[0].mxu0
    %v1391 = vadd.f32 0.0, %v1390
    %v1392 = vpop.f32.mrb[0].mxu0
    %v1393 = vadd.f32 0.0, %v1392
    %v1394 = vpop.f32.mrb[0].mxu0
    %v1395 = vpop.f32.mrb[0].mxu0
    %1396 = vdwg.mxu0
    %1397 = vmatprep.subr.bf16.mxu0 %v1340
    %1398 = vmatpush1.bf16.msra.mxu0 %v1339
    %1399 = vmatprep.subr.bf16.mxu0 %v1344
    %1400 = vmatpush1.bf16.msra.mxu0 %v1343
    %1401 = vmatprep.subr.bf16.mxu0 %v1348
    %1402 = vmatpush1.bf16.msra.mxu0 %v1347
    %1403 = vmatprep.subr.bf16.mxu0 %v1352
    %1404 = vmatpush1.bf16.msra.mxu0 %v1351
    %1405 = vmatprep.subr.bf16.mxu0 0
    %1406 = vmatpush1.bf16.msra.mxu0 0
    %1407 = vmatprep.subr.bf16.mxu0 0
    %1408 = vmatpush1.bf16.msra.mxu0 0
    %1409 = vmatprep.subr.bf16.mxu0 0
    %1410 = vmatpush1.bf16.msra.mxu0 0
    %1411 = vmatprep.subr.bf16.mxu0 0
    %1412 = vmatpush1.bf16.msra.mxu0 0
    %1413 = vmatprep.subr.bf16.mxu0 0
    %1414 = vmatpush1.bf16.msra.mxu0 0
    %1415 = vmatprep.subr.bf16.mxu0 0
    %1416 = vmatpush1.bf16.msra.mxu0 0
    %1417 = vmatprep.subr.bf16.mxu0 0
    %1418 = vmatpush1.bf16.msra.mxu0 0
    %1419 = vmatprep.subr.bf16.mxu0 0
    %1420 = vmatpush1.bf16.msra.mxu0 0
    %1421 = vmatprep.subr.bf16.mxu0 0
    %1422 = vmatpush1.bf16.msra.mxu0 0
    %1423 = vmatprep.subr.bf16.mxu0 0
    %1424 = vmatpush1.bf16.msra.mxu0 0
    %1425 = vmatprep.subr.bf16.mxu0 0
    %1426 = vmatpush1.bf16.msra.mxu0 0
    %1427 = vmatprep.subr.bf16.mxu0 0
    %1428 = vmatpush1.bf16.msra.mxu0 0
    %1429 = vmatprep.mubr.bf16.mxu0 0
    %1430 = vmatmul.mubr.bf16.gmra.mrb[0].mxu0 %v1354
    %v1431 = vpop.f32.mrb[0].mxu0
    %v1432 = vadd.f32 0.0, %v1431
    %v1433 = vpop.f32.mrb[0].mxu0
    %v1434 = vadd.f32 0.0, %v1433
    %v1435 = vpop.f32.mrb[0].mxu0
    %v1436 = vpop.f32.mrb[0].mxu0
    %1437 = vdwg.mxu0
    %v1442 = vcombine.low %v1391, %v1393
    %v1443 = vcombine.low %v1432, %v1434
    %v1445 = vunpack.c.l.s4 1966171168
    %v1446 = vunpack.c.0.s8 %v1445
    %v1447 = vlaneseq
    %v1448 = vshrl.u32 %v1447, 7
    %v1449 = vsub.s32 %v1446, %v1448
    %v1450 = vrot.slane %v1442, %v1449
    %v1452 = vunpack.c.l.s4 1966171168
    %v1453 = vunpack.c.0.s8 %v1452
    %v1454 = vlaneseq
    %v1455 = vshrl.u32 %v1454, 7
    %v1456 = vsub.s32 %v1453, %v1455
    %v1457 = vrot.slane %v1443, %v1456
    %v1458 = vcombine.low %v1450, %v1457
    %v1460 = vunpack.c.l.s4 1966171168
    %v1461 = vunpack.c.0.s8 %v1460
    %v1462 = vlaneseq
    %v1463 = vshrl.u32 %v1462, 7
    %v1464 = vsub.s32 %v1461, %v1463
    %v1465 = vrot.slane %v1458, %v1464
    %v1467 = vadd.f32 %v1334, %v1465
    %v1468 = vld [vmem:[#allocation3 + $0x2] sm:$0x1]
    %v1469 = vpack.c.bf16 %v1468, %v1468
    %v1470 = vld [vmem:[#allocation2 + $0x100] sm:$0xff]
    %v1471 = vld [vmem:[#allocation2 + $0x108] sm:$0xff]
    %v1472 = vld [vmem:[#allocation2 + $0x110] sm:$0xff]
    %v1473 = vld [vmem:[#allocation2 + $0x118] sm:$0xff]
    %v1474 = vld [vmem:[#allocation2 + $0x120] sm:$0xff]
    %v1475 = vld [vmem:[#allocation2 + $0x128] sm:$0xff]
    %v1476 = vld [vmem:[#allocation2 + $0x130] sm:$0xff]
    %v1477 = vld [vmem:[#allocation2 + $0x138] sm:$0xff]
    %v1478 = vld [vmem:[#allocation2 + $0x140] sm:$0xff]
    %v1479 = vld [vmem:[#allocation2 + $0x148] sm:$0xff]
    %v1480 = vld [vmem:[#allocation2 + $0x150] sm:$0xff]
    %v1481 = vld [vmem:[#allocation2 + $0x158] sm:$0xff]
    %v1482 = vld [vmem:[#allocation2 + $0x160] sm:$0xff]
    %v1483 = vld [vmem:[#allocation2 + $0x168] sm:$0xff]
    %v1484 = vld [vmem:[#allocation2 + $0x170] sm:$0xff]
    %v1485 = vld [vmem:[#allocation2 + $0x178] sm:$0xff]
    %v1487 = vsel %vm761, %v1469, 0
    %1489 = vmatprep.subr.bf16.mxu0 %v1471
    %1490 = vmatpush1.bf16.msra.mxu0 %v1470
    %1491 = vmatprep.subr.bf16.mxu0 %v1475
    %1492 = vmatpush1.bf16.msra.mxu0 %v1474
    %1493 = vmatprep.subr.bf16.mxu0 %v1479
    %1494 = vmatpush1.bf16.msra.mxu0 %v1478
    %1495 = vmatprep.subr.bf16.mxu0 %v1483
    %1496 = vmatpush1.bf16.msra.mxu0 %v1482
    %1497 = vmatprep.subr.bf16.mxu0 0
    %1498 = vmatpush1.bf16.msra.mxu0 0
    %1499 = vmatprep.subr.bf16.mxu0 0
    %1500 = vmatpush1.bf16.msra.mxu0 0
    %1501 = vmatprep.subr.bf16.mxu0 0
    %1502 = vmatpush1.bf16.msra.mxu0 0
    %1503 = vmatprep.subr.bf16.mxu0 0
    %1504 = vmatpush1.bf16.msra.mxu0 0
    %1505 = vmatprep.subr.bf16.mxu0 0
    %1506 = vmatpush1.bf16.msra.mxu0 0
    %1507 = vmatprep.subr.bf16.mxu0 0
    %1508 = vmatpush1.bf16.msra.mxu0 0
    %1509 = vmatprep.subr.bf16.mxu0 0
    %1510 = vmatpush1.bf16.msra.mxu0 0
    %1511 = vmatprep.subr.bf16.mxu0 0
    %1512 = vmatpush1.bf16.msra.mxu0 0
    %1513 = vmatprep.subr.bf16.mxu0 0
    %1514 = vmatpush1.bf16.msra.mxu0 0
    %1515 = vmatprep.subr.bf16.mxu0 0
    %1516 = vmatpush1.bf16.msra.mxu0 0
    %1517 = vmatprep.subr.bf16.mxu0 0
    %1518 = vmatpush1.bf16.msra.mxu0 0
    %1519 = vmatprep.subr.bf16.mxu0 0
    %1520 = vmatpush1.bf16.msra.mxu0 0
    %1521 = vmatprep.mubr.bf16.mxu0 0
    %1522 = vmatmul.mubr.bf16.gmra.mrb[0].mxu0 %v1487
    %v1523 = vpop.f32.mrb[0].mxu0
    %v1524 = vadd.f32 0.0, %v1523
    %v1525 = vpop.f32.mrb[0].mxu0
    %v1526 = vadd.f32 0.0, %v1525
    %v1527 = vpop.f32.mrb[0].mxu0
    %v1528 = vpop.f32.mrb[0].mxu0
    %1529 = vdwg.mxu0
    %1530 = vmatprep.subr.bf16.mxu0 %v1473
    %1531 = vmatpush1.bf16.msra.mxu0 %v1472
    %1532 = vmatprep.subr.bf16.mxu0 %v1477
    %1533 = vmatpush1.bf16.msra.mxu0 %v1476
    %1534 = vmatprep.subr.bf16.mxu0 %v1481
    %1535 = vmatpush1.bf16.msra.mxu0 %v1480
    %1536 = vmatprep.subr.bf16.mxu0 %v1485
    %1537 = vmatpush1.bf16.msra.mxu0 %v1484
    %1538 = vmatprep.subr.bf16.mxu0 0
    %1539 = vmatpush1.bf16.msra.mxu0 0
    %1540 = vmatprep.subr.bf16.mxu0 0
    %1541 = vmatpush1.bf16.msra.mxu0 0
    %1542 = vmatprep.subr.bf16.mxu0 0
    %1543 = vmatpush1.bf16.msra.mxu0 0
    %1544 = vmatprep.subr.bf16.mxu0 0
    %1545 = vmatpush1.bf16.msra.mxu0 0
    %1546 = vmatprep.subr.bf16.mxu0 0
    %1547 = vmatpush1.bf16.msra.mxu0 0
    %1548 = vmatprep.subr.bf16.mxu0 0
    %1549 = vmatpush1.bf16.msra.mxu0 0
    %1550 = vmatprep.subr.bf16.mxu0 0
    %1551 = vmatpush1.bf16.msra.mxu0 0
    %1552 = vmatprep.subr.bf16.mxu0 0
    %1553 = vmatpush1.bf16.msra.mxu0 0
    %1554 = vmatprep.subr.bf16.mxu0 0
    %1555 = vmatpush1.bf16.msra.mxu0 0
    %1556 = vmatprep.subr.bf16.mxu0 0
    %1557 = vmatpush1.bf16.msra.mxu0 0
    %1558 = vmatprep.subr.bf16.mxu0 0
    %1559 = vmatpush1.bf16.msra.mxu0 0
    %1560 = vmatprep.subr.bf16.mxu0 0
    %1561 = vmatpush1.bf16.msra.mxu0 0
    %1562 = vmatprep.mubr.bf16.mxu0 0
    %1563 = vmatmul.mubr.bf16.gmra.mrb[0].mxu0 %v1487
    %v1564 = vpop.f32.mrb[0].mxu0
    %v1565 = vadd.f32 0.0, %v1564
    %v1566 = vpop.f32.mrb[0].mxu0
    %v1567 = vadd.f32 0.0, %v1566
    %v1568 = vpop.f32.mrb[0].mxu0
    %v1569 = vpop.f32.mrb[0].mxu0
    %1570 = vdwg.mxu0
    %v1575 = vcombine.low %v1524, %v1526
    %v1576 = vcombine.low %v1565, %v1567
    %v1578 = vunpack.c.l.s4 1966171168
    %v1579 = vunpack.c.0.s8 %v1578
    %v1580 = vlaneseq
    %v1581 = vshrl.u32 %v1580, 7
    %v1582 = vsub.s32 %v1579, %v1581
    %v1583 = vrot.slane %v1575, %v1582
    %v1585 = vunpack.c.l.s4 1966171168
    %v1586 = vunpack.c.0.s8 %v1585
    %v1587 = vlaneseq
    %v1588 = vshrl.u32 %v1587, 7
    %v1589 = vsub.s32 %v1586, %v1588
    %v1590 = vrot.slane %v1576, %v1589
    %v1591 = vcombine.low %v1583, %v1590
    %v1593 = vunpack.c.l.s4 1966171168
    %v1594 = vunpack.c.0.s8 %v1593
    %v1595 = vlaneseq
    %v1596 = vshrl.u32 %v1595, 7
    %v1597 = vsub.s32 %v1594, %v1596
    %v1598 = vrot.slane %v1591, %v1597
    %v1600 = vadd.f32 %v1467, %v1598
    %v1601 = vld [vmem:[#allocation3 + $0x3] sm:$0x1]
    %v1602 = vpack.c.bf16 %v1601, %v1601
    %v1603 = vld [vmem:[#allocation2 + $0x180] sm:$0xff]
    %v1604 = vld [vmem:[#allocation2 + $0x188] sm:$0xff]
    %v1605 = vld [vmem:[#allocation2 + $0x190] sm:$0xff]
    %v1606 = vld [vmem:[#allocation2 + $0x198] sm:$0xff]
    %v1607 = vld [vmem:[#allocation2 + $0x1a0] sm:$0xff]
    %v1608 = vld [vmem:[#allocation2 + $0x1a8] sm:$0xff]
    %v1609 = vld [vmem:[#allocation2 + $0x1b0] sm:$0xff]
    %v1610 = vld [vmem:[#allocation2 + $0x1b8] sm:$0xff]
    %v1611 = vld [vmem:[#allocation2 + $0x1c0] sm:$0xff]
    %v1612 = vld [vmem:[#allocation2 + $0x1c8] sm:$0xff]
    %v1613 = vld [vmem:[#allocation2 + $0x1d0] sm:$0xff]
    %v1614 = vld [vmem:[#allocation2 + $0x1d8] sm:$0xff]
    %v1615 = vld [vmem:[#allocation2 + $0x1e0] sm:$0xff]
    %v1616 = vld [vmem:[#allocation2 + $0x1e8] sm:$0xff]
    %v1617 = vld [vmem:[#allocation2 + $0x1f0] sm:$0xff]
    %v1618 = vld [vmem:[#allocation2 + $0x1f8] sm:$0xff]
    %v1620 = vsel %vm761, %v1602, 0
    %1622 = vmatprep.subr.bf16.mxu0 %v1604
    %1623 = vmatpush1.bf16.msra.mxu0 %v1603
    %1624 = vmatprep.subr.bf16.mxu0 %v1608
    %1625 = vmatpush1.bf16.msra.mxu0 %v1607
    %1626 = vmatprep.subr.bf16.mxu0 %v1612
    %1627 = vmatpush1.bf16.msra.mxu0 %v1611
    %1628 = vmatprep.subr.bf16.mxu0 %v1616
    %1629 = vmatpush1.bf16.msra.mxu0 %v1615
    %1630 = vmatprep.subr.bf16.mxu0 0
    %1631 = vmatpush1.bf16.msra.mxu0 0
    %1632 = vmatprep.subr.bf16.mxu0 0
    %1633 = vmatpush1.bf16.msra.mxu0 0
    %1634 = vmatprep.subr.bf16.mxu0 0
    %1635 = vmatpush1.bf16.msra.mxu0 0
    %1636 = vmatprep.subr.bf16.mxu0 0
    %1637 = vmatpush1.bf16.msra.mxu0 0
    %1638 = vmatprep.subr.bf16.mxu0 0
    %1639 = vmatpush1.bf16.msra.mxu0 0
    %1640 = vmatprep.subr.bf16.mxu0 0
    %1641 = vmatpush1.bf16.msra.mxu0 0
    %1642 = vmatprep.subr.bf16.mxu0 0
    %1643 = vmatpush1.bf16.msra.mxu0 0
    %1644 = vmatprep.subr.bf16.mxu0 0
    %1645 = vmatpush1.bf16.msra.mxu0 0
    %1646 = vmatprep.subr.bf16.mxu0 0
    %1647 = vmatpush1.bf16.msra.mxu0 0
    %1648 = vmatprep.subr.bf16.mxu0 0
    %1649 = vmatpush1.bf16.msra.mxu0 0
    %1650 = vmatprep.subr.bf16.mxu0 0
    %1651 = vmatpush1.bf16.msra.mxu0 0
    %1652 = vmatprep.subr.bf16.mxu0 0
    %1653 = vmatpush1.bf16.msra.mxu0 0
    %1654 = vmatprep.mubr.bf16.mxu0 0
    %1655 = vmatmul.mubr.bf16.gmra.mrb[0].mxu0 %v1620
    %v1656 = vpop.f32.mrb[0].mxu0
    %v1657 = vadd.f32 0.0, %v1656
    %v1658 = vpop.f32.mrb[0].mxu0
    %v1659 = vadd.f32 0.0, %v1658
    %v1660 = vpop.f32.mrb[0].mxu0
    %v1661 = vpop.f32.mrb[0].mxu0
    %1662 = vdwg.mxu0
    %1663 = vmatprep.subr.bf16.mxu0 %v1606
    %1664 = vmatpush1.bf16.msra.mxu0 %v1605
    %1665 = vmatprep.subr.bf16.mxu0 %v1610
    %1666 = vmatpush1.bf16.msra.mxu0 %v1609
    %1667 = vmatprep.subr.bf16.mxu0 %v1614
    %1668 = vmatpush1.bf16.msra.mxu0 %v1613
    %1669 = vmatprep.subr.bf16.mxu0 %v1618
    %1670 = vmatpush1.bf16.msra.mxu0 %v1617
    %1671 = vmatprep.subr.bf16.mxu0 0
    %1672 = vmatpush1.bf16.msra.mxu0 0
    %1673 = vmatprep.subr.bf16.mxu0 0
    %1674 = vmatpush1.bf16.msra.mxu0 0
    %1675 = vmatprep.subr.bf16.mxu0 0
    %1676 = vmatpush1.bf16.msra.mxu0 0
    %1677 = vmatprep.subr.bf16.mxu0 0
    %1678 = vmatpush1.bf16.msra.mxu0 0
    %1679 = vmatprep.subr.bf16.mxu0 0
    %1680 = vmatpush1.bf16.msra.mxu0 0
    %1681 = vmatprep.subr.bf16.mxu0 0
    %1682 = vmatpush1.bf16.msra.mxu0 0
    %1683 = vmatprep.subr.bf16.mxu0 0
    %1684 = vmatpush1.bf16.msra.mxu0 0
    %1685 = vmatprep.subr.bf16.mxu0 0
    %1686 = vmatpush1.bf16.msra.mxu0 0
    %1687 = vmatprep.subr.bf16.mxu0 0
    %1688 = vmatpush1.bf16.msra.mxu0 0
    %1689 = vmatprep.subr.bf16.mxu0 0
    %1690 = vmatpush1.bf16.msra.mxu0 0
    %1691 = vmatprep.subr.bf16.mxu0 0
    %1692 = vmatpush1.bf16.msra.mxu0 0
    %1693 = vmatprep.subr.bf16.mxu0 0
    %1694 = vmatpush1.bf16.msra.mxu0 0
    %1695 = vmatprep.mubr.bf16.mxu0 0
    %1696 = vmatmul.mubr.bf16.gmra.mrb[0].mxu0 %v1620
    %v1697 = vpop.f32.mrb[0].mxu0
    %v1698 = vadd.f32 0.0, %v1697
    %v1699 = vpop.f32.mrb[0].mxu0
    %v1700 = vadd.f32 0.0, %v1699
    %v1701 = vpop.f32.mrb[0].mxu0
    %v1702 = vpop.f32.mrb[0].mxu0
    %1703 = vdwg.mxu0
    %v1708 = vcombine.low %v1657, %v1659
    %v1709 = vcombine.low %v1698, %v1700
    %v1711 = vunpack.c.l.s4 1966171168
    %v1712 = vunpack.c.0.s8 %v1711
    %v1713 = vlaneseq
    %v1714 = vshrl.u32 %v1713, 7
    %v1715 = vsub.s32 %v1712, %v1714
    %v1716 = vrot.slane %v1708, %v1715
    %v1718 = vunpack.c.l.s4 1966171168
    %v1719 = vunpack.c.0.s8 %v1718
    %v1720 = vlaneseq
    %v1721 = vshrl.u32 %v1720, 7
    %v1722 = vsub.s32 %v1719, %v1721
    %v1723 = vrot.slane %v1709, %v1722
    %v1724 = vcombine.low %v1716, %v1723
    %v1726 = vunpack.c.l.s4 1966171168
    %v1727 = vunpack.c.0.s8 %v1726
    %v1728 = vlaneseq
    %v1729 = vshrl.u32 %v1728, 7
    %v1730 = vsub.s32 %v1727, %v1729
    %v1731 = vrot.slane %v1724, %v1730
    %v1733 = vadd.f32 %v1600, %v1731
    %v1734 = vld [vmem:[#allocation3 + $0x4] sm:$0x1]
    %v1735 = vpack.c.bf16 %v1734, %v1734
    %v1736 = vld [vmem:[#allocation2 + $0x200] sm:$0xff]
    %v1737 = vld [vmem:[#allocation2 + $0x208] sm:$0xff]
    %v1738 = vld [vmem:[#allocation2 + $0x210] sm:$0xff]
    %v1739 = vld [vmem:[#allocation2 + $0x218] sm:$0xff]
    %v1740 = vld [vmem:[#allocation2 + $0x220] sm:$0xff]
    %v1741 = vld [vmem:[#allocation2 + $0x228] sm:$0xff]
    %v1742 = vld [vmem:[#allocation2 + $0x230] sm:$0xff]
    %v1743 = vld [vmem:[#allocation2 + $0x238] sm:$0xff]
    %v1744 = vld [vmem:[#allocation2 + $0x240] sm:$0xff]
    %v1745 = vld [vmem:[#allocation2 + $0x248] sm:$0xff]
    %v1746 = vld [vmem:[#allocation2 + $0x250] sm:$0xff]
    %v1747 = vld [vmem:[#allocation2 + $0x258] sm:$0xff]
    %v1748 = vld [vmem:[#allocation2 + $0x260] sm:$0xff]
    %v1749 = vld [vmem:[#allocation2 + $0x268] sm:$0xff]
    %v1750 = vld [vmem:[#allocation2 + $0x270] sm:$0xff]
    %v1751 = vld [vmem:[#allocation2 + $0x278] sm:$0xff]
    %v1753 = vsel %vm761, %v1735, 0
    %1755 = vmatprep.subr.bf16.mxu0 %v1737
    %1756 = vmatpush1.bf16.msra.mxu0 %v1736
    %1757 = vmatprep.subr.bf16.mxu0 %v1741
    %1758 = vmatpush1.bf16.msra.mxu0 %v1740
    %1759 = vmatprep.subr.bf16.mxu0 %v1745
    %1760 = vmatpush1.bf16.msra.mxu0 %v1744
    %1761 = vmatprep.subr.bf16.mxu0 %v1749
    %1762 = vmatpush1.bf16.msra.mxu0 %v1748
    %1763 = vmatprep.subr.bf16.mxu0 0
    %1764 = vmatpush1.bf16.msra.mxu0 0
    %1765 = vmatprep.subr.bf16.mxu0 0
    %1766 = vmatpush1.bf16.msra.mxu0 0
    %1767 = vmatprep.subr.bf16.mxu0 0
    %1768 = vmatpush1.bf16.msra.mxu0 0
    %1769 = vmatprep.subr.bf16.mxu0 0
    %1770 = vmatpush1.bf16.msra.mxu0 0
    %1771 = vmatprep.subr.bf16.mxu0 0
    %1772 = vmatpush1.bf16.msra.mxu0 0
    %1773 = vmatprep.subr.bf16.mxu0 0
    %1774 = vmatpush1.bf16.msra.mxu0 0
    %1775 = vmatprep.subr.bf16.mxu0 0
    %1776 = vmatpush1.bf16.msra.mxu0 0
    %1777 = vmatprep.subr.bf16.mxu0 0
    %1778 = vmatpush1.bf16.msra.mxu0 0
    %1779 = vmatprep.subr.bf16.mxu0 0
    %1780 = vmatpush1.bf16.msra.mxu0 0
    %1781 = vmatprep.subr.bf16.mxu0 0
    %1782 = vmatpush1.bf16.msra.mxu0 0
    %1783 = vmatprep.subr.bf16.mxu0 0
    %1784 = vmatpush1.bf16.msra.mxu0 0
    %1785 = vmatprep.subr.bf16.mxu0 0
    %1786 = vmatpush1.bf16.msra.mxu0 0
    %1787 = vmatprep.mubr.bf16.mxu0 0
    %1788 = vmatmul.mubr.bf16.gmra.mrb[0].mxu0 %v1753
    %v1789 = vpop.f32.mrb[0].mxu0
    %v1790 = vadd.f32 0.0, %v1789
    %v1791 = vpop.f32.mrb[0].mxu0
    %v1792 = vadd.f32 0.0, %v1791
    %v1793 = vpop.f32.mrb[0].mxu0
    %v1794 = vpop.f32.mrb[0].mxu0
    %1795 = vdwg.mxu0
    %1796 = vmatprep.subr.bf16.mxu0 %v1739
    %1797 = vmatpush1.bf16.msra.mxu0 %v1738
    %1798 = vmatprep.subr.bf16.mxu0 %v1743
    %1799 = vmatpush1.bf16.msra.mxu0 %v1742
    %1800 = vmatprep.subr.bf16.mxu0 %v1747
    %1801 = vmatpush1.bf16.msra.mxu0 %v1746
    %1802 = vmatprep.subr.bf16.mxu0 %v1751
    %1803 = vmatpush1.bf16.msra.mxu0 %v1750
    %1804 = vmatprep.subr.bf16.mxu0 0
    %1805 = vmatpush1.bf16.msra.mxu0 0
    %1806 = vmatprep.subr.bf16.mxu0 0
    %1807 = vmatpush1.bf16.msra.mxu0 0
    %1808 = vmatprep.subr.bf16.mxu0 0
    %1809 = vmatpush1.bf16.msra.mxu0 0
    %1810 = vmatprep.subr.bf16.mxu0 0
    %1811 = vmatpush1.bf16.msra.mxu0 0
    %1812 = vmatprep.subr.bf16.mxu0 0
    %1813 = vmatpush1.bf16.msra.mxu0 0
    %1814 = vmatprep.subr.bf16.mxu0 0
    %1815 = vmatpush1.bf16.msra.mxu0 0
    %1816 = vmatprep.subr.bf16.mxu0 0
    %1817 = vmatpush1.bf16.msra.mxu0 0
    %1818 = vmatprep.subr.bf16.mxu0 0
    %1819 = vmatpush1.bf16.msra.mxu0 0
    %1820 = vmatprep.subr.bf16.mxu0 0
    %1821 = vmatpush1.bf16.msra.mxu0 0
    %1822 = vmatprep.subr.bf16.mxu0 0
    %1823 = vmatpush1.bf16.msra.mxu0 0
    %1824 = vmatprep.subr.bf16.mxu0 0
    %1825 = vmatpush1.bf16.msra.mxu0 0
    %1826 = vmatprep.subr.bf16.mxu0 0
    %1827 = vmatpush1.bf16.msra.mxu0 0
    %1828 = vmatprep.mubr.bf16.mxu0 0
    %1829 = vmatmul.mubr.bf16.gmra.mrb[0].mxu0 %v1753
    %v1830 = vpop.f32.mrb[0].mxu0
    %v1831 = vadd.f32 0.0, %v1830
    %v1832 = vpop.f32.mrb[0].mxu0
    %v1833 = vadd.f32 0.0, %v1832
    %v1834 = vpop.f32.mrb[0].mxu0
    %v1835 = vpop.f32.mrb[0].mxu0
    %1836 = vdwg.mxu0
    %v1841 = vcombine.low %v1790, %v1792
    %v1842 = vcombine.low %v1831, %v1833
    %v1844 = vunpack.c.l.s4 1966171168
    %v1845 = vunpack.c.0.s8 %v1844
    %v1846 = vlaneseq
    %v1847 = vshrl.u32 %v1846, 7
    %v1848 = vsub.s32 %v1845, %v1847
    %v1849 = vrot.slane %v1841, %v1848
    %v1851 = vunpack.c.l.s4 1966171168
    %v1852 = vunpack.c.0.s8 %v1851
    %v1853 = vlaneseq
    %v1854 = vshrl.u32 %v1853, 7
    %v1855 = vsub.s32 %v1852, %v1854
    %v1856 = vrot.slane %v1842, %v1855
    %v1857 = vcombine.low %v1849, %v1856
    %v1859 = vunpack.c.l.s4 1966171168
    %v1860 = vunpack.c.0.s8 %v1859
    %v1861 = vlaneseq
    %v1862 = vshrl.u32 %v1861, 7
    %v1863 = vsub.s32 %v1860, %v1862
    %v1864 = vrot.slane %v1857, %v1863
    %v1866 = vadd.f32 %v1733, %v1864
    %v1867 = vld [vmem:[#allocation3 + $0x5] sm:$0x1]
    %v1868 = vpack.c.bf16 %v1867, %v1867
    %v1869 = vld [vmem:[#allocation2 + $0x280] sm:$0xff]
    %v1870 = vld [vmem:[#allocation2 + $0x288] sm:$0xff]
    %v1871 = vld [vmem:[#allocation2 + $0x290] sm:$0xff]
    %v1872 = vld [vmem:[#allocation2 + $0x298] sm:$0xff]
    %v1873 = vld [vmem:[#allocation2 + $0x2a0] sm:$0xff]
    %v1874 = vld [vmem:[#allocation2 + $0x2a8] sm:$0xff]
    %v1875 = vld [vmem:[#allocation2 + $0x2b0] sm:$0xff]
    %v1876 = vld [vmem:[#allocation2 + $0x2b8] sm:$0xff]
    %v1877 = vld [vmem:[#allocation2 + $0x2c0] sm:$0xff]
    %v1878 = vld [vmem:[#allocation2 + $0x2c8] sm:$0xff]
    %v1879 = vld [vmem:[#allocation2 + $0x2d0] sm:$0xff]
    %v1880 = vld [vmem:[#allocation2 + $0x2d8] sm:$0xff]
    %v1881 = vld [vmem:[#allocation2 + $0x2e0] sm:$0xff]
    %v1882 = vld [vmem:[#allocation2 + $0x2e8] sm:$0xff]
    %v1883 = vld [vmem:[#allocation2 + $0x2f0] sm:$0xff]
    %v1884 = vld [vmem:[#allocation2 + $0x2f8] sm:$0xff]
    %v1886 = vsel %vm761, %v1868, 0
    %1888 = vmatprep.subr.bf16.mxu0 %v1870
    %1889 = vmatpush1.bf16.msra.mxu0 %v1869
    %1890 = vmatprep.subr.bf16.mxu0 %v1874
    %1891 = vmatpush1.bf16.msra.mxu0 %v1873
    %1892 = vmatprep.subr.bf16.mxu0 %v1878
    %1893 = vmatpush1.bf16.msra.mxu0 %v1877
    %1894 = vmatprep.subr.bf16.mxu0 %v1882
    %1895 = vmatpush1.bf16.msra.mxu0 %v1881
    %1896 = vmatprep.subr.bf16.mxu0 0
    %1897 = vmatpush1.bf16.msra.mxu0 0
    %1898 = vmatprep.subr.bf16.mxu0 0
    %1899 = vmatpush1.bf16.msra.mxu0 0
    %1900 = vmatprep.subr.bf16.mxu0 0
    %1901 = vmatpush1.bf16.msra.mxu0 0
    %1902 = vmatprep.subr.bf16.mxu0 0
    %1903 = vmatpush1.bf16.msra.mxu0 0
    %1904 = vmatprep.subr.bf16.mxu0 0
    %1905 = vmatpush1.bf16.msra.mxu0 0
    %1906 = vmatprep.subr.bf16.mxu0 0
    %1907 = vmatpush1.bf16.msra.mxu0 0
    %1908 = vmatprep.subr.bf16.mxu0 0
    %1909 = vmatpush1.bf16.msra.mxu0 0
    %1910 = vmatprep.subr.bf16.mxu0 0
    %1911 = vmatpush1.bf16.msra.mxu0 0
    %1912 = vmatprep.subr.bf16.mxu0 0
    %1913 = vmatpush1.bf16.msra.mxu0 0
    %1914 = vmatprep.subr.bf16.mxu0 0
    %1915 = vmatpush1.bf16.msra.mxu0 0
    %1916 = vmatprep.subr.bf16.mxu0 0
    %1917 = vmatpush1.bf16.msra.mxu0 0
    %1918 = vmatprep.subr.bf16.mxu0 0
    %1919 = vmatpush1.bf16.msra.mxu0 0
    %1920 = vmatprep.mubr.bf16.mxu0 0
    %1921 = vmatmul.mubr.bf16.gmra.mrb[0].mxu0 %v1886
    %v1922 = vpop.f32.mrb[0].mxu0
    %v1923 = vadd.f32 0.0, %v1922
    %v1924 = vpop.f32.mrb[0].mxu0
    %v1925 = vadd.f32 0.0, %v1924
    %v1926 = vpop.f32.mrb[0].mxu0
    %v1927 = vpop.f32.mrb[0].mxu0
    %1928 = vdwg.mxu0
    %1929 = vmatprep.subr.bf16.mxu0 %v1872
    %1930 = vmatpush1.bf16.msra.mxu0 %v1871
    %1931 = vmatprep.subr.bf16.mxu0 %v1876
    %1932 = vmatpush1.bf16.msra.mxu0 %v1875
    %1933 = vmatprep.subr.bf16.mxu0 %v1880
    %1934 = vmatpush1.bf16.msra.mxu0 %v1879
    %1935 = vmatprep.subr.bf16.mxu0 %v1884
    %1936 = vmatpush1.bf16.msra.mxu0 %v1883
    %1937 = vmatprep.subr.bf16.mxu0 0
    %1938 = vmatpush1.bf16.msra.mxu0 0
    %1939 = vmatprep.subr.bf16.mxu0 0
    %1940 = vmatpush1.bf16.msra.mxu0 0
    %1941 = vmatprep.subr.bf16.mxu0 0
    %1942 = vmatpush1.bf16.msra.mxu0 0
    %1943 = vmatprep.subr.bf16.mxu0 0
    %1944 = vmatpush1.bf16.msra.mxu0 0
    %1945 = vmatprep.subr.bf16.mxu0 0
    %1946 = vmatpush1.bf16.msra.mxu0 0
    %1947 = vmatprep.subr.bf16.mxu0 0
    %1948 = vmatpush1.bf16.msra.mxu0 0
    %1949 = vmatprep.subr.bf16.mxu0 0
    %1950 = vmatpush1.bf16.msra.mxu0 0
    %1951 = vmatprep.subr.bf16.mxu0 0
    %1952 = vmatpush1.bf16.msra.mxu0 0
    %1953 = vmatprep.subr.bf16.mxu0 0
    %1954 = vmatpush1.bf16.msra.mxu0 0
    %1955 = vmatprep.subr.bf16.mxu0 0
    %1956 = vmatpush1.bf16.msra.mxu0 0
    %1957 = vmatprep.subr.bf16.mxu0 0
    %1958 = vmatpush1.bf16.msra.mxu0 0
    %1959 = vmatprep.subr.bf16.mxu0 0
    %1960 = vmatpush1.bf16.msra.mxu0 0
    %1961 = vmatprep.mubr.bf16.mxu0 0
    %1962 = vmatmul.mubr.bf16.gmra.mrb[0].mxu0 %v1886
    %v1963 = vpop.f32.mrb[0].mxu0
    %v1964 = vadd.f32 0.0, %v1963
    %v1965 = vpop.f32.mrb[0].mxu0
    %v1966 = vadd.f32 0.0, %v1965
    %v1967 = vpop.f32.mrb[0].mxu0
    %v1968 = vpop.f32.mrb[0].mxu0
    %1969 = vdwg.mxu0
    %v1974 = vcombine.low %v1923, %v1925
    %v1975 = vcombine.low %v1964, %v1966
    %v1977 = vunpack.c.l.s4 1966171168
    %v1978 = vunpack.c.0.s8 %v1977
    %v1979 = vlaneseq
    %v1980 = vshrl.u32 %v1979, 7
    %v1981 = vsub.s32 %v1978, %v1980
    %v1982 = vrot.slane %v1974, %v1981
    %v1984 = vunpack.c.l.s4 1966171168
    %v1985 = vunpack.c.0.s8 %v1984
    %v1986 = vlaneseq
    %v1987 = vshrl.u32 %v1986, 7
    %v1988 = vsub.s32 %v1985, %v1987
    %v1989 = vrot.slane %v1975, %v1988
    %v1990 = vcombine.low %v1982, %v1989
    %v1992 = vunpack.c.l.s4 1966171168
    %v1993 = vunpack.c.0.s8 %v1992
    %v1994 = vlaneseq
    %v1995 = vshrl.u32 %v1994, 7
    %v1996 = vsub.s32 %v1993, %v1995
    %v1997 = vrot.slane %v1990, %v1996
    %v1999 = vadd.f32 %v1866, %v1997
    %v2000 = vld [vmem:[#allocation3 + $0x6] sm:$0x1]
    %v2001 = vpack.c.bf16 %v2000, %v2000
    %v2002 = vld [vmem:[#allocation2 + $0x300] sm:$0xff]
    %v2003 = vld [vmem:[#allocation2 + $0x308] sm:$0xff]
    %v2004 = vld [vmem:[#allocation2 + $0x310] sm:$0xff]
    %v2005 = vld [vmem:[#allocation2 + $0x318] sm:$0xff]
    %v2006 = vld [vmem:[#allocation2 + $0x320] sm:$0xff]
    %v2007 = vld [vmem:[#allocation2 + $0x328] sm:$0xff]
    %v2008 = vld [vmem:[#allocation2 + $0x330] sm:$0xff]
    %v2009 = vld [vmem:[#allocation2 + $0x338] sm:$0xff]
    %v2010 = vld [vmem:[#allocation2 + $0x340] sm:$0xff]
    %v2011 = vld [vmem:[#allocation2 + $0x348] sm:$0xff]
    %v2012 = vld [vmem:[#allocation2 + $0x350] sm:$0xff]
    %v2013 = vld [vmem:[#allocation2 + $0x358] sm:$0xff]
    %v2014 = vld [vmem:[#allocation2 + $0x360] sm:$0xff]
    %v2015 = vld [vmem:[#allocation2 + $0x368] sm:$0xff]
    %v2016 = vld [vmem:[#allocation2 + $0x370] sm:$0xff]
    %v2017 = vld [vmem:[#allocation2 + $0x378] sm:$0xff]
    %v2019 = vsel %vm761, %v2001, 0
    %2021 = vmatprep.subr.bf16.mxu0 %v2003
    %2022 = vmatpush1.bf16.msra.mxu0 %v2002
    %2023 = vmatprep.subr.bf16.mxu0 %v2007
    %2024 = vmatpush1.bf16.msra.mxu0 %v2006
    %2025 = vmatprep.subr.bf16.mxu0 %v2011
    %2026 = vmatpush1.bf16.msra.mxu0 %v2010
    %2027 = vmatprep.subr.bf16.mxu0 %v2015
    %2028 = vmatpush1.bf16.msra.mxu0 %v2014
    %2029 = vmatprep.subr.bf16.mxu0 0
    %2030 = vmatpush1.bf16.msra.mxu0 0
    %2031 = vmatprep.subr.bf16.mxu0 0
    %2032 = vmatpush1.bf16.msra.mxu0 0
    %2033 = vmatprep.subr.bf16.mxu0 0
    %2034 = vmatpush1.bf16.msra.mxu0 0
    %2035 = vmatprep.subr.bf16.mxu0 0
    %2036 = vmatpush1.bf16.msra.mxu0 0
    %2037 = vmatprep.subr.bf16.mxu0 0
    %2038 = vmatpush1.bf16.msra.mxu0 0
    %2039 = vmatprep.subr.bf16.mxu0 0
    %2040 = vmatpush1.bf16.msra.mxu0 0
    %2041 = vmatprep.subr.bf16.mxu0 0
    %2042 = vmatpush1.bf16.msra.mxu0 0
    %2043 = vmatprep.subr.bf16.mxu0 0
    %2044 = vmatpush1.bf16.msra.mxu0 0
    %2045 = vmatprep.subr.bf16.mxu0 0
    %2046 = vmatpush1.bf16.msra.mxu0 0
    %2047 = vmatprep.subr.bf16.mxu0 0
    %2048 = vmatpush1.bf16.msra.mxu0 0
    %2049 = vmatprep.subr.bf16.mxu0 0
    %2050 = vmatpush1.bf16.msra.mxu0 0
    %2051 = vmatprep.subr.bf16.mxu0 0
    %2052 = vmatpush1.bf16.msra.mxu0 0
    %2053 = vmatprep.mubr.bf16.mxu0 0
    %2054 = vmatmul.mubr.bf16.gmra.mrb[0].mxu0 %v2019
    %v2055 = vpop.f32.mrb[0].mxu0
    %v2056 = vadd.f32 0.0, %v2055
    %v2057 = vpop.f32.mrb[0].mxu0
    %v2058 = vadd.f32 0.0, %v2057
    %v2059 = vpop.f32.mrb[0].mxu0
    %v2060 = vpop.f32.mrb[0].mxu0
    %2061 = vdwg.mxu0
    %2062 = vmatprep.subr.bf16.mxu0 %v2005
    %2063 = vmatpush1.bf16.msra.mxu0 %v2004
    %2064 = vmatprep.subr.bf16.mxu0 %v2009
    %2065 = vmatpush1.bf16.msra.mxu0 %v2008
    %2066 = vmatprep.subr.bf16.mxu0 %v2013
    %2067 = vmatpush1.bf16.msra.mxu0 %v2012
    %2068 = vmatprep.subr.bf16.mxu0 %v2017
    %2069 = vmatpush1.bf16.msra.mxu0 %v2016
    %2070 = vmatprep.subr.bf16.mxu0 0
    %2071 = vmatpush1.bf16.msra.mxu0 0
    %2072 = vmatprep.subr.bf16.mxu0 0
    %2073 = vmatpush1.bf16.msra.mxu0 0
    %2074 = vmatprep.subr.bf16.mxu0 0
    %2075 = vmatpush1.bf16.msra.mxu0 0
    %2076 = vmatprep.subr.bf16.mxu0 0
    %2077 = vmatpush1.bf16.msra.mxu0 0
    %2078 = vmatprep.subr.bf16.mxu0 0
    %2079 = vmatpush1.bf16.msra.mxu0 0
    %2080 = vmatprep.subr.bf16.mxu0 0
    %2081 = vmatpush1.bf16.msra.mxu0 0
    %2082 = vmatprep.subr.bf16.mxu0 0
    %2083 = vmatpush1.bf16.msra.mxu0 0
    %2084 = vmatprep.subr.bf16.mxu0 0
    %2085 = vmatpush1.bf16.msra.mxu0 0
    %2086 = vmatprep.subr.bf16.mxu0 0
    %2087 = vmatpush1.bf16.msra.mxu0 0
    %2088 = vmatprep.subr.bf16.mxu0 0
    %2089 = vmatpush1.bf16.msra.mxu0 0
    %2090 = vmatprep.subr.bf16.mxu0 0
    %2091 = vmatpush1.bf16.msra.mxu0 0
    %2092 = vmatprep.subr.bf16.mxu0 0
    %2093 = vmatpush1.bf16.msra.mxu0 0
    %2094 = vmatprep.mubr.bf16.mxu0 0
    %2095 = vmatmul.mubr.bf16.gmra.mrb[0].mxu0 %v2019
    %v2096 = vpop.f32.mrb[0].mxu0
    %v2097 = vadd.f32 0.0, %v2096
    %v2098 = vpop.f32.mrb[0].mxu0
    %v2099 = vadd.f32 0.0, %v2098
    %v2100 = vpop.f32.mrb[0].mxu0
    %v2101 = vpop.f32.mrb[0].mxu0
    %2102 = vdwg.mxu0
    %v2107 = vcombine.low %v2056, %v2058
    %v2108 = vcombine.low %v2097, %v2099
    %v2110 = vunpack.c.l.s4 1966171168
    %v2111 = vunpack.c.0.s8 %v2110
    %v2112 = vlaneseq
    %v2113 = vshrl.u32 %v2112, 7
    %v2114 = vsub.s32 %v2111, %v2113
    %v2115 = vrot.slane %v2107, %v2114
    %v2117 = vunpack.c.l.s4 1966171168
    %v2118 = vunpack.c.0.s8 %v2117
    %v2119 = vlaneseq
    %v2120 = vshrl.u32 %v2119, 7
    %v2121 = vsub.s32 %v2118, %v2120
    %v2122 = vrot.slane %v2108, %v2121
    %v2123 = vcombine.low %v2115, %v2122
    %v2125 = vunpack.c.l.s4 1966171168
    %v2126 = vunpack.c.0.s8 %v2125
    %v2127 = vlaneseq
    %v2128 = vshrl.u32 %v2127, 7
    %v2129 = vsub.s32 %v2126, %v2128
    %v2130 = vrot.slane %v2123, %v2129
    %v2132 = vadd.f32 %v1999, %v2130
    %v2133 = vld [vmem:[#allocation3 + $0x7] sm:$0x1]
    %v2134 = vpack.c.bf16 %v2133, %v2133
    %v2135 = vld [vmem:[#allocation2 + $0x380] sm:$0xff]
    %v2136 = vld [vmem:[#allocation2 + $0x388] sm:$0xff]
    %v2137 = vld [vmem:[#allocation2 + $0x390] sm:$0xff]
    %v2138 = vld [vmem:[#allocation2 + $0x398] sm:$0xff]
    %v2139 = vld [vmem:[#allocation2 + $0x3a0] sm:$0xff]
    %v2140 = vld [vmem:[#allocation2 + $0x3a8] sm:$0xff]
    %v2141 = vld [vmem:[#allocation2 + $0x3b0] sm:$0xff]
    %v2142 = vld [vmem:[#allocation2 + $0x3b8] sm:$0xff]
    %v2143 = vld [vmem:[#allocation2 + $0x3c0] sm:$0xff]
    %v2144 = vld [vmem:[#allocation2 + $0x3c8] sm:$0xff]
    %v2145 = vld [vmem:[#allocation2 + $0x3d0] sm:$0xff]
    %v2146 = vld [vmem:[#allocation2 + $0x3d8] sm:$0xff]
    %v2147 = vld [vmem:[#allocation2 + $0x3e0] sm:$0xff]
    %v2148 = vld [vmem:[#allocation2 + $0x3e8] sm:$0xff]
    %v2149 = vld [vmem:[#allocation2 + $0x3f0] sm:$0xff]
    %v2150 = vld [vmem:[#allocation2 + $0x3f8] sm:$0xff]
    %v2152 = vsel %vm761, %v2134, 0
    %2154 = vmatprep.subr.bf16.mxu0 %v2136
    %2155 = vmatpush1.bf16.msra.mxu0 %v2135
    %2156 = vmatprep.subr.bf16.mxu0 %v2140
    %2157 = vmatpush1.bf16.msra.mxu0 %v2139
    %2158 = vmatprep.subr.bf16.mxu0 %v2144
    %2159 = vmatpush1.bf16.msra.mxu0 %v2143
    %2160 = vmatprep.subr.bf16.mxu0 %v2148
    %2161 = vmatpush1.bf16.msra.mxu0 %v2147
    %2162 = vmatprep.subr.bf16.mxu0 0
    %2163 = vmatpush1.bf16.msra.mxu0 0
    %2164 = vmatprep.subr.bf16.mxu0 0
    %2165 = vmatpush1.bf16.msra.mxu0 0
    %2166 = vmatprep.subr.bf16.mxu0 0
    %2167 = vmatpush1.bf16.msra.mxu0 0
    %2168 = vmatprep.subr.bf16.mxu0 0
    %2169 = vmatpush1.bf16.msra.mxu0 0
    %2170 = vmatprep.subr.bf16.mxu0 0
    %2171 = vmatpush1.bf16.msra.mxu0 0
    %2172 = vmatprep.subr.bf16.mxu0 0
    %2173 = vmatpush1.bf16.msra.mxu0 0
    %2174 = vmatprep.subr.bf16.mxu0 0
    %2175 = vmatpush1.bf16.msra.mxu0 0
    %2176 = vmatprep.subr.bf16.mxu0 0
    %2177 = vmatpush1.bf16.msra.mxu0 0
    %2178 = vmatprep.subr.bf16.mxu0 0
    %2179 = vmatpush1.bf16.msra.mxu0 0
    %2180 = vmatprep.subr.bf16.mxu0 0
    %2181 = vmatpush1.bf16.msra.mxu0 0
    %2182 = vmatprep.subr.bf16.mxu0 0
    %2183 = vmatpush1.bf16.msra.mxu0 0
    %2184 = vmatprep.subr.bf16.mxu0 0
    %2185 = vmatpush1.bf16.msra.mxu0 0
    %2186 = vmatprep.mubr.bf16.mxu0 0
    %2187 = vmatmul.mubr.bf16.gmra.mrb[0].mxu0 %v2152
    %v2188 = vpop.f32.mrb[0].mxu0
    %v2189 = vadd.f32 0.0, %v2188
    %v2190 = vpop.f32.mrb[0].mxu0
    %v2191 = vadd.f32 0.0, %v2190
    %v2192 = vpop.f32.mrb[0].mxu0
    %v2193 = vpop.f32.mrb[0].mxu0
    %2194 = vdwg.mxu0
    %2195 = vmatprep.subr.bf16.mxu0 %v2138
    %2196 = vmatpush1.bf16.msra.mxu0 %v2137
    %2197 = vmatprep.subr.bf16.mxu0 %v2142
    %2198 = vmatpush1.bf16.msra.mxu0 %v2141
    %2199 = vmatprep.subr.bf16.mxu0 %v2146
    %2200 = vmatpush1.bf16.msra.mxu0 %v2145
    %2201 = vmatprep.subr.bf16.mxu0 %v2150
    %2202 = vmatpush1.bf16.msra.mxu0 %v2149
    %2203 = vmatprep.subr.bf16.mxu0 0
    %2204 = vmatpush1.bf16.msra.mxu0 0
    %2205 = vmatprep.subr.bf16.mxu0 0
    %2206 = vmatpush1.bf16.msra.mxu0 0
    %2207 = vmatprep.subr.bf16.mxu0 0
    %2208 = vmatpush1.bf16.msra.mxu0 0
    %2209 = vmatprep.subr.bf16.mxu0 0
    %2210 = vmatpush1.bf16.msra.mxu0 0
    %2211 = vmatprep.subr.bf16.mxu0 0
    %2212 = vmatpush1.bf16.msra.mxu0 0
    %2213 = vmatprep.subr.bf16.mxu0 0
    %2214 = vmatpush1.bf16.msra.mxu0 0
    %2215 = vmatprep.subr.bf16.mxu0 0
    %2216 = vmatpush1.bf16.msra.mxu0 0
    %2217 = vmatprep.subr.bf16.mxu0 0
    %2218 = vmatpush1.bf16.msra.mxu0 0
    %2219 = vmatprep.subr.bf16.mxu0 0
    %2220 = vmatpush1.bf16.msra.mxu0 0
    %2221 = vmatprep.subr.bf16.mxu0 0
    %2222 = vmatpush1.bf16.msra.mxu0 0
    %2223 = vmatprep.subr.bf16.mxu0 0
    %2224 = vmatpush1.bf16.msra.mxu0 0
    %2225 = vmatprep.subr.bf16.mxu0 0
    %2226 = vmatpush1.bf16.msra.mxu0 0
    %2227 = vmatprep.mubr.bf16.mxu0 0
    %2228 = vmatmul.mubr.bf16.gmra.mrb[0].mxu0 %v2152
    %v2229 = vpop.f32.mrb[0].mxu0
    %v2230 = vadd.f32 0.0, %v2229
    %v2231 = vpop.f32.mrb[0].mxu0
    %v2232 = vadd.f32 0.0, %v2231
    %v2233 = vpop.f32.mrb[0].mxu0
    %v2234 = vpop.f32.mrb[0].mxu0
    %2235 = vdwg.mxu0
    %v2240 = vcombine.low %v2189, %v2191
    %v2241 = vcombine.low %v2230, %v2232
    %v2243 = vunpack.c.l.s4 1966171168
    %v2244 = vunpack.c.0.s8 %v2243
    %v2245 = vlaneseq
    %v2246 = vshrl.u32 %v2245, 7
    %v2247 = vsub.s32 %v2244, %v2246
    %v2248 = vrot.slane %v2240, %v2247
    %v2250 = vunpack.c.l.s4 1966171168
    %v2251 = vunpack.c.0.s8 %v2250
    %v2252 = vlaneseq
    %v2253 = vshrl.u32 %v2252, 7
    %v2254 = vsub.s32 %v2251, %v2253
    %v2255 = vrot.slane %v2241, %v2254
    %v2256 = vcombine.low %v2248, %v2255
    %v2258 = vunpack.c.l.s4 1966171168
    %v2259 = vunpack.c.0.s8 %v2258
    %v2260 = vlaneseq
    %v2261 = vshrl.u32 %v2260, 7
    %v2262 = vsub.s32 %v2259, %v2261
    %v2263 = vrot.slane %v2256, %v2262
    %v2265 = vadd.f32 %v2132, %v2263
    %v2266 = vld [vmem:[#allocation3 + $0x8] sm:$0x1]
    %v2267 = vpack.c.bf16 %v2266, %v2266
    %v2268 = vld [vmem:[#allocation2 + $0x400] sm:$0xff]
    %v2269 = vld [vmem:[#allocation2 + $0x408] sm:$0xff]
    %v2270 = vld [vmem:[#allocation2 + $0x410] sm:$0xff]
    %v2271 = vld [vmem:[#allocation2 + $0x418] sm:$0xff]
    %v2272 = vld [vmem:[#allocation2 + $0x420] sm:$0xff]
    %v2273 = vld [vmem:[#allocation2 + $0x428] sm:$0xff]
    %v2274 = vld [vmem:[#allocation2 + $0x430] sm:$0xff]
    %v2275 = vld [vmem:[#allocation2 + $0x438] sm:$0xff]
    %v2276 = vld [vmem:[#allocation2 + $0x440] sm:$0xff]
    %v2277 = vld [vmem:[#allocation2 + $0x448] sm:$0xff]
    %v2278 = vld [vmem:[#allocation2 + $0x450] sm:$0xff]
    %v2279 = vld [vmem:[#allocation2 + $0x458] sm:$0xff]
    %v2280 = vld [vmem:[#allocation2 + $0x460] sm:$0xff]
    %v2281 = vld [vmem:[#allocation2 + $0x468] sm:$0xff]
    %v2282 = vld [vmem:[#allocation2 + $0x470] sm:$0xff]
    %v2283 = vld [vmem:[#allocation2 + $0x478] sm:$0xff]
    %v2285 = vsel %vm761, %v2267, 0
    %2287 = vmatprep.subr.bf16.mxu0 %v2269
    %2288 = vmatpush1.bf16.msra.mxu0 %v2268
    %2289 = vmatprep.subr.bf16.mxu0 %v2273
    %2290 = vmatpush1.bf16.msra.mxu0 %v2272
    %2291 = vmatprep.subr.bf16.mxu0 %v2277
    %2292 = vmatpush1.bf16.msra.mxu0 %v2276
    %2293 = vmatprep.subr.bf16.mxu0 %v2281
    %2294 = vmatpush1.bf16.msra.mxu0 %v2280
    %2295 = vmatprep.subr.bf16.mxu0 0
    %2296 = vmatpush1.bf16.msra.mxu0 0
    %2297 = vmatprep.subr.bf16.mxu0 0
    %2298 = vmatpush1.bf16.msra.mxu0 0
    %2299 = vmatprep.subr.bf16.mxu0 0
    %2300 = vmatpush1.bf16.msra.mxu0 0
    %2301 = vmatprep.subr.bf16.mxu0 0
    %2302 = vmatpush1.bf16.msra.mxu0 0
    %2303 = vmatprep.subr.bf16.mxu0 0
    %2304 = vmatpush1.bf16.msra.mxu0 0
    %2305 = vmatprep.subr.bf16.mxu0 0
    %2306 = vmatpush1.bf16.msra.mxu0 0
    %2307 = vmatprep.subr.bf16.mxu0 0
    %2308 = vmatpush1.bf16.msra.mxu0 0
    %2309 = vmatprep.subr.bf16.mxu0 0
    %2310 = vmatpush1.bf16.msra.mxu0 0
    %2311 = vmatprep.subr.bf16.mxu0 0
    %2312 = vmatpush1.bf16.msra.mxu0 0
    %2313 = vmatprep.subr.bf16.mxu0 0
    %2314 = vmatpush1.bf16.msra.mxu0 0
    %2315 = vmatprep.subr.bf16.mxu0 0
    %2316 = vmatpush1.bf16.msra.mxu0 0
    %2317 = vmatprep.subr.bf16.mxu0 0
    %2318 = vmatpush1.bf16.msra.mxu0 0
    %2319 = vmatprep.mubr.bf16.mxu0 0
    %2320 = vmatmul.mubr.bf16.gmra.mrb[0].mxu0 %v2285
    %v2321 = vpop.f32.mrb[0].mxu0
    %v2322 = vadd.f32 0.0, %v2321
    %v2323 = vpop.f32.mrb[0].mxu0
    %v2324 = vadd.f32 0.0, %v2323
    %v2325 = vpop.f32.mrb[0].mxu0
    %v2326 = vpop.f32.mrb[0].mxu0
    %2327 = vdwg.mxu0
    %2328 = vmatprep.subr.bf16.mxu0 %v2271
    %2329 = vmatpush1.bf16.msra.mxu0 %v2270
    %2330 = vmatprep.subr.bf16.mxu0 %v2275
    %2331 = vmatpush1.bf16.msra.mxu0 %v2274
    %2332 = vmatprep.subr.bf16.mxu0 %v2279
    %2333 = vmatpush1.bf16.msra.mxu0 %v2278
    %2334 = vmatprep.subr.bf16.mxu0 %v2283
    %2335 = vmatpush1.bf16.msra.mxu0 %v2282
    %2336 = vmatprep.subr.bf16.mxu0 0
    %2337 = vmatpush1.bf16.msra.mxu0 0
    %2338 = vmatprep.subr.bf16.mxu0 0
    %2339 = vmatpush1.bf16.msra.mxu0 0
    %2340 = vmatprep.subr.bf16.mxu0 0
    %2341 = vmatpush1.bf16.msra.mxu0 0
    %2342 = vmatprep.subr.bf16.mxu0 0
    %2343 = vmatpush1.bf16.msra.mxu0 0
    %2344 = vmatprep.subr.bf16.mxu0 0
    %2345 = vmatpush1.bf16.msra.mxu0 0
    %2346 = vmatprep.subr.bf16.mxu0 0
    %2347 = vmatpush1.bf16.msra.mxu0 0
    %2348 = vmatprep.subr.bf16.mxu0 0
    %2349 = vmatpush1.bf16.msra.mxu0 0
    %2350 = vmatprep.subr.bf16.mxu0 0
    %2351 = vmatpush1.bf16.msra.mxu0 0
    %2352 = vmatprep.subr.bf16.mxu0 0
    %2353 = vmatpush1.bf16.msra.mxu0 0
    %2354 = vmatprep.subr.bf16.mxu0 0
    %2355 = vmatpush1.bf16.msra.mxu0 0
    %2356 = vmatprep.subr.bf16.mxu0 0
    %2357 = vmatpush1.bf16.msra.mxu0 0
    %2358 = vmatprep.subr.bf16.mxu0 0
    %2359 = vmatpush1.bf16.msra.mxu0 0
    %2360 = vmatprep.mubr.bf16.mxu0 0
    %2361 = vmatmul.mubr.bf16.gmra.mrb[0].mxu0 %v2285
    %v2362 = vpop.f32.mrb[0].mxu0
    %v2363 = vadd.f32 0.0, %v2362
    %v2364 = vpop.f32.mrb[0].mxu0
    %v2365 = vadd.f32 0.0, %v2364
    %v2366 = vpop.f32.mrb[0].mxu0
    %v2367 = vpop.f32.mrb[0].mxu0
    %2368 = vdwg.mxu0
    %v2373 = vcombine.low %v2322, %v2324
    %v2374 = vcombine.low %v2363, %v2365
    %v2376 = vunpack.c.l.s4 1966171168
    %v2377 = vunpack.c.0.s8 %v2376
    %v2378 = vlaneseq
    %v2379 = vshrl.u32 %v2378, 7
    %v2380 = vsub.s32 %v2377, %v2379
    %v2381 = vrot.slane %v2373, %v2380
    %v2383 = vunpack.c.l.s4 1966171168
    %v2384 = vunpack.c.0.s8 %v2383
    %v2385 = vlaneseq
    %v2386 = vshrl.u32 %v2385, 7
    %v2387 = vsub.s32 %v2384, %v2386
    %v2388 = vrot.slane %v2374, %v2387
    %v2389 = vcombine.low %v2381, %v2388
    %v2391 = vunpack.c.l.s4 1966171168
    %v2392 = vunpack.c.0.s8 %v2391
    %v2393 = vlaneseq
    %v2394 = vshrl.u32 %v2393, 7
    %v2395 = vsub.s32 %v2392, %v2394
    %v2396 = vrot.slane %v2389, %v2395
    %v2398 = vadd.f32 %v2265, %v2396
    %v2399 = vld [vmem:[#allocation3 + $0x9] sm:$0x1]
    %v2400 = vpack.c.bf16 %v2399, %v2399
    %v2401 = vld [vmem:[#allocation2 + $0x480] sm:$0xff]
    %v2402 = vld [vmem:[#allocation2 + $0x488] sm:$0xff]
    %v2403 = vld [vmem:[#allocation2 + $0x490] sm:$0xff]
    %v2404 = vld [vmem:[#allocation2 + $0x498] sm:$0xff]
    %v2405 = vld [vmem:[#allocation2 + $0x4a0] sm:$0xff]
    %v2406 = vld [vmem:[#allocation2 + $0x4a8] sm:$0xff]
    %v2407 = vld [vmem:[#allocation2 + $0x4b0] sm:$0xff]
    %v2408 = vld [vmem:[#allocation2 + $0x4b8] sm:$0xff]
    %v2409 = vld [vmem:[#allocation2 + $0x4c0] sm:$0xff]
    %v2410 = vld [vmem:[#allocation2 + $0x4c8] sm:$0xff]
    %v2411 = vld [vmem:[#allocation2 + $0x4d0] sm:$0xff]
    %v2412 = vld [vmem:[#allocation2 + $0x4d8] sm:$0xff]
    %v2413 = vld [vmem:[#allocation2 + $0x4e0] sm:$0xff]
    %v2414 = vld [vmem:[#allocation2 + $0x4e8] sm:$0xff]
    %v2415 = vld [vmem:[#allocation2 + $0x4f0] sm:$0xff]
    %v2416 = vld [vmem:[#allocation2 + $0x4f8] sm:$0xff]
    %v2418 = vsel %vm761, %v2400, 0
    %2420 = vmatprep.subr.bf16.mxu0 %v2402
    %2421 = vmatpush1.bf16.msra.mxu0 %v2401
    %2422 = vmatprep.subr.bf16.mxu0 %v2406
    %2423 = vmatpush1.bf16.msra.mxu0 %v2405
    %2424 = vmatprep.subr.bf16.mxu0 %v2410
    %2425 = vmatpush1.bf16.msra.mxu0 %v2409
    %2426 = vmatprep.subr.bf16.mxu0 %v2414
    %2427 = vmatpush1.bf16.msra.mxu0 %v2413
    %2428 = vmatprep.subr.bf16.mxu0 0
    %2429 = vmatpush1.bf16.msra.mxu0 0
    %2430 = vmatprep.subr.bf16.mxu0 0
    %2431 = vmatpush1.bf16.msra.mxu0 0
    %2432 = vmatprep.subr.bf16.mxu0 0
    %2433 = vmatpush1.bf16.msra.mxu0 0
    %2434 = vmatprep.subr.bf16.mxu0 0
    %2435 = vmatpush1.bf16.msra.mxu0 0
    %2436 = vmatprep.subr.bf16.mxu0 0
    %2437 = vmatpush1.bf16.msra.mxu0 0
    %2438 = vmatprep.subr.bf16.mxu0 0
    %2439 = vmatpush1.bf16.msra.mxu0 0
    %2440 = vmatprep.subr.bf16.mxu0 0
    %2441 = vmatpush1.bf16.msra.mxu0 0
    %2442 = vmatprep.subr.bf16.mxu0 0
    %2443 = vmatpush1.bf16.msra.mxu0 0
    %2444 = vmatprep.subr.bf16.mxu0 0
    %2445 = vmatpush1.bf16.msra.mxu0 0
    %2446 = vmatprep.subr.bf16.mxu0 0
    %2447 = vmatpush1.bf16.msra.mxu0 0
    %2448 = vmatprep.subr.bf16.mxu0 0
    %2449 = vmatpush1.bf16.msra.mxu0 0
    %2450 = vmatprep.subr.bf16.mxu0 0
    %2451 = vmatpush1.bf16.msra.mxu0 0
    %2452 = vmatprep.mubr.bf16.mxu0 0
    %2453 = vmatmul.mubr.bf16.gmra.mrb[0].mxu0 %v2418
    %v2454 = vpop.f32.mrb[0].mxu0
    %v2455 = vadd.f32 0.0, %v2454
    %v2456 = vpop.f32.mrb[0].mxu0
    %v2457 = vadd.f32 0.0, %v2456
    %v2458 = vpop.f32.mrb[0].mxu0
    %v2459 = vpop.f32.mrb[0].mxu0
    %2460 = vdwg.mxu0
    %2461 = vmatprep.subr.bf16.mxu0 %v2404
    %2462 = vmatpush1.bf16.msra.mxu0 %v2403
    %2463 = vmatprep.subr.bf16.mxu0 %v2408
    %2464 = vmatpush1.bf16.msra.mxu0 %v2407
    %2465 = vmatprep.subr.bf16.mxu0 %v2412
    %2466 = vmatpush1.bf16.msra.mxu0 %v2411
    %2467 = vmatprep.subr.bf16.mxu0 %v2416
    %2468 = vmatpush1.bf16.msra.mxu0 %v2415
    %2469 = vmatprep.subr.bf16.mxu0 0
    %2470 = vmatpush1.bf16.msra.mxu0 0
    %2471 = vmatprep.subr.bf16.mxu0 0
    %2472 = vmatpush1.bf16.msra.mxu0 0
    %2473 = vmatprep.subr.bf16.mxu0 0
    %2474 = vmatpush1.bf16.msra.mxu0 0
    %2475 = vmatprep.subr.bf16.mxu0 0
    %2476 = vmatpush1.bf16.msra.mxu0 0
    %2477 = vmatprep.subr.bf16.mxu0 0
    %2478 = vmatpush1.bf16.msra.mxu0 0
    %2479 = vmatprep.subr.bf16.mxu0 0
    %2480 = vmatpush1.bf16.msra.mxu0 0
    %2481 = vmatprep.subr.bf16.mxu0 0
    %2482 = vmatpush1.bf16.msra.mxu0 0
    %2483 = vmatprep.subr.bf16.mxu0 0
    %2484 = vmatpush1.bf16.msra.mxu0 0
    %2485 = vmatprep.subr.bf16.mxu0 0
    %2486 = vmatpush1.bf16.msra.mxu0 0
    %2487 = vmatprep.subr.bf16.mxu0 0
    %2488 = vmatpush1.bf16.msra.mxu0 0
    %2489 = vmatprep.subr.bf16.mxu0 0
    %2490 = vmatpush1.bf16.msra.mxu0 0
    %2491 = vmatprep.subr.bf16.mxu0 0
    %2492 = vmatpush1.bf16.msra.mxu0 0
    %2493 = vmatprep.mubr.bf16.mxu0 0
    %2494 = vmatmul.mubr.bf16.gmra.mrb[0].mxu0 %v2418
    %v2495 = vpop.f32.mrb[0].mxu0
    %v2496 = vadd.f32 0.0, %v2495
    %v2497 = vpop.f32.mrb[0].mxu0
    %v2498 = vadd.f32 0.0, %v2497
    %v2499 = vpop.f32.mrb[0].mxu0
    %v2500 = vpop.f32.mrb[0].mxu0
    %2501 = vdwg.mxu0
    %v2506 = vcombine.low %v2455, %v2457
    %v2507 = vcombine.low %v2496, %v2498
    %v2509 = vunpack.c.l.s4 1966171168
    %v2510 = vunpack.c.0.s8 %v2509
    %v2511 = vlaneseq
    %v2512 = vshrl.u32 %v2511, 7
    %v2513 = vsub.s32 %v2510, %v2512
    %v2514 = vrot.slane %v2506, %v2513
    %v2516 = vunpack.c.l.s4 1966171168
    %v2517 = vunpack.c.0.s8 %v2516
    %v2518 = vlaneseq
    %v2519 = vshrl.u32 %v2518, 7
    %v2520 = vsub.s32 %v2517, %v2519
    %v2521 = vrot.slane %v2507, %v2520
    %v2522 = vcombine.low %v2514, %v2521
    %v2524 = vunpack.c.l.s4 1966171168
    %v2525 = vunpack.c.0.s8 %v2524
    %v2526 = vlaneseq
    %v2527 = vshrl.u32 %v2526, 7
    %v2528 = vsub.s32 %v2525, %v2527
    %v2529 = vrot.slane %v2522, %v2528
    %v2531 = vadd.f32 %v2398, %v2529
    %v2532 = vld [vmem:[#allocation3 + $0xa] sm:$0x1]
    %v2533 = vpack.c.bf16 %v2532, %v2532
    %v2534 = vld [vmem:[#allocation2 + $0x500] sm:$0xff]
    %v2535 = vld [vmem:[#allocation2 + $0x508] sm:$0xff]
    %v2536 = vld [vmem:[#allocation2 + $0x510] sm:$0xff]
    %v2537 = vld [vmem:[#allocation2 + $0x518] sm:$0xff]
    %v2538 = vld [vmem:[#allocation2 + $0x520] sm:$0xff]
    %v2539 = vld [vmem:[#allocation2 + $0x528] sm:$0xff]
    %v2540 = vld [vmem:[#allocation2 + $0x530] sm:$0xff]
    %v2541 = vld [vmem:[#allocation2 + $0x538] sm:$0xff]
    %v2542 = vld [vmem:[#allocation2 + $0x540] sm:$0xff]
    %v2543 = vld [vmem:[#allocation2 + $0x548] sm:$0xff]
    %v2544 = vld [vmem:[#allocation2 + $0x550] sm:$0xff]
    %v2545 = vld [vmem:[#allocation2 + $0x558] sm:$0xff]
    %v2546 = vld [vmem:[#allocation2 + $0x560] sm:$0xff]
    %v2547 = vld [vmem:[#allocation2 + $0x568] sm:$0xff]
    %v2548 = vld [vmem:[#allocation2 + $0x570] sm:$0xff]
    %v2549 = vld [vmem:[#allocation2 + $0x578] sm:$0xff]
    %v2551 = vsel %vm761, %v2533, 0
    %2553 = vmatprep.subr.bf16.mxu0 %v2535
    %2554 = vmatpush1.bf16.msra.mxu0 %v2534
    %2555 = vmatprep.subr.bf16.mxu0 %v2539
    %2556 = vmatpush1.bf16.msra.mxu0 %v2538
    %2557 = vmatprep.subr.bf16.mxu0 %v2543
    %2558 = vmatpush1.bf16.msra.mxu0 %v2542
    %2559 = vmatprep.subr.bf16.mxu0 %v2547
    %2560 = vmatpush1.bf16.msra.mxu0 %v2546
    %2561 = vmatprep.subr.bf16.mxu0 0
    %2562 = vmatpush1.bf16.msra.mxu0 0
    %2563 = vmatprep.subr.bf16.mxu0 0
    %2564 = vmatpush1.bf16.msra.mxu0 0
    %2565 = vmatprep.subr.bf16.mxu0 0
    %2566 = vmatpush1.bf16.msra.mxu0 0
    %2567 = vmatprep.subr.bf16.mxu0 0
    %2568 = vmatpush1.bf16.msra.mxu0 0
    %2569 = vmatprep.subr.bf16.mxu0 0
    %2570 = vmatpush1.bf16.msra.mxu0 0
    %2571 = vmatprep.subr.bf16.mxu0 0
    %2572 = vmatpush1.bf16.msra.mxu0 0
    %2573 = vmatprep.subr.bf16.mxu0 0
    %2574 = vmatpush1.bf16.msra.mxu0 0
    %2575 = vmatprep.subr.bf16.mxu0 0
    %2576 = vmatpush1.bf16.msra.mxu0 0
    %2577 = vmatprep.subr.bf16.mxu0 0
    %2578 = vmatpush1.bf16.msra.mxu0 0
    %2579 = vmatprep.subr.bf16.mxu0 0
    %2580 = vmatpush1.bf16.msra.mxu0 0
    %2581 = vmatprep.subr.bf16.mxu0 0
    %2582 = vmatpush1.bf16.msra.mxu0 0
    %2583 = vmatprep.subr.bf16.mxu0 0
    %2584 = vmatpush1.bf16.msra.mxu0 0
    %2585 = vmatprep.mubr.bf16.mxu0 0
    %2586 = vmatmul.mubr.bf16.gmra.mrb[0].mxu0 %v2551
    %v2587 = vpop.f32.mrb[0].mxu0
    %v2588 = vadd.f32 0.0, %v2587
    %v2589 = vpop.f32.mrb[0].mxu0
    %v2590 = vadd.f32 0.0, %v2589
    %v2591 = vpop.f32.mrb[0].mxu0
    %v2592 = vpop.f32.mrb[0].mxu0
    %2593 = vdwg.mxu0
    %2594 = vmatprep.subr.bf16.mxu0 %v2537
    %2595 = vmatpush1.bf16.msra.mxu0 %v2536
    %2596 = vmatprep.subr.bf16.mxu0 %v2541
    %2597 = vmatpush1.bf16.msra.mxu0 %v2540
    %2598 = vmatprep.subr.bf16.mxu0 %v2545
    %2599 = vmatpush1.bf16.msra.mxu0 %v2544
    %2600 = vmatprep.subr.bf16.mxu0 %v2549
    %2601 = vmatpush1.bf16.msra.mxu0 %v2548
    %2602 = vmatprep.subr.bf16.mxu0 0
    %2603 = vmatpush1.bf16.msra.mxu0 0
    %2604 = vmatprep.subr.bf16.mxu0 0
    %2605 = vmatpush1.bf16.msra.mxu0 0
    %2606 = vmatprep.subr.bf16.mxu0 0
    %2607 = vmatpush1.bf16.msra.mxu0 0
    %2608 = vmatprep.subr.bf16.mxu0 0
    %2609 = vmatpush1.bf16.msra.mxu0 0
    %2610 = vmatprep.subr.bf16.mxu0 0
    %2611 = vmatpush1.bf16.msra.mxu0 0
    %2612 = vmatprep.subr.bf16.mxu0 0
    %2613 = vmatpush1.bf16.msra.mxu0 0
    %2614 = vmatprep.subr.bf16.mxu0 0
    %2615 = vmatpush1.bf16.msra.mxu0 0
    %2616 = vmatprep.subr.bf16.mxu0 0
    %2617 = vmatpush1.bf16.msra.mxu0 0
    %2618 = vmatprep.subr.bf16.mxu0 0
    %2619 = vmatpush1.bf16.msra.mxu0 0
    %2620 = vmatprep.subr.bf16.mxu0 0
    %2621 = vmatpush1.bf16.msra.mxu0 0
    %2622 = vmatprep.subr.bf16.mxu0 0
    %2623 = vmatpush1.bf16.msra.mxu0 0
    %2624 = vmatprep.subr.bf16.mxu0 0
    %2625 = vmatpush1.bf16.msra.mxu0 0
    %2626 = vmatprep.mubr.bf16.mxu0 0
    %2627 = vmatmul.mubr.bf16.gmra.mrb[0].mxu0 %v2551
    %v2628 = vpop.f32.mrb[0].mxu0
    %v2629 = vadd.f32 0.0, %v2628
    %v2630 = vpop.f32.mrb[0].mxu0
    %v2631 = vadd.f32 0.0, %v2630
    %v2632 = vpop.f32.mrb[0].mxu0
    %v2633 = vpop.f32.mrb[0].mxu0
    %2634 = vdwg.mxu0
    %v2639 = vcombine.low %v2588, %v2590
    %v2640 = vcombine.low %v2629, %v2631
    %v2642 = vunpack.c.l.s4 1966171168
    %v2643 = vunpack.c.0.s8 %v2642
    %v2644 = vlaneseq
    %v2645 = vshrl.u32 %v2644, 7
    %v2646 = vsub.s32 %v2643, %v2645
    %v2647 = vrot.slane %v2639, %v2646
    %v2649 = vunpack.c.l.s4 1966171168
    %v2650 = vunpack.c.0.s8 %v2649
    %v2651 = vlaneseq
    %v2652 = vshrl.u32 %v2651, 7
    %v2653 = vsub.s32 %v2650, %v2652
    %v2654 = vrot.slane %v2640, %v2653
    %v2655 = vcombine.low %v2647, %v2654
    %v2657 = vunpack.c.l.s4 1966171168
    %v2658 = vunpack.c.0.s8 %v2657
    %v2659 = vlaneseq
    %v2660 = vshrl.u32 %v2659, 7
    %v2661 = vsub.s32 %v2658, %v2660
    %v2662 = vrot.slane %v2655, %v2661
    %v2664 = vadd.f32 %v2531, %v2662
    %v2665 = vld [vmem:[#allocation3 + $0xb] sm:$0x1]
    %v2666 = vpack.c.bf16 %v2665, %v2665
    %v2667 = vld [vmem:[#allocation2 + $0x580] sm:$0xff]
    %v2668 = vld [vmem:[#allocation2 + $0x588] sm:$0xff]
    %v2669 = vld [vmem:[#allocation2 + $0x590] sm:$0xff]
    %v2670 = vld [vmem:[#allocation2 + $0x598] sm:$0xff]
    %v2671 = vld [vmem:[#allocation2 + $0x5a0] sm:$0xff]
    %v2672 = vld [vmem:[#allocation2 + $0x5a8] sm:$0xff]
    %v2673 = vld [vmem:[#allocation2 + $0x5b0] sm:$0xff]
    %v2674 = vld [vmem:[#allocation2 + $0x5b8] sm:$0xff]
    %v2675 = vld [vmem:[#allocation2 + $0x5c0] sm:$0xff]
    %v2676 = vld [vmem:[#allocation2 + $0x5c8] sm:$0xff]
    %v2677 = vld [vmem:[#allocation2 + $0x5d0] sm:$0xff]
    %v2678 = vld [vmem:[#allocation2 + $0x5d8] sm:$0xff]
    %v2679 = vld [vmem:[#allocation2 + $0x5e0] sm:$0xff]
    %v2680 = vld [vmem:[#allocation2 + $0x5e8] sm:$0xff]
    %v2681 = vld [vmem:[#allocation2 + $0x5f0] sm:$0xff]
    %v2682 = vld [vmem:[#allocation2 + $0x5f8] sm:$0xff]
    %v2684 = vsel %vm761, %v2666, 0
    %2686 = vmatprep.subr.bf16.mxu0 %v2668
    %2687 = vmatpush1.bf16.msra.mxu0 %v2667
    %2688 = vmatprep.subr.bf16.mxu0 %v2672
    %2689 = vmatpush1.bf16.msra.mxu0 %v2671
    %2690 = vmatprep.subr.bf16.mxu0 %v2676
    %2691 = vmatpush1.bf16.msra.mxu0 %v2675
    %2692 = vmatprep.subr.bf16.mxu0 %v2680
    %2693 = vmatpush1.bf16.msra.mxu0 %v2679
    %2694 = vmatprep.subr.bf16.mxu0 0
    %2695 = vmatpush1.bf16.msra.mxu0 0
    %2696 = vmatprep.subr.bf16.mxu0 0
    %2697 = vmatpush1.bf16.msra.mxu0 0
    %2698 = vmatprep.subr.bf16.mxu0 0
    %2699 = vmatpush1.bf16.msra.mxu0 0
    %2700 = vmatprep.subr.bf16.mxu0 0
    %2701 = vmatpush1.bf16.msra.mxu0 0
    %2702 = vmatprep.subr.bf16.mxu0 0
    %2703 = vmatpush1.bf16.msra.mxu0 0
    %2704 = vmatprep.subr.bf16.mxu0 0
    %2705 = vmatpush1.bf16.msra.mxu0 0
    %2706 = vmatprep.subr.bf16.mxu0 0
    %2707 = vmatpush1.bf16.msra.mxu0 0
    %2708 = vmatprep.subr.bf16.mxu0 0
    %2709 = vmatpush1.bf16.msra.mxu0 0
    %2710 = vmatprep.subr.bf16.mxu0 0
    %2711 = vmatpush1.bf16.msra.mxu0 0
    %2712 = vmatprep.subr.bf16.mxu0 0
    %2713 = vmatpush1.bf16.msra.mxu0 0
    %2714 = vmatprep.subr.bf16.mxu0 0
    %2715 = vmatpush1.bf16.msra.mxu0 0
    %2716 = vmatprep.subr.bf16.mxu0 0
    %2717 = vmatpush1.bf16.msra.mxu0 0
    %2718 = vmatprep.mubr.bf16.mxu0 0
    %2719 = vmatmul.mubr.bf16.gmra.mrb[0].mxu0 %v2684
    %v2720 = vpop.f32.mrb[0].mxu0
    %v2721 = vadd.f32 0.0, %v2720
    %v2722 = vpop.f32.mrb[0].mxu0
    %v2723 = vadd.f32 0.0, %v2722
    %v2724 = vpop.f32.mrb[0].mxu0
    %v2725 = vpop.f32.mrb[0].mxu0
    %2726 = vdwg.mxu0
    %2727 = vmatprep.subr.bf16.mxu0 %v2670
    %2728 = vmatpush1.bf16.msra.mxu0 %v2669
    %2729 = vmatprep.subr.bf16.mxu0 %v2674
    %2730 = vmatpush1.bf16.msra.mxu0 %v2673
    %2731 = vmatprep.subr.bf16.mxu0 %v2678
    %2732 = vmatpush1.bf16.msra.mxu0 %v2677
    %2733 = vmatprep.subr.bf16.mxu0 %v2682
    %2734 = vmatpush1.bf16.msra.mxu0 %v2681
    %2735 = vmatprep.subr.bf16.mxu0 0
    %2736 = vmatpush1.bf16.msra.mxu0 0
    %2737 = vmatprep.subr.bf16.mxu0 0
    %2738 = vmatpush1.bf16.msra.mxu0 0
    %2739 = vmatprep.subr.bf16.mxu0 0
    %2740 = vmatpush1.bf16.msra.mxu0 0
    %2741 = vmatprep.subr.bf16.mxu0 0
    %2742 = vmatpush1.bf16.msra.mxu0 0
    %2743 = vmatprep.subr.bf16.mxu0 0
    %2744 = vmatpush1.bf16.msra.mxu0 0
    %2745 = vmatprep.subr.bf16.mxu0 0
    %2746 = vmatpush1.bf16.msra.mxu0 0
    %2747 = vmatprep.subr.bf16.mxu0 0
    %2748 = vmatpush1.bf16.msra.mxu0 0
    %2749 = vmatprep.subr.bf16.mxu0 0
    %2750 = vmatpush1.bf16.msra.mxu0 0
    %2751 = vmatprep.subr.bf16.mxu0 0
    %2752 = vmatpush1.bf16.msra.mxu0 0
    %2753 = vmatprep.subr.bf16.mxu0 0
    %2754 = vmatpush1.bf16.msra.mxu0 0
    %2755 = vmatprep.subr.bf16.mxu0 0
    %2756 = vmatpush1.bf16.msra.mxu0 0
    %2757 = vmatprep.subr.bf16.mxu0 0
    %2758 = vmatpush1.bf16.msra.mxu0 0
    %2759 = vmatprep.mubr.bf16.mxu0 0
    %2760 = vmatmul.mubr.bf16.gmra.mrb[0].mxu0 %v2684
    %v2761 = vpop.f32.mrb[0].mxu0
    %v2762 = vadd.f32 0.0, %v2761
    %v2763 = vpop.f32.mrb[0].mxu0
    %v2764 = vadd.f32 0.0, %v2763
    %v2765 = vpop.f32.mrb[0].mxu0
    %v2766 = vpop.f32.mrb[0].mxu0
    %2767 = vdwg.mxu0
    %v2772 = vcombine.low %v2721, %v2723
    %v2773 = vcombine.low %v2762, %v2764
    %v2775 = vunpack.c.l.s4 1966171168
    %v2776 = vunpack.c.0.s8 %v2775
    %v2777 = vlaneseq
    %v2778 = vshrl.u32 %v2777, 7
    %v2779 = vsub.s32 %v2776, %v2778
    %v2780 = vrot.slane %v2772, %v2779
    %v2782 = vunpack.c.l.s4 1966171168
    %v2783 = vunpack.c.0.s8 %v2782
    %v2784 = vlaneseq
    %v2785 = vshrl.u32 %v2784, 7
    %v2786 = vsub.s32 %v2783, %v2785
    %v2787 = vrot.slane %v2773, %v2786
    %v2788 = vcombine.low %v2780, %v2787
    %v2790 = vunpack.c.l.s4 1966171168
    %v2791 = vunpack.c.0.s8 %v2790
    %v2792 = vlaneseq
    %v2793 = vshrl.u32 %v2792, 7
    %v2794 = vsub.s32 %v2791, %v2793
    %v2795 = vrot.slane %v2788, %v2794
    %v2797 = vadd.f32 %v2664, %v2795
    %v2798 = vld [vmem:[#allocation3 + $0xc] sm:$0x1]
    %v2799 = vpack.c.bf16 %v2798, %v2798
    %v2800 = vld [vmem:[#allocation2 + $0x600] sm:$0xff]
    %v2801 = vld [vmem:[#allocation2 + $0x608] sm:$0xff]
    %v2802 = vld [vmem:[#allocation2 + $0x610] sm:$0xff]
    %v2803 = vld [vmem:[#allocation2 + $0x618] sm:$0xff]
    %v2804 = vld [vmem:[#allocation2 + $0x620] sm:$0xff]
    %v2805 = vld [vmem:[#allocation2 + $0x628] sm:$0xff]
    %v2806 = vld [vmem:[#allocation2 + $0x630] sm:$0xff]
    %v2807 = vld [vmem:[#allocation2 + $0x638] sm:$0xff]
    %v2808 = vld [vmem:[#allocation2 + $0x640] sm:$0xff]
    %v2809 = vld [vmem:[#allocation2 + $0x648] sm:$0xff]
    %v2810 = vld [vmem:[#allocation2 + $0x650] sm:$0xff]
    %v2811 = vld [vmem:[#allocation2 + $0x658] sm:$0xff]
    %v2812 = vld [vmem:[#allocation2 + $0x660] sm:$0xff]
    %v2813 = vld [vmem:[#allocation2 + $0x668] sm:$0xff]
    %v2814 = vld [vmem:[#allocation2 + $0x670] sm:$0xff]
    %v2815 = vld [vmem:[#allocation2 + $0x678] sm:$0xff]
    %v2817 = vsel %vm761, %v2799, 0
    %2819 = vmatprep.subr.bf16.mxu0 %v2801
    %2820 = vmatpush1.bf16.msra.mxu0 %v2800
    %2821 = vmatprep.subr.bf16.mxu0 %v2805
    %2822 = vmatpush1.bf16.msra.mxu0 %v2804
    %2823 = vmatprep.subr.bf16.mxu0 %v2809
    %2824 = vmatpush1.bf16.msra.mxu0 %v2808
    %2825 = vmatprep.subr.bf16.mxu0 %v2813
    %2826 = vmatpush1.bf16.msra.mxu0 %v2812
    %2827 = vmatprep.subr.bf16.mxu0 0
    %2828 = vmatpush1.bf16.msra.mxu0 0
    %2829 = vmatprep.subr.bf16.mxu0 0
    %2830 = vmatpush1.bf16.msra.mxu0 0
    %2831 = vmatprep.subr.bf16.mxu0 0
    %2832 = vmatpush1.bf16.msra.mxu0 0
    %2833 = vmatprep.subr.bf16.mxu0 0
    %2834 = vmatpush1.bf16.msra.mxu0 0
    %2835 = vmatprep.subr.bf16.mxu0 0
    %2836 = vmatpush1.bf16.msra.mxu0 0
    %2837 = vmatprep.subr.bf16.mxu0 0
    %2838 = vmatpush1.bf16.msra.mxu0 0
    %2839 = vmatprep.subr.bf16.mxu0 0
    %2840 = vmatpush1.bf16.msra.mxu0 0
    %2841 = vmatprep.subr.bf16.mxu0 0
    %2842 = vmatpush1.bf16.msra.mxu0 0
    %2843 = vmatprep.subr.bf16.mxu0 0
    %2844 = vmatpush1.bf16.msra.mxu0 0
    %2845 = vmatprep.subr.bf16.mxu0 0
    %2846 = vmatpush1.bf16.msra.mxu0 0
    %2847 = vmatprep.subr.bf16.mxu0 0
    %2848 = vmatpush1.bf16.msra.mxu0 0
    %2849 = vmatprep.subr.bf16.mxu0 0
    %2850 = vmatpush1.bf16.msra.mxu0 0
    %2851 = vmatprep.mubr.bf16.mxu0 0
    %2852 = vmatmul.mubr.bf16.gmra.mrb[0].mxu0 %v2817
    %v2853 = vpop.f32.mrb[0].mxu0
    %v2854 = vadd.f32 0.0, %v2853
    %v2855 = vpop.f32.mrb[0].mxu0
    %v2856 = vadd.f32 0.0, %v2855
    %v2857 = vpop.f32.mrb[0].mxu0
    %v2858 = vpop.f32.mrb[0].mxu0
    %2859 = vdwg.mxu0
    %2860 = vmatprep.subr.bf16.mxu0 %v2803
    %2861 = vmatpush1.bf16.msra.mxu0 %v2802
    %2862 = vmatprep.subr.bf16.mxu0 %v2807
    %2863 = vmatpush1.bf16.msra.mxu0 %v2806
    %2864 = vmatprep.subr.bf16.mxu0 %v2811
    %2865 = vmatpush1.bf16.msra.mxu0 %v2810
    %2866 = vmatprep.subr.bf16.mxu0 %v2815
    %2867 = vmatpush1.bf16.msra.mxu0 %v2814
    %2868 = vmatprep.subr.bf16.mxu0 0
    %2869 = vmatpush1.bf16.msra.mxu0 0
    %2870 = vmatprep.subr.bf16.mxu0 0
    %2871 = vmatpush1.bf16.msra.mxu0 0
    %2872 = vmatprep.subr.bf16.mxu0 0
    %2873 = vmatpush1.bf16.msra.mxu0 0
    %2874 = vmatprep.subr.bf16.mxu0 0
    %2875 = vmatpush1.bf16.msra.mxu0 0
    %2876 = vmatprep.subr.bf16.mxu0 0
    %2877 = vmatpush1.bf16.msra.mxu0 0
    %2878 = vmatprep.subr.bf16.mxu0 0
    %2879 = vmatpush1.bf16.msra.mxu0 0
    %2880 = vmatprep.subr.bf16.mxu0 0
    %2881 = vmatpush1.bf16.msra.mxu0 0
    %2882 = vmatprep.subr.bf16.mxu0 0
    %2883 = vmatpush1.bf16.msra.mxu0 0
    %2884 = vmatprep.subr.bf16.mxu0 0
    %2885 = vmatpush1.bf16.msra.mxu0 0
    %2886 = vmatprep.subr.bf16.mxu0 0
    %2887 = vmatpush1.bf16.msra.mxu0 0
    %2888 = vmatprep.subr.bf16.mxu0 0
    %2889 = vmatpush1.bf16.msra.mxu0 0
    %2890 = vmatprep.subr.bf16.mxu0 0
    %2891 = vmatpush1.bf16.msra.mxu0 0
    %2892 = vmatprep.mubr.bf16.mxu0 0
    %2893 = vmatmul.mubr.bf16.gmra.mrb[0].mxu0 %v2817
    %v2894 = vpop.f32.mrb[0].mxu0
    %v2895 = vadd.f32 0.0, %v2894
    %v2896 = vpop.f32.mrb[0].mxu0
    %v2897 = vadd.f32 0.0, %v2896
    %v2898 = vpop.f32.mrb[0].mxu0
    %v2899 = vpop.f32.mrb[0].mxu0
    %2900 = vdwg.mxu0
    %v2905 = vcombine.low %v2854, %v2856
    %v2906 = vcombine.low %v2895, %v2897
    %v2908 = vunpack.c.l.s4 1966171168
    %v2909 = vunpack.c.0.s8 %v2908
    %v2910 = vlaneseq
    %v2911 = vshrl.u32 %v2910, 7
    %v2912 = vsub.s32 %v2909, %v2911
    %v2913 = vrot.slane %v2905, %v2912
    %v2915 = vunpack.c.l.s4 1966171168
    %v2916 = vunpack.c.0.s8 %v2915
    %v2917 = vlaneseq
    %v2918 = vshrl.u32 %v2917, 7
    %v2919 = vsub.s32 %v2916, %v2918
    %v2920 = vrot.slane %v2906, %v2919
    %v2921 = vcombine.low %v2913, %v2920
    %v2923 = vunpack.c.l.s4 1966171168
    %v2924 = vunpack.c.0.s8 %v2923
    %v2925 = vlaneseq
    %v2926 = vshrl.u32 %v2925, 7
    %v2927 = vsub.s32 %v2924, %v2926
    %v2928 = vrot.slane %v2921, %v2927
    %v2930 = vadd.f32 %v2797, %v2928
    %v2931 = vld [vmem:[#allocation3 + $0xd] sm:$0x1]
    %v2932 = vpack.c.bf16 %v2931, %v2931
    %v2933 = vld [vmem:[#allocation2 + $0x680] sm:$0xff]
    %v2934 = vld [vmem:[#allocation2 + $0x688] sm:$0xff]
    %v2935 = vld [vmem:[#allocation2 + $0x690] sm:$0xff]
    %v2936 = vld [vmem:[#allocation2 + $0x698] sm:$0xff]
    %v2937 = vld [vmem:[#allocation2 + $0x6a0] sm:$0xff]
    %v2938 = vld [vmem:[#allocation2 + $0x6a8] sm:$0xff]
    %v2939 = vld [vmem:[#allocation2 + $0x6b0] sm:$0xff]
    %v2940 = vld [vmem:[#allocation2 + $0x6b8] sm:$0xff]
    %v2941 = vld [vmem:[#allocation2 + $0x6c0] sm:$0xff]
    %v2942 = vld [vmem:[#allocation2 + $0x6c8] sm:$0xff]
    %v2943 = vld [vmem:[#allocation2 + $0x6d0] sm:$0xff]
    %v2944 = vld [vmem:[#allocation2 + $0x6d8] sm:$0xff]
    %v2945 = vld [vmem:[#allocation2 + $0x6e0] sm:$0xff]
    %v2946 = vld [vmem:[#allocation2 + $0x6e8] sm:$0xff]
    %v2947 = vld [vmem:[#allocation2 + $0x6f0] sm:$0xff]
    %v2948 = vld [vmem:[#allocation2 + $0x6f8] sm:$0xff]
    %v2950 = vsel %vm761, %v2932, 0
    %2952 = vmatprep.subr.bf16.mxu0 %v2934
    %2953 = vmatpush1.bf16.msra.mxu0 %v2933
    %2954 = vmatprep.subr.bf16.mxu0 %v2938
    %2955 = vmatpush1.bf16.msra.mxu0 %v2937
    %2956 = vmatprep.subr.bf16.mxu0 %v2942
    %2957 = vmatpush1.bf16.msra.mxu0 %v2941
    %2958 = vmatprep.subr.bf16.mxu0 %v2946
    %2959 = vmatpush1.bf16.msra.mxu0 %v2945
    %2960 = vmatprep.subr.bf16.mxu0 0
    %2961 = vmatpush1.bf16.msra.mxu0 0
    %2962 = vmatprep.subr.bf16.mxu0 0
    %2963 = vmatpush1.bf16.msra.mxu0 0
    %2964 = vmatprep.subr.bf16.mxu0 0
    %2965 = vmatpush1.bf16.msra.mxu0 0
    %2966 = vmatprep.subr.bf16.mxu0 0
    %2967 = vmatpush1.bf16.msra.mxu0 0
    %2968 = vmatprep.subr.bf16.mxu0 0
    %2969 = vmatpush1.bf16.msra.mxu0 0
    %2970 = vmatprep.subr.bf16.mxu0 0
    %2971 = vmatpush1.bf16.msra.mxu0 0
    %2972 = vmatprep.subr.bf16.mxu0 0
    %2973 = vmatpush1.bf16.msra.mxu0 0
    %2974 = vmatprep.subr.bf16.mxu0 0
    %2975 = vmatpush1.bf16.msra.mxu0 0
    %2976 = vmatprep.subr.bf16.mxu0 0
    %2977 = vmatpush1.bf16.msra.mxu0 0
    %2978 = vmatprep.subr.bf16.mxu0 0
    %2979 = vmatpush1.bf16.msra.mxu0 0
    %2980 = vmatprep.subr.bf16.mxu0 0
    %2981 = vmatpush1.bf16.msra.mxu0 0
    %2982 = vmatprep.subr.bf16.mxu0 0
    %2983 = vmatpush1.bf16.msra.mxu0 0
    %2984 = vmatprep.mubr.bf16.mxu0 0
    %2985 = vmatmul.mubr.bf16.gmra.mrb[0].mxu0 %v2950
    %v2986 = vpop.f32.mrb[0].mxu0
    %v2987 = vadd.f32 0.0, %v2986
    %v2988 = vpop.f32.mrb[0].mxu0
    %v2989 = vadd.f32 0.0, %v2988
    %v2990 = vpop.f32.mrb[0].mxu0
    %v2991 = vpop.f32.mrb[0].mxu0
    %2992 = vdwg.mxu0
    %2993 = vmatprep.subr.bf16.mxu0 %v2936
    %2994 = vmatpush1.bf16.msra.mxu0 %v2935
    %2995 = vmatprep.subr.bf16.mxu0 %v2940
    %2996 = vmatpush1.bf16.msra.mxu0 %v2939
    %2997 = vmatprep.subr.bf16.mxu0 %v2944
    %2998 = vmatpush1.bf16.msra.mxu0 %v2943
    %2999 = vmatprep.subr.bf16.mxu0 %v2948
    %3000 = vmatpush1.bf16.msra.mxu0 %v2947
    %3001 = vmatprep.subr.bf16.mxu0 0
    %3002 = vmatpush1.bf16.msra.mxu0 0
    %3003 = vmatprep.subr.bf16.mxu0 0
    %3004 = vmatpush1.bf16.msra.mxu0 0
    %3005 = vmatprep.subr.bf16.mxu0 0
    %3006 = vmatpush1.bf16.msra.mxu0 0
    %3007 = vmatprep.subr.bf16.mxu0 0
    %3008 = vmatpush1.bf16.msra.mxu0 0
    %3009 = vmatprep.subr.bf16.mxu0 0
    %3010 = vmatpush1.bf16.msra.mxu0 0
    %3011 = vmatprep.subr.bf16.mxu0 0
    %3012 = vmatpush1.bf16.msra.mxu0 0
    %3013 = vmatprep.subr.bf16.mxu0 0
    %3014 = vmatpush1.bf16.msra.mxu0 0
    %3015 = vmatprep.subr.bf16.mxu0 0
    %3016 = vmatpush1.bf16.msra.mxu0 0
    %3017 = vmatprep.subr.bf16.mxu0 0
    %3018 = vmatpush1.bf16.msra.mxu0 0
    %3019 = vmatprep.subr.bf16.mxu0 0
    %3020 = vmatpush1.bf16.msra.mxu0 0
    %3021 = vmatprep.subr.bf16.mxu0 0
    %3022 = vmatpush1.bf16.msra.mxu0 0
    %3023 = vmatprep.subr.bf16.mxu0 0
    %3024 = vmatpush1.bf16.msra.mxu0 0
    %3025 = vmatprep.mubr.bf16.mxu0 0
    %3026 = vmatmul.mubr.bf16.gmra.mrb[0].mxu0 %v2950
    %v3027 = vpop.f32.mrb[0].mxu0
    %v3028 = vadd.f32 0.0, %v3027
    %v3029 = vpop.f32.mrb[0].mxu0
    %v3030 = vadd.f32 0.0, %v3029
    %v3031 = vpop.f32.mrb[0].mxu0
    %v3032 = vpop.f32.mrb[0].mxu0
    %3033 = vdwg.mxu0
    %v3038 = vcombine.low %v2987, %v2989
    %v3039 = vcombine.low %v3028, %v3030
    %v3041 = vunpack.c.l.s4 1966171168
    %v3042 = vunpack.c.0.s8 %v3041
    %v3043 = vlaneseq
    %v3044 = vshrl.u32 %v3043, 7
    %v3045 = vsub.s32 %v3042, %v3044
    %v3046 = vrot.slane %v3038, %v3045
    %v3048 = vunpack.c.l.s4 1966171168
    %v3049 = vunpack.c.0.s8 %v3048
    %v3050 = vlaneseq
    %v3051 = vshrl.u32 %v3050, 7
    %v3052 = vsub.s32 %v3049, %v3051
    %v3053 = vrot.slane %v3039, %v3052
    %v3054 = vcombine.low %v3046, %v3053
    %v3056 = vunpack.c.l.s4 1966171168
    %v3057 = vunpack.c.0.s8 %v3056
    %v3058 = vlaneseq
    %v3059 = vshrl.u32 %v3058, 7
    %v3060 = vsub.s32 %v3057, %v3059
    %v3061 = vrot.slane %v3054, %v3060
    %v3063 = vadd.f32 %v2930, %v3061
    %v3064 = vld [vmem:[#allocation3 + $0xe] sm:$0x1]
    %v3065 = vpack.c.bf16 %v3064, %v3064
    %v3066 = vld [vmem:[#allocation2 + $0x700] sm:$0xff]
    %v3067 = vld [vmem:[#allocation2 + $0x708] sm:$0xff]
    %v3068 = vld [vmem:[#allocation2 + $0x710] sm:$0xff]
    %v3069 = vld [vmem:[#allocation2 + $0x718] sm:$0xff]
    %v3070 = vld [vmem:[#allocation2 + $0x720] sm:$0xff]
    %v3071 = vld [vmem:[#allocation2 + $0x728] sm:$0xff]
    %v3072 = vld [vmem:[#allocation2 + $0x730] sm:$0xff]
    %v3073 = vld [vmem:[#allocation2 + $0x738] sm:$0xff]
    %v3074 = vld [vmem:[#allocation2 + $0x740] sm:$0xff]
    %v3075 = vld [vmem:[#allocation2 + $0x748] sm:$0xff]
    %v3076 = vld [vmem:[#allocation2 + $0x750] sm:$0xff]
    %v3077 = vld [vmem:[#allocation2 + $0x758] sm:$0xff]
    %v3078 = vld [vmem:[#allocation2 + $0x760] sm:$0xff]
    %v3079 = vld [vmem:[#allocation2 + $0x768] sm:$0xff]
    %v3080 = vld [vmem:[#allocation2 + $0x770] sm:$0xff]
    %v3081 = vld [vmem:[#allocation2 + $0x778] sm:$0xff]
    %v3083 = vsel %vm761, %v3065, 0
    %3085 = vmatprep.subr.bf16.mxu0 %v3067
    %3086 = vmatpush1.bf16.msra.mxu0 %v3066
    %3087 = vmatprep.subr.bf16.mxu0 %v3071
    %3088 = vmatpush1.bf16.msra.mxu0 %v3070
    %3089 = vmatprep.subr.bf16.mxu0 %v3075
    %3090 = vmatpush1.bf16.msra.mxu0 %v3074
    %3091 = vmatprep.subr.bf16.mxu0 %v3079
    %3092 = vmatpush1.bf16.msra.mxu0 %v3078
    %3093 = vmatprep.subr.bf16.mxu0 0
    %3094 = vmatpush1.bf16.msra.mxu0 0
    %3095 = vmatprep.subr.bf16.mxu0 0
    %3096 = vmatpush1.bf16.msra.mxu0 0
    %3097 = vmatprep.subr.bf16.mxu0 0
    %3098 = vmatpush1.bf16.msra.mxu0 0
    %3099 = vmatprep.subr.bf16.mxu0 0
    %3100 = vmatpush1.bf16.msra.mxu0 0
    %3101 = vmatprep.subr.bf16.mxu0 0
    %3102 = vmatpush1.bf16.msra.mxu0 0
    %3103 = vmatprep.subr.bf16.mxu0 0
    %3104 = vmatpush1.bf16.msra.mxu0 0
    %3105 = vmatprep.subr.bf16.mxu0 0
    %3106 = vmatpush1.bf16.msra.mxu0 0
    %3107 = vmatprep.subr.bf16.mxu0 0
    %3108 = vmatpush1.bf16.msra.mxu0 0
    %3109 = vmatprep.subr.bf16.mxu0 0
    %3110 = vmatpush1.bf16.msra.mxu0 0
    %3111 = vmatprep.subr.bf16.mxu0 0
    %3112 = vmatpush1.bf16.msra.mxu0 0
    %3113 = vmatprep.subr.bf16.mxu0 0
    %3114 = vmatpush1.bf16.msra.mxu0 0
    %3115 = vmatprep.subr.bf16.mxu0 0
    %3116 = vmatpush1.bf16.msra.mxu0 0
    %3117 = vmatprep.mubr.bf16.mxu0 0
    %3118 = vmatmul.mubr.bf16.gmra.mrb[0].mxu0 %v3083
    %v3119 = vpop.f32.mrb[0].mxu0
    %v3120 = vadd.f32 0.0, %v3119
    %v3121 = vpop.f32.mrb[0].mxu0
    %v3122 = vadd.f32 0.0, %v3121
    %v3123 = vpop.f32.mrb[0].mxu0
    %v3124 = vpop.f32.mrb[0].mxu0
    %3125 = vdwg.mxu0
    %3126 = vmatprep.subr.bf16.mxu0 %v3069
    %3127 = vmatpush1.bf16.msra.mxu0 %v3068
    %3128 = vmatprep.subr.bf16.mxu0 %v3073
    %3129 = vmatpush1.bf16.msra.mxu0 %v3072
    %3130 = vmatprep.subr.bf16.mxu0 %v3077
    %3131 = vmatpush1.bf16.msra.mxu0 %v3076
    %3132 = vmatprep.subr.bf16.mxu0 %v3081
    %3133 = vmatpush1.bf16.msra.mxu0 %v3080
    %3134 = vmatprep.subr.bf16.mxu0 0
    %3135 = vmatpush1.bf16.msra.mxu0 0
    %3136 = vmatprep.subr.bf16.mxu0 0
    %3137 = vmatpush1.bf16.msra.mxu0 0
    %3138 = vmatprep.subr.bf16.mxu0 0
    %3139 = vmatpush1.bf16.msra.mxu0 0
    %3140 = vmatprep.subr.bf16.mxu0 0
    %3141 = vmatpush1.bf16.msra.mxu0 0
    %3142 = vmatprep.subr.bf16.mxu0 0
    %3143 = vmatpush1.bf16.msra.mxu0 0
    %3144 = vmatprep.subr.bf16.mxu0 0
    %3145 = vmatpush1.bf16.msra.mxu0 0
    %3146 = vmatprep.subr.bf16.mxu0 0
    %3147 = vmatpush1.bf16.msra.mxu0 0
    %3148 = vmatprep.subr.bf16.mxu0 0
    %3149 = vmatpush1.bf16.msra.mxu0 0
    %3150 = vmatprep.subr.bf16.mxu0 0
    %3151 = vmatpush1.bf16.msra.mxu0 0
    %3152 = vmatprep.subr.bf16.mxu0 0
    %3153 = vmatpush1.bf16.msra.mxu0 0
    %3154 = vmatprep.subr.bf16.mxu0 0
    %3155 = vmatpush1.bf16.msra.mxu0 0
    %3156 = vmatprep.subr.bf16.mxu0 0
    %3157 = vmatpush1.bf16.msra.mxu0 0
    %3158 = vmatprep.mubr.bf16.mxu0 0
    %3159 = vmatmul.mubr.bf16.gmra.mrb[0].mxu0 %v3083
    %v3160 = vpop.f32.mrb[0].mxu0
    %v3161 = vadd.f32 0.0, %v3160
    %v3162 = vpop.f32.mrb[0].mxu0
    %v3163 = vadd.f32 0.0, %v3162
    %v3164 = vpop.f32.mrb[0].mxu0
    %v3165 = vpop.f32.mrb[0].mxu0
    %3166 = vdwg.mxu0
    %v3171 = vcombine.low %v3120, %v3122
    %v3172 = vcombine.low %v3161, %v3163
    %v3174 = vunpack.c.l.s4 1966171168
    %v3175 = vunpack.c.0.s8 %v3174
    %v3176 = vlaneseq
    %v3177 = vshrl.u32 %v3176, 7
    %v3178 = vsub.s32 %v3175, %v3177
    %v3179 = vrot.slane %v3171, %v3178
    %v3181 = vunpack.c.l.s4 1966171168
    %v3182 = vunpack.c.0.s8 %v3181
    %v3183 = vlaneseq
    %v3184 = vshrl.u32 %v3183, 7
    %v3185 = vsub.s32 %v3182, %v3184
    %v3186 = vrot.slane %v3172, %v3185
    %v3187 = vcombine.low %v3179, %v3186
    %v3189 = vunpack.c.l.s4 1966171168
    %v3190 = vunpack.c.0.s8 %v3189
    %v3191 = vlaneseq
    %v3192 = vshrl.u32 %v3191, 7
    %v3193 = vsub.s32 %v3190, %v3192
    %v3194 = vrot.slane %v3187, %v3193
    %v3196 = vadd.f32 %v3063, %v3194
    %v3197 = vld [vmem:[#allocation3 + $0xf] sm:$0x1]
    %v3198 = vpack.c.bf16 %v3197, %v3197
    %v3199 = vld [vmem:[#allocation2 + $0x780] sm:$0xff]
    %v3200 = vld [vmem:[#allocation2 + $0x788] sm:$0xff]
    %v3201 = vld [vmem:[#allocation2 + $0x790] sm:$0xff]
    %v3202 = vld [vmem:[#allocation2 + $0x798] sm:$0xff]
    %v3203 = vld [vmem:[#allocation2 + $0x7a0] sm:$0xff]
    %v3204 = vld [vmem:[#allocation2 + $0x7a8] sm:$0xff]
    %v3205 = vld [vmem:[#allocation2 + $0x7b0] sm:$0xff]
    %v3206 = vld [vmem:[#allocation2 + $0x7b8] sm:$0xff]
    %v3207 = vld [vmem:[#allocation2 + $0x7c0] sm:$0xff]
    %v3208 = vld [vmem:[#allocation2 + $0x7c8] sm:$0xff]
    %v3209 = vld [vmem:[#allocation2 + $0x7d0] sm:$0xff]
    %v3210 = vld [vmem:[#allocation2 + $0x7d8] sm:$0xff]
    %v3211 = vld [vmem:[#allocation2 + $0x7e0] sm:$0xff]
    %v3212 = vld [vmem:[#allocation2 + $0x7e8] sm:$0xff]
    %v3213 = vld [vmem:[#allocation2 + $0x7f0] sm:$0xff]
    %v3214 = vld [vmem:[#allocation2 + $0x7f8] sm:$0xff]
    %v3216 = vsel %vm761, %v3198, 0
    %3218 = vmatprep.subr.bf16.mxu0 %v3200
    %3219 = vmatpush1.bf16.msra.mxu0 %v3199
    %3220 = vmatprep.subr.bf16.mxu0 %v3204
    %3221 = vmatpush1.bf16.msra.mxu0 %v3203
    %3222 = vmatprep.subr.bf16.mxu0 %v3208
    %3223 = vmatpush1.bf16.msra.mxu0 %v3207
    %3224 = vmatprep.subr.bf16.mxu0 %v3212
    %3225 = vmatpush1.bf16.msra.mxu0 %v3211
    %3226 = vmatprep.subr.bf16.mxu0 0
    %3227 = vmatpush1.bf16.msra.mxu0 0
    %3228 = vmatprep.subr.bf16.mxu0 0
    %3229 = vmatpush1.bf16.msra.mxu0 0
    %3230 = vmatprep.subr.bf16.mxu0 0
    %3231 = vmatpush1.bf16.msra.mxu0 0
    %3232 = vmatprep.subr.bf16.mxu0 0
    %3233 = vmatpush1.bf16.msra.mxu0 0
    %3234 = vmatprep.subr.bf16.mxu0 0
    %3235 = vmatpush1.bf16.msra.mxu0 0
    %3236 = vmatprep.subr.bf16.mxu0 0
    %3237 = vmatpush1.bf16.msra.mxu0 0
    %3238 = vmatprep.subr.bf16.mxu0 0
    %3239 = vmatpush1.bf16.msra.mxu0 0
    %3240 = vmatprep.subr.bf16.mxu0 0
    %3241 = vmatpush1.bf16.msra.mxu0 0
    %3242 = vmatprep.subr.bf16.mxu0 0
    %3243 = vmatpush1.bf16.msra.mxu0 0
    %3244 = vmatprep.subr.bf16.mxu0 0
    %3245 = vmatpush1.bf16.msra.mxu0 0
    %3246 = vmatprep.subr.bf16.mxu0 0
    %3247 = vmatpush1.bf16.msra.mxu0 0
    %3248 = vmatprep.subr.bf16.mxu0 0
    %3249 = vmatpush1.bf16.msra.mxu0 0
    %3250 = vmatprep.mubr.bf16.mxu0 0
    %3251 = vmatmul.mubr.bf16.gmra.mrb[0].mxu0 %v3216
    %v3252 = vpop.f32.mrb[0].mxu0
    %v3253 = vadd.f32 0.0, %v3252
    %v3254 = vpop.f32.mrb[0].mxu0
    %v3255 = vadd.f32 0.0, %v3254
    %v3256 = vpop.f32.mrb[0].mxu0
    %v3257 = vpop.f32.mrb[0].mxu0
    %3258 = vdwg.mxu0
    %3259 = vmatprep.subr.bf16.mxu0 %v3202
    %3260 = vmatpush1.bf16.msra.mxu0 %v3201
    %3261 = vmatprep.subr.bf16.mxu0 %v3206
    %3262 = vmatpush1.bf16.msra.mxu0 %v3205
    %3263 = vmatprep.subr.bf16.mxu0 %v3210
    %3264 = vmatpush1.bf16.msra.mxu0 %v3209
    %3265 = vmatprep.subr.bf16.mxu0 %v3214
    %3266 = vmatpush1.bf16.msra.mxu0 %v3213
    %3267 = vmatprep.subr.bf16.mxu0 0
    %3268 = vmatpush1.bf16.msra.mxu0 0
    %3269 = vmatprep.subr.bf16.mxu0 0
    %3270 = vmatpush1.bf16.msra.mxu0 0
    %3271 = vmatprep.subr.bf16.mxu0 0
    %3272 = vmatpush1.bf16.msra.mxu0 0
    %3273 = vmatprep.subr.bf16.mxu0 0
    %3274 = vmatpush1.bf16.msra.mxu0 0
    %3275 = vmatprep.subr.bf16.mxu0 0
    %3276 = vmatpush1.bf16.msra.mxu0 0
    %3277 = vmatprep.subr.bf16.mxu0 0
    %3278 = vmatpush1.bf16.msra.mxu0 0
    %3279 = vmatprep.subr.bf16.mxu0 0
    %3280 = vmatpush1.bf16.msra.mxu0 0
    %3281 = vmatprep.subr.bf16.mxu0 0
    %3282 = vmatpush1.bf16.msra.mxu0 0
    %3283 = vmatprep.subr.bf16.mxu0 0
    %3284 = vmatpush1.bf16.msra.mxu0 0
    %3285 = vmatprep.subr.bf16.mxu0 0
    %3286 = vmatpush1.bf16.msra.mxu0 0
    %3287 = vmatprep.subr.bf16.mxu0 0
    %3288 = vmatpush1.bf16.msra.mxu0 0
    %3289 = vmatprep.subr.bf16.mxu0 0
    %3290 = vmatpush1.bf16.msra.mxu0 0
    %3291 = vmatprep.mubr.bf16.mxu0 0
    %3292 = vmatmul.mubr.bf16.gmra.mrb[0].mxu0 %v3216
    %v3293 = vpop.f32.mrb[0].mxu0
    %v3294 = vadd.f32 0.0, %v3293
    %v3295 = vpop.f32.mrb[0].mxu0
    %v3296 = vadd.f32 0.0, %v3295
    %v3297 = vpop.f32.mrb[0].mxu0
    %v3298 = vpop.f32.mrb[0].mxu0
    %3299 = vdwg.mxu0
    %v3304 = vcombine.low %v3253, %v3255
    %v3305 = vcombine.low %v3294, %v3296
    %v3307 = vunpack.c.l.s4 1966171168
    %v3308 = vunpack.c.0.s8 %v3307
    %v3309 = vlaneseq
    %v3310 = vshrl.u32 %v3309, 7
    %v3311 = vsub.s32 %v3308, %v3310
    %v3312 = vrot.slane %v3304, %v3311
    %v3314 = vunpack.c.l.s4 1966171168
    %v3315 = vunpack.c.0.s8 %v3314
    %v3316 = vlaneseq
    %v3317 = vshrl.u32 %v3316, 7
    %v3318 = vsub.s32 %v3315, %v3317
    %v3319 = vrot.slane %v3305, %v3318
    %v3320 = vcombine.low %v3312, %v3319
    %v3322 = vunpack.c.l.s4 1966171168
    %v3323 = vunpack.c.0.s8 %v3322
    %v3324 = vlaneseq
    %v3325 = vshrl.u32 %v3324, 7
    %v3326 = vsub.s32 %v3323, %v3325
    %v3327 = vrot.slane %v3320, %v3326
    %v3329 = vadd.f32 %v3196, %v3327
    %v3330 = vld [vmem:[#allocation3 + $0x10] sm:$0x1]
    %v3331 = vpack.c.bf16 %v3330, %v3330
    %v3332 = vld [vmem:[#allocation2 + $0x800] sm:$0xff]
    %v3333 = vld [vmem:[#allocation2 + $0x808] sm:$0xff]
    %v3334 = vld [vmem:[#allocation2 + $0x810] sm:$0xff]
    %v3335 = vld [vmem:[#allocation2 + $0x818] sm:$0xff]
    %v3336 = vld [vmem:[#allocation2 + $0x820] sm:$0xff]
    %v3337 = vld [vmem:[#allocation2 + $0x828] sm:$0xff]
    %v3338 = vld [vmem:[#allocation2 + $0x830] sm:$0xff]
    %v3339 = vld [vmem:[#allocation2 + $0x838] sm:$0xff]
    %v3340 = vld [vmem:[#allocation2 + $0x840] sm:$0xff]
    %v3341 = vld [vmem:[#allocation2 + $0x848] sm:$0xff]
    %v3342 = vld [vmem:[#allocation2 + $0x850] sm:$0xff]
    %v3343 = vld [vmem:[#allocation2 + $0x858] sm:$0xff]
    %v3344 = vld [vmem:[#allocation2 + $0x860] sm:$0xff]
    %v3345 = vld [vmem:[#allocation2 + $0x868] sm:$0xff]
    %v3346 = vld [vmem:[#allocation2 + $0x870] sm:$0xff]
    %v3347 = vld [vmem:[#allocation2 + $0x878] sm:$0xff]
    %v3349 = vsel %vm761, %v3331, 0
    %3351 = vmatprep.subr.bf16.mxu0 %v3333
    %3352 = vmatpush1.bf16.msra.mxu0 %v3332
    %3353 = vmatprep.subr.bf16.mxu0 %v3337
    %3354 = vmatpush1.bf16.msra.mxu0 %v3336
    %3355 = vmatprep.subr.bf16.mxu0 %v3341
    %3356 = vmatpush1.bf16.msra.mxu0 %v3340
    %3357 = vmatprep.subr.bf16.mxu0 %v3345
    %3358 = vmatpush1.bf16.msra.mxu0 %v3344
    %3359 = vmatprep.subr.bf16.mxu0 0
    %3360 = vmatpush1.bf16.msra.mxu0 0
    %3361 = vmatprep.subr.bf16.mxu0 0
    %3362 = vmatpush1.bf16.msra.mxu0 0
    %3363 = vmatprep.subr.bf16.mxu0 0
    %3364 = vmatpush1.bf16.msra.mxu0 0
    %3365 = vmatprep.subr.bf16.mxu0 0
    %3366 = vmatpush1.bf16.msra.mxu0 0
    %3367 = vmatprep.subr.bf16.mxu0 0
    %3368 = vmatpush1.bf16.msra.mxu0 0
    %3369 = vmatprep.subr.bf16.mxu0 0
    %3370 = vmatpush1.bf16.msra.mxu0 0
    %3371 = vmatprep.subr.bf16.mxu0 0
    %3372 = vmatpush1.bf16.msra.mxu0 0
    %3373 = vmatprep.subr.bf16.mxu0 0
    %3374 = vmatpush1.bf16.msra.mxu0 0
    %3375 = vmatprep.subr.bf16.mxu0 0
    %3376 = vmatpush1.bf16.msra.mxu0 0
    %3377 = vmatprep.subr.bf16.mxu0 0
    %3378 = vmatpush1.bf16.msra.mxu0 0
    %3379 = vmatprep.subr.bf16.mxu0 0
    %3380 = vmatpush1.bf16.msra.mxu0 0
    %3381 = vmatprep.subr.bf16.mxu0 0
    %3382 = vmatpush1.bf16.msra.mxu0 0
    %3383 = vmatprep.mubr.bf16.mxu0 0
    %3384 = vmatmul.mubr.bf16.gmra.mrb[0].mxu0 %v3349
    %v3385 = vpop.f32.mrb[0].mxu0
    %v3386 = vadd.f32 0.0, %v3385
    %v3387 = vpop.f32.mrb[0].mxu0
    %v3388 = vadd.f32 0.0, %v3387
    %v3389 = vpop.f32.mrb[0].mxu0
    %v3390 = vpop.f32.mrb[0].mxu0
    %3391 = vdwg.mxu0
    %3392 = vmatprep.subr.bf16.mxu0 %v3335
    %3393 = vmatpush1.bf16.msra.mxu0 %v3334
    %3394 = vmatprep.subr.bf16.mxu0 %v3339
    %3395 = vmatpush1.bf16.msra.mxu0 %v3338
    %3396 = vmatprep.subr.bf16.mxu0 %v3343
    %3397 = vmatpush1.bf16.msra.mxu0 %v3342
    %3398 = vmatprep.subr.bf16.mxu0 %v3347
    %3399 = vmatpush1.bf16.msra.mxu0 %v3346
    %3400 = vmatprep.subr.bf16.mxu0 0
    %3401 = vmatpush1.bf16.msra.mxu0 0
    %3402 = vmatprep.subr.bf16.mxu0 0
    %3403 = vmatpush1.bf16.msra.mxu0 0
    %3404 = vmatprep.subr.bf16.mxu0 0
    %3405 = vmatpush1.bf16.msra.mxu0 0
    %3406 = vmatprep.subr.bf16.mxu0 0
    %3407 = vmatpush1.bf16.msra.mxu0 0
    %3408 = vmatprep.subr.bf16.mxu0 0
    %3409 = vmatpush1.bf16.msra.mxu0 0
    %3410 = vmatprep.subr.bf16.mxu0 0
    %3411 = vmatpush1.bf16.msra.mxu0 0
    %3412 = vmatprep.subr.bf16.mxu0 0
    %3413 = vmatpush1.bf16.msra.mxu0 0
    %3414 = vmatprep.subr.bf16.mxu0 0
    %3415 = vmatpush1.bf16.msra.mxu0 0
    %3416 = vmatprep.subr.bf16.mxu0 0
    %3417 = vmatpush1.bf16.msra.mxu0 0
    %3418 = vmatprep.subr.bf16.mxu0 0
    %3419 = vmatpush1.bf16.msra.mxu0 0
    %3420 = vmatprep.subr.bf16.mxu0 0
    %3421 = vmatpush1.bf16.msra.mxu0 0
    %3422 = vmatprep.subr.bf16.mxu0 0
    %3423 = vmatpush1.bf16.msra.mxu0 0
    %3424 = vmatprep.mubr.bf16.mxu0 0
    %3425 = vmatmul.mubr.bf16.gmra.mrb[0].mxu0 %v3349
    %v3426 = vpop.f32.mrb[0].mxu0
    %v3427 = vadd.f32 0.0, %v3426
    %v3428 = vpop.f32.mrb[0].mxu0
    %v3429 = vadd.f32 0.0, %v3428
    %v3430 = vpop.f32.mrb[0].mxu0
    %v3431 = vpop.f32.mrb[0].mxu0
    %3432 = vdwg.mxu0
    %v3437 = vcombine.low %v3386, %v3388
    %v3438 = vcombine.low %v3427, %v3429
    %v3440 = vunpack.c.l.s4 1966171168
    %v3441 = vunpack.c.0.s8 %v3440
    %v3442 = vlaneseq
    %v3443 = vshrl.u32 %v3442, 7
    %v3444 = vsub.s32 %v3441, %v3443
    %v3445 = vrot.slane %v3437, %v3444
    %v3447 = vunpack.c.l.s4 1966171168
    %v3448 = vunpack.c.0.s8 %v3447
    %v3449 = vlaneseq
    %v3450 = vshrl.u32 %v3449, 7
    %v3451 = vsub.s32 %v3448, %v3450
    %v3452 = vrot.slane %v3438, %v3451
    %v3453 = vcombine.low %v3445, %v3452
    %v3455 = vunpack.c.l.s4 1966171168
    %v3456 = vunpack.c.0.s8 %v3455
    %v3457 = vlaneseq
    %v3458 = vshrl.u32 %v3457, 7
    %v3459 = vsub.s32 %v3456, %v3458
    %v3460 = vrot.slane %v3453, %v3459
    %v3462 = vadd.f32 %v3329, %v3460
    %v3463 = vld [vmem:[#allocation3 + $0x11] sm:$0x1]
    %v3464 = vpack.c.bf16 %v3463, %v3463
    %v3465 = vld [vmem:[#allocation2 + $0x880] sm:$0xff]
    %v3466 = vld [vmem:[#allocation2 + $0x888] sm:$0xff]
    %v3467 = vld [vmem:[#allocation2 + $0x890] sm:$0xff]
    %v3468 = vld [vmem:[#allocation2 + $0x898] sm:$0xff]
    %v3469 = vld [vmem:[#allocation2 + $0x8a0] sm:$0xff]
    %v3470 = vld [vmem:[#allocation2 + $0x8a8] sm:$0xff]
    %v3471 = vld [vmem:[#allocation2 + $0x8b0] sm:$0xff]
    %v3472 = vld [vmem:[#allocation2 + $0x8b8] sm:$0xff]
    %v3473 = vld [vmem:[#allocation2 + $0x8c0] sm:$0xff]
    %v3474 = vld [vmem:[#allocation2 + $0x8c8] sm:$0xff]
    %v3475 = vld [vmem:[#allocation2 + $0x8d0] sm:$0xff]
    %v3476 = vld [vmem:[#allocation2 + $0x8d8] sm:$0xff]
    %v3477 = vld [vmem:[#allocation2 + $0x8e0] sm:$0xff]
    %v3478 = vld [vmem:[#allocation2 + $0x8e8] sm:$0xff]
    %v3479 = vld [vmem:[#allocation2 + $0x8f0] sm:$0xff]
    %v3480 = vld [vmem:[#allocation2 + $0x8f8] sm:$0xff]
    %v3482 = vsel %vm761, %v3464, 0
    %3484 = vmatprep.subr.bf16.mxu0 %v3466
    %3485 = vmatpush1.bf16.msra.mxu0 %v3465
    %3486 = vmatprep.subr.bf16.mxu0 %v3470
    %3487 = vmatpush1.bf16.msra.mxu0 %v3469
    %3488 = vmatprep.subr.bf16.mxu0 %v3474
    %3489 = vmatpush1.bf16.msra.mxu0 %v3473
    %3490 = vmatprep.subr.bf16.mxu0 %v3478
    %3491 = vmatpush1.bf16.msra.mxu0 %v3477
    %3492 = vmatprep.subr.bf16.mxu0 0
    %3493 = vmatpush1.bf16.msra.mxu0 0
    %3494 = vmatprep.subr.bf16.mxu0 0
    %3495 = vmatpush1.bf16.msra.mxu0 0
    %3496 = vmatprep.subr.bf16.mxu0 0
    %3497 = vmatpush1.bf16.msra.mxu0 0
    %3498 = vmatprep.subr.bf16.mxu0 0
    %3499 = vmatpush1.bf16.msra.mxu0 0
    %3500 = vmatprep.subr.bf16.mxu0 0
    %3501 = vmatpush1.bf16.msra.mxu0 0
    %3502 = vmatprep.subr.bf16.mxu0 0
    %3503 = vmatpush1.bf16.msra.mxu0 0
    %3504 = vmatprep.subr.bf16.mxu0 0
    %3505 = vmatpush1.bf16.msra.mxu0 0
    %3506 = vmatprep.subr.bf16.mxu0 0
    %3507 = vmatpush1.bf16.msra.mxu0 0
    %3508 = vmatprep.subr.bf16.mxu0 0
    %3509 = vmatpush1.bf16.msra.mxu0 0
    %3510 = vmatprep.subr.bf16.mxu0 0
    %3511 = vmatpush1.bf16.msra.mxu0 0
    %3512 = vmatprep.subr.bf16.mxu0 0
    %3513 = vmatpush1.bf16.msra.mxu0 0
    %3514 = vmatprep.subr.bf16.mxu0 0
    %3515 = vmatpush1.bf16.msra.mxu0 0
    %3516 = vmatprep.mubr.bf16.mxu0 0
    %3517 = vmatmul.mubr.bf16.gmra.mrb[0].mxu0 %v3482
    %v3518 = vpop.f32.mrb[0].mxu0
    %v3519 = vadd.f32 0.0, %v3518
    %v3520 = vpop.f32.mrb[0].mxu0
    %v3521 = vadd.f32 0.0, %v3520
    %v3522 = vpop.f32.mrb[0].mxu0
    %v3523 = vpop.f32.mrb[0].mxu0
    %3524 = vdwg.mxu0
    %3525 = vmatprep.subr.bf16.mxu0 %v3468
    %3526 = vmatpush1.bf16.msra.mxu0 %v3467
    %3527 = vmatprep.subr.bf16.mxu0 %v3472
    %3528 = vmatpush1.bf16.msra.mxu0 %v3471
    %3529 = vmatprep.subr.bf16.mxu0 %v3476
    %3530 = vmatpush1.bf16.msra.mxu0 %v3475
    %3531 = vmatprep.subr.bf16.mxu0 %v3480
    %3532 = vmatpush1.bf16.msra.mxu0 %v3479
    %3533 = vmatprep.subr.bf16.mxu0 0
    %3534 = vmatpush1.bf16.msra.mxu0 0
    %3535 = vmatprep.subr.bf16.mxu0 0
    %3536 = vmatpush1.bf16.msra.mxu0 0
    %3537 = vmatprep.subr.bf16.mxu0 0
    %3538 = vmatpush1.bf16.msra.mxu0 0
    %3539 = vmatprep.subr.bf16.mxu0 0
    %3540 = vmatpush1.bf16.msra.mxu0 0
    %3541 = vmatprep.subr.bf16.mxu0 0
    %3542 = vmatpush1.bf16.msra.mxu0 0
    %3543 = vmatprep.subr.bf16.mxu0 0
    %3544 = vmatpush1.bf16.msra.mxu0 0
    %3545 = vmatprep.subr.bf16.mxu0 0
    %3546 = vmatpush1.bf16.msra.mxu0 0
    %3547 = vmatprep.subr.bf16.mxu0 0
    %3548 = vmatpush1.bf16.msra.mxu0 0
    %3549 = vmatprep.subr.bf16.mxu0 0
    %3550 = vmatpush1.bf16.msra.mxu0 0
    %3551 = vmatprep.subr.bf16.mxu0 0
    %3552 = vmatpush1.bf16.msra.mxu0 0
    %3553 = vmatprep.subr.bf16.mxu0 0
    %3554 = vmatpush1.bf16.msra.mxu0 0
    %3555 = vmatprep.subr.bf16.mxu0 0
    %3556 = vmatpush1.bf16.msra.mxu0 0
    %3557 = vmatprep.mubr.bf16.mxu0 0
    %3558 = vmatmul.mubr.bf16.gmra.mrb[0].mxu0 %v3482
    %v3559 = vpop.f32.mrb[0].mxu0
    %v3560 = vadd.f32 0.0, %v3559
    %v3561 = vpop.f32.mrb[0].mxu0
    %v3562 = vadd.f32 0.0, %v3561
    %v3563 = vpop.f32.mrb[0].mxu0
    %v3564 = vpop.f32.mrb[0].mxu0
    %3565 = vdwg.mxu0
    %v3570 = vcombine.low %v3519, %v3521
    %v3571 = vcombine.low %v3560, %v3562
    %v3573 = vunpack.c.l.s4 1966171168
    %v3574 = vunpack.c.0.s8 %v3573
    %v3575 = vlaneseq
    %v3576 = vshrl.u32 %v3575, 7
    %v3577 = vsub.s32 %v3574, %v3576
    %v3578 = vrot.slane %v3570, %v3577
    %v3580 = vunpack.c.l.s4 1966171168
    %v3581 = vunpack.c.0.s8 %v3580
    %v3582 = vlaneseq
    %v3583 = vshrl.u32 %v3582, 7
    %v3584 = vsub.s32 %v3581, %v3583
    %v3585 = vrot.slane %v3571, %v3584
    %v3586 = vcombine.low %v3578, %v3585
    %v3588 = vunpack.c.l.s4 1966171168
    %v3589 = vunpack.c.0.s8 %v3588
    %v3590 = vlaneseq
    %v3591 = vshrl.u32 %v3590, 7
    %v3592 = vsub.s32 %v3589, %v3591
    %v3593 = vrot.slane %v3586, %v3592
    %v3595 = vadd.f32 %v3462, %v3593
    %v3596 = vld [vmem:[#allocation3 + $0x12] sm:$0x1]
    %v3597 = vpack.c.bf16 %v3596, %v3596
    %v3598 = vld [vmem:[#allocation2 + $0x900] sm:$0xff]
    %v3599 = vld [vmem:[#allocation2 + $0x908] sm:$0xff]
    %v3600 = vld [vmem:[#allocation2 + $0x910] sm:$0xff]
    %v3601 = vld [vmem:[#allocation2 + $0x918] sm:$0xff]
    %v3602 = vld [vmem:[#allocation2 + $0x920] sm:$0xff]
    %v3603 = vld [vmem:[#allocation2 + $0x928] sm:$0xff]
    %v3604 = vld [vmem:[#allocation2 + $0x930] sm:$0xff]
    %v3605 = vld [vmem:[#allocation2 + $0x938] sm:$0xff]
    %v3606 = vld [vmem:[#allocation2 + $0x940] sm:$0xff]
    %v3607 = vld [vmem:[#allocation2 + $0x948] sm:$0xff]
    %v3608 = vld [vmem:[#allocation2 + $0x950] sm:$0xff]
    %v3609 = vld [vmem:[#allocation2 + $0x958] sm:$0xff]
    %v3610 = vld [vmem:[#allocation2 + $0x960] sm:$0xff]
    %v3611 = vld [vmem:[#allocation2 + $0x968] sm:$0xff]
    %v3612 = vld [vmem:[#allocation2 + $0x970] sm:$0xff]
    %v3613 = vld [vmem:[#allocation2 + $0x978] sm:$0xff]
    %v3615 = vsel %vm761, %v3597, 0
    %3617 = vmatprep.subr.bf16.mxu0 %v3599
    %3618 = vmatpush1.bf16.msra.mxu0 %v3598
    %3619 = vmatprep.subr.bf16.mxu0 %v3603
    %3620 = vmatpush1.bf16.msra.mxu0 %v3602
    %3621 = vmatprep.subr.bf16.mxu0 %v3607
    %3622 = vmatpush1.bf16.msra.mxu0 %v3606
    %3623 = vmatprep.subr.bf16.mxu0 %v3611
    %3624 = vmatpush1.bf16.msra.mxu0 %v3610
    %3625 = vmatprep.subr.bf16.mxu0 0
    %3626 = vmatpush1.bf16.msra.mxu0 0
    %3627 = vmatprep.subr.bf16.mxu0 0
    %3628 = vmatpush1.bf16.msra.mxu0 0
    %3629 = vmatprep.subr.bf16.mxu0 0
    %3630 = vmatpush1.bf16.msra.mxu0 0
    %3631 = vmatprep.subr.bf16.mxu0 0
    %3632 = vmatpush1.bf16.msra.mxu0 0
    %3633 = vmatprep.subr.bf16.mxu0 0
    %3634 = vmatpush1.bf16.msra.mxu0 0
    %3635 = vmatprep.subr.bf16.mxu0 0
    %3636 = vmatpush1.bf16.msra.mxu0 0
    %3637 = vmatprep.subr.bf16.mxu0 0
    %3638 = vmatpush1.bf16.msra.mxu0 0
    %3639 = vmatprep.subr.bf16.mxu0 0
    %3640 = vmatpush1.bf16.msra.mxu0 0
    %3641 = vmatprep.subr.bf16.mxu0 0
    %3642 = vmatpush1.bf16.msra.mxu0 0
    %3643 = vmatprep.subr.bf16.mxu0 0
    %3644 = vmatpush1.bf16.msra.mxu0 0
    %3645 = vmatprep.subr.bf16.mxu0 0
    %3646 = vmatpush1.bf16.msra.mxu0 0
    %3647 = vmatprep.subr.bf16.mxu0 0
    %3648 = vmatpush1.bf16.msra.mxu0 0
    %3649 = vmatprep.mubr.bf16.mxu0 0
    %3650 = vmatmul.mubr.bf16.gmra.mrb[0].mxu0 %v3615
    %v3651 = vpop.f32.mrb[0].mxu0
    %v3652 = vadd.f32 0.0, %v3651
    %v3653 = vpop.f32.mrb[0].mxu0
    %v3654 = vadd.f32 0.0, %v3653
    %v3655 = vpop.f32.mrb[0].mxu0
    %v3656 = vpop.f32.mrb[0].mxu0
    %3657 = vdwg.mxu0
    %3658 = vmatprep.subr.bf16.mxu0 %v3601
    %3659 = vmatpush1.bf16.msra.mxu0 %v3600
    %3660 = vmatprep.subr.bf16.mxu0 %v3605
    %3661 = vmatpush1.bf16.msra.mxu0 %v3604
    %3662 = vmatprep.subr.bf16.mxu0 %v3609
    %3663 = vmatpush1.bf16.msra.mxu0 %v3608
    %3664 = vmatprep.subr.bf16.mxu0 %v3613
    %3665 = vmatpush1.bf16.msra.mxu0 %v3612
    %3666 = vmatprep.subr.bf16.mxu0 0
    %3667 = vmatpush1.bf16.msra.mxu0 0
    %3668 = vmatprep.subr.bf16.mxu0 0
    %3669 = vmatpush1.bf16.msra.mxu0 0
    %3670 = vmatprep.subr.bf16.mxu0 0
    %3671 = vmatpush1.bf16.msra.mxu0 0
    %3672 = vmatprep.subr.bf16.mxu0 0
    %3673 = vmatpush1.bf16.msra.mxu0 0
    %3674 = vmatprep.subr.bf16.mxu0 0
    %3675 = vmatpush1.bf16.msra.mxu0 0
    %3676 = vmatprep.subr.bf16.mxu0 0
    %3677 = vmatpush1.bf16.msra.mxu0 0
    %3678 = vmatprep.subr.bf16.mxu0 0
    %3679 = vmatpush1.bf16.msra.mxu0 0
    %3680 = vmatprep.subr.bf16.mxu0 0
    %3681 = vmatpush1.bf16.msra.mxu0 0
    %3682 = vmatprep.subr.bf16.mxu0 0
    %3683 = vmatpush1.bf16.msra.mxu0 0
    %3684 = vmatprep.subr.bf16.mxu0 0
    %3685 = vmatpush1.bf16.msra.mxu0 0
    %3686 = vmatprep.subr.bf16.mxu0 0
    %3687 = vmatpush1.bf16.msra.mxu0 0
    %3688 = vmatprep.subr.bf16.mxu0 0
    %3689 = vmatpush1.bf16.msra.mxu0 0
    %3690 = vmatprep.mubr.bf16.mxu0 0
    %3691 = vmatmul.mubr.bf16.gmra.mrb[0].mxu0 %v3615
    %v3692 = vpop.f32.mrb[0].mxu0
    %v3693 = vadd.f32 0.0, %v3692
    %v3694 = vpop.f32.mrb[0].mxu0
    %v3695 = vadd.f32 0.0, %v3694
    %v3696 = vpop.f32.mrb[0].mxu0
    %v3697 = vpop.f32.mrb[0].mxu0
    %3698 = vdwg.mxu0
    %v3703 = vcombine.low %v3652, %v3654
    %v3704 = vcombine.low %v3693, %v3695
    %v3706 = vunpack.c.l.s4 1966171168
    %v3707 = vunpack.c.0.s8 %v3706
    %v3708 = vlaneseq
    %v3709 = vshrl.u32 %v3708, 7
    %v3710 = vsub.s32 %v3707, %v3709
    %v3711 = vrot.slane %v3703, %v3710
    %v3713 = vunpack.c.l.s4 1966171168
    %v3714 = vunpack.c.0.s8 %v3713
    %v3715 = vlaneseq
    %v3716 = vshrl.u32 %v3715, 7
    %v3717 = vsub.s32 %v3714, %v3716
    %v3718 = vrot.slane %v3704, %v3717
    %v3719 = vcombine.low %v3711, %v3718
    %v3721 = vunpack.c.l.s4 1966171168
    %v3722 = vunpack.c.0.s8 %v3721
    %v3723 = vlaneseq
    %v3724 = vshrl.u32 %v3723, 7
    %v3725 = vsub.s32 %v3722, %v3724
    %v3726 = vrot.slane %v3719, %v3725
    %v3728 = vadd.f32 %v3595, %v3726
    %v3729 = vld [vmem:[#allocation3 + $0x13] sm:$0x1]
    %v3730 = vpack.c.bf16 %v3729, %v3729
    %v3731 = vld [vmem:[#allocation2 + $0x980] sm:$0xff]
    %v3732 = vld [vmem:[#allocation2 + $0x988] sm:$0xff]
    %v3733 = vld [vmem:[#allocation2 + $0x990] sm:$0xff]
    %v3734 = vld [vmem:[#allocation2 + $0x998] sm:$0xff]
    %v3735 = vld [vmem:[#allocation2 + $0x9a0] sm:$0xff]
    %v3736 = vld [vmem:[#allocation2 + $0x9a8] sm:$0xff]
    %v3737 = vld [vmem:[#allocation2 + $0x9b0] sm:$0xff]
    %v3738 = vld [vmem:[#allocation2 + $0x9b8] sm:$0xff]
    %v3739 = vld [vmem:[#allocation2 + $0x9c0] sm:$0xff]
    %v3740 = vld [vmem:[#allocation2 + $0x9c8] sm:$0xff]
    %v3741 = vld [vmem:[#allocation2 + $0x9d0] sm:$0xff]
    %v3742 = vld [vmem:[#allocation2 + $0x9d8] sm:$0xff]
    %v3743 = vld [vmem:[#allocation2 + $0x9e0] sm:$0xff]
    %v3744 = vld [vmem:[#allocation2 + $0x9e8] sm:$0xff]
    %v3745 = vld [vmem:[#allocation2 + $0x9f0] sm:$0xff]
    %v3746 = vld [vmem:[#allocation2 + $0x9f8] sm:$0xff]
    %v3748 = vsel %vm761, %v3730, 0
    %3750 = vmatprep.subr.bf16.mxu0 %v3732
    %3751 = vmatpush1.bf16.msra.mxu0 %v3731
    %3752 = vmatprep.subr.bf16.mxu0 %v3736
    %3753 = vmatpush1.bf16.msra.mxu0 %v3735
    %3754 = vmatprep.subr.bf16.mxu0 %v3740
    %3755 = vmatpush1.bf16.msra.mxu0 %v3739
    %3756 = vmatprep.subr.bf16.mxu0 %v3744
    %3757 = vmatpush1.bf16.msra.mxu0 %v3743
    %3758 = vmatprep.subr.bf16.mxu0 0
    %3759 = vmatpush1.bf16.msra.mxu0 0
    %3760 = vmatprep.subr.bf16.mxu0 0
    %3761 = vmatpush1.bf16.msra.mxu0 0
    %3762 = vmatprep.subr.bf16.mxu0 0
    %3763 = vmatpush1.bf16.msra.mxu0 0
    %3764 = vmatprep.subr.bf16.mxu0 0
    %3765 = vmatpush1.bf16.msra.mxu0 0
    %3766 = vmatprep.subr.bf16.mxu0 0
    %3767 = vmatpush1.bf16.msra.mxu0 0
    %3768 = vmatprep.subr.bf16.mxu0 0
    %3769 = vmatpush1.bf16.msra.mxu0 0
    %3770 = vmatprep.subr.bf16.mxu0 0
    %3771 = vmatpush1.bf16.msra.mxu0 0
    %3772 = vmatprep.subr.bf16.mxu0 0
    %3773 = vmatpush1.bf16.msra.mxu0 0
    %3774 = vmatprep.subr.bf16.mxu0 0
    %3775 = vmatpush1.bf16.msra.mxu0 0
    %3776 = vmatprep.subr.bf16.mxu0 0
    %3777 = vmatpush1.bf16.msra.mxu0 0
    %3778 = vmatprep.subr.bf16.mxu0 0
    %3779 = vmatpush1.bf16.msra.mxu0 0
    %3780 = vmatprep.subr.bf16.mxu0 0
    %3781 = vmatpush1.bf16.msra.mxu0 0
    %3782 = vmatprep.mubr.bf16.mxu0 0
    %3783 = vmatmul.mubr.bf16.gmra.mrb[0].mxu0 %v3748
    %v3784 = vpop.f32.mrb[0].mxu0
    %v3785 = vadd.f32 0.0, %v3784
    %v3786 = vpop.f32.mrb[0].mxu0
    %v3787 = vadd.f32 0.0, %v3786
    %v3788 = vpop.f32.mrb[0].mxu0
    %v3789 = vpop.f32.mrb[0].mxu0
    %3790 = vdwg.mxu0
    %3791 = vmatprep.subr.bf16.mxu0 %v3734
    %3792 = vmatpush1.bf16.msra.mxu0 %v3733
    %3793 = vmatprep.subr.bf16.mxu0 %v3738
    %3794 = vmatpush1.bf16.msra.mxu0 %v3737
    %3795 = vmatprep.subr.bf16.mxu0 %v3742
    %3796 = vmatpush1.bf16.msra.mxu0 %v3741
    %3797 = vmatprep.subr.bf16.mxu0 %v3746
    %3798 = vmatpush1.bf16.msra.mxu0 %v3745
    %3799 = vmatprep.subr.bf16.mxu0 0
    %3800 = vmatpush1.bf16.msra.mxu0 0
    %3801 = vmatprep.subr.bf16.mxu0 0
    %3802 = vmatpush1.bf16.msra.mxu0 0
    %3803 = vmatprep.subr.bf16.mxu0 0
    %3804 = vmatpush1.bf16.msra.mxu0 0
    %3805 = vmatprep.subr.bf16.mxu0 0
    %3806 = vmatpush1.bf16.msra.mxu0 0
    %3807 = vmatprep.subr.bf16.mxu0 0
    %3808 = vmatpush1.bf16.msra.mxu0 0
    %3809 = vmatprep.subr.bf16.mxu0 0
    %3810 = vmatpush1.bf16.msra.mxu0 0
    %3811 = vmatprep.subr.bf16.mxu0 0
    %3812 = vmatpush1.bf16.msra.mxu0 0
    %3813 = vmatprep.subr.bf16.mxu0 0
    %3814 = vmatpush1.bf16.msra.mxu0 0
    %3815 = vmatprep.subr.bf16.mxu0 0
    %3816 = vmatpush1.bf16.msra.mxu0 0
    %3817 = vmatprep.subr.bf16.mxu0 0
    %3818 = vmatpush1.bf16.msra.mxu0 0
    %3819 = vmatprep.subr.bf16.mxu0 0
    %3820 = vmatpush1.bf16.msra.mxu0 0
    %3821 = vmatprep.subr.bf16.mxu0 0
    %3822 = vmatpush1.bf16.msra.mxu0 0
    %3823 = vmatprep.mubr.bf16.mxu0 0
    %3824 = vmatmul.mubr.bf16.gmra.mrb[0].mxu0 %v3748
    %v3825 = vpop.f32.mrb[0].mxu0
    %v3826 = vadd.f32 0.0, %v3825
    %v3827 = vpop.f32.mrb[0].mxu0
    %v3828 = vadd.f32 0.0, %v3827
    %v3829 = vpop.f32.mrb[0].mxu0
    %v3830 = vpop.f32.mrb[0].mxu0
    %3831 = vdwg.mxu0
    %v3836 = vcombine.low %v3785, %v3787
    %v3837 = vcombine.low %v3826, %v3828
    %v3839 = vunpack.c.l.s4 1966171168
    %v3840 = vunpack.c.0.s8 %v3839
    %v3841 = vlaneseq
    %v3842 = vshrl.u32 %v3841, 7
    %v3843 = vsub.s32 %v3840, %v3842
    %v3844 = vrot.slane %v3836, %v3843
    %v3846 = vunpack.c.l.s4 1966171168
    %v3847 = vunpack.c.0.s8 %v3846
    %v3848 = vlaneseq
    %v3849 = vshrl.u32 %v3848, 7
    %v3850 = vsub.s32 %v3847, %v3849
    %v3851 = vrot.slane %v3837, %v3850
    %v3852 = vcombine.low %v3844, %v3851
    %v3854 = vunpack.c.l.s4 1966171168
    %v3855 = vunpack.c.0.s8 %v3854
    %v3856 = vlaneseq
    %v3857 = vshrl.u32 %v3856, 7
    %v3858 = vsub.s32 %v3855, %v3857
    %v3859 = vrot.slane %v3852, %v3858
    %v3861 = vadd.f32 %v3728, %v3859
    %v3862 = vld [vmem:[#allocation3 + $0x14] sm:$0x1]
    %v3863 = vpack.c.bf16 %v3862, %v3862
    %v3864 = vld [vmem:[#allocation2 + $0xa00] sm:$0xff]
    %v3865 = vld [vmem:[#allocation2 + $0xa08] sm:$0xff]
    %v3866 = vld [vmem:[#allocation2 + $0xa10] sm:$0xff]
    %v3867 = vld [vmem:[#allocation2 + $0xa18] sm:$0xff]
    %v3868 = vld [vmem:[#allocation2 + $0xa20] sm:$0xff]
    %v3869 = vld [vmem:[#allocation2 + $0xa28] sm:$0xff]
    %v3870 = vld [vmem:[#allocation2 + $0xa30] sm:$0xff]
    %v3871 = vld [vmem:[#allocation2 + $0xa38] sm:$0xff]
    %v3872 = vld [vmem:[#allocation2 + $0xa40] sm:$0xff]
    %v3873 = vld [vmem:[#allocation2 + $0xa48] sm:$0xff]
    %v3874 = vld [vmem:[#allocation2 + $0xa50] sm:$0xff]
    %v3875 = vld [vmem:[#allocation2 + $0xa58] sm:$0xff]
    %v3876 = vld [vmem:[#allocation2 + $0xa60] sm:$0xff]
    %v3877 = vld [vmem:[#allocation2 + $0xa68] sm:$0xff]
    %v3878 = vld [vmem:[#allocation2 + $0xa70] sm:$0xff]
    %v3879 = vld [vmem:[#allocation2 + $0xa78] sm:$0xff]
    %v3881 = vsel %vm761, %v3863, 0
    %3883 = vmatprep.subr.bf16.mxu0 %v3865
    %3884 = vmatpush1.bf16.msra.mxu0 %v3864
    %3885 = vmatprep.subr.bf16.mxu0 %v3869
    %3886 = vmatpush1.bf16.msra.mxu0 %v3868
    %3887 = vmatprep.subr.bf16.mxu0 %v3873
    %3888 = vmatpush1.bf16.msra.mxu0 %v3872
    %3889 = vmatprep.subr.bf16.mxu0 %v3877
    %3890 = vmatpush1.bf16.msra.mxu0 %v3876
    %3891 = vmatprep.subr.bf16.mxu0 0
    %3892 = vmatpush1.bf16.msra.mxu0 0
    %3893 = vmatprep.subr.bf16.mxu0 0
    %3894 = vmatpush1.bf16.msra.mxu0 0
    %3895 = vmatprep.subr.bf16.mxu0 0
    %3896 = vmatpush1.bf16.msra.mxu0 0
    %3897 = vmatprep.subr.bf16.mxu0 0
    %3898 = vmatpush1.bf16.msra.mxu0 0
    %3899 = vmatprep.subr.bf16.mxu0 0
    %3900 = vmatpush1.bf16.msra.mxu0 0
    %3901 = vmatprep.subr.bf16.mxu0 0
    %3902 = vmatpush1.bf16.msra.mxu0 0
    %3903 = vmatprep.subr.bf16.mxu0 0
    %3904 = vmatpush1.bf16.msra.mxu0 0
    %3905 = vmatprep.subr.bf16.mxu0 0
    %3906 = vmatpush1.bf16.msra.mxu0 0
    %3907 = vmatprep.subr.bf16.mxu0 0
    %3908 = vmatpush1.bf16.msra.mxu0 0
    %3909 = vmatprep.subr.bf16.mxu0 0
    %3910 = vmatpush1.bf16.msra.mxu0 0
    %3911 = vmatprep.subr.bf16.mxu0 0
    %3912 = vmatpush1.bf16.msra.mxu0 0
    %3913 = vmatprep.subr.bf16.mxu0 0
    %3914 = vmatpush1.bf16.msra.mxu0 0
    %3915 = vmatprep.mubr.bf16.mxu0 0
    %3916 = vmatmul.mubr.bf16.gmra.mrb[0].mxu0 %v3881
    %v3917 = vpop.f32.mrb[0].mxu0
    %v3918 = vadd.f32 0.0, %v3917
    %v3919 = vpop.f32.mrb[0].mxu0
    %v3920 = vadd.f32 0.0, %v3919
    %v3921 = vpop.f32.mrb[0].mxu0
    %v3922 = vpop.f32.mrb[0].mxu0
    %3923 = vdwg.mxu0
    %3924 = vmatprep.subr.bf16.mxu0 %v3867
    %3925 = vmatpush1.bf16.msra.mxu0 %v3866
    %3926 = vmatprep.subr.bf16.mxu0 %v3871
    %3927 = vmatpush1.bf16.msra.mxu0 %v3870
    %3928 = vmatprep.subr.bf16.mxu0 %v3875
    %3929 = vmatpush1.bf16.msra.mxu0 %v3874
    %3930 = vmatprep.subr.bf16.mxu0 %v3879
    %3931 = vmatpush1.bf16.msra.mxu0 %v3878
    %3932 = vmatprep.subr.bf16.mxu0 0
    %3933 = vmatpush1.bf16.msra.mxu0 0
    %3934 = vmatprep.subr.bf16.mxu0 0
    %3935 = vmatpush1.bf16.msra.mxu0 0
    %3936 = vmatprep.subr.bf16.mxu0 0
    %3937 = vmatpush1.bf16.msra.mxu0 0
    %3938 = vmatprep.subr.bf16.mxu0 0
    %3939 = vmatpush1.bf16.msra.mxu0 0
    %3940 = vmatprep.subr.bf16.mxu0 0
    %3941 = vmatpush1.bf16.msra.mxu0 0
    %3942 = vmatprep.subr.bf16.mxu0 0
    %3943 = vmatpush1.bf16.msra.mxu0 0
    %3944 = vmatprep.subr.bf16.mxu0 0
    %3945 = vmatpush1.bf16.msra.mxu0 0
    %3946 = vmatprep.subr.bf16.mxu0 0
    %3947 = vmatpush1.bf16.msra.mxu0 0
    %3948 = vmatprep.subr.bf16.mxu0 0
    %3949 = vmatpush1.bf16.msra.mxu0 0
    %3950 = vmatprep.subr.bf16.mxu0 0
    %3951 = vmatpush1.bf16.msra.mxu0 0
    %3952 = vmatprep.subr.bf16.mxu0 0
    %3953 = vmatpush1.bf16.msra.mxu0 0
    %3954 = vmatprep.subr.bf16.mxu0 0
    %3955 = vmatpush1.bf16.msra.mxu0 0
    %3956 = vmatprep.mubr.bf16.mxu0 0
    %3957 = vmatmul.mubr.bf16.gmra.mrb[0].mxu0 %v3881
    %v3958 = vpop.f32.mrb[0].mxu0
    %v3959 = vadd.f32 0.0, %v3958
    %v3960 = vpop.f32.mrb[0].mxu0
    %v3961 = vadd.f32 0.0, %v3960
    %v3962 = vpop.f32.mrb[0].mxu0
    %v3963 = vpop.f32.mrb[0].mxu0
    %3964 = vdwg.mxu0
    %v3969 = vcombine.low %v3918, %v3920
    %v3970 = vcombine.low %v3959, %v3961
    %v3972 = vunpack.c.l.s4 1966171168
    %v3973 = vunpack.c.0.s8 %v3972
    %v3974 = vlaneseq
    %v3975 = vshrl.u32 %v3974, 7
    %v3976 = vsub.s32 %v3973, %v3975
    %v3977 = vrot.slane %v3969, %v3976
    %v3979 = vunpack.c.l.s4 1966171168
    %v3980 = vunpack.c.0.s8 %v3979
    %v3981 = vlaneseq
    %v3982 = vshrl.u32 %v3981, 7
    %v3983 = vsub.s32 %v3980, %v3982
    %v3984 = vrot.slane %v3970, %v3983
    %v3985 = vcombine.low %v3977, %v3984
    %v3987 = vunpack.c.l.s4 1966171168
    %v3988 = vunpack.c.0.s8 %v3987
    %v3989 = vlaneseq
    %v3990 = vshrl.u32 %v3989, 7
    %v3991 = vsub.s32 %v3988, %v3990
    %v3992 = vrot.slane %v3985, %v3991
    %v3994 = vadd.f32 %v3861, %v3992
    %v3995 = vld [vmem:[#allocation3 + $0x15] sm:$0x1]
    %v3996 = vpack.c.bf16 %v3995, %v3995
    %v3997 = vld [vmem:[#allocation2 + $0xa80] sm:$0xff]
    %v3998 = vld [vmem:[#allocation2 + $0xa88] sm:$0xff]
    %v3999 = vld [vmem:[#allocation2 + $0xa90] sm:$0xff]
    %v4000 = vld [vmem:[#allocation2 + $0xa98] sm:$0xff]
    %v4001 = vld [vmem:[#allocation2 + $0xaa0] sm:$0xff]
    %v4002 = vld [vmem:[#allocation2 + $0xaa8] sm:$0xff]
    %v4003 = vld [vmem:[#allocation2 + $0xab0] sm:$0xff]
    %v4004 = vld [vmem:[#allocation2 + $0xab8] sm:$0xff]
    %v4005 = vld [vmem:[#allocation2 + $0xac0] sm:$0xff]
    %v4006 = vld [vmem:[#allocation2 + $0xac8] sm:$0xff]
    %v4007 = vld [vmem:[#allocation2 + $0xad0] sm:$0xff]
    %v4008 = vld [vmem:[#allocation2 + $0xad8] sm:$0xff]
    %v4009 = vld [vmem:[#allocation2 + $0xae0] sm:$0xff]
    %v4010 = vld [vmem:[#allocation2 + $0xae8] sm:$0xff]
    %v4011 = vld [vmem:[#allocation2 + $0xaf0] sm:$0xff]
    %v4012 = vld [vmem:[#allocation2 + $0xaf8] sm:$0xff]
    %v4014 = vsel %vm761, %v3996, 0
    %4016 = vmatprep.subr.bf16.mxu0 %v3998
    %4017 = vmatpush1.bf16.msra.mxu0 %v3997
    %4018 = vmatprep.subr.bf16.mxu0 %v4002
    %4019 = vmatpush1.bf16.msra.mxu0 %v4001
    %4020 = vmatprep.subr.bf16.mxu0 %v4006
    %4021 = vmatpush1.bf16.msra.mxu0 %v4005
    %4022 = vmatprep.subr.bf16.mxu0 %v4010
    %4023 = vmatpush1.bf16.msra.mxu0 %v4009
    %4024 = vmatprep.subr.bf16.mxu0 0
    %4025 = vmatpush1.bf16.msra.mxu0 0
    %4026 = vmatprep.subr.bf16.mxu0 0
    %4027 = vmatpush1.bf16.msra.mxu0 0
    %4028 = vmatprep.subr.bf16.mxu0 0
    %4029 = vmatpush1.bf16.msra.mxu0 0
    %4030 = vmatprep.subr.bf16.mxu0 0
    %4031 = vmatpush1.bf16.msra.mxu0 0
    %4032 = vmatprep.subr.bf16.mxu0 0
    %4033 = vmatpush1.bf16.msra.mxu0 0
    %4034 = vmatprep.subr.bf16.mxu0 0
    %4035 = vmatpush1.bf16.msra.mxu0 0
    %4036 = vmatprep.subr.bf16.mxu0 0
    %4037 = vmatpush1.bf16.msra.mxu0 0
    %4038 = vmatprep.subr.bf16.mxu0 0
    %4039 = vmatpush1.bf16.msra.mxu0 0
    %4040 = vmatprep.subr.bf16.mxu0 0
    %4041 = vmatpush1.bf16.msra.mxu0 0
    %4042 = vmatprep.subr.bf16.mxu0 0
    %4043 = vmatpush1.bf16.msra.mxu0 0
    %4044 = vmatprep.subr.bf16.mxu0 0
    %4045 = vmatpush1.bf16.msra.mxu0 0
    %4046 = vmatprep.subr.bf16.mxu0 0
    %4047 = vmatpush1.bf16.msra.mxu0 0
    %4048 = vmatprep.mubr.bf16.mxu0 0
    %4049 = vmatmul.mubr.bf16.gmra.mrb[0].mxu0 %v4014
    %v4050 = vpop.f32.mrb[0].mxu0
    %v4051 = vadd.f32 0.0, %v4050
    %v4052 = vpop.f32.mrb[0].mxu0
    %v4053 = vadd.f32 0.0, %v4052
    %v4054 = vpop.f32.mrb[0].mxu0
    %v4055 = vpop.f32.mrb[0].mxu0
    %4056 = vdwg.mxu0
    %4057 = vmatprep.subr.bf16.mxu0 %v4000
    %4058 = vmatpush1.bf16.msra.mxu0 %v3999
    %4059 = vmatprep.subr.bf16.mxu0 %v4004
    %4060 = vmatpush1.bf16.msra.mxu0 %v4003
    %4061 = vmatprep.subr.bf16.mxu0 %v4008
    %4062 = vmatpush1.bf16.msra.mxu0 %v4007
    %4063 = vmatprep.subr.bf16.mxu0 %v4012
    %4064 = vmatpush1.bf16.msra.mxu0 %v4011
    %4065 = vmatprep.subr.bf16.mxu0 0
    %4066 = vmatpush1.bf16.msra.mxu0 0
    %4067 = vmatprep.subr.bf16.mxu0 0
    %4068 = vmatpush1.bf16.msra.mxu0 0
    %4069 = vmatprep.subr.bf16.mxu0 0
    %4070 = vmatpush1.bf16.msra.mxu0 0
    %4071 = vmatprep.subr.bf16.mxu0 0
    %4072 = vmatpush1.bf16.msra.mxu0 0
    %4073 = vmatprep.subr.bf16.mxu0 0
    %4074 = vmatpush1.bf16.msra.mxu0 0
    %4075 = vmatprep.subr.bf16.mxu0 0
    %4076 = vmatpush1.bf16.msra.mxu0 0
    %4077 = vmatprep.subr.bf16.mxu0 0
    %4078 = vmatpush1.bf16.msra.mxu0 0
    %4079 = vmatprep.subr.bf16.mxu0 0
    %4080 = vmatpush1.bf16.msra.mxu0 0
    %4081 = vmatprep.subr.bf16.mxu0 0
    %4082 = vmatpush1.bf16.msra.mxu0 0
    %4083 = vmatprep.subr.bf16.mxu0 0
    %4084 = vmatpush1.bf16.msra.mxu0 0
    %4085 = vmatprep.subr.bf16.mxu0 0
    %4086 = vmatpush1.bf16.msra.mxu0 0
    %4087 = vmatprep.subr.bf16.mxu0 0
    %4088 = vmatpush1.bf16.msra.mxu0 0
    %4089 = vmatprep.mubr.bf16.mxu0 0
    %4090 = vmatmul.mubr.bf16.gmra.mrb[0].mxu0 %v4014
    %v4091 = vpop.f32.mrb[0].mxu0
    %v4092 = vadd.f32 0.0, %v4091
    %v4093 = vpop.f32.mrb[0].mxu0
    %v4094 = vadd.f32 0.0, %v4093
    %v4095 = vpop.f32.mrb[0].mxu0
    %v4096 = vpop.f32.mrb[0].mxu0
    %4097 = vdwg.mxu0
    %v4102 = vcombine.low %v4051, %v4053
    %v4103 = vcombine.low %v4092, %v4094
    %v4105 = vunpack.c.l.s4 1966171168
    %v4106 = vunpack.c.0.s8 %v4105
    %v4107 = vlaneseq
    %v4108 = vshrl.u32 %v4107, 7
    %v4109 = vsub.s32 %v4106, %v4108
    %v4110 = vrot.slane %v4102, %v4109
    %v4112 = vunpack.c.l.s4 1966171168
    %v4113 = vunpack.c.0.s8 %v4112
    %v4114 = vlaneseq
    %v4115 = vshrl.u32 %v4114, 7
    %v4116 = vsub.s32 %v4113, %v4115
    %v4117 = vrot.slane %v4103, %v4116
    %v4118 = vcombine.low %v4110, %v4117
    %v4120 = vunpack.c.l.s4 1966171168
    %v4121 = vunpack.c.0.s8 %v4120
    %v4122 = vlaneseq
    %v4123 = vshrl.u32 %v4122, 7
    %v4124 = vsub.s32 %v4121, %v4123
    %v4125 = vrot.slane %v4118, %v4124
    %v4127 = vadd.f32 %v3994, %v4125
    %v4128 = vld [vmem:[#allocation3 + $0x16] sm:$0x1]
    %v4129 = vpack.c.bf16 %v4128, %v4128
    %v4130 = vld [vmem:[#allocation2 + $0xb00] sm:$0xff]
    %v4131 = vld [vmem:[#allocation2 + $0xb08] sm:$0xff]
    %v4132 = vld [vmem:[#allocation2 + $0xb10] sm:$0xff]
    %v4133 = vld [vmem:[#allocation2 + $0xb18] sm:$0xff]
    %v4134 = vld [vmem:[#allocation2 + $0xb20] sm:$0xff]
    %v4135 = vld [vmem:[#allocation2 + $0xb28] sm:$0xff]
    %v4136 = vld [vmem:[#allocation2 + $0xb30] sm:$0xff]
    %v4137 = vld [vmem:[#allocation2 + $0xb38] sm:$0xff]
    %v4138 = vld [vmem:[#allocation2 + $0xb40] sm:$0xff]
    %v4139 = vld [vmem:[#allocation2 + $0xb48] sm:$0xff]
    %v4140 = vld [vmem:[#allocation2 + $0xb50] sm:$0xff]
    %v4141 = vld [vmem:[#allocation2 + $0xb58] sm:$0xff]
    %v4142 = vld [vmem:[#allocation2 + $0xb60] sm:$0xff]
    %v4143 = vld [vmem:[#allocation2 + $0xb68] sm:$0xff]
    %v4144 = vld [vmem:[#allocation2 + $0xb70] sm:$0xff]
    %v4145 = vld [vmem:[#allocation2 + $0xb78] sm:$0xff]
    %v4147 = vsel %vm761, %v4129, 0
    %4149 = vmatprep.subr.bf16.mxu0 %v4131
    %4150 = vmatpush1.bf16.msra.mxu0 %v4130
    %4151 = vmatprep.subr.bf16.mxu0 %v4135
    %4152 = vmatpush1.bf16.msra.mxu0 %v4134
    %4153 = vmatprep.subr.bf16.mxu0 %v4139
    %4154 = vmatpush1.bf16.msra.mxu0 %v4138
    %4155 = vmatprep.subr.bf16.mxu0 %v4143
    %4156 = vmatpush1.bf16.msra.mxu0 %v4142
    %4157 = vmatprep.subr.bf16.mxu0 0
    %4158 = vmatpush1.bf16.msra.mxu0 0
    %4159 = vmatprep.subr.bf16.mxu0 0
    %4160 = vmatpush1.bf16.msra.mxu0 0
    %4161 = vmatprep.subr.bf16.mxu0 0
    %4162 = vmatpush1.bf16.msra.mxu0 0
    %4163 = vmatprep.subr.bf16.mxu0 0
    %4164 = vmatpush1.bf16.msra.mxu0 0
    %4165 = vmatprep.subr.bf16.mxu0 0
    %4166 = vmatpush1.bf16.msra.mxu0 0
    %4167 = vmatprep.subr.bf16.mxu0 0
    %4168 = vmatpush1.bf16.msra.mxu0 0
    %4169 = vmatprep.subr.bf16.mxu0 0
    %4170 = vmatpush1.bf16.msra.mxu0 0
    %4171 = vmatprep.subr.bf16.mxu0 0
    %4172 = vmatpush1.bf16.msra.mxu0 0
    %4173 = vmatprep.subr.bf16.mxu0 0
    %4174 = vmatpush1.bf16.msra.mxu0 0
    %4175 = vmatprep.subr.bf16.mxu0 0
    %4176 = vmatpush1.bf16.msra.mxu0 0
    %4177 = vmatprep.subr.bf16.mxu0 0
    %4178 = vmatpush1.bf16.msra.mxu0 0
    %4179 = vmatprep.subr.bf16.mxu0 0
    %4180 = vmatpush1.bf16.msra.mxu0 0
    %4181 = vmatprep.mubr.bf16.mxu0 0
    %4182 = vmatmul.mubr.bf16.gmra.mrb[0].mxu0 %v4147
    %v4183 = vpop.f32.mrb[0].mxu0
    %v4184 = vadd.f32 0.0, %v4183
    %v4185 = vpop.f32.mrb[0].mxu0
    %v4186 = vadd.f32 0.0, %v4185
    %v4187 = vpop.f32.mrb[0].mxu0
    %v4188 = vpop.f32.mrb[0].mxu0
    %4189 = vdwg.mxu0
    %4190 = vmatprep.subr.bf16.mxu0 %v4133
    %4191 = vmatpush1.bf16.msra.mxu0 %v4132
    %4192 = vmatprep.subr.bf16.mxu0 %v4137
    %4193 = vmatpush1.bf16.msra.mxu0 %v4136
    %4194 = vmatprep.subr.bf16.mxu0 %v4141
    %4195 = vmatpush1.bf16.msra.mxu0 %v4140
    %4196 = vmatprep.subr.bf16.mxu0 %v4145
    %4197 = vmatpush1.bf16.msra.mxu0 %v4144
    %4198 = vmatprep.subr.bf16.mxu0 0
    %4199 = vmatpush1.bf16.msra.mxu0 0
    %4200 = vmatprep.subr.bf16.mxu0 0
    %4201 = vmatpush1.bf16.msra.mxu0 0
    %4202 = vmatprep.subr.bf16.mxu0 0
    %4203 = vmatpush1.bf16.msra.mxu0 0
    %4204 = vmatprep.subr.bf16.mxu0 0
    %4205 = vmatpush1.bf16.msra.mxu0 0
    %4206 = vmatprep.subr.bf16.mxu0 0
    %4207 = vmatpush1.bf16.msra.mxu0 0
    %4208 = vmatprep.subr.bf16.mxu0 0
    %4209 = vmatpush1.bf16.msra.mxu0 0
    %4210 = vmatprep.subr.bf16.mxu0 0
    %4211 = vmatpush1.bf16.msra.mxu0 0
    %4212 = vmatprep.subr.bf16.mxu0 0
    %4213 = vmatpush1.bf16.msra.mxu0 0
    %4214 = vmatprep.subr.bf16.mxu0 0
    %4215 = vmatpush1.bf16.msra.mxu0 0
    %4216 = vmatprep.subr.bf16.mxu0 0
    %4217 = vmatpush1.bf16.msra.mxu0 0
    %4218 = vmatprep.subr.bf16.mxu0 0
    %4219 = vmatpush1.bf16.msra.mxu0 0
    %4220 = vmatprep.subr.bf16.mxu0 0
    %4221 = vmatpush1.bf16.msra.mxu0 0
    %4222 = vmatprep.mubr.bf16.mxu0 0
    %4223 = vmatmul.mubr.bf16.gmra.mrb[0].mxu0 %v4147
    %v4224 = vpop.f32.mrb[0].mxu0
    %v4225 = vadd.f32 0.0, %v4224
    %v4226 = vpop.f32.mrb[0].mxu0
    %v4227 = vadd.f32 0.0, %v4226
    %v4228 = vpop.f32.mrb[0].mxu0
    %v4229 = vpop.f32.mrb[0].mxu0
    %4230 = vdwg.mxu0
    %v4235 = vcombine.low %v4184, %v4186
    %v4236 = vcombine.low %v4225, %v4227
    %v4238 = vunpack.c.l.s4 1966171168
    %v4239 = vunpack.c.0.s8 %v4238
    %v4240 = vlaneseq
    %v4241 = vshrl.u32 %v4240, 7
    %v4242 = vsub.s32 %v4239, %v4241
    %v4243 = vrot.slane %v4235, %v4242
    %v4245 = vunpack.c.l.s4 1966171168
    %v4246 = vunpack.c.0.s8 %v4245
    %v4247 = vlaneseq
    %v4248 = vshrl.u32 %v4247, 7
    %v4249 = vsub.s32 %v4246, %v4248
    %v4250 = vrot.slane %v4236, %v4249
    %v4251 = vcombine.low %v4243, %v4250
    %v4253 = vunpack.c.l.s4 1966171168
    %v4254 = vunpack.c.0.s8 %v4253
    %v4255 = vlaneseq
    %v4256 = vshrl.u32 %v4255, 7
    %v4257 = vsub.s32 %v4254, %v4256
    %v4258 = vrot.slane %v4251, %v4257
    %v4260 = vadd.f32 %v4127, %v4258
    %v4261 = vld [vmem:[#allocation3 + $0x17] sm:$0x1]
    %v4262 = vpack.c.bf16 %v4261, %v4261
    %v4263 = vld [vmem:[#allocation2 + $0xb80] sm:$0xff]
    %v4264 = vld [vmem:[#allocation2 + $0xb88] sm:$0xff]
    %v4265 = vld [vmem:[#allocation2 + $0xb90] sm:$0xff]
    %v4266 = vld [vmem:[#allocation2 + $0xb98] sm:$0xff]
    %v4267 = vld [vmem:[#allocation2 + $0xba0] sm:$0xff]
    %v4268 = vld [vmem:[#allocation2 + $0xba8] sm:$0xff]
    %v4269 = vld [vmem:[#allocation2 + $0xbb0] sm:$0xff]
    %v4270 = vld [vmem:[#allocation2 + $0xbb8] sm:$0xff]
    %v4271 = vld [vmem:[#allocation2 + $0xbc0] sm:$0xff]
    %v4272 = vld [vmem:[#allocation2 + $0xbc8] sm:$0xff]
    %v4273 = vld [vmem:[#allocation2 + $0xbd0] sm:$0xff]
    %v4274 = vld [vmem:[#allocation2 + $0xbd8] sm:$0xff]
    %v4275 = vld [vmem:[#allocation2 + $0xbe0] sm:$0xff]
    %v4276 = vld [vmem:[#allocation2 + $0xbe8] sm:$0xff]
    %v4277 = vld [vmem:[#allocation2 + $0xbf0] sm:$0xff]
    %v4278 = vld [vmem:[#allocation2 + $0xbf8] sm:$0xff]
    %v4280 = vsel %vm761, %v4262, 0
    %4282 = vmatprep.subr.bf16.mxu0 %v4264
    %4283 = vmatpush1.bf16.msra.mxu0 %v4263
    %4284 = vmatprep.subr.bf16.mxu0 %v4268
    %4285 = vmatpush1.bf16.msra.mxu0 %v4267
    %4286 = vmatprep.subr.bf16.mxu0 %v4272
    %4287 = vmatpush1.bf16.msra.mxu0 %v4271
    %4288 = vmatprep.subr.bf16.mxu0 %v4276
    %4289 = vmatpush1.bf16.msra.mxu0 %v4275
    %4290 = vmatprep.subr.bf16.mxu0 0
    %4291 = vmatpush1.bf16.msra.mxu0 0
    %4292 = vmatprep.subr.bf16.mxu0 0
    %4293 = vmatpush1.bf16.msra.mxu0 0
    %4294 = vmatprep.subr.bf16.mxu0 0
    %4295 = vmatpush1.bf16.msra.mxu0 0
    %4296 = vmatprep.subr.bf16.mxu0 0
    %4297 = vmatpush1.bf16.msra.mxu0 0
    %4298 = vmatprep.subr.bf16.mxu0 0
    %4299 = vmatpush1.bf16.msra.mxu0 0
    %4300 = vmatprep.subr.bf16.mxu0 0
    %4301 = vmatpush1.bf16.msra.mxu0 0
    %4302 = vmatprep.subr.bf16.mxu0 0
    %4303 = vmatpush1.bf16.msra.mxu0 0
    %4304 = vmatprep.subr.bf16.mxu0 0
    %4305 = vmatpush1.bf16.msra.mxu0 0
    %4306 = vmatprep.subr.bf16.mxu0 0
    %4307 = vmatpush1.bf16.msra.mxu0 0
    %4308 = vmatprep.subr.bf16.mxu0 0
    %4309 = vmatpush1.bf16.msra.mxu0 0
    %4310 = vmatprep.subr.bf16.mxu0 0
    %4311 = vmatpush1.bf16.msra.mxu0 0
    %4312 = vmatprep.subr.bf16.mxu0 0
    %4313 = vmatpush1.bf16.msra.mxu0 0
    %4314 = vmatprep.mubr.bf16.mxu0 0
    %4315 = vmatmul.mubr.bf16.gmra.mrb[0].mxu0 %v4280
    %v4316 = vpop.f32.mrb[0].mxu0
    %v4317 = vadd.f32 0.0, %v4316
    %v4318 = vpop.f32.mrb[0].mxu0
    %v4319 = vadd.f32 0.0, %v4318
    %v4320 = vpop.f32.mrb[0].mxu0
    %v4321 = vpop.f32.mrb[0].mxu0
    %4322 = vdwg.mxu0
    %4323 = vmatprep.subr.bf16.mxu0 %v4266
    %4324 = vmatpush1.bf16.msra.mxu0 %v4265
    %4325 = vmatprep.subr.bf16.mxu0 %v4270
    %4326 = vmatpush1.bf16.msra.mxu0 %v4269
    %4327 = vmatprep.subr.bf16.mxu0 %v4274
    %4328 = vmatpush1.bf16.msra.mxu0 %v4273
    %4329 = vmatprep.subr.bf16.mxu0 %v4278
    %4330 = vmatpush1.bf16.msra.mxu0 %v4277
    %4331 = vmatprep.subr.bf16.mxu0 0
    %4332 = vmatpush1.bf16.msra.mxu0 0
    %4333 = vmatprep.subr.bf16.mxu0 0
    %4334 = vmatpush1.bf16.msra.mxu0 0
    %4335 = vmatprep.subr.bf16.mxu0 0
    %4336 = vmatpush1.bf16.msra.mxu0 0
    %4337 = vmatprep.subr.bf16.mxu0 0
    %4338 = vmatpush1.bf16.msra.mxu0 0
    %4339 = vmatprep.subr.bf16.mxu0 0
    %4340 = vmatpush1.bf16.msra.mxu0 0
    %4341 = vmatprep.subr.bf16.mxu0 0
    %4342 = vmatpush1.bf16.msra.mxu0 0
    %4343 = vmatprep.subr.bf16.mxu0 0
    %4344 = vmatpush1.bf16.msra.mxu0 0
    %4345 = vmatprep.subr.bf16.mxu0 0
    %4346 = vmatpush1.bf16.msra.mxu0 0
    %4347 = vmatprep.subr.bf16.mxu0 0
    %4348 = vmatpush1.bf16.msra.mxu0 0
    %4349 = vmatprep.subr.bf16.mxu0 0
    %4350 = vmatpush1.bf16.msra.mxu0 0
    %4351 = vmatprep.subr.bf16.mxu0 0
    %4352 = vmatpush1.bf16.msra.mxu0 0
    %4353 = vmatprep.subr.bf16.mxu0 0
    %4354 = vmatpush1.bf16.msra.mxu0 0
    %4355 = vmatprep.mubr.bf16.mxu0 0
    %4356 = vmatmul.mubr.bf16.gmra.mrb[0].mxu0 %v4280
    %v4357 = vpop.f32.mrb[0].mxu0
    %v4358 = vadd.f32 0.0, %v4357
    %v4359 = vpop.f32.mrb[0].mxu0
    %v4360 = vadd.f32 0.0, %v4359
    %v4361 = vpop.f32.mrb[0].mxu0
    %v4362 = vpop.f32.mrb[0].mxu0
    %4363 = vdwg.mxu0
    %v4368 = vcombine.low %v4317, %v4319
    %v4369 = vcombine.low %v4358, %v4360
    %v4371 = vunpack.c.l.s4 1966171168
    %v4372 = vunpack.c.0.s8 %v4371
    %v4373 = vlaneseq
    %v4374 = vshrl.u32 %v4373, 7
    %v4375 = vsub.s32 %v4372, %v4374
    %v4376 = vrot.slane %v4368, %v4375
    %v4378 = vunpack.c.l.s4 1966171168
    %v4379 = vunpack.c.0.s8 %v4378
    %v4380 = vlaneseq
    %v4381 = vshrl.u32 %v4380, 7
    %v4382 = vsub.s32 %v4379, %v4381
    %v4383 = vrot.slane %v4369, %v4382
    %v4384 = vcombine.low %v4376, %v4383
    %v4386 = vunpack.c.l.s4 1966171168
    %v4387 = vunpack.c.0.s8 %v4386
    %v4388 = vlaneseq
    %v4389 = vshrl.u32 %v4388, 7
    %v4390 = vsub.s32 %v4387, %v4389
    %v4391 = vrot.slane %v4384, %v4390
    %v4393 = vadd.f32 %v4260, %v4391
    %v4394 = vld [vmem:[#allocation3 + $0x18] sm:$0x1]
    %v4395 = vpack.c.bf16 %v4394, %v4394
    %v4396 = vld [vmem:[#allocation2 + $0xc00] sm:$0xff]
    %v4397 = vld [vmem:[#allocation2 + $0xc08] sm:$0xff]
    %v4398 = vld [vmem:[#allocation2 + $0xc10] sm:$0xff]
    %v4399 = vld [vmem:[#allocation2 + $0xc18] sm:$0xff]
    %v4400 = vld [vmem:[#allocation2 + $0xc20] sm:$0xff]
    %v4401 = vld [vmem:[#allocation2 + $0xc28] sm:$0xff]
    %v4402 = vld [vmem:[#allocation2 + $0xc30] sm:$0xff]
    %v4403 = vld [vmem:[#allocation2 + $0xc38] sm:$0xff]
    %v4404 = vld [vmem:[#allocation2 + $0xc40] sm:$0xff]
    %v4405 = vld [vmem:[#allocation2 + $0xc48] sm:$0xff]
    %v4406 = vld [vmem:[#allocation2 + $0xc50] sm:$0xff]
    %v4407 = vld [vmem:[#allocation2 + $0xc58] sm:$0xff]
    %v4408 = vld [vmem:[#allocation2 + $0xc60] sm:$0xff]
    %v4409 = vld [vmem:[#allocation2 + $0xc68] sm:$0xff]
    %v4410 = vld [vmem:[#allocation2 + $0xc70] sm:$0xff]
    %v4411 = vld [vmem:[#allocation2 + $0xc78] sm:$0xff]
    %v4413 = vsel %vm761, %v4395, 0
    %4415 = vmatprep.subr.bf16.mxu0 %v4397
    %4416 = vmatpush1.bf16.msra.mxu0 %v4396
    %4417 = vmatprep.subr.bf16.mxu0 %v4401
    %4418 = vmatpush1.bf16.msra.mxu0 %v4400
    %4419 = vmatprep.subr.bf16.mxu0 %v4405
    %4420 = vmatpush1.bf16.msra.mxu0 %v4404
    %4421 = vmatprep.subr.bf16.mxu0 %v4409
    %4422 = vmatpush1.bf16.msra.mxu0 %v4408
    %4423 = vmatprep.subr.bf16.mxu0 0
    %4424 = vmatpush1.bf16.msra.mxu0 0
    %4425 = vmatprep.subr.bf16.mxu0 0
    %4426 = vmatpush1.bf16.msra.mxu0 0
    %4427 = vmatprep.subr.bf16.mxu0 0
    %4428 = vmatpush1.bf16.msra.mxu0 0
    %4429 = vmatprep.subr.bf16.mxu0 0
    %4430 = vmatpush1.bf16.msra.mxu0 0
    %4431 = vmatprep.subr.bf16.mxu0 0
    %4432 = vmatpush1.bf16.msra.mxu0 0
    %4433 = vmatprep.subr.bf16.mxu0 0
    %4434 = vmatpush1.bf16.msra.mxu0 0
    %4435 = vmatprep.subr.bf16.mxu0 0
    %4436 = vmatpush1.bf16.msra.mxu0 0
    %4437 = vmatprep.subr.bf16.mxu0 0
    %4438 = vmatpush1.bf16.msra.mxu0 0
    %4439 = vmatprep.subr.bf16.mxu0 0
    %4440 = vmatpush1.bf16.msra.mxu0 0
    %4441 = vmatprep.subr.bf16.mxu0 0
    %4442 = vmatpush1.bf16.msra.mxu0 0
    %4443 = vmatprep.subr.bf16.mxu0 0
    %4444 = vmatpush1.bf16.msra.mxu0 0
    %4445 = vmatprep.subr.bf16.mxu0 0
    %4446 = vmatpush1.bf16.msra.mxu0 0
    %4447 = vmatprep.mubr.bf16.mxu0 0
    %4448 = vmatmul.mubr.bf16.gmra.mrb[0].mxu0 %v4413
    %v4449 = vpop.f32.mrb[0].mxu0
    %v4450 = vadd.f32 0.0, %v4449
    %v4451 = vpop.f32.mrb[0].mxu0
    %v4452 = vadd.f32 0.0, %v4451
    %v4453 = vpop.f32.mrb[0].mxu0
    %v4454 = vpop.f32.mrb[0].mxu0
    %4455 = vdwg.mxu0
    %4456 = vmatprep.subr.bf16.mxu0 %v4399
    %4457 = vmatpush1.bf16.msra.mxu0 %v4398
    %4458 = vmatprep.subr.bf16.mxu0 %v4403
    %4459 = vmatpush1.bf16.msra.mxu0 %v4402
    %4460 = vmatprep.subr.bf16.mxu0 %v4407
    %4461 = vmatpush1.bf16.msra.mxu0 %v4406
    %4462 = vmatprep.subr.bf16.mxu0 %v4411
    %4463 = vmatpush1.bf16.msra.mxu0 %v4410
    %4464 = vmatprep.subr.bf16.mxu0 0
    %4465 = vmatpush1.bf16.msra.mxu0 0
    %4466 = vmatprep.subr.bf16.mxu0 0
    %4467 = vmatpush1.bf16.msra.mxu0 0
    %4468 = vmatprep.subr.bf16.mxu0 0
    %4469 = vmatpush1.bf16.msra.mxu0 0
    %4470 = vmatprep.subr.bf16.mxu0 0
    %4471 = vmatpush1.bf16.msra.mxu0 0
    %4472 = vmatprep.subr.bf16.mxu0 0
    %4473 = vmatpush1.bf16.msra.mxu0 0
    %4474 = vmatprep.subr.bf16.mxu0 0
    %4475 = vmatpush1.bf16.msra.mxu0 0
    %4476 = vmatprep.subr.bf16.mxu0 0
    %4477 = vmatpush1.bf16.msra.mxu0 0
    %4478 = vmatprep.subr.bf16.mxu0 0
    %4479 = vmatpush1.bf16.msra.mxu0 0
    %4480 = vmatprep.subr.bf16.mxu0 0
    %4481 = vmatpush1.bf16.msra.mxu0 0
    %4482 = vmatprep.subr.bf16.mxu0 0
    %4483 = vmatpush1.bf16.msra.mxu0 0
    %4484 = vmatprep.subr.bf16.mxu0 0
    %4485 = vmatpush1.bf16.msra.mxu0 0
    %4486 = vmatprep.subr.bf16.mxu0 0
    %4487 = vmatpush1.bf16.msra.mxu0 0
    %4488 = vmatprep.mubr.bf16.mxu0 0
    %4489 = vmatmul.mubr.bf16.gmra.mrb[0].mxu0 %v4413
    %v4490 = vpop.f32.mrb[0].mxu0
    %v4491 = vadd.f32 0.0, %v4490
    %v4492 = vpop.f32.mrb[0].mxu0
    %v4493 = vadd.f32 0.0, %v4492
    %v4494 = vpop.f32.mrb[0].mxu0
    %v4495 = vpop.f32.mrb[0].mxu0
    %4496 = vdwg.mxu0
    %v4501 = vcombine.low %v4450, %v4452
    %v4502 = vcombine.low %v4491, %v4493
    %v4504 = vunpack.c.l.s4 1966171168
    %v4505 = vunpack.c.0.s8 %v4504
    %v4506 = vlaneseq
    %v4507 = vshrl.u32 %v4506, 7
    %v4508 = vsub.s32 %v4505, %v4507
    %v4509 = vrot.slane %v4501, %v4508
    %v4511 = vunpack.c.l.s4 1966171168
    %v4512 = vunpack.c.0.s8 %v4511
    %v4513 = vlaneseq
    %v4514 = vshrl.u32 %v4513, 7
    %v4515 = vsub.s32 %v4512, %v4514
    %v4516 = vrot.slane %v4502, %v4515
    %v4517 = vcombine.low %v4509, %v4516
    %v4519 = vunpack.c.l.s4 1966171168
    %v4520 = vunpack.c.0.s8 %v4519
    %v4521 = vlaneseq
    %v4522 = vshrl.u32 %v4521, 7
    %v4523 = vsub.s32 %v4520, %v4522
    %v4524 = vrot.slane %v4517, %v4523
    %v4526 = vadd.f32 %v4393, %v4524
    %v4527 = vld [vmem:[#allocation3 + $0x19] sm:$0x1]
    %v4528 = vpack.c.bf16 %v4527, %v4527
    %v4529 = vld [vmem:[#allocation2 + $0xc80] sm:$0xff]
    %v4530 = vld [vmem:[#allocation2 + $0xc88] sm:$0xff]
    %v4531 = vld [vmem:[#allocation2 + $0xc90] sm:$0xff]
    %v4532 = vld [vmem:[#allocation2 + $0xc98] sm:$0xff]
    %v4533 = vld [vmem:[#allocation2 + $0xca0] sm:$0xff]
    %v4534 = vld [vmem:[#allocation2 + $0xca8] sm:$0xff]
    %v4535 = vld [vmem:[#allocation2 + $0xcb0] sm:$0xff]
    %v4536 = vld [vmem:[#allocation2 + $0xcb8] sm:$0xff]
    %v4537 = vld [vmem:[#allocation2 + $0xcc0] sm:$0xff]
    %v4538 = vld [vmem:[#allocation2 + $0xcc8] sm:$0xff]
    %v4539 = vld [vmem:[#allocation2 + $0xcd0] sm:$0xff]
    %v4540 = vld [vmem:[#allocation2 + $0xcd8] sm:$0xff]
    %v4541 = vld [vmem:[#allocation2 + $0xce0] sm:$0xff]
    %v4542 = vld [vmem:[#allocation2 + $0xce8] sm:$0xff]
    %v4543 = vld [vmem:[#allocation2 + $0xcf0] sm:$0xff]
    %v4544 = vld [vmem:[#allocation2 + $0xcf8] sm:$0xff]
    %v4546 = vsel %vm761, %v4528, 0
    %4548 = vmatprep.subr.bf16.mxu0 %v4530
    %4549 = vmatpush1.bf16.msra.mxu0 %v4529
    %4550 = vmatprep.subr.bf16.mxu0 %v4534
    %4551 = vmatpush1.bf16.msra.mxu0 %v4533
    %4552 = vmatprep.subr.bf16.mxu0 %v4538
    %4553 = vmatpush1.bf16.msra.mxu0 %v4537
    %4554 = vmatprep.subr.bf16.mxu0 %v4542
    %4555 = vmatpush1.bf16.msra.mxu0 %v4541
    %4556 = vmatprep.subr.bf16.mxu0 0
    %4557 = vmatpush1.bf16.msra.mxu0 0
    %4558 = vmatprep.subr.bf16.mxu0 0
    %4559 = vmatpush1.bf16.msra.mxu0 0
    %4560 = vmatprep.subr.bf16.mxu0 0
    %4561 = vmatpush1.bf16.msra.mxu0 0
    %4562 = vmatprep.subr.bf16.mxu0 0
    %4563 = vmatpush1.bf16.msra.mxu0 0
    %4564 = vmatprep.subr.bf16.mxu0 0
    %4565 = vmatpush1.bf16.msra.mxu0 0
    %4566 = vmatprep.subr.bf16.mxu0 0
    %4567 = vmatpush1.bf16.msra.mxu0 0
    %4568 = vmatprep.subr.bf16.mxu0 0
    %4569 = vmatpush1.bf16.msra.mxu0 0
    %4570 = vmatprep.subr.bf16.mxu0 0
    %4571 = vmatpush1.bf16.msra.mxu0 0
    %4572 = vmatprep.subr.bf16.mxu0 0
    %4573 = vmatpush1.bf16.msra.mxu0 0
    %4574 = vmatprep.subr.bf16.mxu0 0
    %4575 = vmatpush1.bf16.msra.mxu0 0
    %4576 = vmatprep.subr.bf16.mxu0 0
    %4577 = vmatpush1.bf16.msra.mxu0 0
    %4578 = vmatprep.subr.bf16.mxu0 0
    %4579 = vmatpush1.bf16.msra.mxu0 0
    %4580 = vmatprep.mubr.bf16.mxu0 0
    %4581 = vmatmul.mubr.bf16.gmra.mrb[0].mxu0 %v4546
    %v4582 = vpop.f32.mrb[0].mxu0
    %v4583 = vadd.f32 0.0, %v4582
    %v4584 = vpop.f32.mrb[0].mxu0
    %v4585 = vadd.f32 0.0, %v4584
    %v4586 = vpop.f32.mrb[0].mxu0
    %v4587 = vpop.f32.mrb[0].mxu0
    %4588 = vdwg.mxu0
    %4589 = vmatprep.subr.bf16.mxu0 %v4532
    %4590 = vmatpush1.bf16.msra.mxu0 %v4531
    %4591 = vmatprep.subr.bf16.mxu0 %v4536
    %4592 = vmatpush1.bf16.msra.mxu0 %v4535
    %4593 = vmatprep.subr.bf16.mxu0 %v4540
    %4594 = vmatpush1.bf16.msra.mxu0 %v4539
    %4595 = vmatprep.subr.bf16.mxu0 %v4544
    %4596 = vmatpush1.bf16.msra.mxu0 %v4543
    %4597 = vmatprep.subr.bf16.mxu0 0
    %4598 = vmatpush1.bf16.msra.mxu0 0
    %4599 = vmatprep.subr.bf16.mxu0 0
    %4600 = vmatpush1.bf16.msra.mxu0 0
    %4601 = vmatprep.subr.bf16.mxu0 0
    %4602 = vmatpush1.bf16.msra.mxu0 0
    %4603 = vmatprep.subr.bf16.mxu0 0
    %4604 = vmatpush1.bf16.msra.mxu0 0
    %4605 = vmatprep.subr.bf16.mxu0 0
    %4606 = vmatpush1.bf16.msra.mxu0 0
    %4607 = vmatprep.subr.bf16.mxu0 0
    %4608 = vmatpush1.bf16.msra.mxu0 0
    %4609 = vmatprep.subr.bf16.mxu0 0
    %4610 = vmatpush1.bf16.msra.mxu0 0
    %4611 = vmatprep.subr.bf16.mxu0 0
    %4612 = vmatpush1.bf16.msra.mxu0 0
    %4613 = vmatprep.subr.bf16.mxu0 0
    %4614 = vmatpush1.bf16.msra.mxu0 0
    %4615 = vmatprep.subr.bf16.mxu0 0
    %4616 = vmatpush1.bf16.msra.mxu0 0
    %4617 = vmatprep.subr.bf16.mxu0 0
    %4618 = vmatpush1.bf16.msra.mxu0 0
    %4619 = vmatprep.subr.bf16.mxu0 0
    %4620 = vmatpush1.bf16.msra.mxu0 0
    %4621 = vmatprep.mubr.bf16.mxu0 0
    %4622 = vmatmul.mubr.bf16.gmra.mrb[0].mxu0 %v4546
    %v4623 = vpop.f32.mrb[0].mxu0
    %v4624 = vadd.f32 0.0, %v4623
    %v4625 = vpop.f32.mrb[0].mxu0
    %v4626 = vadd.f32 0.0, %v4625
    %v4627 = vpop.f32.mrb[0].mxu0
    %v4628 = vpop.f32.mrb[0].mxu0
    %4629 = vdwg.mxu0
    %v4634 = vcombine.low %v4583, %v4585
    %v4635 = vcombine.low %v4624, %v4626
    %v4637 = vunpack.c.l.s4 1966171168
    %v4638 = vunpack.c.0.s8 %v4637
    %v4639 = vlaneseq
    %v4640 = vshrl.u32 %v4639, 7
    %v4641 = vsub.s32 %v4638, %v4640
    %v4642 = vrot.slane %v4634, %v4641
    %v4644 = vunpack.c.l.s4 1966171168
    %v4645 = vunpack.c.0.s8 %v4644
    %v4646 = vlaneseq
    %v4647 = vshrl.u32 %v4646, 7
    %v4648 = vsub.s32 %v4645, %v4647
    %v4649 = vrot.slane %v4635, %v4648
    %v4650 = vcombine.low %v4642, %v4649
    %v4652 = vunpack.c.l.s4 1966171168
    %v4653 = vunpack.c.0.s8 %v4652
    %v4654 = vlaneseq
    %v4655 = vshrl.u32 %v4654, 7
    %v4656 = vsub.s32 %v4653, %v4655
    %v4657 = vrot.slane %v4650, %v4656
    %v4659 = vadd.f32 %v4526, %v4657
    %v4660 = vld [vmem:[#allocation3 + $0x1a] sm:$0x1]
    %v4661 = vpack.c.bf16 %v4660, %v4660
    %v4662 = vld [vmem:[#allocation2 + $0xd00] sm:$0xff]
    %v4663 = vld [vmem:[#allocation2 + $0xd08] sm:$0xff]
    %v4664 = vld [vmem:[#allocation2 + $0xd10] sm:$0xff]
    %v4665 = vld [vmem:[#allocation2 + $0xd18] sm:$0xff]
    %v4666 = vld [vmem:[#allocation2 + $0xd20] sm:$0xff]
    %v4667 = vld [vmem:[#allocation2 + $0xd28] sm:$0xff]
    %v4668 = vld [vmem:[#allocation2 + $0xd30] sm:$0xff]
    %v4669 = vld [vmem:[#allocation2 + $0xd38] sm:$0xff]
    %v4670 = vld [vmem:[#allocation2 + $0xd40] sm:$0xff]
    %v4671 = vld [vmem:[#allocation2 + $0xd48] sm:$0xff]
    %v4672 = vld [vmem:[#allocation2 + $0xd50] sm:$0xff]
    %v4673 = vld [vmem:[#allocation2 + $0xd58] sm:$0xff]
    %v4674 = vld [vmem:[#allocation2 + $0xd60] sm:$0xff]
    %v4675 = vld [vmem:[#allocation2 + $0xd68] sm:$0xff]
    %v4676 = vld [vmem:[#allocation2 + $0xd70] sm:$0xff]
    %v4677 = vld [vmem:[#allocation2 + $0xd78] sm:$0xff]
    %v4679 = vsel %vm761, %v4661, 0
    %4681 = vmatprep.subr.bf16.mxu0 %v4663
    %4682 = vmatpush1.bf16.msra.mxu0 %v4662
    %4683 = vmatprep.subr.bf16.mxu0 %v4667
    %4684 = vmatpush1.bf16.msra.mxu0 %v4666
    %4685 = vmatprep.subr.bf16.mxu0 %v4671
    %4686 = vmatpush1.bf16.msra.mxu0 %v4670
    %4687 = vmatprep.subr.bf16.mxu0 %v4675
    %4688 = vmatpush1.bf16.msra.mxu0 %v4674
    %4689 = vmatprep.subr.bf16.mxu0 0
    %4690 = vmatpush1.bf16.msra.mxu0 0
    %4691 = vmatprep.subr.bf16.mxu0 0
    %4692 = vmatpush1.bf16.msra.mxu0 0
    %4693 = vmatprep.subr.bf16.mxu0 0
    %4694 = vmatpush1.bf16.msra.mxu0 0
    %4695 = vmatprep.subr.bf16.mxu0 0
    %4696 = vmatpush1.bf16.msra.mxu0 0
    %4697 = vmatprep.subr.bf16.mxu0 0
    %4698 = vmatpush1.bf16.msra.mxu0 0
    %4699 = vmatprep.subr.bf16.mxu0 0
    %4700 = vmatpush1.bf16.msra.mxu0 0
    %4701 = vmatprep.subr.bf16.mxu0 0
    %4702 = vmatpush1.bf16.msra.mxu0 0
    %4703 = vmatprep.subr.bf16.mxu0 0
    %4704 = vmatpush1.bf16.msra.mxu0 0
    %4705 = vmatprep.subr.bf16.mxu0 0
    %4706 = vmatpush1.bf16.msra.mxu0 0
    %4707 = vmatprep.subr.bf16.mxu0 0
    %4708 = vmatpush1.bf16.msra.mxu0 0
    %4709 = vmatprep.subr.bf16.mxu0 0
    %4710 = vmatpush1.bf16.msra.mxu0 0
    %4711 = vmatprep.subr.bf16.mxu0 0
    %4712 = vmatpush1.bf16.msra.mxu0 0
    %4713 = vmatprep.mubr.bf16.mxu0 0
    %4714 = vmatmul.mubr.bf16.gmra.mrb[0].mxu0 %v4679
    %v4715 = vpop.f32.mrb[0].mxu0
    %v4716 = vadd.f32 0.0, %v4715
    %v4717 = vpop.f32.mrb[0].mxu0
    %v4718 = vadd.f32 0.0, %v4717
    %v4719 = vpop.f32.mrb[0].mxu0
    %v4720 = vpop.f32.mrb[0].mxu0
    %4721 = vdwg.mxu0
    %4722 = vmatprep.subr.bf16.mxu0 %v4665
    %4723 = vmatpush1.bf16.msra.mxu0 %v4664
    %4724 = vmatprep.subr.bf16.mxu0 %v4669
    %4725 = vmatpush1.bf16.msra.mxu0 %v4668
    %4726 = vmatprep.subr.bf16.mxu0 %v4673
    %4727 = vmatpush1.bf16.msra.mxu0 %v4672
    %4728 = vmatprep.subr.bf16.mxu0 %v4677
    %4729 = vmatpush1.bf16.msra.mxu0 %v4676
    %4730 = vmatprep.subr.bf16.mxu0 0
    %4731 = vmatpush1.bf16.msra.mxu0 0
    %4732 = vmatprep.subr.bf16.mxu0 0
    %4733 = vmatpush1.bf16.msra.mxu0 0
    %4734 = vmatprep.subr.bf16.mxu0 0
    %4735 = vmatpush1.bf16.msra.mxu0 0
    %4736 = vmatprep.subr.bf16.mxu0 0
    %4737 = vmatpush1.bf16.msra.mxu0 0
    %4738 = vmatprep.subr.bf16.mxu0 0
    %4739 = vmatpush1.bf16.msra.mxu0 0
    %4740 = vmatprep.subr.bf16.mxu0 0
    %4741 = vmatpush1.bf16.msra.mxu0 0
    %4742 = vmatprep.subr.bf16.mxu0 0
    %4743 = vmatpush1.bf16.msra.mxu0 0
    %4744 = vmatprep.subr.bf16.mxu0 0
    %4745 = vmatpush1.bf16.msra.mxu0 0
    %4746 = vmatprep.subr.bf16.mxu0 0
    %4747 = vmatpush1.bf16.msra.mxu0 0
    %4748 = vmatprep.subr.bf16.mxu0 0
    %4749 = vmatpush1.bf16.msra.mxu0 0
    %4750 = vmatprep.subr.bf16.mxu0 0
    %4751 = vmatpush1.bf16.msra.mxu0 0
    %4752 = vmatprep.subr.bf16.mxu0 0
    %4753 = vmatpush1.bf16.msra.mxu0 0
    %4754 = vmatprep.mubr.bf16.mxu0 0
    %4755 = vmatmul.mubr.bf16.gmra.mrb[0].mxu0 %v4679
    %v4756 = vpop.f32.mrb[0].mxu0
    %v4757 = vadd.f32 0.0, %v4756
    %v4758 = vpop.f32.mrb[0].mxu0
    %v4759 = vadd.f32 0.0, %v4758
    %v4760 = vpop.f32.mrb[0].mxu0
    %v4761 = vpop.f32.mrb[0].mxu0
    %4762 = vdwg.mxu0
    %v4767 = vcombine.low %v4716, %v4718
    %v4768 = vcombine.low %v4757, %v4759
    %v4770 = vunpack.c.l.s4 1966171168
    %v4771 = vunpack.c.0.s8 %v4770
    %v4772 = vlaneseq
    %v4773 = vshrl.u32 %v4772, 7
    %v4774 = vsub.s32 %v4771, %v4773
    %v4775 = vrot.slane %v4767, %v4774
    %v4777 = vunpack.c.l.s4 1966171168
    %v4778 = vunpack.c.0.s8 %v4777
    %v4779 = vlaneseq
    %v4780 = vshrl.u32 %v4779, 7
    %v4781 = vsub.s32 %v4778, %v4780
    %v4782 = vrot.slane %v4768, %v4781
    %v4783 = vcombine.low %v4775, %v4782
    %v4785 = vunpack.c.l.s4 1966171168
    %v4786 = vunpack.c.0.s8 %v4785
    %v4787 = vlaneseq
    %v4788 = vshrl.u32 %v4787, 7
    %v4789 = vsub.s32 %v4786, %v4788
    %v4790 = vrot.slane %v4783, %v4789
    %v4792 = vadd.f32 %v4659, %v4790
    %v4793 = vld [vmem:[#allocation3 + $0x1b] sm:$0x1]
    %v4794 = vpack.c.bf16 %v4793, %v4793
    %v4795 = vld [vmem:[#allocation2 + $0xd80] sm:$0xff]
    %v4796 = vld [vmem:[#allocation2 + $0xd88] sm:$0xff]
    %v4797 = vld [vmem:[#allocation2 + $0xd90] sm:$0xff]
    %v4798 = vld [vmem:[#allocation2 + $0xd98] sm:$0xff]
    %v4799 = vld [vmem:[#allocation2 + $0xda0] sm:$0xff]
    %v4800 = vld [vmem:[#allocation2 + $0xda8] sm:$0xff]
    %v4801 = vld [vmem:[#allocation2 + $0xdb0] sm:$0xff]
    %v4802 = vld [vmem:[#allocation2 + $0xdb8] sm:$0xff]
    %v4803 = vld [vmem:[#allocation2 + $0xdc0] sm:$0xff]
    %v4804 = vld [vmem:[#allocation2 + $0xdc8] sm:$0xff]
    %v4805 = vld [vmem:[#allocation2 + $0xdd0] sm:$0xff]
    %v4806 = vld [vmem:[#allocation2 + $0xdd8] sm:$0xff]
    %v4807 = vld [vmem:[#allocation2 + $0xde0] sm:$0xff]
    %v4808 = vld [vmem:[#allocation2 + $0xde8] sm:$0xff]
    %v4809 = vld [vmem:[#allocation2 + $0xdf0] sm:$0xff]
    %v4810 = vld [vmem:[#allocation2 + $0xdf8] sm:$0xff]
    %v4812 = vsel %vm761, %v4794, 0
    %4814 = vmatprep.subr.bf16.mxu0 %v4796
    %4815 = vmatpush1.bf16.msra.mxu0 %v4795
    %4816 = vmatprep.subr.bf16.mxu0 %v4800
    %4817 = vmatpush1.bf16.msra.mxu0 %v4799
    %4818 = vmatprep.subr.bf16.mxu0 %v4804
    %4819 = vmatpush1.bf16.msra.mxu0 %v4803
    %4820 = vmatprep.subr.bf16.mxu0 %v4808
    %4821 = vmatpush1.bf16.msra.mxu0 %v4807
    %4822 = vmatprep.subr.bf16.mxu0 0
    %4823 = vmatpush1.bf16.msra.mxu0 0
    %4824 = vmatprep.subr.bf16.mxu0 0
    %4825 = vmatpush1.bf16.msra.mxu0 0
    %4826 = vmatprep.subr.bf16.mxu0 0
    %4827 = vmatpush1.bf16.msra.mxu0 0
    %4828 = vmatprep.subr.bf16.mxu0 0
    %4829 = vmatpush1.bf16.msra.mxu0 0
    %4830 = vmatprep.subr.bf16.mxu0 0
    %4831 = vmatpush1.bf16.msra.mxu0 0
    %4832 = vmatprep.subr.bf16.mxu0 0
    %4833 = vmatpush1.bf16.msra.mxu0 0
    %4834 = vmatprep.subr.bf16.mxu0 0
    %4835 = vmatpush1.bf16.msra.mxu0 0
    %4836 = vmatprep.subr.bf16.mxu0 0
    %4837 = vmatpush1.bf16.msra.mxu0 0
    %4838 = vmatprep.subr.bf16.mxu0 0
    %4839 = vmatpush1.bf16.msra.mxu0 0
    %4840 = vmatprep.subr.bf16.mxu0 0
    %4841 = vmatpush1.bf16.msra.mxu0 0
    %4842 = vmatprep.subr.bf16.mxu0 0
    %4843 = vmatpush1.bf16.msra.mxu0 0
    %4844 = vmatprep.subr.bf16.mxu0 0
    %4845 = vmatpush1.bf16.msra.mxu0 0
    %4846 = vmatprep.mubr.bf16.mxu0 0
    %4847 = vmatmul.mubr.bf16.gmra.mrb[0].mxu0 %v4812
    %v4848 = vpop.f32.mrb[0].mxu0
    %v4849 = vadd.f32 0.0, %v4848
    %v4850 = vpop.f32.mrb[0].mxu0
    %v4851 = vadd.f32 0.0, %v4850
    %v4852 = vpop.f32.mrb[0].mxu0
    %v4853 = vpop.f32.mrb[0].mxu0
    %4854 = vdwg.mxu0
    %4855 = vmatprep.subr.bf16.mxu0 %v4798
    %4856 = vmatpush1.bf16.msra.mxu0 %v4797
    %4857 = vmatprep.subr.bf16.mxu0 %v4802
    %4858 = vmatpush1.bf16.msra.mxu0 %v4801
    %4859 = vmatprep.subr.bf16.mxu0 %v4806
    %4860 = vmatpush1.bf16.msra.mxu0 %v4805
    %4861 = vmatprep.subr.bf16.mxu0 %v4810
    %4862 = vmatpush1.bf16.msra.mxu0 %v4809
    %4863 = vmatprep.subr.bf16.mxu0 0
    %4864 = vmatpush1.bf16.msra.mxu0 0
    %4865 = vmatprep.subr.bf16.mxu0 0
    %4866 = vmatpush1.bf16.msra.mxu0 0
    %4867 = vmatprep.subr.bf16.mxu0 0
    %4868 = vmatpush1.bf16.msra.mxu0 0
    %4869 = vmatprep.subr.bf16.mxu0 0
    %4870 = vmatpush1.bf16.msra.mxu0 0
    %4871 = vmatprep.subr.bf16.mxu0 0
    %4872 = vmatpush1.bf16.msra.mxu0 0
    %4873 = vmatprep.subr.bf16.mxu0 0
    %4874 = vmatpush1.bf16.msra.mxu0 0
    %4875 = vmatprep.subr.bf16.mxu0 0
    %4876 = vmatpush1.bf16.msra.mxu0 0
    %4877 = vmatprep.subr.bf16.mxu0 0
    %4878 = vmatpush1.bf16.msra.mxu0 0
    %4879 = vmatprep.subr.bf16.mxu0 0
    %4880 = vmatpush1.bf16.msra.mxu0 0
    %4881 = vmatprep.subr.bf16.mxu0 0
    %4882 = vmatpush1.bf16.msra.mxu0 0
    %4883 = vmatprep.subr.bf16.mxu0 0
    %4884 = vmatpush1.bf16.msra.mxu0 0
    %4885 = vmatprep.subr.bf16.mxu0 0
    %4886 = vmatpush1.bf16.msra.mxu0 0
    %4887 = vmatprep.mubr.bf16.mxu0 0
    %4888 = vmatmul.mubr.bf16.gmra.mrb[0].mxu0 %v4812
    %v4889 = vpop.f32.mrb[0].mxu0
    %v4890 = vadd.f32 0.0, %v4889
    %v4891 = vpop.f32.mrb[0].mxu0
    %v4892 = vadd.f32 0.0, %v4891
    %v4893 = vpop.f32.mrb[0].mxu0
    %v4894 = vpop.f32.mrb[0].mxu0
    %4895 = vdwg.mxu0
    %v4900 = vcombine.low %v4849, %v4851
    %v4901 = vcombine.low %v4890, %v4892
    %v4903 = vunpack.c.l.s4 1966171168
    %v4904 = vunpack.c.0.s8 %v4903
    %v4905 = vlaneseq
    %v4906 = vshrl.u32 %v4905, 7
    %v4907 = vsub.s32 %v4904, %v4906
    %v4908 = vrot.slane %v4900, %v4907
    %v4910 = vunpack.c.l.s4 1966171168
    %v4911 = vunpack.c.0.s8 %v4910
    %v4912 = vlaneseq
    %v4913 = vshrl.u32 %v4912, 7
    %v4914 = vsub.s32 %v4911, %v4913
    %v4915 = vrot.slane %v4901, %v4914
    %v4916 = vcombine.low %v4908, %v4915
    %v4918 = vunpack.c.l.s4 1966171168
    %v4919 = vunpack.c.0.s8 %v4918
    %v4920 = vlaneseq
    %v4921 = vshrl.u32 %v4920, 7
    %v4922 = vsub.s32 %v4919, %v4921
    %v4923 = vrot.slane %v4916, %v4922
    %v4925 = vadd.f32 %v4792, %v4923
    %v4926 = vld [vmem:[#allocation3 + $0x1c] sm:$0x1]
    %v4927 = vpack.c.bf16 %v4926, %v4926
    %v4928 = vld [vmem:[#allocation2 + $0xe00] sm:$0xff]
    %v4929 = vld [vmem:[#allocation2 + $0xe08] sm:$0xff]
    %v4930 = vld [vmem:[#allocation2 + $0xe10] sm:$0xff]
    %v4931 = vld [vmem:[#allocation2 + $0xe18] sm:$0xff]
    %v4932 = vld [vmem:[#allocation2 + $0xe20] sm:$0xff]
    %v4933 = vld [vmem:[#allocation2 + $0xe28] sm:$0xff]
    %v4934 = vld [vmem:[#allocation2 + $0xe30] sm:$0xff]
    %v4935 = vld [vmem:[#allocation2 + $0xe38] sm:$0xff]
    %v4936 = vld [vmem:[#allocation2 + $0xe40] sm:$0xff]
    %v4937 = vld [vmem:[#allocation2 + $0xe48] sm:$0xff]
    %v4938 = vld [vmem:[#allocation2 + $0xe50] sm:$0xff]
    %v4939 = vld [vmem:[#allocation2 + $0xe58] sm:$0xff]
    %v4940 = vld [vmem:[#allocation2 + $0xe60] sm:$0xff]
    %v4941 = vld [vmem:[#allocation2 + $0xe68] sm:$0xff]
    %v4942 = vld [vmem:[#allocation2 + $0xe70] sm:$0xff]
    %v4943 = vld [vmem:[#allocation2 + $0xe78] sm:$0xff]
    %v4945 = vsel %vm761, %v4927, 0
    %4947 = vmatprep.subr.bf16.mxu0 %v4929
    %4948 = vmatpush1.bf16.msra.mxu0 %v4928
    %4949 = vmatprep.subr.bf16.mxu0 %v4933
    %4950 = vmatpush1.bf16.msra.mxu0 %v4932
    %4951 = vmatprep.subr.bf16.mxu0 %v4937
    %4952 = vmatpush1.bf16.msra.mxu0 %v4936
    %4953 = vmatprep.subr.bf16.mxu0 %v4941
    %4954 = vmatpush1.bf16.msra.mxu0 %v4940
    %4955 = vmatprep.subr.bf16.mxu0 0
    %4956 = vmatpush1.bf16.msra.mxu0 0
    %4957 = vmatprep.subr.bf16.mxu0 0
    %4958 = vmatpush1.bf16.msra.mxu0 0
    %4959 = vmatprep.subr.bf16.mxu0 0
    %4960 = vmatpush1.bf16.msra.mxu0 0
    %4961 = vmatprep.subr.bf16.mxu0 0
    %4962 = vmatpush1.bf16.msra.mxu0 0
    %4963 = vmatprep.subr.bf16.mxu0 0
    %4964 = vmatpush1.bf16.msra.mxu0 0
    %4965 = vmatprep.subr.bf16.mxu0 0
    %4966 = vmatpush1.bf16.msra.mxu0 0
    %4967 = vmatprep.subr.bf16.mxu0 0
    %4968 = vmatpush1.bf16.msra.mxu0 0
    %4969 = vmatprep.subr.bf16.mxu0 0
    %4970 = vmatpush1.bf16.msra.mxu0 0
    %4971 = vmatprep.subr.bf16.mxu0 0
    %4972 = vmatpush1.bf16.msra.mxu0 0
    %4973 = vmatprep.subr.bf16.mxu0 0
    %4974 = vmatpush1.bf16.msra.mxu0 0
    %4975 = vmatprep.subr.bf16.mxu0 0
    %4976 = vmatpush1.bf16.msra.mxu0 0
    %4977 = vmatprep.subr.bf16.mxu0 0
    %4978 = vmatpush1.bf16.msra.mxu0 0
    %4979 = vmatprep.mubr.bf16.mxu0 0
    %4980 = vmatmul.mubr.bf16.gmra.mrb[0].mxu0 %v4945
    %v4981 = vpop.f32.mrb[0].mxu0
    %v4982 = vadd.f32 0.0, %v4981
    %v4983 = vpop.f32.mrb[0].mxu0
    %v4984 = vadd.f32 0.0, %v4983
    %v4985 = vpop.f32.mrb[0].mxu0
    %v4986 = vpop.f32.mrb[0].mxu0
    %4987 = vdwg.mxu0
    %4988 = vmatprep.subr.bf16.mxu0 %v4931
    %4989 = vmatpush1.bf16.msra.mxu0 %v4930
    %4990 = vmatprep.subr.bf16.mxu0 %v4935
    %4991 = vmatpush1.bf16.msra.mxu0 %v4934
    %4992 = vmatprep.subr.bf16.mxu0 %v4939
    %4993 = vmatpush1.bf16.msra.mxu0 %v4938
    %4994 = vmatprep.subr.bf16.mxu0 %v4943
    %4995 = vmatpush1.bf16.msra.mxu0 %v4942
    %4996 = vmatprep.subr.bf16.mxu0 0
    %4997 = vmatpush1.bf16.msra.mxu0 0
    %4998 = vmatprep.subr.bf16.mxu0 0
    %4999 = vmatpush1.bf16.msra.mxu0 0
    %5000 = vmatprep.subr.bf16.mxu0 0
    %5001 = vmatpush1.bf16.msra.mxu0 0
    %5002 = vmatprep.subr.bf16.mxu0 0
    %5003 = vmatpush1.bf16.msra.mxu0 0
    %5004 = vmatprep.subr.bf16.mxu0 0
    %5005 = vmatpush1.bf16.msra.mxu0 0
    %5006 = vmatprep.subr.bf16.mxu0 0
    %5007 = vmatpush1.bf16.msra.mxu0 0
    %5008 = vmatprep.subr.bf16.mxu0 0
    %5009 = vmatpush1.bf16.msra.mxu0 0
    %5010 = vmatprep.subr.bf16.mxu0 0
    %5011 = vmatpush1.bf16.msra.mxu0 0
    %5012 = vmatprep.subr.bf16.mxu0 0
    %5013 = vmatpush1.bf16.msra.mxu0 0
    %5014 = vmatprep.subr.bf16.mxu0 0
    %5015 = vmatpush1.bf16.msra.mxu0 0
    %5016 = vmatprep.subr.bf16.mxu0 0
    %5017 = vmatpush1.bf16.msra.mxu0 0
    %5018 = vmatprep.subr.bf16.mxu0 0
    %5019 = vmatpush1.bf16.msra.mxu0 0
    %5020 = vmatprep.mubr.bf16.mxu0 0
    %5021 = vmatmul.mubr.bf16.gmra.mrb[0].mxu0 %v4945
    %v5022 = vpop.f32.mrb[0].mxu0
    %v5023 = vadd.f32 0.0, %v5022
    %v5024 = vpop.f32.mrb[0].mxu0
    %v5025 = vadd.f32 0.0, %v5024
    %v5026 = vpop.f32.mrb[0].mxu0
    %v5027 = vpop.f32.mrb[0].mxu0
    %5028 = vdwg.mxu0
    %v5033 = vcombine.low %v4982, %v4984
    %v5034 = vcombine.low %v5023, %v5025
    %v5036 = vunpack.c.l.s4 1966171168
    %v5037 = vunpack.c.0.s8 %v5036
    %v5038 = vlaneseq
    %v5039 = vshrl.u32 %v5038, 7
    %v5040 = vsub.s32 %v5037, %v5039
    %v5041 = vrot.slane %v5033, %v5040
    %v5043 = vunpack.c.l.s4 1966171168
    %v5044 = vunpack.c.0.s8 %v5043
    %v5045 = vlaneseq
    %v5046 = vshrl.u32 %v5045, 7
    %v5047 = vsub.s32 %v5044, %v5046
    %v5048 = vrot.slane %v5034, %v5047
    %v5049 = vcombine.low %v5041, %v5048
    %v5051 = vunpack.c.l.s4 1966171168
    %v5052 = vunpack.c.0.s8 %v5051
    %v5053 = vlaneseq
    %v5054 = vshrl.u32 %v5053, 7
    %v5055 = vsub.s32 %v5052, %v5054
    %v5056 = vrot.slane %v5049, %v5055
    %v5058 = vadd.f32 %v4925, %v5056
    %v5059 = vld [vmem:[#allocation3 + $0x1d] sm:$0x1]
    %v5060 = vpack.c.bf16 %v5059, %v5059
    %v5061 = vld [vmem:[#allocation2 + $0xe80] sm:$0xff]
    %v5062 = vld [vmem:[#allocation2 + $0xe88] sm:$0xff]
    %v5063 = vld [vmem:[#allocation2 + $0xe90] sm:$0xff]
    %v5064 = vld [vmem:[#allocation2 + $0xe98] sm:$0xff]
    %v5065 = vld [vmem:[#allocation2 + $0xea0] sm:$0xff]
    %v5066 = vld [vmem:[#allocation2 + $0xea8] sm:$0xff]
    %v5067 = vld [vmem:[#allocation2 + $0xeb0] sm:$0xff]
    %v5068 = vld [vmem:[#allocation2 + $0xeb8] sm:$0xff]
    %v5069 = vld [vmem:[#allocation2 + $0xec0] sm:$0xff]
    %v5070 = vld [vmem:[#allocation2 + $0xec8] sm:$0xff]
    %v5071 = vld [vmem:[#allocation2 + $0xed0] sm:$0xff]
    %v5072 = vld [vmem:[#allocation2 + $0xed8] sm:$0xff]
    %v5073 = vld [vmem:[#allocation2 + $0xee0] sm:$0xff]
    %v5074 = vld [vmem:[#allocation2 + $0xee8] sm:$0xff]
    %v5075 = vld [vmem:[#allocation2 + $0xef0] sm:$0xff]
    %v5076 = vld [vmem:[#allocation2 + $0xef8] sm:$0xff]
    %v5078 = vsel %vm761, %v5060, 0
    %5080 = vmatprep.subr.bf16.mxu0 %v5062
    %5081 = vmatpush1.bf16.msra.mxu0 %v5061
    %5082 = vmatprep.subr.bf16.mxu0 %v5066
    %5083 = vmatpush1.bf16.msra.mxu0 %v5065
    %5084 = vmatprep.subr.bf16.mxu0 %v5070
    %5085 = vmatpush1.bf16.msra.mxu0 %v5069
    %5086 = vmatprep.subr.bf16.mxu0 %v5074
    %5087 = vmatpush1.bf16.msra.mxu0 %v5073
    %5088 = vmatprep.subr.bf16.mxu0 0
    %5089 = vmatpush1.bf16.msra.mxu0 0
    %5090 = vmatprep.subr.bf16.mxu0 0
    %5091 = vmatpush1.bf16.msra.mxu0 0
    %5092 = vmatprep.subr.bf16.mxu0 0
    %5093 = vmatpush1.bf16.msra.mxu0 0
    %5094 = vmatprep.subr.bf16.mxu0 0
    %5095 = vmatpush1.bf16.msra.mxu0 0
    %5096 = vmatprep.subr.bf16.mxu0 0
    %5097 = vmatpush1.bf16.msra.mxu0 0
    %5098 = vmatprep.subr.bf16.mxu0 0
    %5099 = vmatpush1.bf16.msra.mxu0 0
    %5100 = vmatprep.subr.bf16.mxu0 0
    %5101 = vmatpush1.bf16.msra.mxu0 0
    %5102 = vmatprep.subr.bf16.mxu0 0
    %5103 = vmatpush1.bf16.msra.mxu0 0
    %5104 = vmatprep.subr.bf16.mxu0 0
    %5105 = vmatpush1.bf16.msra.mxu0 0
    %5106 = vmatprep.subr.bf16.mxu0 0
    %5107 = vmatpush1.bf16.msra.mxu0 0
    %5108 = vmatprep.subr.bf16.mxu0 0
    %5109 = vmatpush1.bf16.msra.mxu0 0
    %5110 = vmatprep.subr.bf16.mxu0 0
    %5111 = vmatpush1.bf16.msra.mxu0 0
    %5112 = vmatprep.mubr.bf16.mxu0 0
    %5113 = vmatmul.mubr.bf16.gmra.mrb[0].mxu0 %v5078
    %v5114 = vpop.f32.mrb[0].mxu0
    %v5115 = vadd.f32 0.0, %v5114
    %v5116 = vpop.f32.mrb[0].mxu0
    %v5117 = vadd.f32 0.0, %v5116
    %v5118 = vpop.f32.mrb[0].mxu0
    %v5119 = vpop.f32.mrb[0].mxu0
    %5120 = vdwg.mxu0
    %5121 = vmatprep.subr.bf16.mxu0 %v5064
    %5122 = vmatpush1.bf16.msra.mxu0 %v5063
    %5123 = vmatprep.subr.bf16.mxu0 %v5068
    %5124 = vmatpush1.bf16.msra.mxu0 %v5067
    %5125 = vmatprep.subr.bf16.mxu0 %v5072
    %5126 = vmatpush1.bf16.msra.mxu0 %v5071
    %5127 = vmatprep.subr.bf16.mxu0 %v5076
    %5128 = vmatpush1.bf16.msra.mxu0 %v5075
    %5129 = vmatprep.subr.bf16.mxu0 0
    %5130 = vmatpush1.bf16.msra.mxu0 0
    %5131 = vmatprep.subr.bf16.mxu0 0
    %5132 = vmatpush1.bf16.msra.mxu0 0
    %5133 = vmatprep.subr.bf16.mxu0 0
    %5134 = vmatpush1.bf16.msra.mxu0 0
    %5135 = vmatprep.subr.bf16.mxu0 0
    %5136 = vmatpush1.bf16.msra.mxu0 0
    %5137 = vmatprep.subr.bf16.mxu0 0
    %5138 = vmatpush1.bf16.msra.mxu0 0
    %5139 = vmatprep.subr.bf16.mxu0 0
    %5140 = vmatpush1.bf16.msra.mxu0 0
    %5141 = vmatprep.subr.bf16.mxu0 0
    %5142 = vmatpush1.bf16.msra.mxu0 0
    %5143 = vmatprep.subr.bf16.mxu0 0
    %5144 = vmatpush1.bf16.msra.mxu0 0
    %5145 = vmatprep.subr.bf16.mxu0 0
    %5146 = vmatpush1.bf16.msra.mxu0 0
    %5147 = vmatprep.subr.bf16.mxu0 0
    %5148 = vmatpush1.bf16.msra.mxu0 0
    %5149 = vmatprep.subr.bf16.mxu0 0
    %5150 = vmatpush1.bf16.msra.mxu0 0
    %5151 = vmatprep.subr.bf16.mxu0 0
    %5152 = vmatpush1.bf16.msra.mxu0 0
    %5153 = vmatprep.mubr.bf16.mxu0 0
    %5154 = vmatmul.mubr.bf16.gmra.mrb[0].mxu0 %v5078
    %v5155 = vpop.f32.mrb[0].mxu0
    %v5156 = vadd.f32 0.0, %v5155
    %v5157 = vpop.f32.mrb[0].mxu0
    %v5158 = vadd.f32 0.0, %v5157
    %v5159 = vpop.f32.mrb[0].mxu0
    %v5160 = vpop.f32.mrb[0].mxu0
    %5161 = vdwg.mxu0
    %v5166 = vcombine.low %v5115, %v5117
    %v5167 = vcombine.low %v5156, %v5158
    %v5169 = vunpack.c.l.s4 1966171168
    %v5170 = vunpack.c.0.s8 %v5169
    %v5171 = vlaneseq
    %v5172 = vshrl.u32 %v5171, 7
    %v5173 = vsub.s32 %v5170, %v5172
    %v5174 = vrot.slane %v5166, %v5173
    %v5176 = vunpack.c.l.s4 1966171168
    %v5177 = vunpack.c.0.s8 %v5176
    %v5178 = vlaneseq
    %v5179 = vshrl.u32 %v5178, 7
    %v5180 = vsub.s32 %v5177, %v5179
    %v5181 = vrot.slane %v5167, %v5180
    %v5182 = vcombine.low %v5174, %v5181
    %v5184 = vunpack.c.l.s4 1966171168
    %v5185 = vunpack.c.0.s8 %v5184
    %v5186 = vlaneseq
    %v5187 = vshrl.u32 %v5186, 7
    %v5188 = vsub.s32 %v5185, %v5187
    %v5189 = vrot.slane %v5182, %v5188
    %v5191 = vadd.f32 %v5058, %v5189
    %v5192 = vld [vmem:[#allocation3 + $0x1e] sm:$0x1]
    %v5193 = vpack.c.bf16 %v5192, %v5192
    %v5194 = vld [vmem:[#allocation2 + $0xf00] sm:$0xff]
    %v5195 = vld [vmem:[#allocation2 + $0xf08] sm:$0xff]
    %v5196 = vld [vmem:[#allocation2 + $0xf10] sm:$0xff]
    %v5197 = vld [vmem:[#allocation2 + $0xf18] sm:$0xff]
    %v5198 = vld [vmem:[#allocation2 + $0xf20] sm:$0xff]
    %v5199 = vld [vmem:[#allocation2 + $0xf28] sm:$0xff]
    %v5200 = vld [vmem:[#allocation2 + $0xf30] sm:$0xff]
    %v5201 = vld [vmem:[#allocation2 + $0xf38] sm:$0xff]
    %v5202 = vld [vmem:[#allocation2 + $0xf40] sm:$0xff]
    %v5203 = vld [vmem:[#allocation2 + $0xf48] sm:$0xff]
    %v5204 = vld [vmem:[#allocation2 + $0xf50] sm:$0xff]
    %v5205 = vld [vmem:[#allocation2 + $0xf58] sm:$0xff]
    %v5206 = vld [vmem:[#allocation2 + $0xf60] sm:$0xff]
    %v5207 = vld [vmem:[#allocation2 + $0xf68] sm:$0xff]
    %v5208 = vld [vmem:[#allocation2 + $0xf70] sm:$0xff]
    %v5209 = vld [vmem:[#allocation2 + $0xf78] sm:$0xff]
    %v5211 = vsel %vm761, %v5193, 0
    %5213 = vmatprep.subr.bf16.mxu0 %v5195
    %5214 = vmatpush1.bf16.msra.mxu0 %v5194
    %5215 = vmatprep.subr.bf16.mxu0 %v5199
    %5216 = vmatpush1.bf16.msra.mxu0 %v5198
    %5217 = vmatprep.subr.bf16.mxu0 %v5203
    %5218 = vmatpush1.bf16.msra.mxu0 %v5202
    %5219 = vmatprep.subr.bf16.mxu0 %v5207
    %5220 = vmatpush1.bf16.msra.mxu0 %v5206
    %5221 = vmatprep.subr.bf16.mxu0 0
    %5222 = vmatpush1.bf16.msra.mxu0 0
    %5223 = vmatprep.subr.bf16.mxu0 0
    %5224 = vmatpush1.bf16.msra.mxu0 0
    %5225 = vmatprep.subr.bf16.mxu0 0
    %5226 = vmatpush1.bf16.msra.mxu0 0
    %5227 = vmatprep.subr.bf16.mxu0 0
    %5228 = vmatpush1.bf16.msra.mxu0 0
    %5229 = vmatprep.subr.bf16.mxu0 0
    %5230 = vmatpush1.bf16.msra.mxu0 0
    %5231 = vmatprep.subr.bf16.mxu0 0
    %5232 = vmatpush1.bf16.msra.mxu0 0
    %5233 = vmatprep.subr.bf16.mxu0 0
    %5234 = vmatpush1.bf16.msra.mxu0 0
    %5235 = vmatprep.subr.bf16.mxu0 0
    %5236 = vmatpush1.bf16.msra.mxu0 0
    %5237 = vmatprep.subr.bf16.mxu0 0
    %5238 = vmatpush1.bf16.msra.mxu0 0
    %5239 = vmatprep.subr.bf16.mxu0 0
    %5240 = vmatpush1.bf16.msra.mxu0 0
    %5241 = vmatprep.subr.bf16.mxu0 0
    %5242 = vmatpush1.bf16.msra.mxu0 0
    %5243 = vmatprep.subr.bf16.mxu0 0
    %5244 = vmatpush1.bf16.msra.mxu0 0
    %5245 = vmatprep.mubr.bf16.mxu0 0
    %5246 = vmatmul.mubr.bf16.gmra.mrb[0].mxu0 %v5211
    %v5247 = vpop.f32.mrb[0].mxu0
    %v5248 = vadd.f32 0.0, %v5247
    %v5249 = vpop.f32.mrb[0].mxu0
    %v5250 = vadd.f32 0.0, %v5249
    %v5251 = vpop.f32.mrb[0].mxu0
    %v5252 = vpop.f32.mrb[0].mxu0
    %5253 = vdwg.mxu0
    %5254 = vmatprep.subr.bf16.mxu0 %v5197
    %5255 = vmatpush1.bf16.msra.mxu0 %v5196
    %5256 = vmatprep.subr.bf16.mxu0 %v5201
    %5257 = vmatpush1.bf16.msra.mxu0 %v5200
    %5258 = vmatprep.subr.bf16.mxu0 %v5205
    %5259 = vmatpush1.bf16.msra.mxu0 %v5204
    %5260 = vmatprep.subr.bf16.mxu0 %v5209
    %5261 = vmatpush1.bf16.msra.mxu0 %v5208
    %5262 = vmatprep.subr.bf16.mxu0 0
    %5263 = vmatpush1.bf16.msra.mxu0 0
    %5264 = vmatprep.subr.bf16.mxu0 0
    %5265 = vmatpush1.bf16.msra.mxu0 0
    %5266 = vmatprep.subr.bf16.mxu0 0
    %5267 = vmatpush1.bf16.msra.mxu0 0
    %5268 = vmatprep.subr.bf16.mxu0 0
    %5269 = vmatpush1.bf16.msra.mxu0 0
    %5270 = vmatprep.subr.bf16.mxu0 0
    %5271 = vmatpush1.bf16.msra.mxu0 0
    %5272 = vmatprep.subr.bf16.mxu0 0
    %5273 = vmatpush1.bf16.msra.mxu0 0
    %5274 = vmatprep.subr.bf16.mxu0 0
    %5275 = vmatpush1.bf16.msra.mxu0 0
    %5276 = vmatprep.subr.bf16.mxu0 0
    %5277 = vmatpush1.bf16.msra.mxu0 0
    %5278 = vmatprep.subr.bf16.mxu0 0
    %5279 = vmatpush1.bf16.msra.mxu0 0
    %5280 = vmatprep.subr.bf16.mxu0 0
    %5281 = vmatpush1.bf16.msra.mxu0 0
    %5282 = vmatprep.subr.bf16.mxu0 0
    %5283 = vmatpush1.bf16.msra.mxu0 0
    %5284 = vmatprep.subr.bf16.mxu0 0
    %5285 = vmatpush1.bf16.msra.mxu0 0
    %5286 = vmatprep.mubr.bf16.mxu0 0
    %5287 = vmatmul.mubr.bf16.gmra.mrb[0].mxu0 %v5211
    %v5288 = vpop.f32.mrb[0].mxu0
    %v5289 = vadd.f32 0.0, %v5288
    %v5290 = vpop.f32.mrb[0].mxu0
    %v5291 = vadd.f32 0.0, %v5290
    %v5292 = vpop.f32.mrb[0].mxu0
    %v5293 = vpop.f32.mrb[0].mxu0
    %5294 = vdwg.mxu0
    %v5299 = vcombine.low %v5248, %v5250
    %v5300 = vcombine.low %v5289, %v5291
    %v5302 = vunpack.c.l.s4 1966171168
    %v5303 = vunpack.c.0.s8 %v5302
    %v5304 = vlaneseq
    %v5305 = vshrl.u32 %v5304, 7
    %v5306 = vsub.s32 %v5303, %v5305
    %v5307 = vrot.slane %v5299, %v5306
    %v5309 = vunpack.c.l.s4 1966171168
    %v5310 = vunpack.c.0.s8 %v5309
    %v5311 = vlaneseq
    %v5312 = vshrl.u32 %v5311, 7
    %v5313 = vsub.s32 %v5310, %v5312
    %v5314 = vrot.slane %v5300, %v5313
    %v5315 = vcombine.low %v5307, %v5314
    %v5317 = vunpack.c.l.s4 1966171168
    %v5318 = vunpack.c.0.s8 %v5317
    %v5319 = vlaneseq
    %v5320 = vshrl.u32 %v5319, 7
    %v5321 = vsub.s32 %v5318, %v5320
    %v5322 = vrot.slane %v5315, %v5321
    %v5324 = vadd.f32 %v5191, %v5322
    %v5325 = vld [vmem:[#allocation3 + $0x1f] sm:$0x1]
    %v5326 = vpack.c.bf16 %v5325, %v5325
    %v5327 = vld [vmem:[#allocation2 + $0xf80] sm:$0xff]
    %v5328 = vld [vmem:[#allocation2 + $0xf88] sm:$0xff]
    %v5329 = vld [vmem:[#allocation2 + $0xf90] sm:$0xff]
    %v5330 = vld [vmem:[#allocation2 + $0xf98] sm:$0xff]
    %v5331 = vld [vmem:[#allocation2 + $0xfa0] sm:$0xff]
    %v5332 = vld [vmem:[#allocation2 + $0xfa8] sm:$0xff]
    %v5333 = vld [vmem:[#allocation2 + $0xfb0] sm:$0xff]
    %v5334 = vld [vmem:[#allocation2 + $0xfb8] sm:$0xff]
    %v5335 = vld [vmem:[#allocation2 + $0xfc0] sm:$0xff]
    %v5336 = vld [vmem:[#allocation2 + $0xfc8] sm:$0xff]
    %v5337 = vld [vmem:[#allocation2 + $0xfd0] sm:$0xff]
    %v5338 = vld [vmem:[#allocation2 + $0xfd8] sm:$0xff]
    %v5339 = vld [vmem:[#allocation2 + $0xfe0] sm:$0xff]
    %v5340 = vld [vmem:[#allocation2 + $0xfe8] sm:$0xff]
    %v5341 = vld [vmem:[#allocation2 + $0xff0] sm:$0xff]
    %v5342 = vld [vmem:[#allocation2 + $0xff8] sm:$0xff]
    %v5344 = vsel %vm761, %v5326, 0
    %5346 = vmatprep.subr.bf16.mxu0 %v5328
    %5347 = vmatpush1.bf16.msra.mxu0 %v5327
    %5348 = vmatprep.subr.bf16.mxu0 %v5332
    %5349 = vmatpush1.bf16.msra.mxu0 %v5331
    %5350 = vmatprep.subr.bf16.mxu0 %v5336
    %5351 = vmatpush1.bf16.msra.mxu0 %v5335
    %5352 = vmatprep.subr.bf16.mxu0 %v5340
    %5353 = vmatpush1.bf16.msra.mxu0 %v5339
    %5354 = vmatprep.subr.bf16.mxu0 0
    %5355 = vmatpush1.bf16.msra.mxu0 0
    %5356 = vmatprep.subr.bf16.mxu0 0
    %5357 = vmatpush1.bf16.msra.mxu0 0
    %5358 = vmatprep.subr.bf16.mxu0 0
    %5359 = vmatpush1.bf16.msra.mxu0 0
    %5360 = vmatprep.subr.bf16.mxu0 0
    %5361 = vmatpush1.bf16.msra.mxu0 0
    %5362 = vmatprep.subr.bf16.mxu0 0
    %5363 = vmatpush1.bf16.msra.mxu0 0
    %5364 = vmatprep.subr.bf16.mxu0 0
    %5365 = vmatpush1.bf16.msra.mxu0 0
    %5366 = vmatprep.subr.bf16.mxu0 0
    %5367 = vmatpush1.bf16.msra.mxu0 0
    %5368 = vmatprep.subr.bf16.mxu0 0
    %5369 = vmatpush1.bf16.msra.mxu0 0
    %5370 = vmatprep.subr.bf16.mxu0 0
    %5371 = vmatpush1.bf16.msra.mxu0 0
    %5372 = vmatprep.subr.bf16.mxu0 0
    %5373 = vmatpush1.bf16.msra.mxu0 0
    %5374 = vmatprep.subr.bf16.mxu0 0
    %5375 = vmatpush1.bf16.msra.mxu0 0
    %5376 = vmatprep.subr.bf16.mxu0 0
    %5377 = vmatpush1.bf16.msra.mxu0 0
    %5378 = vmatprep.mubr.bf16.mxu0 0
    %5379 = vmatmul.mubr.bf16.gmra.mrb[0].mxu0 %v5344
    %v5380 = vpop.f32.mrb[0].mxu0
    %v5381 = vadd.f32 0.0, %v5380
    %v5382 = vpop.f32.mrb[0].mxu0
    %v5383 = vadd.f32 0.0, %v5382
    %v5384 = vpop.f32.mrb[0].mxu0
    %v5385 = vpop.f32.mrb[0].mxu0
    %5386 = vdwg.mxu0
    %5387 = vmatprep.subr.bf16.mxu0 %v5330
    %5388 = vmatpush1.bf16.msra.mxu0 %v5329
    %5389 = vmatprep.subr.bf16.mxu0 %v5334
    %5390 = vmatpush1.bf16.msra.mxu0 %v5333
    %5391 = vmatprep.subr.bf16.mxu0 %v5338
    %5392 = vmatpush1.bf16.msra.mxu0 %v5337
    %5393 = vmatprep.subr.bf16.mxu0 %v5342
    %5394 = vmatpush1.bf16.msra.mxu0 %v5341
    %5395 = vmatprep.subr.bf16.mxu0 0
    %5396 = vmatpush1.bf16.msra.mxu0 0
    %5397 = vmatprep.subr.bf16.mxu0 0
    %5398 = vmatpush1.bf16.msra.mxu0 0
    %5399 = vmatprep.subr.bf16.mxu0 0
    %5400 = vmatpush1.bf16.msra.mxu0 0
    %5401 = vmatprep.subr.bf16.mxu0 0
    %5402 = vmatpush1.bf16.msra.mxu0 0
    %5403 = vmatprep.subr.bf16.mxu0 0
    %5404 = vmatpush1.bf16.msra.mxu0 0
    %5405 = vmatprep.subr.bf16.mxu0 0
    %5406 = vmatpush1.bf16.msra.mxu0 0
    %5407 = vmatprep.subr.bf16.mxu0 0
    %5408 = vmatpush1.bf16.msra.mxu0 0
    %5409 = vmatprep.subr.bf16.mxu0 0
    %5410 = vmatpush1.bf16.msra.mxu0 0
    %5411 = vmatprep.subr.bf16.mxu0 0
    %5412 = vmatpush1.bf16.msra.mxu0 0
    %5413 = vmatprep.subr.bf16.mxu0 0
    %5414 = vmatpush1.bf16.msra.mxu0 0
    %5415 = vmatprep.subr.bf16.mxu0 0
    %5416 = vmatpush1.bf16.msra.mxu0 0
    %5417 = vmatprep.subr.bf16.mxu0 0
    %5418 = vmatpush1.bf16.msra.mxu0 0
    %5419 = vmatprep.mubr.bf16.mxu0 0
    %5420 = vmatmul.mubr.bf16.gmra.mrb[0].mxu0 %v5344
    %v5421 = vpop.f32.mrb[0].mxu0
    %v5422 = vadd.f32 0.0, %v5421
    %v5423 = vpop.f32.mrb[0].mxu0
    %v5424 = vadd.f32 0.0, %v5423
    %v5425 = vpop.f32.mrb[0].mxu0
    %v5426 = vpop.f32.mrb[0].mxu0
    %5427 = vdwg.mxu0
    %v5432 = vcombine.low %v5381, %v5383
    %v5433 = vcombine.low %v5422, %v5424
    %v5435 = vunpack.c.l.s4 1966171168
    %v5436 = vunpack.c.0.s8 %v5435
    %v5437 = vlaneseq
    %v5438 = vshrl.u32 %v5437, 7
    %v5439 = vsub.s32 %v5436, %v5438
    %v5440 = vrot.slane %v5432, %v5439
    %v5442 = vunpack.c.l.s4 1966171168
    %v5443 = vunpack.c.0.s8 %v5442
    %v5444 = vlaneseq
    %v5445 = vshrl.u32 %v5444, 7
    %v5446 = vsub.s32 %v5443, %v5445
    %v5447 = vrot.slane %v5433, %v5446
    %v5448 = vcombine.low %v5440, %v5447
    %v5450 = vunpack.c.l.s4 1966171168
    %v5451 = vunpack.c.0.s8 %v5450
    %v5452 = vlaneseq
    %v5453 = vshrl.u32 %v5452, 7
    %v5454 = vsub.s32 %v5451, %v5453
    %v5455 = vrot.slane %v5448, %v5454
    %v5457 = vadd.f32 %v5324, %v5455
    %v5458 = vld [vmem:[#allocation3 + $0x20] sm:$0x1]
    %v5459 = vpack.c.bf16 %v5458, %v5458
    %v5460 = vld [vmem:[#allocation2 + $0x1000] sm:$0xff]
    %v5461 = vld [vmem:[#allocation2 + $0x1008] sm:$0xff]
    %v5462 = vld [vmem:[#allocation2 + $0x1010] sm:$0xff]
    %v5463 = vld [vmem:[#allocation2 + $0x1018] sm:$0xff]
    %v5464 = vld [vmem:[#allocation2 + $0x1020] sm:$0xff]
    %v5465 = vld [vmem:[#allocation2 + $0x1028] sm:$0xff]
    %v5466 = vld [vmem:[#allocation2 + $0x1030] sm:$0xff]
    %v5467 = vld [vmem:[#allocation2 + $0x1038] sm:$0xff]
    %v5468 = vld [vmem:[#allocation2 + $0x1040] sm:$0xff]
    %v5469 = vld [vmem:[#allocation2 + $0x1048] sm:$0xff]
    %v5470 = vld [vmem:[#allocation2 + $0x1050] sm:$0xff]
    %v5471 = vld [vmem:[#allocation2 + $0x1058] sm:$0xff]
    %v5472 = vld [vmem:[#allocation2 + $0x1060] sm:$0xff]
    %v5473 = vld [vmem:[#allocation2 + $0x1068] sm:$0xff]
    %v5474 = vld [vmem:[#allocation2 + $0x1070] sm:$0xff]
    %v5475 = vld [vmem:[#allocation2 + $0x1078] sm:$0xff]
    %v5477 = vsel %vm761, %v5459, 0
    %5479 = vmatprep.subr.bf16.mxu0 %v5461
    %5480 = vmatpush1.bf16.msra.mxu0 %v5460
    %5481 = vmatprep.subr.bf16.mxu0 %v5465
    %5482 = vmatpush1.bf16.msra.mxu0 %v5464
    %5483 = vmatprep.subr.bf16.mxu0 %v5469
    %5484 = vmatpush1.bf16.msra.mxu0 %v5468
    %5485 = vmatprep.subr.bf16.mxu0 %v5473
    %5486 = vmatpush1.bf16.msra.mxu0 %v5472
    %5487 = vmatprep.subr.bf16.mxu0 0
    %5488 = vmatpush1.bf16.msra.mxu0 0
    %5489 = vmatprep.subr.bf16.mxu0 0
    %5490 = vmatpush1.bf16.msra.mxu0 0
    %5491 = vmatprep.subr.bf16.mxu0 0
    %5492 = vmatpush1.bf16.msra.mxu0 0
    %5493 = vmatprep.subr.bf16.mxu0 0
    %5494 = vmatpush1.bf16.msra.mxu0 0
    %5495 = vmatprep.subr.bf16.mxu0 0
    %5496 = vmatpush1.bf16.msra.mxu0 0
    %5497 = vmatprep.subr.bf16.mxu0 0
    %5498 = vmatpush1.bf16.msra.mxu0 0
    %5499 = vmatprep.subr.bf16.mxu0 0
    %5500 = vmatpush1.bf16.msra.mxu0 0
    %5501 = vmatprep.subr.bf16.mxu0 0
    %5502 = vmatpush1.bf16.msra.mxu0 0
    %5503 = vmatprep.subr.bf16.mxu0 0
    %5504 = vmatpush1.bf16.msra.mxu0 0
    %5505 = vmatprep.subr.bf16.mxu0 0
    %5506 = vmatpush1.bf16.msra.mxu0 0
    %5507 = vmatprep.subr.bf16.mxu0 0
    %5508 = vmatpush1.bf16.msra.mxu0 0
    %5509 = vmatprep.subr.bf16.mxu0 0
    %5510 = vmatpush1.bf16.msra.mxu0 0
    %5511 = vmatprep.mubr.bf16.mxu0 0
    %5512 = vmatmul.mubr.bf16.gmra.mrb[0].mxu0 %v5477
    %v5513 = vpop.f32.mrb[0].mxu0
    %v5514 = vadd.f32 0.0, %v5513
    %v5515 = vpop.f32.mrb[0].mxu0
    %v5516 = vadd.f32 0.0, %v5515
    %v5517 = vpop.f32.mrb[0].mxu0
    %v5518 = vpop.f32.mrb[0].mxu0
    %5519 = vdwg.mxu0
    %5520 = vmatprep.subr.bf16.mxu0 %v5463
    %5521 = vmatpush1.bf16.msra.mxu0 %v5462
    %5522 = vmatprep.subr.bf16.mxu0 %v5467
    %5523 = vmatpush1.bf16.msra.mxu0 %v5466
    %5524 = vmatprep.subr.bf16.mxu0 %v5471
    %5525 = vmatpush1.bf16.msra.mxu0 %v5470
    %5526 = vmatprep.subr.bf16.mxu0 %v5475
    %5527 = vmatpush1.bf16.msra.mxu0 %v5474
    %5528 = vmatprep.subr.bf16.mxu0 0
    %5529 = vmatpush1.bf16.msra.mxu0 0
    %5530 = vmatprep.subr.bf16.mxu0 0
    %5531 = vmatpush1.bf16.msra.mxu0 0
    %5532 = vmatprep.subr.bf16.mxu0 0
    %5533 = vmatpush1.bf16.msra.mxu0 0
    %5534 = vmatprep.subr.bf16.mxu0 0
    %5535 = vmatpush1.bf16.msra.mxu0 0
    %5536 = vmatprep.subr.bf16.mxu0 0
    %5537 = vmatpush1.bf16.msra.mxu0 0
    %5538 = vmatprep.subr.bf16.mxu0 0
    %5539 = vmatpush1.bf16.msra.mxu0 0
    %5540 = vmatprep.subr.bf16.mxu0 0
    %5541 = vmatpush1.bf16.msra.mxu0 0
    %5542 = vmatprep.subr.bf16.mxu0 0
    %5543 = vmatpush1.bf16.msra.mxu0 0
    %5544 = vmatprep.subr.bf16.mxu0 0
    %5545 = vmatpush1.bf16.msra.mxu0 0
    %5546 = vmatprep.subr.bf16.mxu0 0
    %5547 = vmatpush1.bf16.msra.mxu0 0
    %5548 = vmatprep.subr.bf16.mxu0 0
    %5549 = vmatpush1.bf16.msra.mxu0 0
    %5550 = vmatprep.subr.bf16.mxu0 0
    %5551 = vmatpush1.bf16.msra.mxu0 0
    %5552 = vmatprep.mubr.bf16.mxu0 0
    %5553 = vmatmul.mubr.bf16.gmra.mrb[0].mxu0 %v5477
    %v5554 = vpop.f32.mrb[0].mxu0
    %v5555 = vadd.f32 0.0, %v5554
    %v5556 = vpop.f32.mrb[0].mxu0
    %v5557 = vadd.f32 0.0, %v5556
    %v5558 = vpop.f32.mrb[0].mxu0
    %v5559 = vpop.f32.mrb[0].mxu0
    %5560 = vdwg.mxu0
    %v5565 = vcombine.low %v5514, %v5516
    %v5566 = vcombine.low %v5555, %v5557
    %v5568 = vunpack.c.l.s4 1966171168
    %v5569 = vunpack.c.0.s8 %v5568
    %v5570 = vlaneseq
    %v5571 = vshrl.u32 %v5570, 7
    %v5572 = vsub.s32 %v5569, %v5571
    %v5573 = vrot.slane %v5565, %v5572
    %v5575 = vunpack.c.l.s4 1966171168
    %v5576 = vunpack.c.0.s8 %v5575
    %v5577 = vlaneseq
    %v5578 = vshrl.u32 %v5577, 7
    %v5579 = vsub.s32 %v5576, %v5578
    %v5580 = vrot.slane %v5566, %v5579
    %v5581 = vcombine.low %v5573, %v5580
    %v5583 = vunpack.c.l.s4 1966171168
    %v5584 = vunpack.c.0.s8 %v5583
    %v5585 = vlaneseq
    %v5586 = vshrl.u32 %v5585, 7
    %v5587 = vsub.s32 %v5584, %v5586
    %v5588 = vrot.slane %v5581, %v5587
    %v5590 = vadd.f32 %v5457, %v5588
    %v5591 = vld [vmem:[#allocation3 + $0x21] sm:$0x1]
    %v5592 = vpack.c.bf16 %v5591, %v5591
    %v5593 = vld [vmem:[#allocation2 + $0x1080] sm:$0xff]
    %v5594 = vld [vmem:[#allocation2 + $0x1088] sm:$0xff]
    %v5595 = vld [vmem:[#allocation2 + $0x1090] sm:$0xff]
    %v5596 = vld [vmem:[#allocation2 + $0x1098] sm:$0xff]
    %v5597 = vld [vmem:[#allocation2 + $0x10a0] sm:$0xff]
    %v5598 = vld [vmem:[#allocation2 + $0x10a8] sm:$0xff]
    %v5599 = vld [vmem:[#allocation2 + $0x10b0] sm:$0xff]
    %v5600 = vld [vmem:[#allocation2 + $0x10b8] sm:$0xff]
    %v5601 = vld [vmem:[#allocation2 + $0x10c0] sm:$0xff]
    %v5602 = vld [vmem:[#allocation2 + $0x10c8] sm:$0xff]
    %v5603 = vld [vmem:[#allocation2 + $0x10d0] sm:$0xff]
    %v5604 = vld [vmem:[#allocation2 + $0x10d8] sm:$0xff]
    %v5605 = vld [vmem:[#allocation2 + $0x10e0] sm:$0xff]
    %v5606 = vld [vmem:[#allocation2 + $0x10e8] sm:$0xff]
    %v5607 = vld [vmem:[#allocation2 + $0x10f0] sm:$0xff]
    %v5608 = vld [vmem:[#allocation2 + $0x10f8] sm:$0xff]
    %v5610 = vsel %vm761, %v5592, 0
    %5612 = vmatprep.subr.bf16.mxu0 %v5594
    %5613 = vmatpush1.bf16.msra.mxu0 %v5593
    %5614 = vmatprep.subr.bf16.mxu0 %v5598
    %5615 = vmatpush1.bf16.msra.mxu0 %v5597
    %5616 = vmatprep.subr.bf16.mxu0 %v5602
    %5617 = vmatpush1.bf16.msra.mxu0 %v5601
    %5618 = vmatprep.subr.bf16.mxu0 %v5606
    %5619 = vmatpush1.bf16.msra.mxu0 %v5605
    %5620 = vmatprep.subr.bf16.mxu0 0
    %5621 = vmatpush1.bf16.msra.mxu0 0
    %5622 = vmatprep.subr.bf16.mxu0 0
    %5623 = vmatpush1.bf16.msra.mxu0 0
    %5624 = vmatprep.subr.bf16.mxu0 0
    %5625 = vmatpush1.bf16.msra.mxu0 0
    %5626 = vmatprep.subr.bf16.mxu0 0
    %5627 = vmatpush1.bf16.msra.mxu0 0
    %5628 = vmatprep.subr.bf16.mxu0 0
    %5629 = vmatpush1.bf16.msra.mxu0 0
    %5630 = vmatprep.subr.bf16.mxu0 0
    %5631 = vmatpush1.bf16.msra.mxu0 0
    %5632 = vmatprep.subr.bf16.mxu0 0
    %5633 = vmatpush1.bf16.msra.mxu0 0
    %5634 = vmatprep.subr.bf16.mxu0 0
    %5635 = vmatpush1.bf16.msra.mxu0 0
    %5636 = vmatprep.subr.bf16.mxu0 0
    %5637 = vmatpush1.bf16.msra.mxu0 0
    %5638 = vmatprep.subr.bf16.mxu0 0
    %5639 = vmatpush1.bf16.msra.mxu0 0
    %5640 = vmatprep.subr.bf16.mxu0 0
    %5641 = vmatpush1.bf16.msra.mxu0 0
    %5642 = vmatprep.subr.bf16.mxu0 0
    %5643 = vmatpush1.bf16.msra.mxu0 0
    %5644 = vmatprep.mubr.bf16.mxu0 0
    %5645 = vmatmul.mubr.bf16.gmra.mrb[0].mxu0 %v5610
    %v5646 = vpop.f32.mrb[0].mxu0
    %v5647 = vadd.f32 0.0, %v5646
    %v5648 = vpop.f32.mrb[0].mxu0
    %v5649 = vadd.f32 0.0, %v5648
    %v5650 = vpop.f32.mrb[0].mxu0
    %v5651 = vpop.f32.mrb[0].mxu0
    %5652 = vdwg.mxu0
    %5653 = vmatprep.subr.bf16.mxu0 %v5596
    %5654 = vmatpush1.bf16.msra.mxu0 %v5595
    %5655 = vmatprep.subr.bf16.mxu0 %v5600
    %5656 = vmatpush1.bf16.msra.mxu0 %v5599
    %5657 = vmatprep.subr.bf16.mxu0 %v5604
    %5658 = vmatpush1.bf16.msra.mxu0 %v5603
    %5659 = vmatprep.subr.bf16.mxu0 %v5608
    %5660 = vmatpush1.bf16.msra.mxu0 %v5607
    %5661 = vmatprep.subr.bf16.mxu0 0
    %5662 = vmatpush1.bf16.msra.mxu0 0
    %5663 = vmatprep.subr.bf16.mxu0 0
    %5664 = vmatpush1.bf16.msra.mxu0 0
    %5665 = vmatprep.subr.bf16.mxu0 0
    %5666 = vmatpush1.bf16.msra.mxu0 0
    %5667 = vmatprep.subr.bf16.mxu0 0
    %5668 = vmatpush1.bf16.msra.mxu0 0
    %5669 = vmatprep.subr.bf16.mxu0 0
    %5670 = vmatpush1.bf16.msra.mxu0 0
    %5671 = vmatprep.subr.bf16.mxu0 0
    %5672 = vmatpush1.bf16.msra.mxu0 0
    %5673 = vmatprep.subr.bf16.mxu0 0
    %5674 = vmatpush1.bf16.msra.mxu0 0
    %5675 = vmatprep.subr.bf16.mxu0 0
    %5676 = vmatpush1.bf16.msra.mxu0 0
    %5677 = vmatprep.subr.bf16.mxu0 0
    %5678 = vmatpush1.bf16.msra.mxu0 0
    %5679 = vmatprep.subr.bf16.mxu0 0
    %5680 = vmatpush1.bf16.msra.mxu0 0
    %5681 = vmatprep.subr.bf16.mxu0 0
    %5682 = vmatpush1.bf16.msra.mxu0 0
    %5683 = vmatprep.subr.bf16.mxu0 0
    %5684 = vmatpush1.bf16.msra.mxu0 0
    %5685 = vmatprep.mubr.bf16.mxu0 0
    %5686 = vmatmul.mubr.bf16.gmra.mrb[0].mxu0 %v5610
    %v5687 = vpop.f32.mrb[0].mxu0
    %v5688 = vadd.f32 0.0, %v5687
    %v5689 = vpop.f32.mrb[0].mxu0
    %v5690 = vadd.f32 0.0, %v5689
    %v5691 = vpop.f32.mrb[0].mxu0
    %v5692 = vpop.f32.mrb[0].mxu0
    %5693 = vdwg.mxu0
    %v5698 = vcombine.low %v5647, %v5649
    %v5699 = vcombine.low %v5688, %v5690
    %v5701 = vunpack.c.l.s4 1966171168
    %v5702 = vunpack.c.0.s8 %v5701
    %v5703 = vlaneseq
    %v5704 = vshrl.u32 %v5703, 7
    %v5705 = vsub.s32 %v5702, %v5704
    %v5706 = vrot.slane %v5698, %v5705
    %v5708 = vunpack.c.l.s4 1966171168
    %v5709 = vunpack.c.0.s8 %v5708
    %v5710 = vlaneseq
    %v5711 = vshrl.u32 %v5710, 7
    %v5712 = vsub.s32 %v5709, %v5711
    %v5713 = vrot.slane %v5699, %v5712
    %v5714 = vcombine.low %v5706, %v5713
    %v5716 = vunpack.c.l.s4 1966171168
    %v5717 = vunpack.c.0.s8 %v5716
    %v5718 = vlaneseq
    %v5719 = vshrl.u32 %v5718, 7
    %v5720 = vsub.s32 %v5717, %v5719
    %v5721 = vrot.slane %v5714, %v5720
    %v5723 = vadd.f32 %v5590, %v5721
    %v5724 = vld [vmem:[#allocation3 + $0x22] sm:$0x1]
    %v5725 = vpack.c.bf16 %v5724, %v5724
    %v5726 = vld [vmem:[#allocation2 + $0x1100] sm:$0xff]
    %v5727 = vld [vmem:[#allocation2 + $0x1108] sm:$0xff]
    %v5728 = vld [vmem:[#allocation2 + $0x1110] sm:$0xff]
    %v5729 = vld [vmem:[#allocation2 + $0x1118] sm:$0xff]
    %v5730 = vld [vmem:[#allocation2 + $0x1120] sm:$0xff]
    %v5731 = vld [vmem:[#allocation2 + $0x1128] sm:$0xff]
    %v5732 = vld [vmem:[#allocation2 + $0x1130] sm:$0xff]
    %v5733 = vld [vmem:[#allocation2 + $0x1138] sm:$0xff]
    %v5734 = vld [vmem:[#allocation2 + $0x1140] sm:$0xff]
    %v5735 = vld [vmem:[#allocation2 + $0x1148] sm:$0xff]
    %v5736 = vld [vmem:[#allocation2 + $0x1150] sm:$0xff]
    %v5737 = vld [vmem:[#allocation2 + $0x1158] sm:$0xff]
    %v5738 = vld [vmem:[#allocation2 + $0x1160] sm:$0xff]
    %v5739 = vld [vmem:[#allocation2 + $0x1168] sm:$0xff]
    %v5740 = vld [vmem:[#allocation2 + $0x1170] sm:$0xff]
    %v5741 = vld [vmem:[#allocation2 + $0x1178] sm:$0xff]
    %v5743 = vsel %vm761, %v5725, 0
    %5745 = vmatprep.subr.bf16.mxu0 %v5727
    %5746 = vmatpush1.bf16.msra.mxu0 %v5726
    %5747 = vmatprep.subr.bf16.mxu0 %v5731
    %5748 = vmatpush1.bf16.msra.mxu0 %v5730
    %5749 = vmatprep.subr.bf16.mxu0 %v5735
    %5750 = vmatpush1.bf16.msra.mxu0 %v5734
    %5751 = vmatprep.subr.bf16.mxu0 %v5739
    %5752 = vmatpush1.bf16.msra.mxu0 %v5738
    %5753 = vmatprep.subr.bf16.mxu0 0
    %5754 = vmatpush1.bf16.msra.mxu0 0
    %5755 = vmatprep.subr.bf16.mxu0 0
    %5756 = vmatpush1.bf16.msra.mxu0 0
    %5757 = vmatprep.subr.bf16.mxu0 0
    %5758 = vmatpush1.bf16.msra.mxu0 0
    %5759 = vmatprep.subr.bf16.mxu0 0
    %5760 = vmatpush1.bf16.msra.mxu0 0
    %5761 = vmatprep.subr.bf16.mxu0 0
    %5762 = vmatpush1.bf16.msra.mxu0 0
    %5763 = vmatprep.subr.bf16.mxu0 0
    %5764 = vmatpush1.bf16.msra.mxu0 0
    %5765 = vmatprep.subr.bf16.mxu0 0
    %5766 = vmatpush1.bf16.msra.mxu0 0
    %5767 = vmatprep.subr.bf16.mxu0 0
    %5768 = vmatpush1.bf16.msra.mxu0 0
    %5769 = vmatprep.subr.bf16.mxu0 0
    %5770 = vmatpush1.bf16.msra.mxu0 0
    %5771 = vmatprep.subr.bf16.mxu0 0
    %5772 = vmatpush1.bf16.msra.mxu0 0
    %5773 = vmatprep.subr.bf16.mxu0 0
    %5774 = vmatpush1.bf16.msra.mxu0 0
    %5775 = vmatprep.subr.bf16.mxu0 0
    %5776 = vmatpush1.bf16.msra.mxu0 0
    %5777 = vmatprep.mubr.bf16.mxu0 0
    %5778 = vmatmul.mubr.bf16.gmra.mrb[0].mxu0 %v5743
    %v5779 = vpop.f32.mrb[0].mxu0
    %v5780 = vadd.f32 0.0, %v5779
    %v5781 = vpop.f32.mrb[0].mxu0
    %v5782 = vadd.f32 0.0, %v5781
    %v5783 = vpop.f32.mrb[0].mxu0
    %v5784 = vpop.f32.mrb[0].mxu0
    %5785 = vdwg.mxu0
    %5786 = vmatprep.subr.bf16.mxu0 %v5729
    %5787 = vmatpush1.bf16.msra.mxu0 %v5728
    %5788 = vmatprep.subr.bf16.mxu0 %v5733
    %5789 = vmatpush1.bf16.msra.mxu0 %v5732
    %5790 = vmatprep.subr.bf16.mxu0 %v5737
    %5791 = vmatpush1.bf16.msra.mxu0 %v5736
    %5792 = vmatprep.subr.bf16.mxu0 %v5741
    %5793 = vmatpush1.bf16.msra.mxu0 %v5740
    %5794 = vmatprep.subr.bf16.mxu0 0
    %5795 = vmatpush1.bf16.msra.mxu0 0
    %5796 = vmatprep.subr.bf16.mxu0 0
    %5797 = vmatpush1.bf16.msra.mxu0 0
    %5798 = vmatprep.subr.bf16.mxu0 0
    %5799 = vmatpush1.bf16.msra.mxu0 0
    %5800 = vmatprep.subr.bf16.mxu0 0
    %5801 = vmatpush1.bf16.msra.mxu0 0
    %5802 = vmatprep.subr.bf16.mxu0 0
    %5803 = vmatpush1.bf16.msra.mxu0 0
    %5804 = vmatprep.subr.bf16.mxu0 0
    %5805 = vmatpush1.bf16.msra.mxu0 0
    %5806 = vmatprep.subr.bf16.mxu0 0
    %5807 = vmatpush1.bf16.msra.mxu0 0
    %5808 = vmatprep.subr.bf16.mxu0 0
    %5809 = vmatpush1.bf16.msra.mxu0 0
    %5810 = vmatprep.subr.bf16.mxu0 0
    %5811 = vmatpush1.bf16.msra.mxu0 0
    %5812 = vmatprep.subr.bf16.mxu0 0
    %5813 = vmatpush1.bf16.msra.mxu0 0
    %5814 = vmatprep.subr.bf16.mxu0 0
    %5815 = vmatpush1.bf16.msra.mxu0 0
    %5816 = vmatprep.subr.bf16.mxu0 0
    %5817 = vmatpush1.bf16.msra.mxu0 0
    %5818 = vmatprep.mubr.bf16.mxu0 0
    %5819 = vmatmul.mubr.bf16.gmra.mrb[0].mxu0 %v5743
    %v5820 = vpop.f32.mrb[0].mxu0
    %v5821 = vadd.f32 0.0, %v5820
    %v5822 = vpop.f32.mrb[0].mxu0
    %v5823 = vadd.f32 0.0, %v5822
    %v5824 = vpop.f32.mrb[0].mxu0
    %v5825 = vpop.f32.mrb[0].mxu0
    %5826 = vdwg.mxu0
    %v5831 = vcombine.low %v5780, %v5782
    %v5832 = vcombine.low %v5821, %v5823
    %v5834 = vunpack.c.l.s4 1966171168
    %v5835 = vunpack.c.0.s8 %v5834
    %v5836 = vlaneseq
    %v5837 = vshrl.u32 %v5836, 7
    %v5838 = vsub.s32 %v5835, %v5837
    %v5839 = vrot.slane %v5831, %v5838
    %v5841 = vunpack.c.l.s4 1966171168
    %v5842 = vunpack.c.0.s8 %v5841
    %v5843 = vlaneseq
    %v5844 = vshrl.u32 %v5843, 7
    %v5845 = vsub.s32 %v5842, %v5844
    %v5846 = vrot.slane %v5832, %v5845
    %v5847 = vcombine.low %v5839, %v5846
    %v5849 = vunpack.c.l.s4 1966171168
    %v5850 = vunpack.c.0.s8 %v5849
    %v5851 = vlaneseq
    %v5852 = vshrl.u32 %v5851, 7
    %v5853 = vsub.s32 %v5850, %v5852
    %v5854 = vrot.slane %v5847, %v5853
    %v5856 = vadd.f32 %v5723, %v5854
    %v5857 = vld [vmem:[#allocation3 + $0x23] sm:$0x1]
    %v5858 = vpack.c.bf16 %v5857, %v5857
    %v5859 = vld [vmem:[#allocation2 + $0x1180] sm:$0xff]
    %v5860 = vld [vmem:[#allocation2 + $0x1188] sm:$0xff]
    %v5861 = vld [vmem:[#allocation2 + $0x1190] sm:$0xff]
    %v5862 = vld [vmem:[#allocation2 + $0x1198] sm:$0xff]
    %v5863 = vld [vmem:[#allocation2 + $0x11a0] sm:$0xff]
    %v5864 = vld [vmem:[#allocation2 + $0x11a8] sm:$0xff]
    %v5865 = vld [vmem:[#allocation2 + $0x11b0] sm:$0xff]
    %v5866 = vld [vmem:[#allocation2 + $0x11b8] sm:$0xff]
    %v5867 = vld [vmem:[#allocation2 + $0x11c0] sm:$0xff]
    %v5868 = vld [vmem:[#allocation2 + $0x11c8] sm:$0xff]
    %v5869 = vld [vmem:[#allocation2 + $0x11d0] sm:$0xff]
    %v5870 = vld [vmem:[#allocation2 + $0x11d8] sm:$0xff]
    %v5871 = vld [vmem:[#allocation2 + $0x11e0] sm:$0xff]
    %v5872 = vld [vmem:[#allocation2 + $0x11e8] sm:$0xff]
    %v5873 = vld [vmem:[#allocation2 + $0x11f0] sm:$0xff]
    %v5874 = vld [vmem:[#allocation2 + $0x11f8] sm:$0xff]
    %v5876 = vsel %vm761, %v5858, 0
    %5878 = vmatprep.subr.bf16.mxu0 %v5860
    %5879 = vmatpush1.bf16.msra.mxu0 %v5859
    %5880 = vmatprep.subr.bf16.mxu0 %v5864
    %5881 = vmatpush1.bf16.msra.mxu0 %v5863
    %5882 = vmatprep.subr.bf16.mxu0 %v5868
    %5883 = vmatpush1.bf16.msra.mxu0 %v5867
    %5884 = vmatprep.subr.bf16.mxu0 %v5872
    %5885 = vmatpush1.bf16.msra.mxu0 %v5871
    %5886 = vmatprep.subr.bf16.mxu0 0
    %5887 = vmatpush1.bf16.msra.mxu0 0
    %5888 = vmatprep.subr.bf16.mxu0 0
    %5889 = vmatpush1.bf16.msra.mxu0 0
    %5890 = vmatprep.subr.bf16.mxu0 0
    %5891 = vmatpush1.bf16.msra.mxu0 0
    %5892 = vmatprep.subr.bf16.mxu0 0
    %5893 = vmatpush1.bf16.msra.mxu0 0
    %5894 = vmatprep.subr.bf16.mxu0 0
    %5895 = vmatpush1.bf16.msra.mxu0 0
    %5896 = vmatprep.subr.bf16.mxu0 0
    %5897 = vmatpush1.bf16.msra.mxu0 0
    %5898 = vmatprep.subr.bf16.mxu0 0
    %5899 = vmatpush1.bf16.msra.mxu0 0
    %5900 = vmatprep.subr.bf16.mxu0 0
    %5901 = vmatpush1.bf16.msra.mxu0 0
    %5902 = vmatprep.subr.bf16.mxu0 0
    %5903 = vmatpush1.bf16.msra.mxu0 0
    %5904 = vmatprep.subr.bf16.mxu0 0
    %5905 = vmatpush1.bf16.msra.mxu0 0
    %5906 = vmatprep.subr.bf16.mxu0 0
    %5907 = vmatpush1.bf16.msra.mxu0 0
    %5908 = vmatprep.subr.bf16.mxu0 0
    %5909 = vmatpush1.bf16.msra.mxu0 0
    %5910 = vmatprep.mubr.bf16.mxu0 0
    %5911 = vmatmul.mubr.bf16.gmra.mrb[0].mxu0 %v5876
    %v5912 = vpop.f32.mrb[0].mxu0
    %v5913 = vadd.f32 0.0, %v5912
    %v5914 = vpop.f32.mrb[0].mxu0
    %v5915 = vadd.f32 0.0, %v5914
    %v5916 = vpop.f32.mrb[0].mxu0
    %v5917 = vpop.f32.mrb[0].mxu0
    %5918 = vdwg.mxu0
    %5919 = vmatprep.subr.bf16.mxu0 %v5862
    %5920 = vmatpush1.bf16.msra.mxu0 %v5861
    %5921 = vmatprep.subr.bf16.mxu0 %v5866
    %5922 = vmatpush1.bf16.msra.mxu0 %v5865
    %5923 = vmatprep.subr.bf16.mxu0 %v5870
    %5924 = vmatpush1.bf16.msra.mxu0 %v5869
    %5925 = vmatprep.subr.bf16.mxu0 %v5874
    %5926 = vmatpush1.bf16.msra.mxu0 %v5873
    %5927 = vmatprep.subr.bf16.mxu0 0
    %5928 = vmatpush1.bf16.msra.mxu0 0
    %5929 = vmatprep.subr.bf16.mxu0 0
    %5930 = vmatpush1.bf16.msra.mxu0 0
    %5931 = vmatprep.subr.bf16.mxu0 0
    %5932 = vmatpush1.bf16.msra.mxu0 0
    %5933 = vmatprep.subr.bf16.mxu0 0
    %5934 = vmatpush1.bf16.msra.mxu0 0
    %5935 = vmatprep.subr.bf16.mxu0 0
    %5936 = vmatpush1.bf16.msra.mxu0 0
    %5937 = vmatprep.subr.bf16.mxu0 0
    %5938 = vmatpush1.bf16.msra.mxu0 0
    %5939 = vmatprep.subr.bf16.mxu0 0
    %5940 = vmatpush1.bf16.msra.mxu0 0
    %5941 = vmatprep.subr.bf16.mxu0 0
    %5942 = vmatpush1.bf16.msra.mxu0 0
    %5943 = vmatprep.subr.bf16.mxu0 0
    %5944 = vmatpush1.bf16.msra.mxu0 0
    %5945 = vmatprep.subr.bf16.mxu0 0
    %5946 = vmatpush1.bf16.msra.mxu0 0
    %5947 = vmatprep.subr.bf16.mxu0 0
    %5948 = vmatpush1.bf16.msra.mxu0 0
    %5949 = vmatprep.subr.bf16.mxu0 0
    %5950 = vmatpush1.bf16.msra.mxu0 0
    %5951 = vmatprep.mubr.bf16.mxu0 0
    %5952 = vmatmul.mubr.bf16.gmra.mrb[0].mxu0 %v5876
    %v5953 = vpop.f32.mrb[0].mxu0
    %v5954 = vadd.f32 0.0, %v5953
    %v5955 = vpop.f32.mrb[0].mxu0
    %v5956 = vadd.f32 0.0, %v5955
    %v5957 = vpop.f32.mrb[0].mxu0
    %v5958 = vpop.f32.mrb[0].mxu0
    %5959 = vdwg.mxu0
    %v5964 = vcombine.low %v5913, %v5915
    %v5965 = vcombine.low %v5954, %v5956
    %v5967 = vunpack.c.l.s4 1966171168
    %v5968 = vunpack.c.0.s8 %v5967
    %v5969 = vlaneseq
    %v5970 = vshrl.u32 %v5969, 7
    %v5971 = vsub.s32 %v5968, %v5970
    %v5972 = vrot.slane %v5964, %v5971
    %v5974 = vunpack.c.l.s4 1966171168
    %v5975 = vunpack.c.0.s8 %v5974
    %v5976 = vlaneseq
    %v5977 = vshrl.u32 %v5976, 7
    %v5978 = vsub.s32 %v5975, %v5977
    %v5979 = vrot.slane %v5965, %v5978
    %v5980 = vcombine.low %v5972, %v5979
    %v5982 = vunpack.c.l.s4 1966171168
    %v5983 = vunpack.c.0.s8 %v5982
    %v5984 = vlaneseq
    %v5985 = vshrl.u32 %v5984, 7
    %v5986 = vsub.s32 %v5983, %v5985
    %v5987 = vrot.slane %v5980, %v5986
    %v5989 = vadd.f32 %v5856, %v5987
    %v5990 = vld [vmem:[#allocation3 + $0x24] sm:$0x1]
    %v5991 = vpack.c.bf16 %v5990, %v5990
    %v5992 = vld [vmem:[#allocation2 + $0x1200] sm:$0xff]
    %v5993 = vld [vmem:[#allocation2 + $0x1208] sm:$0xff]
    %v5994 = vld [vmem:[#allocation2 + $0x1210] sm:$0xff]
    %v5995 = vld [vmem:[#allocation2 + $0x1218] sm:$0xff]
    %v5996 = vld [vmem:[#allocation2 + $0x1220] sm:$0xff]
    %v5997 = vld [vmem:[#allocation2 + $0x1228] sm:$0xff]
    %v5998 = vld [vmem:[#allocation2 + $0x1230] sm:$0xff]
    %v5999 = vld [vmem:[#allocation2 + $0x1238] sm:$0xff]
    %v6000 = vld [vmem:[#allocation2 + $0x1240] sm:$0xff]
    %v6001 = vld [vmem:[#allocation2 + $0x1248] sm:$0xff]
    %v6002 = vld [vmem:[#allocation2 + $0x1250] sm:$0xff]
    %v6003 = vld [vmem:[#allocation2 + $0x1258] sm:$0xff]
    %v6004 = vld [vmem:[#allocation2 + $0x1260] sm:$0xff]
    %v6005 = vld [vmem:[#allocation2 + $0x1268] sm:$0xff]
    %v6006 = vld [vmem:[#allocation2 + $0x1270] sm:$0xff]
    %v6007 = vld [vmem:[#allocation2 + $0x1278] sm:$0xff]
    %v6009 = vsel %vm761, %v5991, 0
    %6011 = vmatprep.subr.bf16.mxu0 %v5993
    %6012 = vmatpush1.bf16.msra.mxu0 %v5992
    %6013 = vmatprep.subr.bf16.mxu0 %v5997
    %6014 = vmatpush1.bf16.msra.mxu0 %v5996
    %6015 = vmatprep.subr.bf16.mxu0 %v6001
    %6016 = vmatpush1.bf16.msra.mxu0 %v6000
    %6017 = vmatprep.subr.bf16.mxu0 %v6005
    %6018 = vmatpush1.bf16.msra.mxu0 %v6004
    %6019 = vmatprep.subr.bf16.mxu0 0
    %6020 = vmatpush1.bf16.msra.mxu0 0
    %6021 = vmatprep.subr.bf16.mxu0 0
    %6022 = vmatpush1.bf16.msra.mxu0 0
    %6023 = vmatprep.subr.bf16.mxu0 0
    %6024 = vmatpush1.bf16.msra.mxu0 0
    %6025 = vmatprep.subr.bf16.mxu0 0
    %6026 = vmatpush1.bf16.msra.mxu0 0
    %6027 = vmatprep.subr.bf16.mxu0 0
    %6028 = vmatpush1.bf16.msra.mxu0 0
    %6029 = vmatprep.subr.bf16.mxu0 0
    %6030 = vmatpush1.bf16.msra.mxu0 0
    %6031 = vmatprep.subr.bf16.mxu0 0
    %6032 = vmatpush1.bf16.msra.mxu0 0
    %6033 = vmatprep.subr.bf16.mxu0 0
    %6034 = vmatpush1.bf16.msra.mxu0 0
    %6035 = vmatprep.subr.bf16.mxu0 0
    %6036 = vmatpush1.bf16.msra.mxu0 0
    %6037 = vmatprep.subr.bf16.mxu0 0
    %6038 = vmatpush1.bf16.msra.mxu0 0
    %6039 = vmatprep.subr.bf16.mxu0 0
    %6040 = vmatpush1.bf16.msra.mxu0 0
    %6041 = vmatprep.subr.bf16.mxu0 0
    %6042 = vmatpush1.bf16.msra.mxu0 0
    %6043 = vmatprep.mubr.bf16.mxu0 0
    %6044 = vmatmul.mubr.bf16.gmra.mrb[0].mxu0 %v6009
    %v6045 = vpop.f32.mrb[0].mxu0
    %v6046 = vadd.f32 0.0, %v6045
    %v6047 = vpop.f32.mrb[0].mxu0
    %v6048 = vadd.f32 0.0, %v6047
    %v6049 = vpop.f32.mrb[0].mxu0
    %v6050 = vpop.f32.mrb[0].mxu0
    %6051 = vdwg.mxu0
    %6052 = vmatprep.subr.bf16.mxu0 %v5995
    %6053 = vmatpush1.bf16.msra.mxu0 %v5994
    %6054 = vmatprep.subr.bf16.mxu0 %v5999
    %6055 = vmatpush1.bf16.msra.mxu0 %v5998
    %6056 = vmatprep.subr.bf16.mxu0 %v6003
    %6057 = vmatpush1.bf16.msra.mxu0 %v6002
    %6058 = vmatprep.subr.bf16.mxu0 %v6007
    %6059 = vmatpush1.bf16.msra.mxu0 %v6006
    %6060 = vmatprep.subr.bf16.mxu0 0
    %6061 = vmatpush1.bf16.msra.mxu0 0
    %6062 = vmatprep.subr.bf16.mxu0 0
    %6063 = vmatpush1.bf16.msra.mxu0 0
    %6064 = vmatprep.subr.bf16.mxu0 0
    %6065 = vmatpush1.bf16.msra.mxu0 0
    %6066 = vmatprep.subr.bf16.mxu0 0
    %6067 = vmatpush1.bf16.msra.mxu0 0
    %6068 = vmatprep.subr.bf16.mxu0 0
    %6069 = vmatpush1.bf16.msra.mxu0 0
    %6070 = vmatprep.subr.bf16.mxu0 0
    %6071 = vmatpush1.bf16.msra.mxu0 0
    %6072 = vmatprep.subr.bf16.mxu0 0
    %6073 = vmatpush1.bf16.msra.mxu0 0
    %6074 = vmatprep.subr.bf16.mxu0 0
    %6075 = vmatpush1.bf16.msra.mxu0 0
    %6076 = vmatprep.subr.bf16.mxu0 0
    %6077 = vmatpush1.bf16.msra.mxu0 0
    %6078 = vmatprep.subr.bf16.mxu0 0
    %6079 = vmatpush1.bf16.msra.mxu0 0
    %6080 = vmatprep.subr.bf16.mxu0 0
    %6081 = vmatpush1.bf16.msra.mxu0 0
    %6082 = vmatprep.subr.bf16.mxu0 0
    %6083 = vmatpush1.bf16.msra.mxu0 0
    %6084 = vmatprep.mubr.bf16.mxu0 0
    %6085 = vmatmul.mubr.bf16.gmra.mrb[0].mxu0 %v6009
    %v6086 = vpop.f32.mrb[0].mxu0
    %v6087 = vadd.f32 0.0, %v6086
    %v6088 = vpop.f32.mrb[0].mxu0
    %v6089 = vadd.f32 0.0, %v6088
    %v6090 = vpop.f32.mrb[0].mxu0
    %v6091 = vpop.f32.mrb[0].mxu0
    %6092 = vdwg.mxu0
    %v6097 = vcombine.low %v6046, %v6048
    %v6098 = vcombine.low %v6087, %v6089
    %v6100 = vunpack.c.l.s4 1966171168
    %v6101 = vunpack.c.0.s8 %v6100
    %v6102 = vlaneseq
    %v6103 = vshrl.u32 %v6102, 7
    %v6104 = vsub.s32 %v6101, %v6103
    %v6105 = vrot.slane %v6097, %v6104
    %v6107 = vunpack.c.l.s4 1966171168
    %v6108 = vunpack.c.0.s8 %v6107
    %v6109 = vlaneseq
    %v6110 = vshrl.u32 %v6109, 7
    %v6111 = vsub.s32 %v6108, %v6110
    %v6112 = vrot.slane %v6098, %v6111
    %v6113 = vcombine.low %v6105, %v6112
    %v6115 = vunpack.c.l.s4 1966171168
    %v6116 = vunpack.c.0.s8 %v6115
    %v6117 = vlaneseq
    %v6118 = vshrl.u32 %v6117, 7
    %v6119 = vsub.s32 %v6116, %v6118
    %v6120 = vrot.slane %v6113, %v6119
    %v6122 = vadd.f32 %v5989, %v6120
    %v6123 = vld [vmem:[#allocation3 + $0x25] sm:$0x1]
    %v6124 = vpack.c.bf16 %v6123, %v6123
    %v6125 = vld [vmem:[#allocation2 + $0x1280] sm:$0xff]
    %v6126 = vld [vmem:[#allocation2 + $0x1288] sm:$0xff]
    %v6127 = vld [vmem:[#allocation2 + $0x1290] sm:$0xff]
    %v6128 = vld [vmem:[#allocation2 + $0x1298] sm:$0xff]
    %v6129 = vld [vmem:[#allocation2 + $0x12a0] sm:$0xff]
    %v6130 = vld [vmem:[#allocation2 + $0x12a8] sm:$0xff]
    %v6131 = vld [vmem:[#allocation2 + $0x12b0] sm:$0xff]
    %v6132 = vld [vmem:[#allocation2 + $0x12b8] sm:$0xff]
    %v6133 = vld [vmem:[#allocation2 + $0x12c0] sm:$0xff]
    %v6134 = vld [vmem:[#allocation2 + $0x12c8] sm:$0xff]
    %v6135 = vld [vmem:[#allocation2 + $0x12d0] sm:$0xff]
    %v6136 = vld [vmem:[#allocation2 + $0x12d8] sm:$0xff]
    %v6137 = vld [vmem:[#allocation2 + $0x12e0] sm:$0xff]
    %v6138 = vld [vmem:[#allocation2 + $0x12e8] sm:$0xff]
    %v6139 = vld [vmem:[#allocation2 + $0x12f0] sm:$0xff]
    %v6140 = vld [vmem:[#allocation2 + $0x12f8] sm:$0xff]
    %v6142 = vsel %vm761, %v6124, 0
    %6144 = vmatprep.subr.bf16.mxu0 %v6126
    %6145 = vmatpush1.bf16.msra.mxu0 %v6125
    %6146 = vmatprep.subr.bf16.mxu0 %v6130
    %6147 = vmatpush1.bf16.msra.mxu0 %v6129
    %6148 = vmatprep.subr.bf16.mxu0 %v6134
    %6149 = vmatpush1.bf16.msra.mxu0 %v6133
    %6150 = vmatprep.subr.bf16.mxu0 %v6138
    %6151 = vmatpush1.bf16.msra.mxu0 %v6137
    %6152 = vmatprep.subr.bf16.mxu0 0
    %6153 = vmatpush1.bf16.msra.mxu0 0
    %6154 = vmatprep.subr.bf16.mxu0 0
    %6155 = vmatpush1.bf16.msra.mxu0 0
    %6156 = vmatprep.subr.bf16.mxu0 0
    %6157 = vmatpush1.bf16.msra.mxu0 0
    %6158 = vmatprep.subr.bf16.mxu0 0
    %6159 = vmatpush1.bf16.msra.mxu0 0
    %6160 = vmatprep.subr.bf16.mxu0 0
    %6161 = vmatpush1.bf16.msra.mxu0 0
    %6162 = vmatprep.subr.bf16.mxu0 0
    %6163 = vmatpush1.bf16.msra.mxu0 0
    %6164 = vmatprep.subr.bf16.mxu0 0
    %6165 = vmatpush1.bf16.msra.mxu0 0
    %6166 = vmatprep.subr.bf16.mxu0 0
    %6167 = vmatpush1.bf16.msra.mxu0 0
    %6168 = vmatprep.subr.bf16.mxu0 0
    %6169 = vmatpush1.bf16.msra.mxu0 0
    %6170 = vmatprep.subr.bf16.mxu0 0
    %6171 = vmatpush1.bf16.msra.mxu0 0
    %6172 = vmatprep.subr.bf16.mxu0 0
    %6173 = vmatpush1.bf16.msra.mxu0 0
    %6174 = vmatprep.subr.bf16.mxu0 0
    %6175 = vmatpush1.bf16.msra.mxu0 0
    %6176 = vmatprep.mubr.bf16.mxu0 0
    %6177 = vmatmul.mubr.bf16.gmra.mrb[0].mxu0 %v6142
    %v6178 = vpop.f32.mrb[0].mxu0
    %v6179 = vadd.f32 0.0, %v6178
    %v6180 = vpop.f32.mrb[0].mxu0
    %v6181 = vadd.f32 0.0, %v6180
    %v6182 = vpop.f32.mrb[0].mxu0
    %v6183 = vpop.f32.mrb[0].mxu0
    %6184 = vdwg.mxu0
    %6185 = vmatprep.subr.bf16.mxu0 %v6128
    %6186 = vmatpush1.bf16.msra.mxu0 %v6127
    %6187 = vmatprep.subr.bf16.mxu0 %v6132
    %6188 = vmatpush1.bf16.msra.mxu0 %v6131
    %6189 = vmatprep.subr.bf16.mxu0 %v6136
    %6190 = vmatpush1.bf16.msra.mxu0 %v6135
    %6191 = vmatprep.subr.bf16.mxu0 %v6140
    %6192 = vmatpush1.bf16.msra.mxu0 %v6139
    %6193 = vmatprep.subr.bf16.mxu0 0
    %6194 = vmatpush1.bf16.msra.mxu0 0
    %6195 = vmatprep.subr.bf16.mxu0 0
    %6196 = vmatpush1.bf16.msra.mxu0 0
    %6197 = vmatprep.subr.bf16.mxu0 0
    %6198 = vmatpush1.bf16.msra.mxu0 0
    %6199 = vmatprep.subr.bf16.mxu0 0
    %6200 = vmatpush1.bf16.msra.mxu0 0
    %6201 = vmatprep.subr.bf16.mxu0 0
    %6202 = vmatpush1.bf16.msra.mxu0 0
    %6203 = vmatprep.subr.bf16.mxu0 0
    %6204 = vmatpush1.bf16.msra.mxu0 0
    %6205 = vmatprep.subr.bf16.mxu0 0
    %6206 = vmatpush1.bf16.msra.mxu0 0
    %6207 = vmatprep.subr.bf16.mxu0 0
    %6208 = vmatpush1.bf16.msra.mxu0 0
    %6209 = vmatprep.subr.bf16.mxu0 0
    %6210 = vmatpush1.bf16.msra.mxu0 0
    %6211 = vmatprep.subr.bf16.mxu0 0
    %6212 = vmatpush1.bf16.msra.mxu0 0
    %6213 = vmatprep.subr.bf16.mxu0 0
    %6214 = vmatpush1.bf16.msra.mxu0 0
    %6215 = vmatprep.subr.bf16.mxu0 0
    %6216 = vmatpush1.bf16.msra.mxu0 0
    %6217 = vmatprep.mubr.bf16.mxu0 0
    %6218 = vmatmul.mubr.bf16.gmra.mrb[0].mxu0 %v6142
    %v6219 = vpop.f32.mrb[0].mxu0
    %v6220 = vadd.f32 0.0, %v6219
    %v6221 = vpop.f32.mrb[0].mxu0
    %v6222 = vadd.f32 0.0, %v6221
    %v6223 = vpop.f32.mrb[0].mxu0
    %v6224 = vpop.f32.mrb[0].mxu0
    %6225 = vdwg.mxu0
    %v6230 = vcombine.low %v6179, %v6181
    %v6231 = vcombine.low %v6220, %v6222
    %v6233 = vunpack.c.l.s4 1966171168
    %v6234 = vunpack.c.0.s8 %v6233
    %v6235 = vlaneseq
    %v6236 = vshrl.u32 %v6235, 7
    %v6237 = vsub.s32 %v6234, %v6236
    %v6238 = vrot.slane %v6230, %v6237
    %v6240 = vunpack.c.l.s4 1966171168
    %v6241 = vunpack.c.0.s8 %v6240
    %v6242 = vlaneseq
    %v6243 = vshrl.u32 %v6242, 7
    %v6244 = vsub.s32 %v6241, %v6243
    %v6245 = vrot.slane %v6231, %v6244
    %v6246 = vcombine.low %v6238, %v6245
    %v6248 = vunpack.c.l.s4 1966171168
    %v6249 = vunpack.c.0.s8 %v6248
    %v6250 = vlaneseq
    %v6251 = vshrl.u32 %v6250, 7
    %v6252 = vsub.s32 %v6249, %v6251
    %v6253 = vrot.slane %v6246, %v6252
    %v6255 = vadd.f32 %v6122, %v6253
    %v6256 = vld [vmem:[#allocation3 + $0x26] sm:$0x1]
    %v6257 = vpack.c.bf16 %v6256, %v6256
    %v6258 = vld [vmem:[#allocation2 + $0x1300] sm:$0xff]
    %v6259 = vld [vmem:[#allocation2 + $0x1308] sm:$0xff]
    %v6260 = vld [vmem:[#allocation2 + $0x1310] sm:$0xff]
    %v6261 = vld [vmem:[#allocation2 + $0x1318] sm:$0xff]
    %v6262 = vld [vmem:[#allocation2 + $0x1320] sm:$0xff]
    %v6263 = vld [vmem:[#allocation2 + $0x1328] sm:$0xff]
    %v6264 = vld [vmem:[#allocation2 + $0x1330] sm:$0xff]
    %v6265 = vld [vmem:[#allocation2 + $0x1338] sm:$0xff]
    %v6266 = vld [vmem:[#allocation2 + $0x1340] sm:$0xff]
    %v6267 = vld [vmem:[#allocation2 + $0x1348] sm:$0xff]
    %v6268 = vld [vmem:[#allocation2 + $0x1350] sm:$0xff]
    %v6269 = vld [vmem:[#allocation2 + $0x1358] sm:$0xff]
    %v6270 = vld [vmem:[#allocation2 + $0x1360] sm:$0xff]
    %v6271 = vld [vmem:[#allocation2 + $0x1368] sm:$0xff]
    %v6272 = vld [vmem:[#allocation2 + $0x1370] sm:$0xff]
    %v6273 = vld [vmem:[#allocation2 + $0x1378] sm:$0xff]
    %v6275 = vsel %vm761, %v6257, 0
    %6277 = vmatprep.subr.bf16.mxu0 %v6259
    %6278 = vmatpush1.bf16.msra.mxu0 %v6258
    %6279 = vmatprep.subr.bf16.mxu0 %v6263
    %6280 = vmatpush1.bf16.msra.mxu0 %v6262
    %6281 = vmatprep.subr.bf16.mxu0 %v6267
    %6282 = vmatpush1.bf16.msra.mxu0 %v6266
    %6283 = vmatprep.subr.bf16.mxu0 %v6271
    %6284 = vmatpush1.bf16.msra.mxu0 %v6270
    %6285 = vmatprep.subr.bf16.mxu0 0
    %6286 = vmatpush1.bf16.msra.mxu0 0
    %6287 = vmatprep.subr.bf16.mxu0 0
    %6288 = vmatpush1.bf16.msra.mxu0 0
    %6289 = vmatprep.subr.bf16.mxu0 0
    %6290 = vmatpush1.bf16.msra.mxu0 0
    %6291 = vmatprep.subr.bf16.mxu0 0
    %6292 = vmatpush1.bf16.msra.mxu0 0
    %6293 = vmatprep.subr.bf16.mxu0 0
    %6294 = vmatpush1.bf16.msra.mxu0 0
    %6295 = vmatprep.subr.bf16.mxu0 0
    %6296 = vmatpush1.bf16.msra.mxu0 0
    %6297 = vmatprep.subr.bf16.mxu0 0
    %6298 = vmatpush1.bf16.msra.mxu0 0
    %6299 = vmatprep.subr.bf16.mxu0 0
    %6300 = vmatpush1.bf16.msra.mxu0 0
    %6301 = vmatprep.subr.bf16.mxu0 0
    %6302 = vmatpush1.bf16.msra.mxu0 0
    %6303 = vmatprep.subr.bf16.mxu0 0
    %6304 = vmatpush1.bf16.msra.mxu0 0
    %6305 = vmatprep.subr.bf16.mxu0 0
    %6306 = vmatpush1.bf16.msra.mxu0 0
    %6307 = vmatprep.subr.bf16.mxu0 0
    %6308 = vmatpush1.bf16.msra.mxu0 0
    %6309 = vmatprep.mubr.bf16.mxu0 0
    %6310 = vmatmul.mubr.bf16.gmra.mrb[0].mxu0 %v6275
    %v6311 = vpop.f32.mrb[0].mxu0
    %v6312 = vadd.f32 0.0, %v6311
    %v6313 = vpop.f32.mrb[0].mxu0
    %v6314 = vadd.f32 0.0, %v6313
    %v6315 = vpop.f32.mrb[0].mxu0
    %v6316 = vpop.f32.mrb[0].mxu0
    %6317 = vdwg.mxu0
    %6318 = vmatprep.subr.bf16.mxu0 %v6261
    %6319 = vmatpush1.bf16.msra.mxu0 %v6260
    %6320 = vmatprep.subr.bf16.mxu0 %v6265
    %6321 = vmatpush1.bf16.msra.mxu0 %v6264
    %6322 = vmatprep.subr.bf16.mxu0 %v6269
    %6323 = vmatpush1.bf16.msra.mxu0 %v6268
    %6324 = vmatprep.subr.bf16.mxu0 %v6273
    %6325 = vmatpush1.bf16.msra.mxu0 %v6272
    %6326 = vmatprep.subr.bf16.mxu0 0
    %6327 = vmatpush1.bf16.msra.mxu0 0
    %6328 = vmatprep.subr.bf16.mxu0 0
    %6329 = vmatpush1.bf16.msra.mxu0 0
    %6330 = vmatprep.subr.bf16.mxu0 0
    %6331 = vmatpush1.bf16.msra.mxu0 0
    %6332 = vmatprep.subr.bf16.mxu0 0
    %6333 = vmatpush1.bf16.msra.mxu0 0
    %6334 = vmatprep.subr.bf16.mxu0 0
    %6335 = vmatpush1.bf16.msra.mxu0 0
    %6336 = vmatprep.subr.bf16.mxu0 0
    %6337 = vmatpush1.bf16.msra.mxu0 0
    %6338 = vmatprep.subr.bf16.mxu0 0
    %6339 = vmatpush1.bf16.msra.mxu0 0
    %6340 = vmatprep.subr.bf16.mxu0 0
    %6341 = vmatpush1.bf16.msra.mxu0 0
    %6342 = vmatprep.subr.bf16.mxu0 0
    %6343 = vmatpush1.bf16.msra.mxu0 0
    %6344 = vmatprep.subr.bf16.mxu0 0
    %6345 = vmatpush1.bf16.msra.mxu0 0
    %6346 = vmatprep.subr.bf16.mxu0 0
    %6347 = vmatpush1.bf16.msra.mxu0 0
    %6348 = vmatprep.subr.bf16.mxu0 0
    %6349 = vmatpush1.bf16.msra.mxu0 0
    %6350 = vmatprep.mubr.bf16.mxu0 0
    %6351 = vmatmul.mubr.bf16.gmra.mrb[0].mxu0 %v6275
    %v6352 = vpop.f32.mrb[0].mxu0
    %v6353 = vadd.f32 0.0, %v6352
    %v6354 = vpop.f32.mrb[0].mxu0
    %v6355 = vadd.f32 0.0, %v6354
    %v6356 = vpop.f32.mrb[0].mxu0
    %v6357 = vpop.f32.mrb[0].mxu0
    %6358 = vdwg.mxu0
    %v6363 = vcombine.low %v6312, %v6314
    %v6364 = vcombine.low %v6353, %v6355
    %v6366 = vunpack.c.l.s4 1966171168
    %v6367 = vunpack.c.0.s8 %v6366
    %v6368 = vlaneseq
    %v6369 = vshrl.u32 %v6368, 7
    %v6370 = vsub.s32 %v6367, %v6369
    %v6371 = vrot.slane %v6363, %v6370
    %v6373 = vunpack.c.l.s4 1966171168
    %v6374 = vunpack.c.0.s8 %v6373
    %v6375 = vlaneseq
    %v6376 = vshrl.u32 %v6375, 7
    %v6377 = vsub.s32 %v6374, %v6376
    %v6378 = vrot.slane %v6364, %v6377
    %v6379 = vcombine.low %v6371, %v6378
    %v6381 = vunpack.c.l.s4 1966171168
    %v6382 = vunpack.c.0.s8 %v6381
    %v6383 = vlaneseq
    %v6384 = vshrl.u32 %v6383, 7
    %v6385 = vsub.s32 %v6382, %v6384
    %v6386 = vrot.slane %v6379, %v6385
    %v6388 = vadd.f32 %v6255, %v6386
    %v6389 = vld [vmem:[#allocation3 + $0x27] sm:$0x1]
    %v6390 = vpack.c.bf16 %v6389, %v6389
    %v6391 = vld [vmem:[#allocation2 + $0x1380] sm:$0xff]
    %v6392 = vld [vmem:[#allocation2 + $0x1388] sm:$0xff]
    %v6393 = vld [vmem:[#allocation2 + $0x1390] sm:$0xff]
    %v6394 = vld [vmem:[#allocation2 + $0x1398] sm:$0xff]
    %v6395 = vld [vmem:[#allocation2 + $0x13a0] sm:$0xff]
    %v6396 = vld [vmem:[#allocation2 + $0x13a8] sm:$0xff]
    %v6397 = vld [vmem:[#allocation2 + $0x13b0] sm:$0xff]
    %v6398 = vld [vmem:[#allocation2 + $0x13b8] sm:$0xff]
    %v6399 = vld [vmem:[#allocation2 + $0x13c0] sm:$0xff]
    %v6400 = vld [vmem:[#allocation2 + $0x13c8] sm:$0xff]
    %v6401 = vld [vmem:[#allocation2 + $0x13d0] sm:$0xff]
    %v6402 = vld [vmem:[#allocation2 + $0x13d8] sm:$0xff]
    %v6403 = vld [vmem:[#allocation2 + $0x13e0] sm:$0xff]
    %v6404 = vld [vmem:[#allocation2 + $0x13e8] sm:$0xff]
    %v6405 = vld [vmem:[#allocation2 + $0x13f0] sm:$0xff]
    %v6406 = vld [vmem:[#allocation2 + $0x13f8] sm:$0xff]
    %v6408 = vsel %vm761, %v6390, 0
    %6410 = vmatprep.subr.bf16.mxu0 %v6392
    %6411 = vmatpush1.bf16.msra.mxu0 %v6391
    %6412 = vmatprep.subr.bf16.mxu0 %v6396
    %6413 = vmatpush1.bf16.msra.mxu0 %v6395
    %6414 = vmatprep.subr.bf16.mxu0 %v6400
    %6415 = vmatpush1.bf16.msra.mxu0 %v6399
    %6416 = vmatprep.subr.bf16.mxu0 %v6404
    %6417 = vmatpush1.bf16.msra.mxu0 %v6403
    %6418 = vmatprep.subr.bf16.mxu0 0
    %6419 = vmatpush1.bf16.msra.mxu0 0
    %6420 = vmatprep.subr.bf16.mxu0 0
    %6421 = vmatpush1.bf16.msra.mxu0 0
    %6422 = vmatprep.subr.bf16.mxu0 0
    %6423 = vmatpush1.bf16.msra.mxu0 0
    %6424 = vmatprep.subr.bf16.mxu0 0
    %6425 = vmatpush1.bf16.msra.mxu0 0
    %6426 = vmatprep.subr.bf16.mxu0 0
    %6427 = vmatpush1.bf16.msra.mxu0 0
    %6428 = vmatprep.subr.bf16.mxu0 0
    %6429 = vmatpush1.bf16.msra.mxu0 0
    %6430 = vmatprep.subr.bf16.mxu0 0
    %6431 = vmatpush1.bf16.msra.mxu0 0
    %6432 = vmatprep.subr.bf16.mxu0 0
    %6433 = vmatpush1.bf16.msra.mxu0 0
    %6434 = vmatprep.subr.bf16.mxu0 0
    %6435 = vmatpush1.bf16.msra.mxu0 0
    %6436 = vmatprep.subr.bf16.mxu0 0
    %6437 = vmatpush1.bf16.msra.mxu0 0
    %6438 = vmatprep.subr.bf16.mxu0 0
    %6439 = vmatpush1.bf16.msra.mxu0 0
    %6440 = vmatprep.subr.bf16.mxu0 0
    %6441 = vmatpush1.bf16.msra.mxu0 0
    %6442 = vmatprep.mubr.bf16.mxu0 0
    %6443 = vmatmul.mubr.bf16.gmra.mrb[0].mxu0 %v6408
    %v6444 = vpop.f32.mrb[0].mxu0
    %v6445 = vadd.f32 0.0, %v6444
    %v6446 = vpop.f32.mrb[0].mxu0
    %v6447 = vadd.f32 0.0, %v6446
    %v6448 = vpop.f32.mrb[0].mxu0
    %v6449 = vpop.f32.mrb[0].mxu0
    %6450 = vdwg.mxu0
    %6451 = vmatprep.subr.bf16.mxu0 %v6394
    %6452 = vmatpush1.bf16.msra.mxu0 %v6393
    %6453 = vmatprep.subr.bf16.mxu0 %v6398
    %6454 = vmatpush1.bf16.msra.mxu0 %v6397
    %6455 = vmatprep.subr.bf16.mxu0 %v6402
    %6456 = vmatpush1.bf16.msra.mxu0 %v6401
    %6457 = vmatprep.subr.bf16.mxu0 %v6406
    %6458 = vmatpush1.bf16.msra.mxu0 %v6405
    %6459 = vmatprep.subr.bf16.mxu0 0
    %6460 = vmatpush1.bf16.msra.mxu0 0
    %6461 = vmatprep.subr.bf16.mxu0 0
    %6462 = vmatpush1.bf16.msra.mxu0 0
    %6463 = vmatprep.subr.bf16.mxu0 0
    %6464 = vmatpush1.bf16.msra.mxu0 0
    %6465 = vmatprep.subr.bf16.mxu0 0
    %6466 = vmatpush1.bf16.msra.mxu0 0
    %6467 = vmatprep.subr.bf16.mxu0 0
    %6468 = vmatpush1.bf16.msra.mxu0 0
    %6469 = vmatprep.subr.bf16.mxu0 0
    %6470 = vmatpush1.bf16.msra.mxu0 0
    %6471 = vmatprep.subr.bf16.mxu0 0
    %6472 = vmatpush1.bf16.msra.mxu0 0
    %6473 = vmatprep.subr.bf16.mxu0 0
    %6474 = vmatpush1.bf16.msra.mxu0 0
    %6475 = vmatprep.subr.bf16.mxu0 0
    %6476 = vmatpush1.bf16.msra.mxu0 0
    %6477 = vmatprep.subr.bf16.mxu0 0
    %6478 = vmatpush1.bf16.msra.mxu0 0
    %6479 = vmatprep.subr.bf16.mxu0 0
    %6480 = vmatpush1.bf16.msra.mxu0 0
    %6481 = vmatprep.subr.bf16.mxu0 0
    %6482 = vmatpush1.bf16.msra.mxu0 0
    %6483 = vmatprep.mubr.bf16.mxu0 0
    %6484 = vmatmul.mubr.bf16.gmra.mrb[0].mxu0 %v6408
    %v6485 = vpop.f32.mrb[0].mxu0
    %v6486 = vadd.f32 0.0, %v6485
    %v6487 = vpop.f32.mrb[0].mxu0
    %v6488 = vadd.f32 0.0, %v6487
    %v6489 = vpop.f32.mrb[0].mxu0
    %v6490 = vpop.f32.mrb[0].mxu0
    %6491 = vdwg.mxu0
    %v6496 = vcombine.low %v6445, %v6447
    %v6497 = vcombine.low %v6486, %v6488
    %v6499 = vunpack.c.l.s4 1966171168
    %v6500 = vunpack.c.0.s8 %v6499
    %v6501 = vlaneseq
    %v6502 = vshrl.u32 %v6501, 7
    %v6503 = vsub.s32 %v6500, %v6502
    %v6504 = vrot.slane %v6496, %v6503
    %v6506 = vunpack.c.l.s4 1966171168
    %v6507 = vunpack.c.0.s8 %v6506
    %v6508 = vlaneseq
    %v6509 = vshrl.u32 %v6508, 7
    %v6510 = vsub.s32 %v6507, %v6509
    %v6511 = vrot.slane %v6497, %v6510
    %v6512 = vcombine.low %v6504, %v6511
    %v6514 = vunpack.c.l.s4 1966171168
    %v6515 = vunpack.c.0.s8 %v6514
    %v6516 = vlaneseq
    %v6517 = vshrl.u32 %v6516, 7
    %v6518 = vsub.s32 %v6515, %v6517
    %v6519 = vrot.slane %v6512, %v6518
    %v6521 = vadd.f32 %v6388, %v6519
    %v6522 = vld [vmem:[#allocation3 + $0x28] sm:$0x1]
    %v6523 = vpack.c.bf16 %v6522, %v6522
    %v6524 = vld [vmem:[#allocation2 + $0x1400] sm:$0xff]
    %v6525 = vld [vmem:[#allocation2 + $0x1408] sm:$0xff]
    %v6526 = vld [vmem:[#allocation2 + $0x1410] sm:$0xff]
    %v6527 = vld [vmem:[#allocation2 + $0x1418] sm:$0xff]
    %v6528 = vld [vmem:[#allocation2 + $0x1420] sm:$0xff]
    %v6529 = vld [vmem:[#allocation2 + $0x1428] sm:$0xff]
    %v6530 = vld [vmem:[#allocation2 + $0x1430] sm:$0xff]
    %v6531 = vld [vmem:[#allocation2 + $0x1438] sm:$0xff]
    %v6532 = vld [vmem:[#allocation2 + $0x1440] sm:$0xff]
    %v6533 = vld [vmem:[#allocation2 + $0x1448] sm:$0xff]
    %v6534 = vld [vmem:[#allocation2 + $0x1450] sm:$0xff]
    %v6535 = vld [vmem:[#allocation2 + $0x1458] sm:$0xff]
    %v6536 = vld [vmem:[#allocation2 + $0x1460] sm:$0xff]
    %v6537 = vld [vmem:[#allocation2 + $0x1468] sm:$0xff]
    %v6538 = vld [vmem:[#allocation2 + $0x1470] sm:$0xff]
    %v6539 = vld [vmem:[#allocation2 + $0x1478] sm:$0xff]
    %v6541 = vsel %vm761, %v6523, 0
    %6543 = vmatprep.subr.bf16.mxu0 %v6525
    %6544 = vmatpush1.bf16.msra.mxu0 %v6524
    %6545 = vmatprep.subr.bf16.mxu0 %v6529
    %6546 = vmatpush1.bf16.msra.mxu0 %v6528
    %6547 = vmatprep.subr.bf16.mxu0 %v6533
    %6548 = vmatpush1.bf16.msra.mxu0 %v6532
    %6549 = vmatprep.subr.bf16.mxu0 %v6537
    %6550 = vmatpush1.bf16.msra.mxu0 %v6536
    %6551 = vmatprep.subr.bf16.mxu0 0
    %6552 = vmatpush1.bf16.msra.mxu0 0
    %6553 = vmatprep.subr.bf16.mxu0 0
    %6554 = vmatpush1.bf16.msra.mxu0 0
    %6555 = vmatprep.subr.bf16.mxu0 0
    %6556 = vmatpush1.bf16.msra.mxu0 0
    %6557 = vmatprep.subr.bf16.mxu0 0
    %6558 = vmatpush1.bf16.msra.mxu0 0
    %6559 = vmatprep.subr.bf16.mxu0 0
    %6560 = vmatpush1.bf16.msra.mxu0 0
    %6561 = vmatprep.subr.bf16.mxu0 0
    %6562 = vmatpush1.bf16.msra.mxu0 0
    %6563 = vmatprep.subr.bf16.mxu0 0
    %6564 = vmatpush1.bf16.msra.mxu0 0
    %6565 = vmatprep.subr.bf16.mxu0 0
    %6566 = vmatpush1.bf16.msra.mxu0 0
    %6567 = vmatprep.subr.bf16.mxu0 0
    %6568 = vmatpush1.bf16.msra.mxu0 0
    %6569 = vmatprep.subr.bf16.mxu0 0
    %6570 = vmatpush1.bf16.msra.mxu0 0
    %6571 = vmatprep.subr.bf16.mxu0 0
    %6572 = vmatpush1.bf16.msra.mxu0 0
    %6573 = vmatprep.subr.bf16.mxu0 0
    %6574 = vmatpush1.bf16.msra.mxu0 0
    %6575 = vmatprep.mubr.bf16.mxu0 0
    %6576 = vmatmul.mubr.bf16.gmra.mrb[0].mxu0 %v6541
    %v6577 = vpop.f32.mrb[0].mxu0
    %v6578 = vadd.f32 0.0, %v6577
    %v6579 = vpop.f32.mrb[0].mxu0
    %v6580 = vadd.f32 0.0, %v6579
    %v6581 = vpop.f32.mrb[0].mxu0
    %v6582 = vpop.f32.mrb[0].mxu0
    %6583 = vdwg.mxu0
    %6584 = vmatprep.subr.bf16.mxu0 %v6527
    %6585 = vmatpush1.bf16.msra.mxu0 %v6526
    %6586 = vmatprep.subr.bf16.mxu0 %v6531
    %6587 = vmatpush1.bf16.msra.mxu0 %v6530
    %6588 = vmatprep.subr.bf16.mxu0 %v6535
    %6589 = vmatpush1.bf16.msra.mxu0 %v6534
    %6590 = vmatprep.subr.bf16.mxu0 %v6539
    %6591 = vmatpush1.bf16.msra.mxu0 %v6538
    %6592 = vmatprep.subr.bf16.mxu0 0
    %6593 = vmatpush1.bf16.msra.mxu0 0
    %6594 = vmatprep.subr.bf16.mxu0 0
    %6595 = vmatpush1.bf16.msra.mxu0 0
    %6596 = vmatprep.subr.bf16.mxu0 0
    %6597 = vmatpush1.bf16.msra.mxu0 0
    %6598 = vmatprep.subr.bf16.mxu0 0
    %6599 = vmatpush1.bf16.msra.mxu0 0
    %6600 = vmatprep.subr.bf16.mxu0 0
    %6601 = vmatpush1.bf16.msra.mxu0 0
    %6602 = vmatprep.subr.bf16.mxu0 0
    %6603 = vmatpush1.bf16.msra.mxu0 0
    %6604 = vmatprep.subr.bf16.mxu0 0
    %6605 = vmatpush1.bf16.msra.mxu0 0
    %6606 = vmatprep.subr.bf16.mxu0 0
    %6607 = vmatpush1.bf16.msra.mxu0 0
    %6608 = vmatprep.subr.bf16.mxu0 0
    %6609 = vmatpush1.bf16.msra.mxu0 0
    %6610 = vmatprep.subr.bf16.mxu0 0
    %6611 = vmatpush1.bf16.msra.mxu0 0
    %6612 = vmatprep.subr.bf16.mxu0 0
    %6613 = vmatpush1.bf16.msra.mxu0 0
    %6614 = vmatprep.subr.bf16.mxu0 0
    %6615 = vmatpush1.bf16.msra.mxu0 0
    %6616 = vmatprep.mubr.bf16.mxu0 0
    %6617 = vmatmul.mubr.bf16.gmra.mrb[0].mxu0 %v6541
    %v6618 = vpop.f32.mrb[0].mxu0
    %v6619 = vadd.f32 0.0, %v6618
    %v6620 = vpop.f32.mrb[0].mxu0
    %v6621 = vadd.f32 0.0, %v6620
    %v6622 = vpop.f32.mrb[0].mxu0
    %v6623 = vpop.f32.mrb[0].mxu0
    %6624 = vdwg.mxu0
    %v6629 = vcombine.low %v6578, %v6580
    %v6630 = vcombine.low %v6619, %v6621
    %v6632 = vunpack.c.l.s4 1966171168
    %v6633 = vunpack.c.0.s8 %v6632
    %v6634 = vlaneseq
    %v6635 = vshrl.u32 %v6634, 7
    %v6636 = vsub.s32 %v6633, %v6635
    %v6637 = vrot.slane %v6629, %v6636
    %v6639 = vunpack.c.l.s4 1966171168
    %v6640 = vunpack.c.0.s8 %v6639
    %v6641 = vlaneseq
    %v6642 = vshrl.u32 %v6641, 7
    %v6643 = vsub.s32 %v6640, %v6642
    %v6644 = vrot.slane %v6630, %v6643
    %v6645 = vcombine.low %v6637, %v6644
    %v6647 = vunpack.c.l.s4 1966171168
    %v6648 = vunpack.c.0.s8 %v6647
    %v6649 = vlaneseq
    %v6650 = vshrl.u32 %v6649, 7
    %v6651 = vsub.s32 %v6648, %v6650
    %v6652 = vrot.slane %v6645, %v6651
    %v6654 = vadd.f32 %v6521, %v6652
    %v6655 = vld [vmem:[#allocation3 + $0x29] sm:$0x1]
    %v6656 = vpack.c.bf16 %v6655, %v6655
    %v6657 = vld [vmem:[#allocation2 + $0x1480] sm:$0xff]
    %v6658 = vld [vmem:[#allocation2 + $0x1488] sm:$0xff]
    %v6659 = vld [vmem:[#allocation2 + $0x1490] sm:$0xff]
    %v6660 = vld [vmem:[#allocation2 + $0x1498] sm:$0xff]
    %v6661 = vld [vmem:[#allocation2 + $0x14a0] sm:$0xff]
    %v6662 = vld [vmem:[#allocation2 + $0x14a8] sm:$0xff]
    %v6663 = vld [vmem:[#allocation2 + $0x14b0] sm:$0xff]
    %v6664 = vld [vmem:[#allocation2 + $0x14b8] sm:$0xff]
    %v6665 = vld [vmem:[#allocation2 + $0x14c0] sm:$0xff]
    %v6666 = vld [vmem:[#allocation2 + $0x14c8] sm:$0xff]
    %v6667 = vld [vmem:[#allocation2 + $0x14d0] sm:$0xff]
    %v6668 = vld [vmem:[#allocation2 + $0x14d8] sm:$0xff]
    %v6669 = vld [vmem:[#allocation2 + $0x14e0] sm:$0xff]
    %v6670 = vld [vmem:[#allocation2 + $0x14e8] sm:$0xff]
    %v6671 = vld [vmem:[#allocation2 + $0x14f0] sm:$0xff]
    %v6672 = vld [vmem:[#allocation2 + $0x14f8] sm:$0xff]
    %v6674 = vsel %vm761, %v6656, 0
    %6676 = vmatprep.subr.bf16.mxu0 %v6658
    %6677 = vmatpush1.bf16.msra.mxu0 %v6657
    %6678 = vmatprep.subr.bf16.mxu0 %v6662
    %6679 = vmatpush1.bf16.msra.mxu0 %v6661
    %6680 = vmatprep.subr.bf16.mxu0 %v6666
    %6681 = vmatpush1.bf16.msra.mxu0 %v6665
    %6682 = vmatprep.subr.bf16.mxu0 %v6670
    %6683 = vmatpush1.bf16.msra.mxu0 %v6669
    %6684 = vmatprep.subr.bf16.mxu0 0
    %6685 = vmatpush1.bf16.msra.mxu0 0
    %6686 = vmatprep.subr.bf16.mxu0 0
    %6687 = vmatpush1.bf16.msra.mxu0 0
    %6688 = vmatprep.subr.bf16.mxu0 0
    %6689 = vmatpush1.bf16.msra.mxu0 0
    %6690 = vmatprep.subr.bf16.mxu0 0
    %6691 = vmatpush1.bf16.msra.mxu0 0
    %6692 = vmatprep.subr.bf16.mxu0 0
    %6693 = vmatpush1.bf16.msra.mxu0 0
    %6694 = vmatprep.subr.bf16.mxu0 0
    %6695 = vmatpush1.bf16.msra.mxu0 0
    %6696 = vmatprep.subr.bf16.mxu0 0
    %6697 = vmatpush1.bf16.msra.mxu0 0
    %6698 = vmatprep.subr.bf16.mxu0 0
    %6699 = vmatpush1.bf16.msra.mxu0 0
    %6700 = vmatprep.subr.bf16.mxu0 0
    %6701 = vmatpush1.bf16.msra.mxu0 0
    %6702 = vmatprep.subr.bf16.mxu0 0
    %6703 = vmatpush1.bf16.msra.mxu0 0
    %6704 = vmatprep.subr.bf16.mxu0 0
    %6705 = vmatpush1.bf16.msra.mxu0 0
    %6706 = vmatprep.subr.bf16.mxu0 0
    %6707 = vmatpush1.bf16.msra.mxu0 0
    %6708 = vmatprep.mubr.bf16.mxu0 0
    %6709 = vmatmul.mubr.bf16.gmra.mrb[0].mxu0 %v6674
    %v6710 = vpop.f32.mrb[0].mxu0
    %v6711 = vadd.f32 0.0, %v6710
    %v6712 = vpop.f32.mrb[0].mxu0
    %v6713 = vadd.f32 0.0, %v6712
    %v6714 = vpop.f32.mrb[0].mxu0
    %v6715 = vpop.f32.mrb[0].mxu0
    %6716 = vdwg.mxu0
    %6717 = vmatprep.subr.bf16.mxu0 %v6660
    %6718 = vmatpush1.bf16.msra.mxu0 %v6659
    %6719 = vmatprep.subr.bf16.mxu0 %v6664
    %6720 = vmatpush1.bf16.msra.mxu0 %v6663
    %6721 = vmatprep.subr.bf16.mxu0 %v6668
    %6722 = vmatpush1.bf16.msra.mxu0 %v6667
    %6723 = vmatprep.subr.bf16.mxu0 %v6672
    %6724 = vmatpush1.bf16.msra.mxu0 %v6671
    %6725 = vmatprep.subr.bf16.mxu0 0
    %6726 = vmatpush1.bf16.msra.mxu0 0
    %6727 = vmatprep.subr.bf16.mxu0 0
    %6728 = vmatpush1.bf16.msra.mxu0 0
    %6729 = vmatprep.subr.bf16.mxu0 0
    %6730 = vmatpush1.bf16.msra.mxu0 0
    %6731 = vmatprep.subr.bf16.mxu0 0
    %6732 = vmatpush1.bf16.msra.mxu0 0
    %6733 = vmatprep.subr.bf16.mxu0 0
    %6734 = vmatpush1.bf16.msra.mxu0 0
    %6735 = vmatprep.subr.bf16.mxu0 0
    %6736 = vmatpush1.bf16.msra.mxu0 0
    %6737 = vmatprep.subr.bf16.mxu0 0
    %6738 = vmatpush1.bf16.msra.mxu0 0
    %6739 = vmatprep.subr.bf16.mxu0 0
    %6740 = vmatpush1.bf16.msra.mxu0 0
    %6741 = vmatprep.subr.bf16.mxu0 0
    %6742 = vmatpush1.bf16.msra.mxu0 0
    %6743 = vmatprep.subr.bf16.mxu0 0
    %6744 = vmatpush1.bf16.msra.mxu0 0
    %6745 = vmatprep.subr.bf16.mxu0 0
    %6746 = vmatpush1.bf16.msra.mxu0 0
    %6747 = vmatprep.subr.bf16.mxu0 0
    %6748 = vmatpush1.bf16.msra.mxu0 0
    %6749 = vmatprep.mubr.bf16.mxu0 0
    %6750 = vmatmul.mubr.bf16.gmra.mrb[0].mxu0 %v6674
    %v6751 = vpop.f32.mrb[0].mxu0
    %v6752 = vadd.f32 0.0, %v6751
    %v6753 = vpop.f32.mrb[0].mxu0
    %v6754 = vadd.f32 0.0, %v6753
    %v6755 = vpop.f32.mrb[0].mxu0
    %v6756 = vpop.f32.mrb[0].mxu0
    %6757 = vdwg.mxu0
    %v6762 = vcombine.low %v6711, %v6713
    %v6763 = vcombine.low %v6752, %v6754
    %v6765 = vunpack.c.l.s4 1966171168
    %v6766 = vunpack.c.0.s8 %v6765
    %v6767 = vlaneseq
    %v6768 = vshrl.u32 %v6767, 7
    %v6769 = vsub.s32 %v6766, %v6768
    %v6770 = vrot.slane %v6762, %v6769
    %v6772 = vunpack.c.l.s4 1966171168
    %v6773 = vunpack.c.0.s8 %v6772
    %v6774 = vlaneseq
    %v6775 = vshrl.u32 %v6774, 7
    %v6776 = vsub.s32 %v6773, %v6775
    %v6777 = vrot.slane %v6763, %v6776
    %v6778 = vcombine.low %v6770, %v6777
    %v6780 = vunpack.c.l.s4 1966171168
    %v6781 = vunpack.c.0.s8 %v6780
    %v6782 = vlaneseq
    %v6783 = vshrl.u32 %v6782, 7
    %v6784 = vsub.s32 %v6781, %v6783
    %v6785 = vrot.slane %v6778, %v6784
    %v6787 = vadd.f32 %v6654, %v6785
    %v6788 = vld [vmem:[#allocation3 + $0x2a] sm:$0x1]
    %v6789 = vpack.c.bf16 %v6788, %v6788
    %v6790 = vld [vmem:[#allocation2 + $0x1500] sm:$0xff]
    %v6791 = vld [vmem:[#allocation2 + $0x1508] sm:$0xff]
    %v6792 = vld [vmem:[#allocation2 + $0x1510] sm:$0xff]
    %v6793 = vld [vmem:[#allocation2 + $0x1518] sm:$0xff]
    %v6794 = vld [vmem:[#allocation2 + $0x1520] sm:$0xff]
    %v6795 = vld [vmem:[#allocation2 + $0x1528] sm:$0xff]
    %v6796 = vld [vmem:[#allocation2 + $0x1530] sm:$0xff]
    %v6797 = vld [vmem:[#allocation2 + $0x1538] sm:$0xff]
    %v6798 = vld [vmem:[#allocation2 + $0x1540] sm:$0xff]
    %v6799 = vld [vmem:[#allocation2 + $0x1548] sm:$0xff]
    %v6800 = vld [vmem:[#allocation2 + $0x1550] sm:$0xff]
    %v6801 = vld [vmem:[#allocation2 + $0x1558] sm:$0xff]
    %v6802 = vld [vmem:[#allocation2 + $0x1560] sm:$0xff]
    %v6803 = vld [vmem:[#allocation2 + $0x1568] sm:$0xff]
    %v6804 = vld [vmem:[#allocation2 + $0x1570] sm:$0xff]
    %v6805 = vld [vmem:[#allocation2 + $0x1578] sm:$0xff]
    %v6807 = vsel %vm761, %v6789, 0
    %6809 = vmatprep.subr.bf16.mxu0 %v6791
    %6810 = vmatpush1.bf16.msra.mxu0 %v6790
    %6811 = vmatprep.subr.bf16.mxu0 %v6795
    %6812 = vmatpush1.bf16.msra.mxu0 %v6794
    %6813 = vmatprep.subr.bf16.mxu0 %v6799
    %6814 = vmatpush1.bf16.msra.mxu0 %v6798
    %6815 = vmatprep.subr.bf16.mxu0 %v6803
    %6816 = vmatpush1.bf16.msra.mxu0 %v6802
    %6817 = vmatprep.subr.bf16.mxu0 0
    %6818 = vmatpush1.bf16.msra.mxu0 0
    %6819 = vmatprep.subr.bf16.mxu0 0
    %6820 = vmatpush1.bf16.msra.mxu0 0
    %6821 = vmatprep.subr.bf16.mxu0 0
    %6822 = vmatpush1.bf16.msra.mxu0 0
    %6823 = vmatprep.subr.bf16.mxu0 0
    %6824 = vmatpush1.bf16.msra.mxu0 0
    %6825 = vmatprep.subr.bf16.mxu0 0
    %6826 = vmatpush1.bf16.msra.mxu0 0
    %6827 = vmatprep.subr.bf16.mxu0 0
    %6828 = vmatpush1.bf16.msra.mxu0 0
    %6829 = vmatprep.subr.bf16.mxu0 0
    %6830 = vmatpush1.bf16.msra.mxu0 0
    %6831 = vmatprep.subr.bf16.mxu0 0
    %6832 = vmatpush1.bf16.msra.mxu0 0
    %6833 = vmatprep.subr.bf16.mxu0 0
    %6834 = vmatpush1.bf16.msra.mxu0 0
    %6835 = vmatprep.subr.bf16.mxu0 0
    %6836 = vmatpush1.bf16.msra.mxu0 0
    %6837 = vmatprep.subr.bf16.mxu0 0
    %6838 = vmatpush1.bf16.msra.mxu0 0
    %6839 = vmatprep.subr.bf16.mxu0 0
    %6840 = vmatpush1.bf16.msra.mxu0 0
    %6841 = vmatprep.mubr.bf16.mxu0 0
    %6842 = vmatmul.mubr.bf16.gmra.mrb[0].mxu0 %v6807
    %v6843 = vpop.f32.mrb[0].mxu0
    %v6844 = vadd.f32 0.0, %v6843
    %v6845 = vpop.f32.mrb[0].mxu0
    %v6846 = vadd.f32 0.0, %v6845
    %v6847 = vpop.f32.mrb[0].mxu0
    %v6848 = vpop.f32.mrb[0].mxu0
    %6849 = vdwg.mxu0
    %6850 = vmatprep.subr.bf16.mxu0 %v6793
    %6851 = vmatpush1.bf16.msra.mxu0 %v6792
    %6852 = vmatprep.subr.bf16.mxu0 %v6797
    %6853 = vmatpush1.bf16.msra.mxu0 %v6796
    %6854 = vmatprep.subr.bf16.mxu0 %v6801
    %6855 = vmatpush1.bf16.msra.mxu0 %v6800
    %6856 = vmatprep.subr.bf16.mxu0 %v6805
    %6857 = vmatpush1.bf16.msra.mxu0 %v6804
    %6858 = vmatprep.subr.bf16.mxu0 0
    %6859 = vmatpush1.bf16.msra.mxu0 0
    %6860 = vmatprep.subr.bf16.mxu0 0
    %6861 = vmatpush1.bf16.msra.mxu0 0
    %6862 = vmatprep.subr.bf16.mxu0 0
    %6863 = vmatpush1.bf16.msra.mxu0 0
    %6864 = vmatprep.subr.bf16.mxu0 0
    %6865 = vmatpush1.bf16.msra.mxu0 0
    %6866 = vmatprep.subr.bf16.mxu0 0
    %6867 = vmatpush1.bf16.msra.mxu0 0
    %6868 = vmatprep.subr.bf16.mxu0 0
    %6869 = vmatpush1.bf16.msra.mxu0 0
    %6870 = vmatprep.subr.bf16.mxu0 0
    %6871 = vmatpush1.bf16.msra.mxu0 0
    %6872 = vmatprep.subr.bf16.mxu0 0
    %6873 = vmatpush1.bf16.msra.mxu0 0
    %6874 = vmatprep.subr.bf16.mxu0 0
    %6875 = vmatpush1.bf16.msra.mxu0 0
    %6876 = vmatprep.subr.bf16.mxu0 0
    %6877 = vmatpush1.bf16.msra.mxu0 0
    %6878 = vmatprep.subr.bf16.mxu0 0
    %6879 = vmatpush1.bf16.msra.mxu0 0
    %6880 = vmatprep.subr.bf16.mxu0 0
    %6881 = vmatpush1.bf16.msra.mxu0 0
    %6882 = vmatprep.mubr.bf16.mxu0 0
    %6883 = vmatmul.mubr.bf16.gmra.mrb[0].mxu0 %v6807
    %v6884 = vpop.f32.mrb[0].mxu0
    %v6885 = vadd.f32 0.0, %v6884
    %v6886 = vpop.f32.mrb[0].mxu0
    %v6887 = vadd.f32 0.0, %v6886
    %v6888 = vpop.f32.mrb[0].mxu0
    %v6889 = vpop.f32.mrb[0].mxu0
    %6890 = vdwg.mxu0
    %v6895 = vcombine.low %v6844, %v6846
    %v6896 = vcombine.low %v6885, %v6887
    %v6898 = vunpack.c.l.s4 1966171168
    %v6899 = vunpack.c.0.s8 %v6898
    %v6900 = vlaneseq
    %v6901 = vshrl.u32 %v6900, 7
    %v6902 = vsub.s32 %v6899, %v6901
    %v6903 = vrot.slane %v6895, %v6902
    %v6905 = vunpack.c.l.s4 1966171168
    %v6906 = vunpack.c.0.s8 %v6905
    %v6907 = vlaneseq
    %v6908 = vshrl.u32 %v6907, 7
    %v6909 = vsub.s32 %v6906, %v6908
    %v6910 = vrot.slane %v6896, %v6909
    %v6911 = vcombine.low %v6903, %v6910
    %v6913 = vunpack.c.l.s4 1966171168
    %v6914 = vunpack.c.0.s8 %v6913
    %v6915 = vlaneseq
    %v6916 = vshrl.u32 %v6915, 7
    %v6917 = vsub.s32 %v6914, %v6916
    %v6918 = vrot.slane %v6911, %v6917
    %v6920 = vadd.f32 %v6787, %v6918
    %v6921 = vld [vmem:[#allocation3 + $0x2b] sm:$0x1]
    %v6922 = vpack.c.bf16 %v6921, %v6921
    %v6923 = vld [vmem:[#allocation2 + $0x1580] sm:$0xff]
    %v6924 = vld [vmem:[#allocation2 + $0x1588] sm:$0xff]
    %v6925 = vld [vmem:[#allocation2 + $0x1590] sm:$0xff]
    %v6926 = vld [vmem:[#allocation2 + $0x1598] sm:$0xff]
    %v6927 = vld [vmem:[#allocation2 + $0x15a0] sm:$0xff]
    %v6928 = vld [vmem:[#allocation2 + $0x15a8] sm:$0xff]
    %v6929 = vld [vmem:[#allocation2 + $0x15b0] sm:$0xff]
    %v6930 = vld [vmem:[#allocation2 + $0x15b8] sm:$0xff]
    %v6931 = vld [vmem:[#allocation2 + $0x15c0] sm:$0xff]
    %v6932 = vld [vmem:[#allocation2 + $0x15c8] sm:$0xff]
    %v6933 = vld [vmem:[#allocation2 + $0x15d0] sm:$0xff]
    %v6934 = vld [vmem:[#allocation2 + $0x15d8] sm:$0xff]
    %v6935 = vld [vmem:[#allocation2 + $0x15e0] sm:$0xff]
    %v6936 = vld [vmem:[#allocation2 + $0x15e8] sm:$0xff]
    %v6937 = vld [vmem:[#allocation2 + $0x15f0] sm:$0xff]
    %v6938 = vld [vmem:[#allocation2 + $0x15f8] sm:$0xff]
    %v6940 = vsel %vm761, %v6922, 0
    %6942 = vmatprep.subr.bf16.mxu0 %v6924
    %6943 = vmatpush1.bf16.msra.mxu0 %v6923
    %6944 = vmatprep.subr.bf16.mxu0 %v6928
    %6945 = vmatpush1.bf16.msra.mxu0 %v6927
    %6946 = vmatprep.subr.bf16.mxu0 %v6932
    %6947 = vmatpush1.bf16.msra.mxu0 %v6931
    %6948 = vmatprep.subr.bf16.mxu0 %v6936
    %6949 = vmatpush1.bf16.msra.mxu0 %v6935
    %6950 = vmatprep.subr.bf16.mxu0 0
    %6951 = vmatpush1.bf16.msra.mxu0 0
    %6952 = vmatprep.subr.bf16.mxu0 0
    %6953 = vmatpush1.bf16.msra.mxu0 0
    %6954 = vmatprep.subr.bf16.mxu0 0
    %6955 = vmatpush1.bf16.msra.mxu0 0
    %6956 = vmatprep.subr.bf16.mxu0 0
    %6957 = vmatpush1.bf16.msra.mxu0 0
    %6958 = vmatprep.subr.bf16.mxu0 0
    %6959 = vmatpush1.bf16.msra.mxu0 0
    %6960 = vmatprep.subr.bf16.mxu0 0
    %6961 = vmatpush1.bf16.msra.mxu0 0
    %6962 = vmatprep.subr.bf16.mxu0 0
    %6963 = vmatpush1.bf16.msra.mxu0 0
    %6964 = vmatprep.subr.bf16.mxu0 0
    %6965 = vmatpush1.bf16.msra.mxu0 0
    %6966 = vmatprep.subr.bf16.mxu0 0
    %6967 = vmatpush1.bf16.msra.mxu0 0
    %6968 = vmatprep.subr.bf16.mxu0 0
    %6969 = vmatpush1.bf16.msra.mxu0 0
    %6970 = vmatprep.subr.bf16.mxu0 0
    %6971 = vmatpush1.bf16.msra.mxu0 0
    %6972 = vmatprep.subr.bf16.mxu0 0
    %6973 = vmatpush1.bf16.msra.mxu0 0
    %6974 = vmatprep.mubr.bf16.mxu0 0
    %6975 = vmatmul.mubr.bf16.gmra.mrb[0].mxu0 %v6940
    %v6976 = vpop.f32.mrb[0].mxu0
    %v6977 = vadd.f32 0.0, %v6976
    %v6978 = vpop.f32.mrb[0].mxu0
    %v6979 = vadd.f32 0.0, %v6978
    %v6980 = vpop.f32.mrb[0].mxu0
    %v6981 = vpop.f32.mrb[0].mxu0
    %6982 = vdwg.mxu0
    %6983 = vmatprep.subr.bf16.mxu0 %v6926
    %6984 = vmatpush1.bf16.msra.mxu0 %v6925
    %6985 = vmatprep.subr.bf16.mxu0 %v6930
    %6986 = vmatpush1.bf16.msra.mxu0 %v6929
    %6987 = vmatprep.subr.bf16.mxu0 %v6934
    %6988 = vmatpush1.bf16.msra.mxu0 %v6933
    %6989 = vmatprep.subr.bf16.mxu0 %v6938
    %6990 = vmatpush1.bf16.msra.mxu0 %v6937
    %6991 = vmatprep.subr.bf16.mxu0 0
    %6992 = vmatpush1.bf16.msra.mxu0 0
    %6993 = vmatprep.subr.bf16.mxu0 0
    %6994 = vmatpush1.bf16.msra.mxu0 0
    %6995 = vmatprep.subr.bf16.mxu0 0
    %6996 = vmatpush1.bf16.msra.mxu0 0
    %6997 = vmatprep.subr.bf16.mxu0 0
    %6998 = vmatpush1.bf16.msra.mxu0 0
    %6999 = vmatprep.subr.bf16.mxu0 0
    %7000 = vmatpush1.bf16.msra.mxu0 0
    %7001 = vmatprep.subr.bf16.mxu0 0
    %7002 = vmatpush1.bf16.msra.mxu0 0
    %7003 = vmatprep.subr.bf16.mxu0 0
    %7004 = vmatpush1.bf16.msra.mxu0 0
    %7005 = vmatprep.subr.bf16.mxu0 0
    %7006 = vmatpush1.bf16.msra.mxu0 0
    %7007 = vmatprep.subr.bf16.mxu0 0
    %7008 = vmatpush1.bf16.msra.mxu0 0
    %7009 = vmatprep.subr.bf16.mxu0 0
    %7010 = vmatpush1.bf16.msra.mxu0 0
    %7011 = vmatprep.subr.bf16.mxu0 0
    %7012 = vmatpush1.bf16.msra.mxu0 0
    %7013 = vmatprep.subr.bf16.mxu0 0
    %7014 = vmatpush1.bf16.msra.mxu0 0
    %7015 = vmatprep.mubr.bf16.mxu0 0
    %7016 = vmatmul.mubr.bf16.gmra.mrb[0].mxu0 %v6940
    %v7017 = vpop.f32.mrb[0].mxu0
    %v7018 = vadd.f32 0.0, %v7017
    %v7019 = vpop.f32.mrb[0].mxu0
    %v7020 = vadd.f32 0.0, %v7019
    %v7021 = vpop.f32.mrb[0].mxu0
    %v7022 = vpop.f32.mrb[0].mxu0
    %7023 = vdwg.mxu0
    %v7028 = vcombine.low %v6977, %v6979
    %v7029 = vcombine.low %v7018, %v7020
    %v7031 = vunpack.c.l.s4 1966171168
    %v7032 = vunpack.c.0.s8 %v7031
    %v7033 = vlaneseq
    %v7034 = vshrl.u32 %v7033, 7
    %v7035 = vsub.s32 %v7032, %v7034
    %v7036 = vrot.slane %v7028, %v7035
    %v7038 = vunpack.c.l.s4 1966171168
    %v7039 = vunpack.c.0.s8 %v7038
    %v7040 = vlaneseq
    %v7041 = vshrl.u32 %v7040, 7
    %v7042 = vsub.s32 %v7039, %v7041
    %v7043 = vrot.slane %v7029, %v7042
    %v7044 = vcombine.low %v7036, %v7043
    %v7046 = vunpack.c.l.s4 1966171168
    %v7047 = vunpack.c.0.s8 %v7046
    %v7048 = vlaneseq
    %v7049 = vshrl.u32 %v7048, 7
    %v7050 = vsub.s32 %v7047, %v7049
    %v7051 = vrot.slane %v7044, %v7050
    %v7053 = vadd.f32 %v6920, %v7051
    %v7054 = vld [vmem:[#allocation3 + $0x2c] sm:$0x1]
    %v7055 = vpack.c.bf16 %v7054, %v7054
    %v7056 = vld [vmem:[#allocation2 + $0x1600] sm:$0xff]
    %v7057 = vld [vmem:[#allocation2 + $0x1608] sm:$0xff]
    %v7058 = vld [vmem:[#allocation2 + $0x1610] sm:$0xff]
    %v7059 = vld [vmem:[#allocation2 + $0x1618] sm:$0xff]
    %v7060 = vld [vmem:[#allocation2 + $0x1620] sm:$0xff]
    %v7061 = vld [vmem:[#allocation2 + $0x1628] sm:$0xff]
    %v7062 = vld [vmem:[#allocation2 + $0x1630] sm:$0xff]
    %v7063 = vld [vmem:[#allocation2 + $0x1638] sm:$0xff]
    %v7064 = vld [vmem:[#allocation2 + $0x1640] sm:$0xff]
    %v7065 = vld [vmem:[#allocation2 + $0x1648] sm:$0xff]
    %v7066 = vld [vmem:[#allocation2 + $0x1650] sm:$0xff]
    %v7067 = vld [vmem:[#allocation2 + $0x1658] sm:$0xff]
    %v7068 = vld [vmem:[#allocation2 + $0x1660] sm:$0xff]
    %v7069 = vld [vmem:[#allocation2 + $0x1668] sm:$0xff]
    %v7070 = vld [vmem:[#allocation2 + $0x1670] sm:$0xff]
    %v7071 = vld [vmem:[#allocation2 + $0x1678] sm:$0xff]
    %v7073 = vsel %vm761, %v7055, 0
    %7075 = vmatprep.subr.bf16.mxu0 %v7057
    %7076 = vmatpush1.bf16.msra.mxu0 %v7056
    %7077 = vmatprep.subr.bf16.mxu0 %v7061
    %7078 = vmatpush1.bf16.msra.mxu0 %v7060
    %7079 = vmatprep.subr.bf16.mxu0 %v7065
    %7080 = vmatpush1.bf16.msra.mxu0 %v7064
    %7081 = vmatprep.subr.bf16.mxu0 %v7069
    %7082 = vmatpush1.bf16.msra.mxu0 %v7068
    %7083 = vmatprep.subr.bf16.mxu0 0
    %7084 = vmatpush1.bf16.msra.mxu0 0
    %7085 = vmatprep.subr.bf16.mxu0 0
    %7086 = vmatpush1.bf16.msra.mxu0 0
    %7087 = vmatprep.subr.bf16.mxu0 0
    %7088 = vmatpush1.bf16.msra.mxu0 0
    %7089 = vmatprep.subr.bf16.mxu0 0
    %7090 = vmatpush1.bf16.msra.mxu0 0
    %7091 = vmatprep.subr.bf16.mxu0 0
    %7092 = vmatpush1.bf16.msra.mxu0 0
    %7093 = vmatprep.subr.bf16.mxu0 0
    %7094 = vmatpush1.bf16.msra.mxu0 0
    %7095 = vmatprep.subr.bf16.mxu0 0
    %7096 = vmatpush1.bf16.msra.mxu0 0
    %7097 = vmatprep.subr.bf16.mxu0 0
    %7098 = vmatpush1.bf16.msra.mxu0 0
    %7099 = vmatprep.subr.bf16.mxu0 0
    %7100 = vmatpush1.bf16.msra.mxu0 0
    %7101 = vmatprep.subr.bf16.mxu0 0
    %7102 = vmatpush1.bf16.msra.mxu0 0
    %7103 = vmatprep.subr.bf16.mxu0 0
    %7104 = vmatpush1.bf16.msra.mxu0 0
    %7105 = vmatprep.subr.bf16.mxu0 0
    %7106 = vmatpush1.bf16.msra.mxu0 0
    %7107 = vmatprep.mubr.bf16.mxu0 0
    %7108 = vmatmul.mubr.bf16.gmra.mrb[0].mxu0 %v7073
    %v7109 = vpop.f32.mrb[0].mxu0
    %v7110 = vadd.f32 0.0, %v7109
    %v7111 = vpop.f32.mrb[0].mxu0
    %v7112 = vadd.f32 0.0, %v7111
    %v7113 = vpop.f32.mrb[0].mxu0
    %v7114 = vpop.f32.mrb[0].mxu0
    %7115 = vdwg.mxu0
    %7116 = vmatprep.subr.bf16.mxu0 %v7059
    %7117 = vmatpush1.bf16.msra.mxu0 %v7058
    %7118 = vmatprep.subr.bf16.mxu0 %v7063
    %7119 = vmatpush1.bf16.msra.mxu0 %v7062
    %7120 = vmatprep.subr.bf16.mxu0 %v7067
    %7121 = vmatpush1.bf16.msra.mxu0 %v7066
    %7122 = vmatprep.subr.bf16.mxu0 %v7071
    %7123 = vmatpush1.bf16.msra.mxu0 %v7070
    %7124 = vmatprep.subr.bf16.mxu0 0
    %7125 = vmatpush1.bf16.msra.mxu0 0
    %7126 = vmatprep.subr.bf16.mxu0 0
    %7127 = vmatpush1.bf16.msra.mxu0 0
    %7128 = vmatprep.subr.bf16.mxu0 0
    %7129 = vmatpush1.bf16.msra.mxu0 0
    %7130 = vmatprep.subr.bf16.mxu0 0
    %7131 = vmatpush1.bf16.msra.mxu0 0
    %7132 = vmatprep.subr.bf16.mxu0 0
    %7133 = vmatpush1.bf16.msra.mxu0 0
    %7134 = vmatprep.subr.bf16.mxu0 0
    %7135 = vmatpush1.bf16.msra.mxu0 0
    %7136 = vmatprep.subr.bf16.mxu0 0
    %7137 = vmatpush1.bf16.msra.mxu0 0
    %7138 = vmatprep.subr.bf16.mxu0 0
    %7139 = vmatpush1.bf16.msra.mxu0 0
    %7140 = vmatprep.subr.bf16.mxu0 0
    %7141 = vmatpush1.bf16.msra.mxu0 0
    %7142 = vmatprep.subr.bf16.mxu0 0
    %7143 = vmatpush1.bf16.msra.mxu0 0
    %7144 = vmatprep.subr.bf16.mxu0 0
    %7145 = vmatpush1.bf16.msra.mxu0 0
    %7146 = vmatprep.subr.bf16.mxu0 0
    %7147 = vmatpush1.bf16.msra.mxu0 0
    %7148 = vmatprep.mubr.bf16.mxu0 0
    %7149 = vmatmul.mubr.bf16.gmra.mrb[0].mxu0 %v7073
    %v7150 = vpop.f32.mrb[0].mxu0
    %v7151 = vadd.f32 0.0, %v7150
    %v7152 = vpop.f32.mrb[0].mxu0
    %v7153 = vadd.f32 0.0, %v7152
    %v7154 = vpop.f32.mrb[0].mxu0
    %v7155 = vpop.f32.mrb[0].mxu0
    %7156 = vdwg.mxu0
    %v7161 = vcombine.low %v7110, %v7112
    %v7162 = vcombine.low %v7151, %v7153
    %v7164 = vunpack.c.l.s4 1966171168
    %v7165 = vunpack.c.0.s8 %v7164
    %v7166 = vlaneseq
    %v7167 = vshrl.u32 %v7166, 7
    %v7168 = vsub.s32 %v7165, %v7167
    %v7169 = vrot.slane %v7161, %v7168
    %v7171 = vunpack.c.l.s4 1966171168
    %v7172 = vunpack.c.0.s8 %v7171
    %v7173 = vlaneseq
    %v7174 = vshrl.u32 %v7173, 7
    %v7175 = vsub.s32 %v7172, %v7174
    %v7176 = vrot.slane %v7162, %v7175
    %v7177 = vcombine.low %v7169, %v7176
    %v7179 = vunpack.c.l.s4 1966171168
    %v7180 = vunpack.c.0.s8 %v7179
    %v7181 = vlaneseq
    %v7182 = vshrl.u32 %v7181, 7
    %v7183 = vsub.s32 %v7180, %v7182
    %v7184 = vrot.slane %v7177, %v7183
    %v7186 = vadd.f32 %v7053, %v7184
    %v7187 = vld [vmem:[#allocation3 + $0x2d] sm:$0x1]
    %v7188 = vpack.c.bf16 %v7187, %v7187
    %v7189 = vld [vmem:[#allocation2 + $0x1680] sm:$0xff]
    %v7190 = vld [vmem:[#allocation2 + $0x1688] sm:$0xff]
    %v7191 = vld [vmem:[#allocation2 + $0x1690] sm:$0xff]
    %v7192 = vld [vmem:[#allocation2 + $0x1698] sm:$0xff]
    %v7193 = vld [vmem:[#allocation2 + $0x16a0] sm:$0xff]
    %v7194 = vld [vmem:[#allocation2 + $0x16a8] sm:$0xff]
    %v7195 = vld [vmem:[#allocation2 + $0x16b0] sm:$0xff]
    %v7196 = vld [vmem:[#allocation2 + $0x16b8] sm:$0xff]
    %v7197 = vld [vmem:[#allocation2 + $0x16c0] sm:$0xff]
    %v7198 = vld [vmem:[#allocation2 + $0x16c8] sm:$0xff]
    %v7199 = vld [vmem:[#allocation2 + $0x16d0] sm:$0xff]
    %v7200 = vld [vmem:[#allocation2 + $0x16d8] sm:$0xff]
    %v7201 = vld [vmem:[#allocation2 + $0x16e0] sm:$0xff]
    %v7202 = vld [vmem:[#allocation2 + $0x16e8] sm:$0xff]
    %v7203 = vld [vmem:[#allocation2 + $0x16f0] sm:$0xff]
    %v7204 = vld [vmem:[#allocation2 + $0x16f8] sm:$0xff]
    %v7206 = vsel %vm761, %v7188, 0
    %7208 = vmatprep.subr.bf16.mxu0 %v7190
    %7209 = vmatpush1.bf16.msra.mxu0 %v7189
    %7210 = vmatprep.subr.bf16.mxu0 %v7194
    %7211 = vmatpush1.bf16.msra.mxu0 %v7193
    %7212 = vmatprep.subr.bf16.mxu0 %v7198
    %7213 = vmatpush1.bf16.msra.mxu0 %v7197
    %7214 = vmatprep.subr.bf16.mxu0 %v7202
    %7215 = vmatpush1.bf16.msra.mxu0 %v7201
    %7216 = vmatprep.subr.bf16.mxu0 0
    %7217 = vmatpush1.bf16.msra.mxu0 0
    %7218 = vmatprep.subr.bf16.mxu0 0
    %7219 = vmatpush1.bf16.msra.mxu0 0
    %7220 = vmatprep.subr.bf16.mxu0 0
    %7221 = vmatpush1.bf16.msra.mxu0 0
    %7222 = vmatprep.subr.bf16.mxu0 0
    %7223 = vmatpush1.bf16.msra.mxu0 0
    %7224 = vmatprep.subr.bf16.mxu0 0
    %7225 = vmatpush1.bf16.msra.mxu0 0
    %7226 = vmatprep.subr.bf16.mxu0 0
    %7227 = vmatpush1.bf16.msra.mxu0 0
    %7228 = vmatprep.subr.bf16.mxu0 0
    %7229 = vmatpush1.bf16.msra.mxu0 0
    %7230 = vmatprep.subr.bf16.mxu0 0
    %7231 = vmatpush1.bf16.msra.mxu0 0
    %7232 = vmatprep.subr.bf16.mxu0 0
    %7233 = vmatpush1.bf16.msra.mxu0 0
    %7234 = vmatprep.subr.bf16.mxu0 0
    %7235 = vmatpush1.bf16.msra.mxu0 0
    %7236 = vmatprep.subr.bf16.mxu0 0
    %7237 = vmatpush1.bf16.msra.mxu0 0
    %7238 = vmatprep.subr.bf16.mxu0 0
    %7239 = vmatpush1.bf16.msra.mxu0 0
    %7240 = vmatprep.mubr.bf16.mxu0 0
    %7241 = vmatmul.mubr.bf16.gmra.mrb[0].mxu0 %v7206
    %v7242 = vpop.f32.mrb[0].mxu0
    %v7243 = vadd.f32 0.0, %v7242
    %v7244 = vpop.f32.mrb[0].mxu0
    %v7245 = vadd.f32 0.0, %v7244
    %v7246 = vpop.f32.mrb[0].mxu0
    %v7247 = vpop.f32.mrb[0].mxu0
    %7248 = vdwg.mxu0
    %7249 = vmatprep.subr.bf16.mxu0 %v7192
    %7250 = vmatpush1.bf16.msra.mxu0 %v7191
    %7251 = vmatprep.subr.bf16.mxu0 %v7196
    %7252 = vmatpush1.bf16.msra.mxu0 %v7195
    %7253 = vmatprep.subr.bf16.mxu0 %v7200
    %7254 = vmatpush1.bf16.msra.mxu0 %v7199
    %7255 = vmatprep.subr.bf16.mxu0 %v7204
    %7256 = vmatpush1.bf16.msra.mxu0 %v7203
    %7257 = vmatprep.subr.bf16.mxu0 0
    %7258 = vmatpush1.bf16.msra.mxu0 0
    %7259 = vmatprep.subr.bf16.mxu0 0
    %7260 = vmatpush1.bf16.msra.mxu0 0
    %7261 = vmatprep.subr.bf16.mxu0 0
    %7262 = vmatpush1.bf16.msra.mxu0 0
    %7263 = vmatprep.subr.bf16.mxu0 0
    %7264 = vmatpush1.bf16.msra.mxu0 0
    %7265 = vmatprep.subr.bf16.mxu0 0
    %7266 = vmatpush1.bf16.msra.mxu0 0
    %7267 = vmatprep.subr.bf16.mxu0 0
    %7268 = vmatpush1.bf16.msra.mxu0 0
    %7269 = vmatprep.subr.bf16.mxu0 0
    %7270 = vmatpush1.bf16.msra.mxu0 0
    %7271 = vmatprep.subr.bf16.mxu0 0
    %7272 = vmatpush1.bf16.msra.mxu0 0
    %7273 = vmatprep.subr.bf16.mxu0 0
    %7274 = vmatpush1.bf16.msra.mxu0 0
    %7275 = vmatprep.subr.bf16.mxu0 0
    %7276 = vmatpush1.bf16.msra.mxu0 0
    %7277 = vmatprep.subr.bf16.mxu0 0
    %7278 = vmatpush1.bf16.msra.mxu0 0
    %7279 = vmatprep.subr.bf16.mxu0 0
    %7280 = vmatpush1.bf16.msra.mxu0 0
    %7281 = vmatprep.mubr.bf16.mxu0 0
    %7282 = vmatmul.mubr.bf16.gmra.mrb[0].mxu0 %v7206
    %v7283 = vpop.f32.mrb[0].mxu0
    %v7284 = vadd.f32 0.0, %v7283
    %v7285 = vpop.f32.mrb[0].mxu0
    %v7286 = vadd.f32 0.0, %v7285
    %v7287 = vpop.f32.mrb[0].mxu0
    %v7288 = vpop.f32.mrb[0].mxu0
    %7289 = vdwg.mxu0
    %v7294 = vcombine.low %v7243, %v7245
    %v7295 = vcombine.low %v7284, %v7286
    %v7297 = vunpack.c.l.s4 1966171168
    %v7298 = vunpack.c.0.s8 %v7297
    %v7299 = vlaneseq
    %v7300 = vshrl.u32 %v7299, 7
    %v7301 = vsub.s32 %v7298, %v7300
    %v7302 = vrot.slane %v7294, %v7301
    %v7304 = vunpack.c.l.s4 1966171168
    %v7305 = vunpack.c.0.s8 %v7304
    %v7306 = vlaneseq
    %v7307 = vshrl.u32 %v7306, 7
    %v7308 = vsub.s32 %v7305, %v7307
    %v7309 = vrot.slane %v7295, %v7308
    %v7310 = vcombine.low %v7302, %v7309
    %v7312 = vunpack.c.l.s4 1966171168
    %v7313 = vunpack.c.0.s8 %v7312
    %v7314 = vlaneseq
    %v7315 = vshrl.u32 %v7314, 7
    %v7316 = vsub.s32 %v7313, %v7315
    %v7317 = vrot.slane %v7310, %v7316
    %v7319 = vadd.f32 %v7186, %v7317
    %v7320 = vld [vmem:[#allocation3 + $0x2e] sm:$0x1]
    %v7321 = vpack.c.bf16 %v7320, %v7320
    %v7322 = vld [vmem:[#allocation2 + $0x1700] sm:$0xff]
    %v7323 = vld [vmem:[#allocation2 + $0x1708] sm:$0xff]
    %v7324 = vld [vmem:[#allocation2 + $0x1710] sm:$0xff]
    %v7325 = vld [vmem:[#allocation2 + $0x1718] sm:$0xff]
    %v7326 = vld [vmem:[#allocation2 + $0x1720] sm:$0xff]
    %v7327 = vld [vmem:[#allocation2 + $0x1728] sm:$0xff]
    %v7328 = vld [vmem:[#allocation2 + $0x1730] sm:$0xff]
    %v7329 = vld [vmem:[#allocation2 + $0x1738] sm:$0xff]
    %v7330 = vld [vmem:[#allocation2 + $0x1740] sm:$0xff]
    %v7331 = vld [vmem:[#allocation2 + $0x1748] sm:$0xff]
    %v7332 = vld [vmem:[#allocation2 + $0x1750] sm:$0xff]
    %v7333 = vld [vmem:[#allocation2 + $0x1758] sm:$0xff]
    %v7334 = vld [vmem:[#allocation2 + $0x1760] sm:$0xff]
    %v7335 = vld [vmem:[#allocation2 + $0x1768] sm:$0xff]
    %v7336 = vld [vmem:[#allocation2 + $0x1770] sm:$0xff]
    %v7337 = vld [vmem:[#allocation2 + $0x1778] sm:$0xff]
    %v7339 = vsel %vm761, %v7321, 0
    %7341 = vmatprep.subr.bf16.mxu0 %v7323
    %7342 = vmatpush1.bf16.msra.mxu0 %v7322
    %7343 = vmatprep.subr.bf16.mxu0 %v7327
    %7344 = vmatpush1.bf16.msra.mxu0 %v7326
    %7345 = vmatprep.subr.bf16.mxu0 %v7331
    %7346 = vmatpush1.bf16.msra.mxu0 %v7330
    %7347 = vmatprep.subr.bf16.mxu0 %v7335
    %7348 = vmatpush1.bf16.msra.mxu0 %v7334
    %7349 = vmatprep.subr.bf16.mxu0 0
    %7350 = vmatpush1.bf16.msra.mxu0 0
    %7351 = vmatprep.subr.bf16.mxu0 0
    %7352 = vmatpush1.bf16.msra.mxu0 0
    %7353 = vmatprep.subr.bf16.mxu0 0
    %7354 = vmatpush1.bf16.msra.mxu0 0
    %7355 = vmatprep.subr.bf16.mxu0 0
    %7356 = vmatpush1.bf16.msra.mxu0 0
    %7357 = vmatprep.subr.bf16.mxu0 0
    %7358 = vmatpush1.bf16.msra.mxu0 0
    %7359 = vmatprep.subr.bf16.mxu0 0
    %7360 = vmatpush1.bf16.msra.mxu0 0
    %7361 = vmatprep.subr.bf16.mxu0 0
    %7362 = vmatpush1.bf16.msra.mxu0 0
    %7363 = vmatprep.subr.bf16.mxu0 0
    %7364 = vmatpush1.bf16.msra.mxu0 0
    %7365 = vmatprep.subr.bf16.mxu0 0
    %7366 = vmatpush1.bf16.msra.mxu0 0
    %7367 = vmatprep.subr.bf16.mxu0 0
    %7368 = vmatpush1.bf16.msra.mxu0 0
    %7369 = vmatprep.subr.bf16.mxu0 0
    %7370 = vmatpush1.bf16.msra.mxu0 0
    %7371 = vmatprep.subr.bf16.mxu0 0
    %7372 = vmatpush1.bf16.msra.mxu0 0
    %7373 = vmatprep.mubr.bf16.mxu0 0
    %7374 = vmatmul.mubr.bf16.gmra.mrb[0].mxu0 %v7339
    %v7375 = vpop.f32.mrb[0].mxu0
    %v7376 = vadd.f32 0.0, %v7375
    %v7377 = vpop.f32.mrb[0].mxu0
    %v7378 = vadd.f32 0.0, %v7377
    %v7379 = vpop.f32.mrb[0].mxu0
    %v7380 = vpop.f32.mrb[0].mxu0
    %7381 = vdwg.mxu0
    %7382 = vmatprep.subr.bf16.mxu0 %v7325
    %7383 = vmatpush1.bf16.msra.mxu0 %v7324
    %7384 = vmatprep.subr.bf16.mxu0 %v7329
    %7385 = vmatpush1.bf16.msra.mxu0 %v7328
    %7386 = vmatprep.subr.bf16.mxu0 %v7333
    %7387 = vmatpush1.bf16.msra.mxu0 %v7332
    %7388 = vmatprep.subr.bf16.mxu0 %v7337
    %7389 = vmatpush1.bf16.msra.mxu0 %v7336
    %7390 = vmatprep.subr.bf16.mxu0 0
    %7391 = vmatpush1.bf16.msra.mxu0 0
    %7392 = vmatprep.subr.bf16.mxu0 0
    %7393 = vmatpush1.bf16.msra.mxu0 0
    %7394 = vmatprep.subr.bf16.mxu0 0
    %7395 = vmatpush1.bf16.msra.mxu0 0
    %7396 = vmatprep.subr.bf16.mxu0 0
    %7397 = vmatpush1.bf16.msra.mxu0 0
    %7398 = vmatprep.subr.bf16.mxu0 0
    %7399 = vmatpush1.bf16.msra.mxu0 0
    %7400 = vmatprep.subr.bf16.mxu0 0
    %7401 = vmatpush1.bf16.msra.mxu0 0
    %7402 = vmatprep.subr.bf16.mxu0 0
    %7403 = vmatpush1.bf16.msra.mxu0 0
    %7404 = vmatprep.subr.bf16.mxu0 0
    %7405 = vmatpush1.bf16.msra.mxu0 0
    %7406 = vmatprep.subr.bf16.mxu0 0
    %7407 = vmatpush1.bf16.msra.mxu0 0
    %7408 = vmatprep.subr.bf16.mxu0 0
    %7409 = vmatpush1.bf16.msra.mxu0 0
    %7410 = vmatprep.subr.bf16.mxu0 0
    %7411 = vmatpush1.bf16.msra.mxu0 0
    %7412 = vmatprep.subr.bf16.mxu0 0
    %7413 = vmatpush1.bf16.msra.mxu0 0
    %7414 = vmatprep.mubr.bf16.mxu0 0
    %7415 = vmatmul.mubr.bf16.gmra.mrb[0].mxu0 %v7339
    %v7416 = vpop.f32.mrb[0].mxu0
    %v7417 = vadd.f32 0.0, %v7416
    %v7418 = vpop.f32.mrb[0].mxu0
    %v7419 = vadd.f32 0.0, %v7418
    %v7420 = vpop.f32.mrb[0].mxu0
    %v7421 = vpop.f32.mrb[0].mxu0
    %7422 = vdwg.mxu0
    %v7427 = vcombine.low %v7376, %v7378
    %v7428 = vcombine.low %v7417, %v7419
    %v7430 = vunpack.c.l.s4 1966171168
    %v7431 = vunpack.c.0.s8 %v7430
    %v7432 = vlaneseq
    %v7433 = vshrl.u32 %v7432, 7
    %v7434 = vsub.s32 %v7431, %v7433
    %v7435 = vrot.slane %v7427, %v7434
    %v7437 = vunpack.c.l.s4 1966171168
    %v7438 = vunpack.c.0.s8 %v7437
    %v7439 = vlaneseq
    %v7440 = vshrl.u32 %v7439, 7
    %v7441 = vsub.s32 %v7438, %v7440
    %v7442 = vrot.slane %v7428, %v7441
    %v7443 = vcombine.low %v7435, %v7442
    %v7445 = vunpack.c.l.s4 1966171168
    %v7446 = vunpack.c.0.s8 %v7445
    %v7447 = vlaneseq
    %v7448 = vshrl.u32 %v7447, 7
    %v7449 = vsub.s32 %v7446, %v7448
    %v7450 = vrot.slane %v7443, %v7449
    %v7452 = vadd.f32 %v7319, %v7450
    %v7453 = vld [vmem:[#allocation3 + $0x2f] sm:$0x1]
    %v7454 = vpack.c.bf16 %v7453, %v7453
    %v7455 = vld [vmem:[#allocation2 + $0x1780] sm:$0xff]
    %v7456 = vld [vmem:[#allocation2 + $0x1788] sm:$0xff]
    %v7457 = vld [vmem:[#allocation2 + $0x1790] sm:$0xff]
    %v7458 = vld [vmem:[#allocation2 + $0x1798] sm:$0xff]
    %v7459 = vld [vmem:[#allocation2 + $0x17a0] sm:$0xff]
    %v7460 = vld [vmem:[#allocation2 + $0x17a8] sm:$0xff]
    %v7461 = vld [vmem:[#allocation2 + $0x17b0] sm:$0xff]
    %v7462 = vld [vmem:[#allocation2 + $0x17b8] sm:$0xff]
    %v7463 = vld [vmem:[#allocation2 + $0x17c0] sm:$0xff]
    %v7464 = vld [vmem:[#allocation2 + $0x17c8] sm:$0xff]
    %v7465 = vld [vmem:[#allocation2 + $0x17d0] sm:$0xff]
    %v7466 = vld [vmem:[#allocation2 + $0x17d8] sm:$0xff]
    %v7467 = vld [vmem:[#allocation2 + $0x17e0] sm:$0xff]
    %v7468 = vld [vmem:[#allocation2 + $0x17e8] sm:$0xff]
    %v7469 = vld [vmem:[#allocation2 + $0x17f0] sm:$0xff]
    %v7470 = vld [vmem:[#allocation2 + $0x17f8] sm:$0xff]
    %v7472 = vsel %vm761, %v7454, 0
    %7474 = vmatprep.subr.bf16.mxu0 %v7456
    %7475 = vmatpush1.bf16.msra.mxu0 %v7455
    %7476 = vmatprep.subr.bf16.mxu0 %v7460
    %7477 = vmatpush1.bf16.msra.mxu0 %v7459
    %7478 = vmatprep.subr.bf16.mxu0 %v7464
    %7479 = vmatpush1.bf16.msra.mxu0 %v7463
    %7480 = vmatprep.subr.bf16.mxu0 %v7468
    %7481 = vmatpush1.bf16.msra.mxu0 %v7467
    %7482 = vmatprep.subr.bf16.mxu0 0
    %7483 = vmatpush1.bf16.msra.mxu0 0
    %7484 = vmatprep.subr.bf16.mxu0 0
    %7485 = vmatpush1.bf16.msra.mxu0 0
    %7486 = vmatprep.subr.bf16.mxu0 0
    %7487 = vmatpush1.bf16.msra.mxu0 0
    %7488 = vmatprep.subr.bf16.mxu0 0
    %7489 = vmatpush1.bf16.msra.mxu0 0
    %7490 = vmatprep.subr.bf16.mxu0 0
    %7491 = vmatpush1.bf16.msra.mxu0 0
    %7492 = vmatprep.subr.bf16.mxu0 0
    %7493 = vmatpush1.bf16.msra.mxu0 0
    %7494 = vmatprep.subr.bf16.mxu0 0
    %7495 = vmatpush1.bf16.msra.mxu0 0
    %7496 = vmatprep.subr.bf16.mxu0 0
    %7497 = vmatpush1.bf16.msra.mxu0 0
    %7498 = vmatprep.subr.bf16.mxu0 0
    %7499 = vmatpush1.bf16.msra.mxu0 0
    %7500 = vmatprep.subr.bf16.mxu0 0
    %7501 = vmatpush1.bf16.msra.mxu0 0
    %7502 = vmatprep.subr.bf16.mxu0 0
    %7503 = vmatpush1.bf16.msra.mxu0 0
    %7504 = vmatprep.subr.bf16.mxu0 0
    %7505 = vmatpush1.bf16.msra.mxu0 0
    %7506 = vmatprep.mubr.bf16.mxu0 0
    %7507 = vmatmul.mubr.bf16.gmra.mrb[0].mxu0 %v7472
    %v7508 = vpop.f32.mrb[0].mxu0
    %v7509 = vadd.f32 0.0, %v7508
    %v7510 = vpop.f32.mrb[0].mxu0
    %v7511 = vadd.f32 0.0, %v7510
    %v7512 = vpop.f32.mrb[0].mxu0
    %v7513 = vpop.f32.mrb[0].mxu0
    %7514 = vdwg.mxu0
    %7515 = vmatprep.subr.bf16.mxu0 %v7458
    %7516 = vmatpush1.bf16.msra.mxu0 %v7457
    %7517 = vmatprep.subr.bf16.mxu0 %v7462
    %7518 = vmatpush1.bf16.msra.mxu0 %v7461
    %7519 = vmatprep.subr.bf16.mxu0 %v7466
    %7520 = vmatpush1.bf16.msra.mxu0 %v7465
    %7521 = vmatprep.subr.bf16.mxu0 %v7470
    %7522 = vmatpush1.bf16.msra.mxu0 %v7469
    %7523 = vmatprep.subr.bf16.mxu0 0
    %7524 = vmatpush1.bf16.msra.mxu0 0
    %7525 = vmatprep.subr.bf16.mxu0 0
    %7526 = vmatpush1.bf16.msra.mxu0 0
    %7527 = vmatprep.subr.bf16.mxu0 0
    %7528 = vmatpush1.bf16.msra.mxu0 0
    %7529 = vmatprep.subr.bf16.mxu0 0
    %7530 = vmatpush1.bf16.msra.mxu0 0
    %7531 = vmatprep.subr.bf16.mxu0 0
    %7532 = vmatpush1.bf16.msra.mxu0 0
    %7533 = vmatprep.subr.bf16.mxu0 0
    %7534 = vmatpush1.bf16.msra.mxu0 0
    %7535 = vmatprep.subr.bf16.mxu0 0
    %7536 = vmatpush1.bf16.msra.mxu0 0
    %7537 = vmatprep.subr.bf16.mxu0 0
    %7538 = vmatpush1.bf16.msra.mxu0 0
    %7539 = vmatprep.subr.bf16.mxu0 0
    %7540 = vmatpush1.bf16.msra.mxu0 0
    %7541 = vmatprep.subr.bf16.mxu0 0
    %7542 = vmatpush1.bf16.msra.mxu0 0
    %7543 = vmatprep.subr.bf16.mxu0 0
    %7544 = vmatpush1.bf16.msra.mxu0 0
    %7545 = vmatprep.subr.bf16.mxu0 0
    %7546 = vmatpush1.bf16.msra.mxu0 0
    %7547 = vmatprep.mubr.bf16.mxu0 0
    %7548 = vmatmul.mubr.bf16.gmra.mrb[0].mxu0 %v7472
    %v7549 = vpop.f32.mrb[0].mxu0
    %v7550 = vadd.f32 0.0, %v7549
    %v7551 = vpop.f32.mrb[0].mxu0
    %v7552 = vadd.f32 0.0, %v7551
    %v7553 = vpop.f32.mrb[0].mxu0
    %v7554 = vpop.f32.mrb[0].mxu0
    %7555 = vdwg.mxu0
    %v7560 = vcombine.low %v7509, %v7511
    %v7561 = vcombine.low %v7550, %v7552
    %v7563 = vunpack.c.l.s4 1966171168
    %v7564 = vunpack.c.0.s8 %v7563
    %v7565 = vlaneseq
    %v7566 = vshrl.u32 %v7565, 7
    %v7567 = vsub.s32 %v7564, %v7566
    %v7568 = vrot.slane %v7560, %v7567
    %v7570 = vunpack.c.l.s4 1966171168
    %v7571 = vunpack.c.0.s8 %v7570
    %v7572 = vlaneseq
    %v7573 = vshrl.u32 %v7572, 7
    %v7574 = vsub.s32 %v7571, %v7573
    %v7575 = vrot.slane %v7561, %v7574
    %v7576 = vcombine.low %v7568, %v7575
    %v7578 = vunpack.c.l.s4 1966171168
    %v7579 = vunpack.c.0.s8 %v7578
    %v7580 = vlaneseq
    %v7581 = vshrl.u32 %v7580, 7
    %v7582 = vsub.s32 %v7579, %v7581
    %v7583 = vrot.slane %v7576, %v7582
    %v7585 = vadd.f32 %v7452, %v7583
    %v7586 = vld [vmem:[#allocation3 + $0x30] sm:$0x1]
    %v7587 = vpack.c.bf16 %v7586, %v7586
    %v7588 = vld [vmem:[#allocation2 + $0x1800] sm:$0xff]
    %v7589 = vld [vmem:[#allocation2 + $0x1808] sm:$0xff]
    %v7590 = vld [vmem:[#allocation2 + $0x1810] sm:$0xff]
    %v7591 = vld [vmem:[#allocation2 + $0x1818] sm:$0xff]
    %v7592 = vld [vmem:[#allocation2 + $0x1820] sm:$0xff]
    %v7593 = vld [vmem:[#allocation2 + $0x1828] sm:$0xff]
    %v7594 = vld [vmem:[#allocation2 + $0x1830] sm:$0xff]
    %v7595 = vld [vmem:[#allocation2 + $0x1838] sm:$0xff]
    %v7596 = vld [vmem:[#allocation2 + $0x1840] sm:$0xff]
    %v7597 = vld [vmem:[#allocation2 + $0x1848] sm:$0xff]
    %v7598 = vld [vmem:[#allocation2 + $0x1850] sm:$0xff]
    %v7599 = vld [vmem:[#allocation2 + $0x1858] sm:$0xff]
    %v7600 = vld [vmem:[#allocation2 + $0x1860] sm:$0xff]
    %v7601 = vld [vmem:[#allocation2 + $0x1868] sm:$0xff]
    %v7602 = vld [vmem:[#allocation2 + $0x1870] sm:$0xff]
    %v7603 = vld [vmem:[#allocation2 + $0x1878] sm:$0xff]
    %v7605 = vsel %vm761, %v7587, 0
    %7607 = vmatprep.subr.bf16.mxu0 %v7589
    %7608 = vmatpush1.bf16.msra.mxu0 %v7588
    %7609 = vmatprep.subr.bf16.mxu0 %v7593
    %7610 = vmatpush1.bf16.msra.mxu0 %v7592
    %7611 = vmatprep.subr.bf16.mxu0 %v7597
    %7612 = vmatpush1.bf16.msra.mxu0 %v7596
    %7613 = vmatprep.subr.bf16.mxu0 %v7601
    %7614 = vmatpush1.bf16.msra.mxu0 %v7600
    %7615 = vmatprep.subr.bf16.mxu0 0
    %7616 = vmatpush1.bf16.msra.mxu0 0
    %7617 = vmatprep.subr.bf16.mxu0 0
    %7618 = vmatpush1.bf16.msra.mxu0 0
    %7619 = vmatprep.subr.bf16.mxu0 0
    %7620 = vmatpush1.bf16.msra.mxu0 0
    %7621 = vmatprep.subr.bf16.mxu0 0
    %7622 = vmatpush1.bf16.msra.mxu0 0
    %7623 = vmatprep.subr.bf16.mxu0 0
    %7624 = vmatpush1.bf16.msra.mxu0 0
    %7625 = vmatprep.subr.bf16.mxu0 0
    %7626 = vmatpush1.bf16.msra.mxu0 0
    %7627 = vmatprep.subr.bf16.mxu0 0
    %7628 = vmatpush1.bf16.msra.mxu0 0
    %7629 = vmatprep.subr.bf16.mxu0 0
    %7630 = vmatpush1.bf16.msra.mxu0 0
    %7631 = vmatprep.subr.bf16.mxu0 0
    %7632 = vmatpush1.bf16.msra.mxu0 0
    %7633 = vmatprep.subr.bf16.mxu0 0
    %7634 = vmatpush1.bf16.msra.mxu0 0
    %7635 = vmatprep.subr.bf16.mxu0 0
    %7636 = vmatpush1.bf16.msra.mxu0 0
    %7637 = vmatprep.subr.bf16.mxu0 0
    %7638 = vmatpush1.bf16.msra.mxu0 0
    %7639 = vmatprep.mubr.bf16.mxu0 0
    %7640 = vmatmul.mubr.bf16.gmra.mrb[0].mxu0 %v7605
    %v7641 = vpop.f32.mrb[0].mxu0
    %v7642 = vadd.f32 0.0, %v7641
    %v7643 = vpop.f32.mrb[0].mxu0
    %v7644 = vadd.f32 0.0, %v7643
    %v7645 = vpop.f32.mrb[0].mxu0
    %v7646 = vpop.f32.mrb[0].mxu0
    %7647 = vdwg.mxu0
    %7648 = vmatprep.subr.bf16.mxu0 %v7591
    %7649 = vmatpush1.bf16.msra.mxu0 %v7590
    %7650 = vmatprep.subr.bf16.mxu0 %v7595
    %7651 = vmatpush1.bf16.msra.mxu0 %v7594
    %7652 = vmatprep.subr.bf16.mxu0 %v7599
    %7653 = vmatpush1.bf16.msra.mxu0 %v7598
    %7654 = vmatprep.subr.bf16.mxu0 %v7603
    %7655 = vmatpush1.bf16.msra.mxu0 %v7602
    %7656 = vmatprep.subr.bf16.mxu0 0
    %7657 = vmatpush1.bf16.msra.mxu0 0
    %7658 = vmatprep.subr.bf16.mxu0 0
    %7659 = vmatpush1.bf16.msra.mxu0 0
    %7660 = vmatprep.subr.bf16.mxu0 0
    %7661 = vmatpush1.bf16.msra.mxu0 0
    %7662 = vmatprep.subr.bf16.mxu0 0
    %7663 = vmatpush1.bf16.msra.mxu0 0
    %7664 = vmatprep.subr.bf16.mxu0 0
    %7665 = vmatpush1.bf16.msra.mxu0 0
    %7666 = vmatprep.subr.bf16.mxu0 0
    %7667 = vmatpush1.bf16.msra.mxu0 0
    %7668 = vmatprep.subr.bf16.mxu0 0
    %7669 = vmatpush1.bf16.msra.mxu0 0
    %7670 = vmatprep.subr.bf16.mxu0 0
    %7671 = vmatpush1.bf16.msra.mxu0 0
    %7672 = vmatprep.subr.bf16.mxu0 0
    %7673 = vmatpush1.bf16.msra.mxu0 0
    %7674 = vmatprep.subr.bf16.mxu0 0
    %7675 = vmatpush1.bf16.msra.mxu0 0
    %7676 = vmatprep.subr.bf16.mxu0 0
    %7677 = vmatpush1.bf16.msra.mxu0 0
    %7678 = vmatprep.subr.bf16.mxu0 0
    %7679 = vmatpush1.bf16.msra.mxu0 0
    %7680 = vmatprep.mubr.bf16.mxu0 0
    %7681 = vmatmul.mubr.bf16.gmra.mrb[0].mxu0 %v7605
    %v7682 = vpop.f32.mrb[0].mxu0
    %v7683 = vadd.f32 0.0, %v7682
    %v7684 = vpop.f32.mrb[0].mxu0
    %v7685 = vadd.f32 0.0, %v7684
    %v7686 = vpop.f32.mrb[0].mxu0
    %v7687 = vpop.f32.mrb[0].mxu0
    %7688 = vdwg.mxu0
    %v7693 = vcombine.low %v7642, %v7644
    %v7694 = vcombine.low %v7683, %v7685
    %v7696 = vunpack.c.l.s4 1966171168
    %v7697 = vunpack.c.0.s8 %v7696
    %v7698 = vlaneseq
    %v7699 = vshrl.u32 %v7698, 7
    %v7700 = vsub.s32 %v7697, %v7699
    %v7701 = vrot.slane %v7693, %v7700
    %v7703 = vunpack.c.l.s4 1966171168
    %v7704 = vunpack.c.0.s8 %v7703
    %v7705 = vlaneseq
    %v7706 = vshrl.u32 %v7705, 7
    %v7707 = vsub.s32 %v7704, %v7706
    %v7708 = vrot.slane %v7694, %v7707
    %v7709 = vcombine.low %v7701, %v7708
    %v7711 = vunpack.c.l.s4 1966171168
    %v7712 = vunpack.c.0.s8 %v7711
    %v7713 = vlaneseq
    %v7714 = vshrl.u32 %v7713, 7
    %v7715 = vsub.s32 %v7712, %v7714
    %v7716 = vrot.slane %v7709, %v7715
    %v7718 = vadd.f32 %v7585, %v7716
    %v7719 = vld [vmem:[#allocation3 + $0x31] sm:$0x1]
    %v7720 = vpack.c.bf16 %v7719, %v7719
    %v7721 = vld [vmem:[#allocation2 + $0x1880] sm:$0xff]
    %v7722 = vld [vmem:[#allocation2 + $0x1888] sm:$0xff]
    %v7723 = vld [vmem:[#allocation2 + $0x1890] sm:$0xff]
    %v7724 = vld [vmem:[#allocation2 + $0x1898] sm:$0xff]
    %v7725 = vld [vmem:[#allocation2 + $0x18a0] sm:$0xff]
    %v7726 = vld [vmem:[#allocation2 + $0x18a8] sm:$0xff]
    %v7727 = vld [vmem:[#allocation2 + $0x18b0] sm:$0xff]
    %v7728 = vld [vmem:[#allocation2 + $0x18b8] sm:$0xff]
    %v7729 = vld [vmem:[#allocation2 + $0x18c0] sm:$0xff]
    %v7730 = vld [vmem:[#allocation2 + $0x18c8] sm:$0xff]
    %v7731 = vld [vmem:[#allocation2 + $0x18d0] sm:$0xff]
    %v7732 = vld [vmem:[#allocation2 + $0x18d8] sm:$0xff]
    %v7733 = vld [vmem:[#allocation2 + $0x18e0] sm:$0xff]
    %v7734 = vld [vmem:[#allocation2 + $0x18e8] sm:$0xff]
    %v7735 = vld [vmem:[#allocation2 + $0x18f0] sm:$0xff]
    %v7736 = vld [vmem:[#allocation2 + $0x18f8] sm:$0xff]
    %v7738 = vsel %vm761, %v7720, 0
    %7740 = vmatprep.subr.bf16.mxu0 %v7722
    %7741 = vmatpush1.bf16.msra.mxu0 %v7721
    %7742 = vmatprep.subr.bf16.mxu0 %v7726
    %7743 = vmatpush1.bf16.msra.mxu0 %v7725
    %7744 = vmatprep.subr.bf16.mxu0 %v7730
    %7745 = vmatpush1.bf16.msra.mxu0 %v7729
    %7746 = vmatprep.subr.bf16.mxu0 %v7734
    %7747 = vmatpush1.bf16.msra.mxu0 %v7733
    %7748 = vmatprep.subr.bf16.mxu0 0
    %7749 = vmatpush1.bf16.msra.mxu0 0
    %7750 = vmatprep.subr.bf16.mxu0 0
    %7751 = vmatpush1.bf16.msra.mxu0 0
    %7752 = vmatprep.subr.bf16.mxu0 0
    %7753 = vmatpush1.bf16.msra.mxu0 0
    %7754 = vmatprep.subr.bf16.mxu0 0
    %7755 = vmatpush1.bf16.msra.mxu0 0
    %7756 = vmatprep.subr.bf16.mxu0 0
    %7757 = vmatpush1.bf16.msra.mxu0 0
    %7758 = vmatprep.subr.bf16.mxu0 0
    %7759 = vmatpush1.bf16.msra.mxu0 0
    %7760 = vmatprep.subr.bf16.mxu0 0
    %7761 = vmatpush1.bf16.msra.mxu0 0
    %7762 = vmatprep.subr.bf16.mxu0 0
    %7763 = vmatpush1.bf16.msra.mxu0 0
    %7764 = vmatprep.subr.bf16.mxu0 0
    %7765 = vmatpush1.bf16.msra.mxu0 0
    %7766 = vmatprep.subr.bf16.mxu0 0
    %7767 = vmatpush1.bf16.msra.mxu0 0
    %7768 = vmatprep.subr.bf16.mxu0 0
    %7769 = vmatpush1.bf16.msra.mxu0 0
    %7770 = vmatprep.subr.bf16.mxu0 0
    %7771 = vmatpush1.bf16.msra.mxu0 0
    %7772 = vmatprep.mubr.bf16.mxu0 0
    %7773 = vmatmul.mubr.bf16.gmra.mrb[0].mxu0 %v7738
    %v7774 = vpop.f32.mrb[0].mxu0
    %v7775 = vadd.f32 0.0, %v7774
    %v7776 = vpop.f32.mrb[0].mxu0
    %v7777 = vadd.f32 0.0, %v7776
    %v7778 = vpop.f32.mrb[0].mxu0
    %v7779 = vpop.f32.mrb[0].mxu0
    %7780 = vdwg.mxu0
    %7781 = vmatprep.subr.bf16.mxu0 %v7724
    %7782 = vmatpush1.bf16.msra.mxu0 %v7723
    %7783 = vmatprep.subr.bf16.mxu0 %v7728
    %7784 = vmatpush1.bf16.msra.mxu0 %v7727
    %7785 = vmatprep.subr.bf16.mxu0 %v7732
    %7786 = vmatpush1.bf16.msra.mxu0 %v7731
    %7787 = vmatprep.subr.bf16.mxu0 %v7736
    %7788 = vmatpush1.bf16.msra.mxu0 %v7735
    %7789 = vmatprep.subr.bf16.mxu0 0
    %7790 = vmatpush1.bf16.msra.mxu0 0
    %7791 = vmatprep.subr.bf16.mxu0 0
    %7792 = vmatpush1.bf16.msra.mxu0 0
    %7793 = vmatprep.subr.bf16.mxu0 0
    %7794 = vmatpush1.bf16.msra.mxu0 0
    %7795 = vmatprep.subr.bf16.mxu0 0
    %7796 = vmatpush1.bf16.msra.mxu0 0
    %7797 = vmatprep.subr.bf16.mxu0 0
    %7798 = vmatpush1.bf16.msra.mxu0 0
    %7799 = vmatprep.subr.bf16.mxu0 0
    %7800 = vmatpush1.bf16.msra.mxu0 0
    %7801 = vmatprep.subr.bf16.mxu0 0
    %7802 = vmatpush1.bf16.msra.mxu0 0
    %7803 = vmatprep.subr.bf16.mxu0 0
    %7804 = vmatpush1.bf16.msra.mxu0 0
    %7805 = vmatprep.subr.bf16.mxu0 0
    %7806 = vmatpush1.bf16.msra.mxu0 0
    %7807 = vmatprep.subr.bf16.mxu0 0
    %7808 = vmatpush1.bf16.msra.mxu0 0
    %7809 = vmatprep.subr.bf16.mxu0 0
    %7810 = vmatpush1.bf16.msra.mxu0 0
    %7811 = vmatprep.subr.bf16.mxu0 0
    %7812 = vmatpush1.bf16.msra.mxu0 0
    %7813 = vmatprep.mubr.bf16.mxu0 0
    %7814 = vmatmul.mubr.bf16.gmra.mrb[0].mxu0 %v7738
    %v7815 = vpop.f32.mrb[0].mxu0
    %v7816 = vadd.f32 0.0, %v7815
    %v7817 = vpop.f32.mrb[0].mxu0
    %v7818 = vadd.f32 0.0, %v7817
    %v7819 = vpop.f32.mrb[0].mxu0
    %v7820 = vpop.f32.mrb[0].mxu0
    %7821 = vdwg.mxu0
    %v7826 = vcombine.low %v7775, %v7777
    %v7827 = vcombine.low %v7816, %v7818
    %v7829 = vunpack.c.l.s4 1966171168
    %v7830 = vunpack.c.0.s8 %v7829
    %v7831 = vlaneseq
    %v7832 = vshrl.u32 %v7831, 7
    %v7833 = vsub.s32 %v7830, %v7832
    %v7834 = vrot.slane %v7826, %v7833
    %v7836 = vunpack.c.l.s4 1966171168
    %v7837 = vunpack.c.0.s8 %v7836
    %v7838 = vlaneseq
    %v7839 = vshrl.u32 %v7838, 7
    %v7840 = vsub.s32 %v7837, %v7839
    %v7841 = vrot.slane %v7827, %v7840
    %v7842 = vcombine.low %v7834, %v7841
    %v7844 = vunpack.c.l.s4 1966171168
    %v7845 = vunpack.c.0.s8 %v7844
    %v7846 = vlaneseq
    %v7847 = vshrl.u32 %v7846, 7
    %v7848 = vsub.s32 %v7845, %v7847
    %v7849 = vrot.slane %v7842, %v7848
    %v7851 = vadd.f32 %v7718, %v7849
    %v7852 = vld [vmem:[#allocation3 + $0x32] sm:$0x1]
    %v7853 = vpack.c.bf16 %v7852, %v7852
    %v7854 = vld [vmem:[#allocation2 + $0x1900] sm:$0xff]
    %v7855 = vld [vmem:[#allocation2 + $0x1908] sm:$0xff]
    %v7856 = vld [vmem:[#allocation2 + $0x1910] sm:$0xff]
    %v7857 = vld [vmem:[#allocation2 + $0x1918] sm:$0xff]
    %v7858 = vld [vmem:[#allocation2 + $0x1920] sm:$0xff]
    %v7859 = vld [vmem:[#allocation2 + $0x1928] sm:$0xff]
    %v7860 = vld [vmem:[#allocation2 + $0x1930] sm:$0xff]
    %v7861 = vld [vmem:[#allocation2 + $0x1938] sm:$0xff]
    %v7862 = vld [vmem:[#allocation2 + $0x1940] sm:$0xff]
    %v7863 = vld [vmem:[#allocation2 + $0x1948] sm:$0xff]
    %v7864 = vld [vmem:[#allocation2 + $0x1950] sm:$0xff]
    %v7865 = vld [vmem:[#allocation2 + $0x1958] sm:$0xff]
    %v7866 = vld [vmem:[#allocation2 + $0x1960] sm:$0xff]
    %v7867 = vld [vmem:[#allocation2 + $0x1968] sm:$0xff]
    %v7868 = vld [vmem:[#allocation2 + $0x1970] sm:$0xff]
    %v7869 = vld [vmem:[#allocation2 + $0x1978] sm:$0xff]
    %v7871 = vsel %vm761, %v7853, 0
    %7873 = vmatprep.subr.bf16.mxu0 %v7855
    %7874 = vmatpush1.bf16.msra.mxu0 %v7854
    %7875 = vmatprep.subr.bf16.mxu0 %v7859
    %7876 = vmatpush1.bf16.msra.mxu0 %v7858
    %7877 = vmatprep.subr.bf16.mxu0 %v7863
    %7878 = vmatpush1.bf16.msra.mxu0 %v7862
    %7879 = vmatprep.subr.bf16.mxu0 %v7867
    %7880 = vmatpush1.bf16.msra.mxu0 %v7866
    %7881 = vmatprep.subr.bf16.mxu0 0
    %7882 = vmatpush1.bf16.msra.mxu0 0
    %7883 = vmatprep.subr.bf16.mxu0 0
    %7884 = vmatpush1.bf16.msra.mxu0 0
    %7885 = vmatprep.subr.bf16.mxu0 0
    %7886 = vmatpush1.bf16.msra.mxu0 0
    %7887 = vmatprep.subr.bf16.mxu0 0
    %7888 = vmatpush1.bf16.msra.mxu0 0
    %7889 = vmatprep.subr.bf16.mxu0 0
    %7890 = vmatpush1.bf16.msra.mxu0 0
    %7891 = vmatprep.subr.bf16.mxu0 0
    %7892 = vmatpush1.bf16.msra.mxu0 0
    %7893 = vmatprep.subr.bf16.mxu0 0
    %7894 = vmatpush1.bf16.msra.mxu0 0
    %7895 = vmatprep.subr.bf16.mxu0 0
    %7896 = vmatpush1.bf16.msra.mxu0 0
    %7897 = vmatprep.subr.bf16.mxu0 0
    %7898 = vmatpush1.bf16.msra.mxu0 0
    %7899 = vmatprep.subr.bf16.mxu0 0
    %7900 = vmatpush1.bf16.msra.mxu0 0
    %7901 = vmatprep.subr.bf16.mxu0 0
    %7902 = vmatpush1.bf16.msra.mxu0 0
    %7903 = vmatprep.subr.bf16.mxu0 0
    %7904 = vmatpush1.bf16.msra.mxu0 0
    %7905 = vmatprep.mubr.bf16.mxu0 0
    %7906 = vmatmul.mubr.bf16.gmra.mrb[0].mxu0 %v7871
    %v7907 = vpop.f32.mrb[0].mxu0
    %v7908 = vadd.f32 0.0, %v7907
    %v7909 = vpop.f32.mrb[0].mxu0
    %v7910 = vadd.f32 0.0, %v7909
    %v7911 = vpop.f32.mrb[0].mxu0
    %v7912 = vpop.f32.mrb[0].mxu0
    %7913 = vdwg.mxu0
    %7914 = vmatprep.subr.bf16.mxu0 %v7857
    %7915 = vmatpush1.bf16.msra.mxu0 %v7856
    %7916 = vmatprep.subr.bf16.mxu0 %v7861
    %7917 = vmatpush1.bf16.msra.mxu0 %v7860
    %7918 = vmatprep.subr.bf16.mxu0 %v7865
    %7919 = vmatpush1.bf16.msra.mxu0 %v7864
    %7920 = vmatprep.subr.bf16.mxu0 %v7869
    %7921 = vmatpush1.bf16.msra.mxu0 %v7868
    %7922 = vmatprep.subr.bf16.mxu0 0
    %7923 = vmatpush1.bf16.msra.mxu0 0
    %7924 = vmatprep.subr.bf16.mxu0 0
    %7925 = vmatpush1.bf16.msra.mxu0 0
    %7926 = vmatprep.subr.bf16.mxu0 0
    %7927 = vmatpush1.bf16.msra.mxu0 0
    %7928 = vmatprep.subr.bf16.mxu0 0
    %7929 = vmatpush1.bf16.msra.mxu0 0
    %7930 = vmatprep.subr.bf16.mxu0 0
    %7931 = vmatpush1.bf16.msra.mxu0 0
    %7932 = vmatprep.subr.bf16.mxu0 0
    %7933 = vmatpush1.bf16.msra.mxu0 0
    %7934 = vmatprep.subr.bf16.mxu0 0
    %7935 = vmatpush1.bf16.msra.mxu0 0
    %7936 = vmatprep.subr.bf16.mxu0 0
    %7937 = vmatpush1.bf16.msra.mxu0 0
    %7938 = vmatprep.subr.bf16.mxu0 0
    %7939 = vmatpush1.bf16.msra.mxu0 0
    %7940 = vmatprep.subr.bf16.mxu0 0
    %7941 = vmatpush1.bf16.msra.mxu0 0
    %7942 = vmatprep.subr.bf16.mxu0 0
    %7943 = vmatpush1.bf16.msra.mxu0 0
    %7944 = vmatprep.subr.bf16.mxu0 0
    %7945 = vmatpush1.bf16.msra.mxu0 0
    %7946 = vmatprep.mubr.bf16.mxu0 0
    %7947 = vmatmul.mubr.bf16.gmra.mrb[0].mxu0 %v7871
    %v7948 = vpop.f32.mrb[0].mxu0
    %v7949 = vadd.f32 0.0, %v7948
    %v7950 = vpop.f32.mrb[0].mxu0
    %v7951 = vadd.f32 0.0, %v7950
    %v7952 = vpop.f32.mrb[0].mxu0
    %v7953 = vpop.f32.mrb[0].mxu0
    %7954 = vdwg.mxu0
    %v7959 = vcombine.low %v7908, %v7910
    %v7960 = vcombine.low %v7949, %v7951
    %v7962 = vunpack.c.l.s4 1966171168
    %v7963 = vunpack.c.0.s8 %v7962
    %v7964 = vlaneseq
    %v7965 = vshrl.u32 %v7964, 7
    %v7966 = vsub.s32 %v7963, %v7965
    %v7967 = vrot.slane %v7959, %v7966
    %v7969 = vunpack.c.l.s4 1966171168
    %v7970 = vunpack.c.0.s8 %v7969
    %v7971 = vlaneseq
    %v7972 = vshrl.u32 %v7971, 7
    %v7973 = vsub.s32 %v7970, %v7972
    %v7974 = vrot.slane %v7960, %v7973
    %v7975 = vcombine.low %v7967, %v7974
    %v7977 = vunpack.c.l.s4 1966171168
    %v7978 = vunpack.c.0.s8 %v7977
    %v7979 = vlaneseq
    %v7980 = vshrl.u32 %v7979, 7
    %v7981 = vsub.s32 %v7978, %v7980
    %v7982 = vrot.slane %v7975, %v7981
    %v7984 = vadd.f32 %v7851, %v7982
    %v7985 = vld [vmem:[#allocation3 + $0x33] sm:$0x1]
    %v7986 = vpack.c.bf16 %v7985, %v7985
    %v7987 = vld [vmem:[#allocation2 + $0x1980] sm:$0xff]
    %v7988 = vld [vmem:[#allocation2 + $0x1988] sm:$0xff]
    %v7989 = vld [vmem:[#allocation2 + $0x1990] sm:$0xff]
    %v7990 = vld [vmem:[#allocation2 + $0x1998] sm:$0xff]
    %v7991 = vld [vmem:[#allocation2 + $0x19a0] sm:$0xff]
    %v7992 = vld [vmem:[#allocation2 + $0x19a8] sm:$0xff]
    %v7993 = vld [vmem:[#allocation2 + $0x19b0] sm:$0xff]
    %v7994 = vld [vmem:[#allocation2 + $0x19b8] sm:$0xff]
    %v7995 = vld [vmem:[#allocation2 + $0x19c0] sm:$0xff]
    %v7996 = vld [vmem:[#allocation2 + $0x19c8] sm:$0xff]
    %v7997 = vld [vmem:[#allocation2 + $0x19d0] sm:$0xff]
    %v7998 = vld [vmem:[#allocation2 + $0x19d8] sm:$0xff]
    %v7999 = vld [vmem:[#allocation2 + $0x19e0] sm:$0xff]
    %v8000 = vld [vmem:[#allocation2 + $0x19e8] sm:$0xff]
    %v8001 = vld [vmem:[#allocation2 + $0x19f0] sm:$0xff]
    %v8002 = vld [vmem:[#allocation2 + $0x19f8] sm:$0xff]
    %v8004 = vsel %vm761, %v7986, 0
    %8006 = vmatprep.subr.bf16.mxu0 %v7988
    %8007 = vmatpush1.bf16.msra.mxu0 %v7987
    %8008 = vmatprep.subr.bf16.mxu0 %v7992
    %8009 = vmatpush1.bf16.msra.mxu0 %v7991
    %8010 = vmatprep.subr.bf16.mxu0 %v7996
    %8011 = vmatpush1.bf16.msra.mxu0 %v7995
    %8012 = vmatprep.subr.bf16.mxu0 %v8000
    %8013 = vmatpush1.bf16.msra.mxu0 %v7999
    %8014 = vmatprep.subr.bf16.mxu0 0
    %8015 = vmatpush1.bf16.msra.mxu0 0
    %8016 = vmatprep.subr.bf16.mxu0 0
    %8017 = vmatpush1.bf16.msra.mxu0 0
    %8018 = vmatprep.subr.bf16.mxu0 0
    %8019 = vmatpush1.bf16.msra.mxu0 0
    %8020 = vmatprep.subr.bf16.mxu0 0
    %8021 = vmatpush1.bf16.msra.mxu0 0
    %8022 = vmatprep.subr.bf16.mxu0 0
    %8023 = vmatpush1.bf16.msra.mxu0 0
    %8024 = vmatprep.subr.bf16.mxu0 0
    %8025 = vmatpush1.bf16.msra.mxu0 0
    %8026 = vmatprep.subr.bf16.mxu0 0
    %8027 = vmatpush1.bf16.msra.mxu0 0
    %8028 = vmatprep.subr.bf16.mxu0 0
    %8029 = vmatpush1.bf16.msra.mxu0 0
    %8030 = vmatprep.subr.bf16.mxu0 0
    %8031 = vmatpush1.bf16.msra.mxu0 0
    %8032 = vmatprep.subr.bf16.mxu0 0
    %8033 = vmatpush1.bf16.msra.mxu0 0
    %8034 = vmatprep.subr.bf16.mxu0 0
    %8035 = vmatpush1.bf16.msra.mxu0 0
    %8036 = vmatprep.subr.bf16.mxu0 0
    %8037 = vmatpush1.bf16.msra.mxu0 0
    %8038 = vmatprep.mubr.bf16.mxu0 0
    %8039 = vmatmul.mubr.bf16.gmra.mrb[0].mxu0 %v8004
    %v8040 = vpop.f32.mrb[0].mxu0
    %v8041 = vadd.f32 0.0, %v8040
    %v8042 = vpop.f32.mrb[0].mxu0
    %v8043 = vadd.f32 0.0, %v8042
    %v8044 = vpop.f32.mrb[0].mxu0
    %v8045 = vpop.f32.mrb[0].mxu0
    %8046 = vdwg.mxu0
    %8047 = vmatprep.subr.bf16.mxu0 %v7990
    %8048 = vmatpush1.bf16.msra.mxu0 %v7989
    %8049 = vmatprep.subr.bf16.mxu0 %v7994
    %8050 = vmatpush1.bf16.msra.mxu0 %v7993
    %8051 = vmatprep.subr.bf16.mxu0 %v7998
    %8052 = vmatpush1.bf16.msra.mxu0 %v7997
    %8053 = vmatprep.subr.bf16.mxu0 %v8002
    %8054 = vmatpush1.bf16.msra.mxu0 %v8001
    %8055 = vmatprep.subr.bf16.mxu0 0
    %8056 = vmatpush1.bf16.msra.mxu0 0
    %8057 = vmatprep.subr.bf16.mxu0 0
    %8058 = vmatpush1.bf16.msra.mxu0 0
    %8059 = vmatprep.subr.bf16.mxu0 0
    %8060 = vmatpush1.bf16.msra.mxu0 0
    %8061 = vmatprep.subr.bf16.mxu0 0
    %8062 = vmatpush1.bf16.msra.mxu0 0
    %8063 = vmatprep.subr.bf16.mxu0 0
    %8064 = vmatpush1.bf16.msra.mxu0 0
    %8065 = vmatprep.subr.bf16.mxu0 0
    %8066 = vmatpush1.bf16.msra.mxu0 0
    %8067 = vmatprep.subr.bf16.mxu0 0
    %8068 = vmatpush1.bf16.msra.mxu0 0
    %8069 = vmatprep.subr.bf16.mxu0 0
    %8070 = vmatpush1.bf16.msra.mxu0 0
    %8071 = vmatprep.subr.bf16.mxu0 0
    %8072 = vmatpush1.bf16.msra.mxu0 0
    %8073 = vmatprep.subr.bf16.mxu0 0
    %8074 = vmatpush1.bf16.msra.mxu0 0
    %8075 = vmatprep.subr.bf16.mxu0 0
    %8076 = vmatpush1.bf16.msra.mxu0 0
    %8077 = vmatprep.subr.bf16.mxu0 0
    %8078 = vmatpush1.bf16.msra.mxu0 0
    %8079 = vmatprep.mubr.bf16.mxu0 0
    %8080 = vmatmul.mubr.bf16.gmra.mrb[0].mxu0 %v8004
    %v8081 = vpop.f32.mrb[0].mxu0
    %v8082 = vadd.f32 0.0, %v8081
    %v8083 = vpop.f32.mrb[0].mxu0
    %v8084 = vadd.f32 0.0, %v8083
    %v8085 = vpop.f32.mrb[0].mxu0
    %v8086 = vpop.f32.mrb[0].mxu0
    %8087 = vdwg.mxu0
    %v8092 = vcombine.low %v8041, %v8043
    %v8093 = vcombine.low %v8082, %v8084
    %v8095 = vunpack.c.l.s4 1966171168
    %v8096 = vunpack.c.0.s8 %v8095
    %v8097 = vlaneseq
    %v8098 = vshrl.u32 %v8097, 7
    %v8099 = vsub.s32 %v8096, %v8098
    %v8100 = vrot.slane %v8092, %v8099
    %v8102 = vunpack.c.l.s4 1966171168
    %v8103 = vunpack.c.0.s8 %v8102
    %v8104 = vlaneseq
    %v8105 = vshrl.u32 %v8104, 7
    %v8106 = vsub.s32 %v8103, %v8105
    %v8107 = vrot.slane %v8093, %v8106
    %v8108 = vcombine.low %v8100, %v8107
    %v8110 = vunpack.c.l.s4 1966171168
    %v8111 = vunpack.c.0.s8 %v8110
    %v8112 = vlaneseq
    %v8113 = vshrl.u32 %v8112, 7
    %v8114 = vsub.s32 %v8111, %v8113
    %v8115 = vrot.slane %v8108, %v8114
    %v8117 = vadd.f32 %v7984, %v8115
    %v8118 = vld [vmem:[#allocation3 + $0x34] sm:$0x1]
    %v8119 = vpack.c.bf16 %v8118, %v8118
    %v8120 = vld [vmem:[#allocation2 + $0x1a00] sm:$0xff]
    %v8121 = vld [vmem:[#allocation2 + $0x1a08] sm:$0xff]
    %v8122 = vld [vmem:[#allocation2 + $0x1a10] sm:$0xff]
    %v8123 = vld [vmem:[#allocation2 + $0x1a18] sm:$0xff]
    %v8124 = vld [vmem:[#allocation2 + $0x1a20] sm:$0xff]
    %v8125 = vld [vmem:[#allocation2 + $0x1a28] sm:$0xff]
    %v8126 = vld [vmem:[#allocation2 + $0x1a30] sm:$0xff]
    %v8127 = vld [vmem:[#allocation2 + $0x1a38] sm:$0xff]
    %v8128 = vld [vmem:[#allocation2 + $0x1a40] sm:$0xff]
    %v8129 = vld [vmem:[#allocation2 + $0x1a48] sm:$0xff]
    %v8130 = vld [vmem:[#allocation2 + $0x1a50] sm:$0xff]
    %v8131 = vld [vmem:[#allocation2 + $0x1a58] sm:$0xff]
    %v8132 = vld [vmem:[#allocation2 + $0x1a60] sm:$0xff]
    %v8133 = vld [vmem:[#allocation2 + $0x1a68] sm:$0xff]
    %v8134 = vld [vmem:[#allocation2 + $0x1a70] sm:$0xff]
    %v8135 = vld [vmem:[#allocation2 + $0x1a78] sm:$0xff]
    %v8137 = vsel %vm761, %v8119, 0
    %8139 = vmatprep.subr.bf16.mxu0 %v8121
    %8140 = vmatpush1.bf16.msra.mxu0 %v8120
    %8141 = vmatprep.subr.bf16.mxu0 %v8125
    %8142 = vmatpush1.bf16.msra.mxu0 %v8124
    %8143 = vmatprep.subr.bf16.mxu0 %v8129
    %8144 = vmatpush1.bf16.msra.mxu0 %v8128
    %8145 = vmatprep.subr.bf16.mxu0 %v8133
    %8146 = vmatpush1.bf16.msra.mxu0 %v8132
    %8147 = vmatprep.subr.bf16.mxu0 0
    %8148 = vmatpush1.bf16.msra.mxu0 0
    %8149 = vmatprep.subr.bf16.mxu0 0
    %8150 = vmatpush1.bf16.msra.mxu0 0
    %8151 = vmatprep.subr.bf16.mxu0 0
    %8152 = vmatpush1.bf16.msra.mxu0 0
    %8153 = vmatprep.subr.bf16.mxu0 0
    %8154 = vmatpush1.bf16.msra.mxu0 0
    %8155 = vmatprep.subr.bf16.mxu0 0
    %8156 = vmatpush1.bf16.msra.mxu0 0
    %8157 = vmatprep.subr.bf16.mxu0 0
    %8158 = vmatpush1.bf16.msra.mxu0 0
    %8159 = vmatprep.subr.bf16.mxu0 0
    %8160 = vmatpush1.bf16.msra.mxu0 0
    %8161 = vmatprep.subr.bf16.mxu0 0
    %8162 = vmatpush1.bf16.msra.mxu0 0
    %8163 = vmatprep.subr.bf16.mxu0 0
    %8164 = vmatpush1.bf16.msra.mxu0 0
    %8165 = vmatprep.subr.bf16.mxu0 0
    %8166 = vmatpush1.bf16.msra.mxu0 0
    %8167 = vmatprep.subr.bf16.mxu0 0
    %8168 = vmatpush1.bf16.msra.mxu0 0
    %8169 = vmatprep.subr.bf16.mxu0 0
    %8170 = vmatpush1.bf16.msra.mxu0 0
    %8171 = vmatprep.mubr.bf16.mxu0 0
    %8172 = vmatmul.mubr.bf16.gmra.mrb[0].mxu0 %v8137
    %v8173 = vpop.f32.mrb[0].mxu0
    %v8174 = vadd.f32 0.0, %v8173
    %v8175 = vpop.f32.mrb[0].mxu0
    %v8176 = vadd.f32 0.0, %v8175
    %v8177 = vpop.f32.mrb[0].mxu0
    %v8178 = vpop.f32.mrb[0].mxu0
    %8179 = vdwg.mxu0
    %8180 = vmatprep.subr.bf16.mxu0 %v8123
    %8181 = vmatpush1.bf16.msra.mxu0 %v8122
    %8182 = vmatprep.subr.bf16.mxu0 %v8127
    %8183 = vmatpush1.bf16.msra.mxu0 %v8126
    %8184 = vmatprep.subr.bf16.mxu0 %v8131
    %8185 = vmatpush1.bf16.msra.mxu0 %v8130
    %8186 = vmatprep.subr.bf16.mxu0 %v8135
    %8187 = vmatpush1.bf16.msra.mxu0 %v8134
    %8188 = vmatprep.subr.bf16.mxu0 0
    %8189 = vmatpush1.bf16.msra.mxu0 0
    %8190 = vmatprep.subr.bf16.mxu0 0
    %8191 = vmatpush1.bf16.msra.mxu0 0
    %8192 = vmatprep.subr.bf16.mxu0 0
    %8193 = vmatpush1.bf16.msra.mxu0 0
    %8194 = vmatprep.subr.bf16.mxu0 0
    %8195 = vmatpush1.bf16.msra.mxu0 0
    %8196 = vmatprep.subr.bf16.mxu0 0
    %8197 = vmatpush1.bf16.msra.mxu0 0
    %8198 = vmatprep.subr.bf16.mxu0 0
    %8199 = vmatpush1.bf16.msra.mxu0 0
    %8200 = vmatprep.subr.bf16.mxu0 0
    %8201 = vmatpush1.bf16.msra.mxu0 0
    %8202 = vmatprep.subr.bf16.mxu0 0
    %8203 = vmatpush1.bf16.msra.mxu0 0
    %8204 = vmatprep.subr.bf16.mxu0 0
    %8205 = vmatpush1.bf16.msra.mxu0 0
    %8206 = vmatprep.subr.bf16.mxu0 0
    %8207 = vmatpush1.bf16.msra.mxu0 0
    %8208 = vmatprep.subr.bf16.mxu0 0
    %8209 = vmatpush1.bf16.msra.mxu0 0
    %8210 = vmatprep.subr.bf16.mxu0 0
    %8211 = vmatpush1.bf16.msra.mxu0 0
    %8212 = vmatprep.mubr.bf16.mxu0 0
    %8213 = vmatmul.mubr.bf16.gmra.mrb[0].mxu0 %v8137
    %v8214 = vpop.f32.mrb[0].mxu0
    %v8215 = vadd.f32 0.0, %v8214
    %v8216 = vpop.f32.mrb[0].mxu0
    %v8217 = vadd.f32 0.0, %v8216
    %v8218 = vpop.f32.mrb[0].mxu0
    %v8219 = vpop.f32.mrb[0].mxu0
    %8220 = vdwg.mxu0
    %v8225 = vcombine.low %v8174, %v8176
    %v8226 = vcombine.low %v8215, %v8217
    %v8228 = vunpack.c.l.s4 1966171168
    %v8229 = vunpack.c.0.s8 %v8228
    %v8230 = vlaneseq
    %v8231 = vshrl.u32 %v8230, 7
    %v8232 = vsub.s32 %v8229, %v8231
    %v8233 = vrot.slane %v8225, %v8232
    %v8235 = vunpack.c.l.s4 1966171168
    %v8236 = vunpack.c.0.s8 %v8235
    %v8237 = vlaneseq
    %v8238 = vshrl.u32 %v8237, 7
    %v8239 = vsub.s32 %v8236, %v8238
    %v8240 = vrot.slane %v8226, %v8239
    %v8241 = vcombine.low %v8233, %v8240
    %v8243 = vunpack.c.l.s4 1966171168
    %v8244 = vunpack.c.0.s8 %v8243
    %v8245 = vlaneseq
    %v8246 = vshrl.u32 %v8245, 7
    %v8247 = vsub.s32 %v8244, %v8246
    %v8248 = vrot.slane %v8241, %v8247
    %v8250 = vadd.f32 %v8117, %v8248
    %v8251 = vld [vmem:[#allocation3 + $0x35] sm:$0x1]
    %v8252 = vpack.c.bf16 %v8251, %v8251
    %v8253 = vld [vmem:[#allocation2 + $0x1a80] sm:$0xff]
    %v8254 = vld [vmem:[#allocation2 + $0x1a88] sm:$0xff]
    %v8255 = vld [vmem:[#allocation2 + $0x1a90] sm:$0xff]
    %v8256 = vld [vmem:[#allocation2 + $0x1a98] sm:$0xff]
    %v8257 = vld [vmem:[#allocation2 + $0x1aa0] sm:$0xff]
    %v8258 = vld [vmem:[#allocation2 + $0x1aa8] sm:$0xff]
    %v8259 = vld [vmem:[#allocation2 + $0x1ab0] sm:$0xff]
    %v8260 = vld [vmem:[#allocation2 + $0x1ab8] sm:$0xff]
    %v8261 = vld [vmem:[#allocation2 + $0x1ac0] sm:$0xff]
    %v8262 = vld [vmem:[#allocation2 + $0x1ac8] sm:$0xff]
    %v8263 = vld [vmem:[#allocation2 + $0x1ad0] sm:$0xff]
    %v8264 = vld [vmem:[#allocation2 + $0x1ad8] sm:$0xff]
    %v8265 = vld [vmem:[#allocation2 + $0x1ae0] sm:$0xff]
    %v8266 = vld [vmem:[#allocation2 + $0x1ae8] sm:$0xff]
    %v8267 = vld [vmem:[#allocation2 + $0x1af0] sm:$0xff]
    %v8268 = vld [vmem:[#allocation2 + $0x1af8] sm:$0xff]
    %v8270 = vsel %vm761, %v8252, 0
    %8272 = vmatprep.subr.bf16.mxu0 %v8254
    %8273 = vmatpush1.bf16.msra.mxu0 %v8253
    %8274 = vmatprep.subr.bf16.mxu0 %v8258
    %8275 = vmatpush1.bf16.msra.mxu0 %v8257
    %8276 = vmatprep.subr.bf16.mxu0 %v8262
    %8277 = vmatpush1.bf16.msra.mxu0 %v8261
    %8278 = vmatprep.subr.bf16.mxu0 %v8266
    %8279 = vmatpush1.bf16.msra.mxu0 %v8265
    %8280 = vmatprep.subr.bf16.mxu0 0
    %8281 = vmatpush1.bf16.msra.mxu0 0
    %8282 = vmatprep.subr.bf16.mxu0 0
    %8283 = vmatpush1.bf16.msra.mxu0 0
    %8284 = vmatprep.subr.bf16.mxu0 0
    %8285 = vmatpush1.bf16.msra.mxu0 0
    %8286 = vmatprep.subr.bf16.mxu0 0
    %8287 = vmatpush1.bf16.msra.mxu0 0
    %8288 = vmatprep.subr.bf16.mxu0 0
    %8289 = vmatpush1.bf16.msra.mxu0 0
    %8290 = vmatprep.subr.bf16.mxu0 0
    %8291 = vmatpush1.bf16.msra.mxu0 0
    %8292 = vmatprep.subr.bf16.mxu0 0
    %8293 = vmatpush1.bf16.msra.mxu0 0
    %8294 = vmatprep.subr.bf16.mxu0 0
    %8295 = vmatpush1.bf16.msra.mxu0 0
    %8296 = vmatprep.subr.bf16.mxu0 0
    %8297 = vmatpush1.bf16.msra.mxu0 0
    %8298 = vmatprep.subr.bf16.mxu0 0
    %8299 = vmatpush1.bf16.msra.mxu0 0
    %8300 = vmatprep.subr.bf16.mxu0 0
    %8301 = vmatpush1.bf16.msra.mxu0 0
    %8302 = vmatprep.subr.bf16.mxu0 0
    %8303 = vmatpush1.bf16.msra.mxu0 0
    %8304 = vmatprep.mubr.bf16.mxu0 0
    %8305 = vmatmul.mubr.bf16.gmra.mrb[0].mxu0 %v8270
    %v8306 = vpop.f32.mrb[0].mxu0
    %v8307 = vadd.f32 0.0, %v8306
    %v8308 = vpop.f32.mrb[0].mxu0
    %v8309 = vadd.f32 0.0, %v8308
    %v8310 = vpop.f32.mrb[0].mxu0
    %v8311 = vpop.f32.mrb[0].mxu0
    %8312 = vdwg.mxu0
    %8313 = vmatprep.subr.bf16.mxu0 %v8256
    %8314 = vmatpush1.bf16.msra.mxu0 %v8255
    %8315 = vmatprep.subr.bf16.mxu0 %v8260
    %8316 = vmatpush1.bf16.msra.mxu0 %v8259
    %8317 = vmatprep.subr.bf16.mxu0 %v8264
    %8318 = vmatpush1.bf16.msra.mxu0 %v8263
    %8319 = vmatprep.subr.bf16.mxu0 %v8268
    %8320 = vmatpush1.bf16.msra.mxu0 %v8267
    %8321 = vmatprep.subr.bf16.mxu0 0
    %8322 = vmatpush1.bf16.msra.mxu0 0
    %8323 = vmatprep.subr.bf16.mxu0 0
    %8324 = vmatpush1.bf16.msra.mxu0 0
    %8325 = vmatprep.subr.bf16.mxu0 0
    %8326 = vmatpush1.bf16.msra.mxu0 0
    %8327 = vmatprep.subr.bf16.mxu0 0
    %8328 = vmatpush1.bf16.msra.mxu0 0
    %8329 = vmatprep.subr.bf16.mxu0 0
    %8330 = vmatpush1.bf16.msra.mxu0 0
    %8331 = vmatprep.subr.bf16.mxu0 0
    %8332 = vmatpush1.bf16.msra.mxu0 0
    %8333 = vmatprep.subr.bf16.mxu0 0
    %8334 = vmatpush1.bf16.msra.mxu0 0
    %8335 = vmatprep.subr.bf16.mxu0 0
    %8336 = vmatpush1.bf16.msra.mxu0 0
    %8337 = vmatprep.subr.bf16.mxu0 0
    %8338 = vmatpush1.bf16.msra.mxu0 0
    %8339 = vmatprep.subr.bf16.mxu0 0
    %8340 = vmatpush1.bf16.msra.mxu0 0
    %8341 = vmatprep.subr.bf16.mxu0 0
    %8342 = vmatpush1.bf16.msra.mxu0 0
    %8343 = vmatprep.subr.bf16.mxu0 0
    %8344 = vmatpush1.bf16.msra.mxu0 0
    %8345 = vmatprep.mubr.bf16.mxu0 0
    %8346 = vmatmul.mubr.bf16.gmra.mrb[0].mxu0 %v8270
    %v8347 = vpop.f32.mrb[0].mxu0
    %v8348 = vadd.f32 0.0, %v8347
    %v8349 = vpop.f32.mrb[0].mxu0
    %v8350 = vadd.f32 0.0, %v8349
    %v8351 = vpop.f32.mrb[0].mxu0
    %v8352 = vpop.f32.mrb[0].mxu0
    %8353 = vdwg.mxu0
    %v8358 = vcombine.low %v8307, %v8309
    %v8359 = vcombine.low %v8348, %v8350
    %v8361 = vunpack.c.l.s4 1966171168
    %v8362 = vunpack.c.0.s8 %v8361
    %v8363 = vlaneseq
    %v8364 = vshrl.u32 %v8363, 7
    %v8365 = vsub.s32 %v8362, %v8364
    %v8366 = vrot.slane %v8358, %v8365
    %v8368 = vunpack.c.l.s4 1966171168
    %v8369 = vunpack.c.0.s8 %v8368
    %v8370 = vlaneseq
    %v8371 = vshrl.u32 %v8370, 7
    %v8372 = vsub.s32 %v8369, %v8371
    %v8373 = vrot.slane %v8359, %v8372
    %v8374 = vcombine.low %v8366, %v8373
    %v8376 = vunpack.c.l.s4 1966171168
    %v8377 = vunpack.c.0.s8 %v8376
    %v8378 = vlaneseq
    %v8379 = vshrl.u32 %v8378, 7
    %v8380 = vsub.s32 %v8377, %v8379
    %v8381 = vrot.slane %v8374, %v8380
    %v8383 = vadd.f32 %v8250, %v8381
    %v8384 = vld [vmem:[#allocation3 + $0x36] sm:$0x1]
    %v8385 = vpack.c.bf16 %v8384, %v8384
    %v8386 = vld [vmem:[#allocation2 + $0x1b00] sm:$0xff]
    %v8387 = vld [vmem:[#allocation2 + $0x1b08] sm:$0xff]
    %v8388 = vld [vmem:[#allocation2 + $0x1b10] sm:$0xff]
    %v8389 = vld [vmem:[#allocation2 + $0x1b18] sm:$0xff]
    %v8390 = vld [vmem:[#allocation2 + $0x1b20] sm:$0xff]
    %v8391 = vld [vmem:[#allocation2 + $0x1b28] sm:$0xff]
    %v8392 = vld [vmem:[#allocation2 + $0x1b30] sm:$0xff]
    %v8393 = vld [vmem:[#allocation2 + $0x1b38] sm:$0xff]
    %v8394 = vld [vmem:[#allocation2 + $0x1b40] sm:$0xff]
    %v8395 = vld [vmem:[#allocation2 + $0x1b48] sm:$0xff]
    %v8396 = vld [vmem:[#allocation2 + $0x1b50] sm:$0xff]
    %v8397 = vld [vmem:[#allocation2 + $0x1b58] sm:$0xff]
    %v8398 = vld [vmem:[#allocation2 + $0x1b60] sm:$0xff]
    %v8399 = vld [vmem:[#allocation2 + $0x1b68] sm:$0xff]
    %v8400 = vld [vmem:[#allocation2 + $0x1b70] sm:$0xff]
    %v8401 = vld [vmem:[#allocation2 + $0x1b78] sm:$0xff]
    %v8403 = vsel %vm761, %v8385, 0
    %8405 = vmatprep.subr.bf16.mxu0 %v8387
    %8406 = vmatpush1.bf16.msra.mxu0 %v8386
    %8407 = vmatprep.subr.bf16.mxu0 %v8391
    %8408 = vmatpush1.bf16.msra.mxu0 %v8390
    %8409 = vmatprep.subr.bf16.mxu0 %v8395
    %8410 = vmatpush1.bf16.msra.mxu0 %v8394
    %8411 = vmatprep.subr.bf16.mxu0 %v8399
    %8412 = vmatpush1.bf16.msra.mxu0 %v8398
    %8413 = vmatprep.subr.bf16.mxu0 0
    %8414 = vmatpush1.bf16.msra.mxu0 0
    %8415 = vmatprep.subr.bf16.mxu0 0
    %8416 = vmatpush1.bf16.msra.mxu0 0
    %8417 = vmatprep.subr.bf16.mxu0 0
    %8418 = vmatpush1.bf16.msra.mxu0 0
    %8419 = vmatprep.subr.bf16.mxu0 0
    %8420 = vmatpush1.bf16.msra.mxu0 0
    %8421 = vmatprep.subr.bf16.mxu0 0
    %8422 = vmatpush1.bf16.msra.mxu0 0
    %8423 = vmatprep.subr.bf16.mxu0 0
    %8424 = vmatpush1.bf16.msra.mxu0 0
    %8425 = vmatprep.subr.bf16.mxu0 0
    %8426 = vmatpush1.bf16.msra.mxu0 0
    %8427 = vmatprep.subr.bf16.mxu0 0
    %8428 = vmatpush1.bf16.msra.mxu0 0
    %8429 = vmatprep.subr.bf16.mxu0 0
    %8430 = vmatpush1.bf16.msra.mxu0 0
    %8431 = vmatprep.subr.bf16.mxu0 0
    %8432 = vmatpush1.bf16.msra.mxu0 0
    %8433 = vmatprep.subr.bf16.mxu0 0
    %8434 = vmatpush1.bf16.msra.mxu0 0
    %8435 = vmatprep.subr.bf16.mxu0 0
    %8436 = vmatpush1.bf16.msra.mxu0 0
    %8437 = vmatprep.mubr.bf16.mxu0 0
    %8438 = vmatmul.mubr.bf16.gmra.mrb[0].mxu0 %v8403
    %v8439 = vpop.f32.mrb[0].mxu0
    %v8440 = vadd.f32 0.0, %v8439
    %v8441 = vpop.f32.mrb[0].mxu0
    %v8442 = vadd.f32 0.0, %v8441
    %v8443 = vpop.f32.mrb[0].mxu0
    %v8444 = vpop.f32.mrb[0].mxu0
    %8445 = vdwg.mxu0
    %8446 = vmatprep.subr.bf16.mxu0 %v8389
    %8447 = vmatpush1.bf16.msra.mxu0 %v8388
    %8448 = vmatprep.subr.bf16.mxu0 %v8393
    %8449 = vmatpush1.bf16.msra.mxu0 %v8392
    %8450 = vmatprep.subr.bf16.mxu0 %v8397
    %8451 = vmatpush1.bf16.msra.mxu0 %v8396
    %8452 = vmatprep.subr.bf16.mxu0 %v8401
    %8453 = vmatpush1.bf16.msra.mxu0 %v8400
    %8454 = vmatprep.subr.bf16.mxu0 0
    %8455 = vmatpush1.bf16.msra.mxu0 0
    %8456 = vmatprep.subr.bf16.mxu0 0
    %8457 = vmatpush1.bf16.msra.mxu0 0
    %8458 = vmatprep.subr.bf16.mxu0 0
    %8459 = vmatpush1.bf16.msra.mxu0 0
    %8460 = vmatprep.subr.bf16.mxu0 0
    %8461 = vmatpush1.bf16.msra.mxu0 0
    %8462 = vmatprep.subr.bf16.mxu0 0
    %8463 = vmatpush1.bf16.msra.mxu0 0
    %8464 = vmatprep.subr.bf16.mxu0 0
    %8465 = vmatpush1.bf16.msra.mxu0 0
    %8466 = vmatprep.subr.bf16.mxu0 0
    %8467 = vmatpush1.bf16.msra.mxu0 0
    %8468 = vmatprep.subr.bf16.mxu0 0
    %8469 = vmatpush1.bf16.msra.mxu0 0
    %8470 = vmatprep.subr.bf16.mxu0 0
    %8471 = vmatpush1.bf16.msra.mxu0 0
    %8472 = vmatprep.subr.bf16.mxu0 0
    %8473 = vmatpush1.bf16.msra.mxu0 0
    %8474 = vmatprep.subr.bf16.mxu0 0
    %8475 = vmatpush1.bf16.msra.mxu0 0
    %8476 = vmatprep.subr.bf16.mxu0 0
    %8477 = vmatpush1.bf16.msra.mxu0 0
    %8478 = vmatprep.mubr.bf16.mxu0 0
    %8479 = vmatmul.mubr.bf16.gmra.mrb[0].mxu0 %v8403
    %v8480 = vpop.f32.mrb[0].mxu0
    %v8481 = vadd.f32 0.0, %v8480
    %v8482 = vpop.f32.mrb[0].mxu0
    %v8483 = vadd.f32 0.0, %v8482
    %v8484 = vpop.f32.mrb[0].mxu0
    %v8485 = vpop.f32.mrb[0].mxu0
    %8486 = vdwg.mxu0
    %v8491 = vcombine.low %v8440, %v8442
    %v8492 = vcombine.low %v8481, %v8483
    %v8494 = vunpack.c.l.s4 1966171168
    %v8495 = vunpack.c.0.s8 %v8494
    %v8496 = vlaneseq
    %v8497 = vshrl.u32 %v8496, 7
    %v8498 = vsub.s32 %v8495, %v8497
    %v8499 = vrot.slane %v8491, %v8498
    %v8501 = vunpack.c.l.s4 1966171168
    %v8502 = vunpack.c.0.s8 %v8501
    %v8503 = vlaneseq
    %v8504 = vshrl.u32 %v8503, 7
    %v8505 = vsub.s32 %v8502, %v8504
    %v8506 = vrot.slane %v8492, %v8505
    %v8507 = vcombine.low %v8499, %v8506
    %v8509 = vunpack.c.l.s4 1966171168
    %v8510 = vunpack.c.0.s8 %v8509
    %v8511 = vlaneseq
    %v8512 = vshrl.u32 %v8511, 7
    %v8513 = vsub.s32 %v8510, %v8512
    %v8514 = vrot.slane %v8507, %v8513
    %v8516 = vadd.f32 %v8383, %v8514
    %v8517 = vld [vmem:[#allocation3 + $0x37] sm:$0x1]
    %v8518 = vpack.c.bf16 %v8517, %v8517
    %v8519 = vld [vmem:[#allocation2 + $0x1b80] sm:$0xff]
    %v8520 = vld [vmem:[#allocation2 + $0x1b88] sm:$0xff]
    %v8521 = vld [vmem:[#allocation2 + $0x1b90] sm:$0xff]
    %v8522 = vld [vmem:[#allocation2 + $0x1b98] sm:$0xff]
    %v8523 = vld [vmem:[#allocation2 + $0x1ba0] sm:$0xff]
    %v8524 = vld [vmem:[#allocation2 + $0x1ba8] sm:$0xff]
    %v8525 = vld [vmem:[#allocation2 + $0x1bb0] sm:$0xff]
    %v8526 = vld [vmem:[#allocation2 + $0x1bb8] sm:$0xff]
    %v8527 = vld [vmem:[#allocation2 + $0x1bc0] sm:$0xff]
    %v8528 = vld [vmem:[#allocation2 + $0x1bc8] sm:$0xff]
    %v8529 = vld [vmem:[#allocation2 + $0x1bd0] sm:$0xff]
    %v8530 = vld [vmem:[#allocation2 + $0x1bd8] sm:$0xff]
    %v8531 = vld [vmem:[#allocation2 + $0x1be0] sm:$0xff]
    %v8532 = vld [vmem:[#allocation2 + $0x1be8] sm:$0xff]
    %v8533 = vld [vmem:[#allocation2 + $0x1bf0] sm:$0xff]
    %v8534 = vld [vmem:[#allocation2 + $0x1bf8] sm:$0xff]
    %v8536 = vsel %vm761, %v8518, 0
    %8538 = vmatprep.subr.bf16.mxu0 %v8520
    %8539 = vmatpush1.bf16.msra.mxu0 %v8519
    %8540 = vmatprep.subr.bf16.mxu0 %v8524
    %8541 = vmatpush1.bf16.msra.mxu0 %v8523
    %8542 = vmatprep.subr.bf16.mxu0 %v8528
    %8543 = vmatpush1.bf16.msra.mxu0 %v8527
    %8544 = vmatprep.subr.bf16.mxu0 %v8532
    %8545 = vmatpush1.bf16.msra.mxu0 %v8531
    %8546 = vmatprep.subr.bf16.mxu0 0
    %8547 = vmatpush1.bf16.msra.mxu0 0
    %8548 = vmatprep.subr.bf16.mxu0 0
    %8549 = vmatpush1.bf16.msra.mxu0 0
    %8550 = vmatprep.subr.bf16.mxu0 0
    %8551 = vmatpush1.bf16.msra.mxu0 0
    %8552 = vmatprep.subr.bf16.mxu0 0
    %8553 = vmatpush1.bf16.msra.mxu0 0
    %8554 = vmatprep.subr.bf16.mxu0 0
    %8555 = vmatpush1.bf16.msra.mxu0 0
    %8556 = vmatprep.subr.bf16.mxu0 0
    %8557 = vmatpush1.bf16.msra.mxu0 0
    %8558 = vmatprep.subr.bf16.mxu0 0
    %8559 = vmatpush1.bf16.msra.mxu0 0
    %8560 = vmatprep.subr.bf16.mxu0 0
    %8561 = vmatpush1.bf16.msra.mxu0 0
    %8562 = vmatprep.subr.bf16.mxu0 0
    %8563 = vmatpush1.bf16.msra.mxu0 0
    %8564 = vmatprep.subr.bf16.mxu0 0
    %8565 = vmatpush1.bf16.msra.mxu0 0
    %8566 = vmatprep.subr.bf16.mxu0 0
    %8567 = vmatpush1.bf16.msra.mxu0 0
    %8568 = vmatprep.subr.bf16.mxu0 0
    %8569 = vmatpush1.bf16.msra.mxu0 0
    %8570 = vmatprep.mubr.bf16.mxu0 0
    %8571 = vmatmul.mubr.bf16.gmra.mrb[0].mxu0 %v8536
    %v8572 = vpop.f32.mrb[0].mxu0
    %v8573 = vadd.f32 0.0, %v8572
    %v8574 = vpop.f32.mrb[0].mxu0
    %v8575 = vadd.f32 0.0, %v8574
    %v8576 = vpop.f32.mrb[0].mxu0
    %v8577 = vpop.f32.mrb[0].mxu0
    %8578 = vdwg.mxu0
    %8579 = vmatprep.subr.bf16.mxu0 %v8522
    %8580 = vmatpush1.bf16.msra.mxu0 %v8521
    %8581 = vmatprep.subr.bf16.mxu0 %v8526
    %8582 = vmatpush1.bf16.msra.mxu0 %v8525
    %8583 = vmatprep.subr.bf16.mxu0 %v8530
    %8584 = vmatpush1.bf16.msra.mxu0 %v8529
    %8585 = vmatprep.subr.bf16.mxu0 %v8534
    %8586 = vmatpush1.bf16.msra.mxu0 %v8533
    %8587 = vmatprep.subr.bf16.mxu0 0
    %8588 = vmatpush1.bf16.msra.mxu0 0
    %8589 = vmatprep.subr.bf16.mxu0 0
    %8590 = vmatpush1.bf16.msra.mxu0 0
    %8591 = vmatprep.subr.bf16.mxu0 0
    %8592 = vmatpush1.bf16.msra.mxu0 0
    %8593 = vmatprep.subr.bf16.mxu0 0
    %8594 = vmatpush1.bf16.msra.mxu0 0
    %8595 = vmatprep.subr.bf16.mxu0 0
    %8596 = vmatpush1.bf16.msra.mxu0 0
    %8597 = vmatprep.subr.bf16.mxu0 0
    %8598 = vmatpush1.bf16.msra.mxu0 0
    %8599 = vmatprep.subr.bf16.mxu0 0
    %8600 = vmatpush1.bf16.msra.mxu0 0
    %8601 = vmatprep.subr.bf16.mxu0 0
    %8602 = vmatpush1.bf16.msra.mxu0 0
    %8603 = vmatprep.subr.bf16.mxu0 0
    %8604 = vmatpush1.bf16.msra.mxu0 0
    %8605 = vmatprep.subr.bf16.mxu0 0
    %8606 = vmatpush1.bf16.msra.mxu0 0
    %8607 = vmatprep.subr.bf16.mxu0 0
    %8608 = vmatpush1.bf16.msra.mxu0 0
    %8609 = vmatprep.subr.bf16.mxu0 0
    %8610 = vmatpush1.bf16.msra.mxu0 0
    %8611 = vmatprep.mubr.bf16.mxu0 0
    %8612 = vmatmul.mubr.bf16.gmra.mrb[0].mxu0 %v8536
    %v8613 = vpop.f32.mrb[0].mxu0
    %v8614 = vadd.f32 0.0, %v8613
    %v8615 = vpop.f32.mrb[0].mxu0
    %v8616 = vadd.f32 0.0, %v8615
    %v8617 = vpop.f32.mrb[0].mxu0
    %v8618 = vpop.f32.mrb[0].mxu0
    %8619 = vdwg.mxu0
    %v8624 = vcombine.low %v8573, %v8575
    %v8625 = vcombine.low %v8614, %v8616
    %v8627 = vunpack.c.l.s4 1966171168
    %v8628 = vunpack.c.0.s8 %v8627
    %v8629 = vlaneseq
    %v8630 = vshrl.u32 %v8629, 7
    %v8631 = vsub.s32 %v8628, %v8630
    %v8632 = vrot.slane %v8624, %v8631
    %v8634 = vunpack.c.l.s4 1966171168
    %v8635 = vunpack.c.0.s8 %v8634
    %v8636 = vlaneseq
    %v8637 = vshrl.u32 %v8636, 7
    %v8638 = vsub.s32 %v8635, %v8637
    %v8639 = vrot.slane %v8625, %v8638
    %v8640 = vcombine.low %v8632, %v8639
    %v8642 = vunpack.c.l.s4 1966171168
    %v8643 = vunpack.c.0.s8 %v8642
    %v8644 = vlaneseq
    %v8645 = vshrl.u32 %v8644, 7
    %v8646 = vsub.s32 %v8643, %v8645
    %v8647 = vrot.slane %v8640, %v8646
    %v8649 = vadd.f32 %v8516, %v8647
    %v8650 = vld [vmem:[#allocation3 + $0x38] sm:$0x1]
    %v8651 = vpack.c.bf16 %v8650, %v8650
    %v8652 = vld [vmem:[#allocation2 + $0x1c00] sm:$0xff]
    %v8653 = vld [vmem:[#allocation2 + $0x1c08] sm:$0xff]
    %v8654 = vld [vmem:[#allocation2 + $0x1c10] sm:$0xff]
    %v8655 = vld [vmem:[#allocation2 + $0x1c18] sm:$0xff]
    %v8656 = vld [vmem:[#allocation2 + $0x1c20] sm:$0xff]
    %v8657 = vld [vmem:[#allocation2 + $0x1c28] sm:$0xff]
    %v8658 = vld [vmem:[#allocation2 + $0x1c30] sm:$0xff]
    %v8659 = vld [vmem:[#allocation2 + $0x1c38] sm:$0xff]
    %v8660 = vld [vmem:[#allocation2 + $0x1c40] sm:$0xff]
    %v8661 = vld [vmem:[#allocation2 + $0x1c48] sm:$0xff]
    %v8662 = vld [vmem:[#allocation2 + $0x1c50] sm:$0xff]
    %v8663 = vld [vmem:[#allocation2 + $0x1c58] sm:$0xff]
    %v8664 = vld [vmem:[#allocation2 + $0x1c60] sm:$0xff]
    %v8665 = vld [vmem:[#allocation2 + $0x1c68] sm:$0xff]
    %v8666 = vld [vmem:[#allocation2 + $0x1c70] sm:$0xff]
    %v8667 = vld [vmem:[#allocation2 + $0x1c78] sm:$0xff]
    %v8669 = vsel %vm761, %v8651, 0
    %8671 = vmatprep.subr.bf16.mxu0 %v8653
    %8672 = vmatpush1.bf16.msra.mxu0 %v8652
    %8673 = vmatprep.subr.bf16.mxu0 %v8657
    %8674 = vmatpush1.bf16.msra.mxu0 %v8656
    %8675 = vmatprep.subr.bf16.mxu0 %v8661
    %8676 = vmatpush1.bf16.msra.mxu0 %v8660
    %8677 = vmatprep.subr.bf16.mxu0 %v8665
    %8678 = vmatpush1.bf16.msra.mxu0 %v8664
    %8679 = vmatprep.subr.bf16.mxu0 0
    %8680 = vmatpush1.bf16.msra.mxu0 0
    %8681 = vmatprep.subr.bf16.mxu0 0
    %8682 = vmatpush1.bf16.msra.mxu0 0
    %8683 = vmatprep.subr.bf16.mxu0 0
    %8684 = vmatpush1.bf16.msra.mxu0 0
    %8685 = vmatprep.subr.bf16.mxu0 0
    %8686 = vmatpush1.bf16.msra.mxu0 0
    %8687 = vmatprep.subr.bf16.mxu0 0
    %8688 = vmatpush1.bf16.msra.mxu0 0
    %8689 = vmatprep.subr.bf16.mxu0 0
    %8690 = vmatpush1.bf16.msra.mxu0 0
    %8691 = vmatprep.subr.bf16.mxu0 0
    %8692 = vmatpush1.bf16.msra.mxu0 0
    %8693 = vmatprep.subr.bf16.mxu0 0
    %8694 = vmatpush1.bf16.msra.mxu0 0
    %8695 = vmatprep.subr.bf16.mxu0 0
    %8696 = vmatpush1.bf16.msra.mxu0 0
    %8697 = vmatprep.subr.bf16.mxu0 0
    %8698 = vmatpush1.bf16.msra.mxu0 0
    %8699 = vmatprep.subr.bf16.mxu0 0
    %8700 = vmatpush1.bf16.msra.mxu0 0
    %8701 = vmatprep.subr.bf16.mxu0 0
    %8702 = vmatpush1.bf16.msra.mxu0 0
    %8703 = vmatprep.mubr.bf16.mxu0 0
    %8704 = vmatmul.mubr.bf16.gmra.mrb[0].mxu0 %v8669
    %v8705 = vpop.f32.mrb[0].mxu0
    %v8706 = vadd.f32 0.0, %v8705
    %v8707 = vpop.f32.mrb[0].mxu0
    %v8708 = vadd.f32 0.0, %v8707
    %v8709 = vpop.f32.mrb[0].mxu0
    %v8710 = vpop.f32.mrb[0].mxu0
    %8711 = vdwg.mxu0
    %8712 = vmatprep.subr.bf16.mxu0 %v8655
    %8713 = vmatpush1.bf16.msra.mxu0 %v8654
    %8714 = vmatprep.subr.bf16.mxu0 %v8659
    %8715 = vmatpush1.bf16.msra.mxu0 %v8658
    %8716 = vmatprep.subr.bf16.mxu0 %v8663
    %8717 = vmatpush1.bf16.msra.mxu0 %v8662
    %8718 = vmatprep.subr.bf16.mxu0 %v8667
    %8719 = vmatpush1.bf16.msra.mxu0 %v8666
    %8720 = vmatprep.subr.bf16.mxu0 0
    %8721 = vmatpush1.bf16.msra.mxu0 0
    %8722 = vmatprep.subr.bf16.mxu0 0
    %8723 = vmatpush1.bf16.msra.mxu0 0
    %8724 = vmatprep.subr.bf16.mxu0 0
    %8725 = vmatpush1.bf16.msra.mxu0 0
    %8726 = vmatprep.subr.bf16.mxu0 0
    %8727 = vmatpush1.bf16.msra.mxu0 0
    %8728 = vmatprep.subr.bf16.mxu0 0
    %8729 = vmatpush1.bf16.msra.mxu0 0
    %8730 = vmatprep.subr.bf16.mxu0 0
    %8731 = vmatpush1.bf16.msra.mxu0 0
    %8732 = vmatprep.subr.bf16.mxu0 0
    %8733 = vmatpush1.bf16.msra.mxu0 0
    %8734 = vmatprep.subr.bf16.mxu0 0
    %8735 = vmatpush1.bf16.msra.mxu0 0
    %8736 = vmatprep.subr.bf16.mxu0 0
    %8737 = vmatpush1.bf16.msra.mxu0 0
    %8738 = vmatprep.subr.bf16.mxu0 0
    %8739 = vmatpush1.bf16.msra.mxu0 0
    %8740 = vmatprep.subr.bf16.mxu0 0
    %8741 = vmatpush1.bf16.msra.mxu0 0
    %8742 = vmatprep.subr.bf16.mxu0 0
    %8743 = vmatpush1.bf16.msra.mxu0 0
    %8744 = vmatprep.mubr.bf16.mxu0 0
    %8745 = vmatmul.mubr.bf16.gmra.mrb[0].mxu0 %v8669
    %v8746 = vpop.f32.mrb[0].mxu0
    %v8747 = vadd.f32 0.0, %v8746
    %v8748 = vpop.f32.mrb[0].mxu0
    %v8749 = vadd.f32 0.0, %v8748
    %v8750 = vpop.f32.mrb[0].mxu0
    %v8751 = vpop.f32.mrb[0].mxu0
    %8752 = vdwg.mxu0
    %v8757 = vcombine.low %v8706, %v8708
    %v8758 = vcombine.low %v8747, %v8749
    %v8760 = vunpack.c.l.s4 1966171168
    %v8761 = vunpack.c.0.s8 %v8760
    %v8762 = vlaneseq
    %v8763 = vshrl.u32 %v8762, 7
    %v8764 = vsub.s32 %v8761, %v8763
    %v8765 = vrot.slane %v8757, %v8764
    %v8767 = vunpack.c.l.s4 1966171168
    %v8768 = vunpack.c.0.s8 %v8767
    %v8769 = vlaneseq
    %v8770 = vshrl.u32 %v8769, 7
    %v8771 = vsub.s32 %v8768, %v8770
    %v8772 = vrot.slane %v8758, %v8771
    %v8773 = vcombine.low %v8765, %v8772
    %v8775 = vunpack.c.l.s4 1966171168
    %v8776 = vunpack.c.0.s8 %v8775
    %v8777 = vlaneseq
    %v8778 = vshrl.u32 %v8777, 7
    %v8779 = vsub.s32 %v8776, %v8778
    %v8780 = vrot.slane %v8773, %v8779
    %v8782 = vadd.f32 %v8649, %v8780
    %v8783 = vld [vmem:[#allocation3 + $0x39] sm:$0x1]
    %v8784 = vpack.c.bf16 %v8783, %v8783
    %v8785 = vld [vmem:[#allocation2 + $0x1c80] sm:$0xff]
    %v8786 = vld [vmem:[#allocation2 + $0x1c88] sm:$0xff]
    %v8787 = vld [vmem:[#allocation2 + $0x1c90] sm:$0xff]
    %v8788 = vld [vmem:[#allocation2 + $0x1c98] sm:$0xff]
    %v8789 = vld [vmem:[#allocation2 + $0x1ca0] sm:$0xff]
    %v8790 = vld [vmem:[#allocation2 + $0x1ca8] sm:$0xff]
    %v8791 = vld [vmem:[#allocation2 + $0x1cb0] sm:$0xff]
    %v8792 = vld [vmem:[#allocation2 + $0x1cb8] sm:$0xff]
    %v8793 = vld [vmem:[#allocation2 + $0x1cc0] sm:$0xff]
    %v8794 = vld [vmem:[#allocation2 + $0x1cc8] sm:$0xff]
    %v8795 = vld [vmem:[#allocation2 + $0x1cd0] sm:$0xff]
    %v8796 = vld [vmem:[#allocation2 + $0x1cd8] sm:$0xff]
    %v8797 = vld [vmem:[#allocation2 + $0x1ce0] sm:$0xff]
    %v8798 = vld [vmem:[#allocation2 + $0x1ce8] sm:$0xff]
    %v8799 = vld [vmem:[#allocation2 + $0x1cf0] sm:$0xff]
    %v8800 = vld [vmem:[#allocation2 + $0x1cf8] sm:$0xff]
    %v8802 = vsel %vm761, %v8784, 0
    %8804 = vmatprep.subr.bf16.mxu0 %v8786
    %8805 = vmatpush1.bf16.msra.mxu0 %v8785
    %8806 = vmatprep.subr.bf16.mxu0 %v8790
    %8807 = vmatpush1.bf16.msra.mxu0 %v8789
    %8808 = vmatprep.subr.bf16.mxu0 %v8794
    %8809 = vmatpush1.bf16.msra.mxu0 %v8793
    %8810 = vmatprep.subr.bf16.mxu0 %v8798
    %8811 = vmatpush1.bf16.msra.mxu0 %v8797
    %8812 = vmatprep.subr.bf16.mxu0 0
    %8813 = vmatpush1.bf16.msra.mxu0 0
    %8814 = vmatprep.subr.bf16.mxu0 0
    %8815 = vmatpush1.bf16.msra.mxu0 0
    %8816 = vmatprep.subr.bf16.mxu0 0
    %8817 = vmatpush1.bf16.msra.mxu0 0
    %8818 = vmatprep.subr.bf16.mxu0 0
    %8819 = vmatpush1.bf16.msra.mxu0 0
    %8820 = vmatprep.subr.bf16.mxu0 0
    %8821 = vmatpush1.bf16.msra.mxu0 0
    %8822 = vmatprep.subr.bf16.mxu0 0
    %8823 = vmatpush1.bf16.msra.mxu0 0
    %8824 = vmatprep.subr.bf16.mxu0 0
    %8825 = vmatpush1.bf16.msra.mxu0 0
    %8826 = vmatprep.subr.bf16.mxu0 0
    %8827 = vmatpush1.bf16.msra.mxu0 0
    %8828 = vmatprep.subr.bf16.mxu0 0
    %8829 = vmatpush1.bf16.msra.mxu0 0
    %8830 = vmatprep.subr.bf16.mxu0 0
    %8831 = vmatpush1.bf16.msra.mxu0 0
    %8832 = vmatprep.subr.bf16.mxu0 0
    %8833 = vmatpush1.bf16.msra.mxu0 0
    %8834 = vmatprep.subr.bf16.mxu0 0
    %8835 = vmatpush1.bf16.msra.mxu0 0
    %8836 = vmatprep.mubr.bf16.mxu0 0
    %8837 = vmatmul.mubr.bf16.gmra.mrb[0].mxu0 %v8802
    %v8838 = vpop.f32.mrb[0].mxu0
    %v8839 = vadd.f32 0.0, %v8838
    %v8840 = vpop.f32.mrb[0].mxu0
    %v8841 = vadd.f32 0.0, %v8840
    %v8842 = vpop.f32.mrb[0].mxu0
    %v8843 = vpop.f32.mrb[0].mxu0
    %8844 = vdwg.mxu0
    %8845 = vmatprep.subr.bf16.mxu0 %v8788
    %8846 = vmatpush1.bf16.msra.mxu0 %v8787
    %8847 = vmatprep.subr.bf16.mxu0 %v8792
    %8848 = vmatpush1.bf16.msra.mxu0 %v8791
    %8849 = vmatprep.subr.bf16.mxu0 %v8796
    %8850 = vmatpush1.bf16.msra.mxu0 %v8795
    %8851 = vmatprep.subr.bf16.mxu0 %v8800
    %8852 = vmatpush1.bf16.msra.mxu0 %v8799
    %8853 = vmatprep.subr.bf16.mxu0 0
    %8854 = vmatpush1.bf16.msra.mxu0 0
    %8855 = vmatprep.subr.bf16.mxu0 0
    %8856 = vmatpush1.bf16.msra.mxu0 0
    %8857 = vmatprep.subr.bf16.mxu0 0
    %8858 = vmatpush1.bf16.msra.mxu0 0
    %8859 = vmatprep.subr.bf16.mxu0 0
    %8860 = vmatpush1.bf16.msra.mxu0 0
    %8861 = vmatprep.subr.bf16.mxu0 0
    %8862 = vmatpush1.bf16.msra.mxu0 0
    %8863 = vmatprep.subr.bf16.mxu0 0
    %8864 = vmatpush1.bf16.msra.mxu0 0
    %8865 = vmatprep.subr.bf16.mxu0 0
    %8866 = vmatpush1.bf16.msra.mxu0 0
    %8867 = vmatprep.subr.bf16.mxu0 0
    %8868 = vmatpush1.bf16.msra.mxu0 0
    %8869 = vmatprep.subr.bf16.mxu0 0
    %8870 = vmatpush1.bf16.msra.mxu0 0
    %8871 = vmatprep.subr.bf16.mxu0 0
    %8872 = vmatpush1.bf16.msra.mxu0 0
    %8873 = vmatprep.subr.bf16.mxu0 0
    %8874 = vmatpush1.bf16.msra.mxu0 0
    %8875 = vmatprep.subr.bf16.mxu0 0
    %8876 = vmatpush1.bf16.msra.mxu0 0
    %8877 = vmatprep.mubr.bf16.mxu0 0
    %8878 = vmatmul.mubr.bf16.gmra.mrb[0].mxu0 %v8802
    %v8879 = vpop.f32.mrb[0].mxu0
    %v8880 = vadd.f32 0.0, %v8879
    %v8881 = vpop.f32.mrb[0].mxu0
    %v8882 = vadd.f32 0.0, %v8881
    %v8883 = vpop.f32.mrb[0].mxu0
    %v8884 = vpop.f32.mrb[0].mxu0
    %8885 = vdwg.mxu0
    %v8890 = vcombine.low %v8839, %v8841
    %v8891 = vcombine.low %v8880, %v8882
    %v8893 = vunpack.c.l.s4 1966171168
    %v8894 = vunpack.c.0.s8 %v8893
    %v8895 = vlaneseq
    %v8896 = vshrl.u32 %v8895, 7
    %v8897 = vsub.s32 %v8894, %v8896
    %v8898 = vrot.slane %v8890, %v8897
    %v8900 = vunpack.c.l.s4 1966171168
    %v8901 = vunpack.c.0.s8 %v8900
    %v8902 = vlaneseq
    %v8903 = vshrl.u32 %v8902, 7
    %v8904 = vsub.s32 %v8901, %v8903
    %v8905 = vrot.slane %v8891, %v8904
    %v8906 = vcombine.low %v8898, %v8905
    %v8908 = vunpack.c.l.s4 1966171168
    %v8909 = vunpack.c.0.s8 %v8908
    %v8910 = vlaneseq
    %v8911 = vshrl.u32 %v8910, 7
    %v8912 = vsub.s32 %v8909, %v8911
    %v8913 = vrot.slane %v8906, %v8912
    %v8915 = vadd.f32 %v8782, %v8913
    %v8916 = vld [vmem:[#allocation3 + $0x3a] sm:$0x1]
    %v8917 = vpack.c.bf16 %v8916, %v8916
    %v8918 = vld [vmem:[#allocation2 + $0x1d00] sm:$0xff]
    %v8919 = vld [vmem:[#allocation2 + $0x1d08] sm:$0xff]
    %v8920 = vld [vmem:[#allocation2 + $0x1d10] sm:$0xff]
    %v8921 = vld [vmem:[#allocation2 + $0x1d18] sm:$0xff]
    %v8922 = vld [vmem:[#allocation2 + $0x1d20] sm:$0xff]
    %v8923 = vld [vmem:[#allocation2 + $0x1d28] sm:$0xff]
    %v8924 = vld [vmem:[#allocation2 + $0x1d30] sm:$0xff]
    %v8925 = vld [vmem:[#allocation2 + $0x1d38] sm:$0xff]
    %v8926 = vld [vmem:[#allocation2 + $0x1d40] sm:$0xff]
    %v8927 = vld [vmem:[#allocation2 + $0x1d48] sm:$0xff]
    %v8928 = vld [vmem:[#allocation2 + $0x1d50] sm:$0xff]
    %v8929 = vld [vmem:[#allocation2 + $0x1d58] sm:$0xff]
    %v8930 = vld [vmem:[#allocation2 + $0x1d60] sm:$0xff]
    %v8931 = vld [vmem:[#allocation2 + $0x1d68] sm:$0xff]
    %v8932 = vld [vmem:[#allocation2 + $0x1d70] sm:$0xff]
    %v8933 = vld [vmem:[#allocation2 + $0x1d78] sm:$0xff]
    %v8935 = vsel %vm761, %v8917, 0
    %8937 = vmatprep.subr.bf16.mxu0 %v8919
    %8938 = vmatpush1.bf16.msra.mxu0 %v8918
    %8939 = vmatprep.subr.bf16.mxu0 %v8923
    %8940 = vmatpush1.bf16.msra.mxu0 %v8922
    %8941 = vmatprep.subr.bf16.mxu0 %v8927
    %8942 = vmatpush1.bf16.msra.mxu0 %v8926
    %8943 = vmatprep.subr.bf16.mxu0 %v8931
    %8944 = vmatpush1.bf16.msra.mxu0 %v8930
    %8945 = vmatprep.subr.bf16.mxu0 0
    %8946 = vmatpush1.bf16.msra.mxu0 0
    %8947 = vmatprep.subr.bf16.mxu0 0
    %8948 = vmatpush1.bf16.msra.mxu0 0
    %8949 = vmatprep.subr.bf16.mxu0 0
    %8950 = vmatpush1.bf16.msra.mxu0 0
    %8951 = vmatprep.subr.bf16.mxu0 0
    %8952 = vmatpush1.bf16.msra.mxu0 0
    %8953 = vmatprep.subr.bf16.mxu0 0
    %8954 = vmatpush1.bf16.msra.mxu0 0
    %8955 = vmatprep.subr.bf16.mxu0 0
    %8956 = vmatpush1.bf16.msra.mxu0 0
    %8957 = vmatprep.subr.bf16.mxu0 0
    %8958 = vmatpush1.bf16.msra.mxu0 0
    %8959 = vmatprep.subr.bf16.mxu0 0
    %8960 = vmatpush1.bf16.msra.mxu0 0
    %8961 = vmatprep.subr.bf16.mxu0 0
    %8962 = vmatpush1.bf16.msra.mxu0 0
    %8963 = vmatprep.subr.bf16.mxu0 0
    %8964 = vmatpush1.bf16.msra.mxu0 0
    %8965 = vmatprep.subr.bf16.mxu0 0
    %8966 = vmatpush1.bf16.msra.mxu0 0
    %8967 = vmatprep.subr.bf16.mxu0 0
    %8968 = vmatpush1.bf16.msra.mxu0 0
    %8969 = vmatprep.mubr.bf16.mxu0 0
    %8970 = vmatmul.mubr.bf16.gmra.mrb[0].mxu0 %v8935
    %v8971 = vpop.f32.mrb[0].mxu0
    %v8972 = vadd.f32 0.0, %v8971
    %v8973 = vpop.f32.mrb[0].mxu0
    %v8974 = vadd.f32 0.0, %v8973
    %v8975 = vpop.f32.mrb[0].mxu0
    %v8976 = vpop.f32.mrb[0].mxu0
    %8977 = vdwg.mxu0
    %8978 = vmatprep.subr.bf16.mxu0 %v8921
    %8979 = vmatpush1.bf16.msra.mxu0 %v8920
    %8980 = vmatprep.subr.bf16.mxu0 %v8925
    %8981 = vmatpush1.bf16.msra.mxu0 %v8924
    %8982 = vmatprep.subr.bf16.mxu0 %v8929
    %8983 = vmatpush1.bf16.msra.mxu0 %v8928
    %8984 = vmatprep.subr.bf16.mxu0 %v8933
    %8985 = vmatpush1.bf16.msra.mxu0 %v8932
    %8986 = vmatprep.subr.bf16.mxu0 0
    %8987 = vmatpush1.bf16.msra.mxu0 0
    %8988 = vmatprep.subr.bf16.mxu0 0
    %8989 = vmatpush1.bf16.msra.mxu0 0
    %8990 = vmatprep.subr.bf16.mxu0 0
    %8991 = vmatpush1.bf16.msra.mxu0 0
    %8992 = vmatprep.subr.bf16.mxu0 0
    %8993 = vmatpush1.bf16.msra.mxu0 0
    %8994 = vmatprep.subr.bf16.mxu0 0
    %8995 = vmatpush1.bf16.msra.mxu0 0
    %8996 = vmatprep.subr.bf16.mxu0 0
    %8997 = vmatpush1.bf16.msra.mxu0 0
    %8998 = vmatprep.subr.bf16.mxu0 0
    %8999 = vmatpush1.bf16.msra.mxu0 0
    %9000 = vmatprep.subr.bf16.mxu0 0
    %9001 = vmatpush1.bf16.msra.mxu0 0
    %9002 = vmatprep.subr.bf16.mxu0 0
    %9003 = vmatpush1.bf16.msra.mxu0 0
    %9004 = vmatprep.subr.bf16.mxu0 0
    %9005 = vmatpush1.bf16.msra.mxu0 0
    %9006 = vmatprep.subr.bf16.mxu0 0
    %9007 = vmatpush1.bf16.msra.mxu0 0
    %9008 = vmatprep.subr.bf16.mxu0 0
    %9009 = vmatpush1.bf16.msra.mxu0 0
    %9010 = vmatprep.mubr.bf16.mxu0 0
    %9011 = vmatmul.mubr.bf16.gmra.mrb[0].mxu0 %v8935
    %v9012 = vpop.f32.mrb[0].mxu0
    %v9013 = vadd.f32 0.0, %v9012
    %v9014 = vpop.f32.mrb[0].mxu0
    %v9015 = vadd.f32 0.0, %v9014
    %v9016 = vpop.f32.mrb[0].mxu0
    %v9017 = vpop.f32.mrb[0].mxu0
    %9018 = vdwg.mxu0
    %v9023 = vcombine.low %v8972, %v8974
    %v9024 = vcombine.low %v9013, %v9015
    %v9026 = vunpack.c.l.s4 1966171168
    %v9027 = vunpack.c.0.s8 %v9026
    %v9028 = vlaneseq
    %v9029 = vshrl.u32 %v9028, 7
    %v9030 = vsub.s32 %v9027, %v9029
    %v9031 = vrot.slane %v9023, %v9030
    %v9033 = vunpack.c.l.s4 1966171168
    %v9034 = vunpack.c.0.s8 %v9033
    %v9035 = vlaneseq
    %v9036 = vshrl.u32 %v9035, 7
    %v9037 = vsub.s32 %v9034, %v9036
    %v9038 = vrot.slane %v9024, %v9037
    %v9039 = vcombine.low %v9031, %v9038
    %v9041 = vunpack.c.l.s4 1966171168
    %v9042 = vunpack.c.0.s8 %v9041
    %v9043 = vlaneseq
    %v9044 = vshrl.u32 %v9043, 7
    %v9045 = vsub.s32 %v9042, %v9044
    %v9046 = vrot.slane %v9039, %v9045
    %v9048 = vadd.f32 %v8915, %v9046
    %v9049 = vmax.f32 %v9048, 0.0
    %v9051 = vlaneseq
    %v9052 = vshrl.u32 %v9051, 7
    %v9053 = vsub.s32 0, %v9052
    %v9054 = vrot.slane %v9049, %v9053
    %v9055 = vlaneseq
    %v9056 = vshrl.u32 %v9055, 7
    %v9057 = vsub.s32 1, %v9056
    %v9058 = vrot.slane %v9049, %v9057
    %v9059 = vlaneseq
    %v9060 = vshrl.u32 %v9059, 7
    %v9061 = vsub.s32 2, %v9060
    %v9062 = vrot.slane %v9049, %v9061
    %v9063 = vlaneseq
    %v9064 = vshrl.u32 %v9063, 7
    %v9065 = vsub.s32 3, %v9064
    %v9066 = vrot.slane %v9049, %v9065
    %v9071 = vpack.c.bf16 %v9054, %v9054
    %v9072 = vpack.c.bf16 %v9058, %v9058
    %v9073 = vpack.c.bf16 %v9062, %v9062
    %v9074 = vpack.c.bf16 %v9066, %v9066
    %v9075 = vld [vmem:[#allocation17] sm:$0xff]
    %v9076 = vld [vmem:[#allocation17 + $0x8] sm:$0xff]
    %v9077 = vld [vmem:[#allocation17 + $0x10] sm:$0xff]
    %v9078 = vld [vmem:[#allocation17 + $0x18] sm:$0xff]
    %v9079 = vld [vmem:[#allocation17 + $0x20] sm:$0xff]
    %v9080 = vld [vmem:[#allocation17 + $0x28] sm:$0xff]
    %v9081 = vld [vmem:[#allocation17 + $0x30] sm:$0xff]
    %v9082 = vld [vmem:[#allocation17 + $0x38] sm:$0xff]
    %v9083 = vld [vmem:[#allocation17 + $0x40] sm:$0xff]
    %v9084 = vld [vmem:[#allocation17 + $0x48] sm:$0xff]
    %v9085 = vld [vmem:[#allocation17 + $0x50] sm:$0xff]
    %v9086 = vld [vmem:[#allocation17 + $0x58] sm:$0xff]
    %v9087 = vld [vmem:[#allocation17 + $0x60] sm:$0xff]
    %v9088 = vld [vmem:[#allocation17 + $0x68] sm:$0xff]
    %v9089 = vld [vmem:[#allocation17 + $0x70] sm:$0xff]
    %v9090 = vld [vmem:[#allocation17 + $0x78] sm:$0xff]
    %v9091 = vld [vmem:[#allocation17 + $0x80] sm:$0xff]
    %v9092 = vld [vmem:[#allocation17 + $0x88] sm:$0xff]
    %v9093 = vld [vmem:[#allocation17 + $0x90] sm:$0xff]
    %v9094 = vld [vmem:[#allocation17 + $0x98] sm:$0xff]
    %v9095 = vld [vmem:[#allocation17 + $0xa0] sm:$0xff]
    %v9096 = vld [vmem:[#allocation17 + $0xa8] sm:$0xff]
    %v9097 = vld [vmem:[#allocation17 + $0xb0] sm:$0xff]
    %v9098 = vld [vmem:[#allocation17 + $0xb8] sm:$0xff]
    %v9099 = vld [vmem:[#allocation17 + $0xc0] sm:$0xff]
    %v9100 = vld [vmem:[#allocation17 + $0xc8] sm:$0xff]
    %v9101 = vld [vmem:[#allocation17 + $0xd0] sm:$0xff]
    %v9102 = vld [vmem:[#allocation17 + $0xd8] sm:$0xff]
    %v9103 = vld [vmem:[#allocation17 + $0xe0] sm:$0xff]
    %v9104 = vld [vmem:[#allocation17 + $0xe8] sm:$0xff]
    %v9105 = vld [vmem:[#allocation17 + $0xf0] sm:$0xff]
    %v9106 = vld [vmem:[#allocation17 + $0xf8] sm:$0xff]
    %v9107 = vld [vmem:[#allocation17 + $0x100] sm:$0xff]
    %v9108 = vld [vmem:[#allocation17 + $0x108] sm:$0xff]
    %v9109 = vld [vmem:[#allocation17 + $0x110] sm:$0xff]
    %v9110 = vld [vmem:[#allocation17 + $0x118] sm:$0xff]
    %v9111 = vld [vmem:[#allocation17 + $0x120] sm:$0xff]
    %v9112 = vld [vmem:[#allocation17 + $0x128] sm:$0xff]
    %v9113 = vld [vmem:[#allocation17 + $0x130] sm:$0xff]
    %v9114 = vld [vmem:[#allocation17 + $0x138] sm:$0xff]
    %v9115 = vld [vmem:[#allocation17 + $0x140] sm:$0xff]
    %v9116 = vld [vmem:[#allocation17 + $0x148] sm:$0xff]
    %v9117 = vld [vmem:[#allocation17 + $0x150] sm:$0xff]
    %v9118 = vld [vmem:[#allocation17 + $0x158] sm:$0xff]
    %v9119 = vld [vmem:[#allocation17 + $0x160] sm:$0xff]
    %v9120 = vld [vmem:[#allocation17 + $0x168] sm:$0xff]
    %v9121 = vld [vmem:[#allocation17 + $0x170] sm:$0xff]
    %v9122 = vld [vmem:[#allocation17 + $0x178] sm:$0xff]
    %v9123 = vld [vmem:[#allocation17 + $0x180] sm:$0xff]
    %v9124 = vld [vmem:[#allocation17 + $0x188] sm:$0xff]
    %v9125 = vld [vmem:[#allocation17 + $0x190] sm:$0xff]
    %v9126 = vld [vmem:[#allocation17 + $0x198] sm:$0xff]
    %v9127 = vld [vmem:[#allocation17 + $0x1a0] sm:$0xff]
    %v9128 = vld [vmem:[#allocation17 + $0x1a8] sm:$0xff]
    %v9129 = vld [vmem:[#allocation17 + $0x1b0] sm:$0xff]
    %v9130 = vld [vmem:[#allocation17 + $0x1b8] sm:$0xff]
    %v9131 = vld [vmem:[#allocation17 + $0x1c0] sm:$0xff]
    %v9132 = vld [vmem:[#allocation17 + $0x1c8] sm:$0xff]
    %v9133 = vld [vmem:[#allocation17 + $0x1d0] sm:$0xff]
    %v9134 = vld [vmem:[#allocation17 + $0x1d8] sm:$0xff]
    %v9135 = vld [vmem:[#allocation17 + $0x1e0] sm:$0xff]
    %v9136 = vld [vmem:[#allocation17 + $0x1e8] sm:$0xff]
    %v9137 = vld [vmem:[#allocation17 + $0x1f0] sm:$0xff]
    %v9138 = vld [vmem:[#allocation17 + $0x1f8] sm:$0xff]
    %v9139 = vld [vmem:[#allocation5] sm:$0x1]
    %v9140 = vld [vmem:[#allocation19] sm:$0xf]
    %v9143 = vunpack.c.l.s4 1983009808
    %v9144 = vunpack.c.0.s8 %v9143
    %v9145 = vlaneseq
    %v9146 = vshrl.u32 %v9145, 7
    %v9147 = vsub.s32 %v9144, %v9146
    %v9148 = vrot.slane %v9140, %v9147
    %v9149 = vcombine.high %v9148, %v9148
    %vm9150 = vcmask 15360
    %v9152 = vsel %vm9150, %v9139, 0
    %vm9154 = vcmask 1041408
    %v9155 = vsel %vm9154, %v9148, 0
    %v9157 = vsel %vm9154, %v9149, 0
    %9159 = vmatprep.subr.mxu0 %v9157
    %9160 = vmatpush1.msra.mxu0 %v9155
    %9161 = vmatprep.subr.mxu0 0.0
    %9162 = vmatpush1.msra.mxu0 0.0
    %9163 = vmatprep.subr.mxu0 0.0
    %9164 = vmatpush1.msra.mxu0 0.0
    %9165 = vmatprep.subr.mxu0 0.0
    %9166 = vmatpush1.msra.mxu0 0.0
    %9167 = vmatprep.subr.mxu0 0.0
    %9168 = vmatpush1.msra.mxu0 0.0
    %9169 = vmatprep.subr.mxu0 0.0
    %9170 = vmatpush1.msra.mxu0 0.0
    %9171 = vmatprep.subr.mxu0 0.0
    %9172 = vmatpush1.msra.mxu0 0.0
    %9173 = vmatprep.subr.mxu0 0.0
    %9174 = vmatpush1.msra.mxu0 0.0
    %9175 = vmatprep.subr.mxu0 0.0
    %9176 = vmatpush1.msra.mxu0 0.0
    %9177 = vmatprep.subr.mxu0 0.0
    %9178 = vmatpush1.msra.mxu0 0.0
    %9179 = vmatprep.subr.mxu0 0.0
    %9180 = vmatpush1.msra.mxu0 0.0
    %9181 = vmatprep.subr.mxu0 0.0
    %9182 = vmatpush1.msra.mxu0 0.0
    %9183 = vmatprep.subr.mxu0 0.0
    %9184 = vmatpush1.msra.mxu0 0.0
    %9185 = vmatprep.subr.mxu0 0.0
    %9186 = vmatpush1.msra.mxu0 0.0
    %9187 = vmatprep.subr.mxu0 0.0
    %9188 = vmatpush1.msra.mxu0 0.0
    %9189 = vmatprep.subr.mxu0 0.0
    %9190 = vmatpush1.msra.mxu0 0.0
    %9191 = vmatprep.subr.mxu0 0.0
    %9192 = vmatpush1.msra.mxu0 0.0
    %9193 = vmatprep.subr.mxu0 0.0
    %9194 = vmatpush1.msra.mxu0 0.0
    %9195 = vmatprep.subr.mxu0 0.0
    %9196 = vmatpush1.msra.mxu0 0.0
    %9197 = vmatprep.subr.mxu0 0.0
    %9198 = vmatpush1.msra.mxu0 0.0
    %9199 = vmatprep.subr.mxu0 0.0
    %9200 = vmatpush1.msra.mxu0 0.0
    %9201 = vmatprep.subr.mxu0 0.0
    %9202 = vmatpush1.msra.mxu0 0.0
    %9203 = vmatprep.subr.mxu0 0.0
    %9204 = vmatpush1.msra.mxu0 0.0
    %9205 = vmatprep.subr.mxu0 0.0
    %9206 = vmatpush1.msra.mxu0 0.0
    %9207 = vmatprep.subr.mxu0 0.0
    %9208 = vmatpush1.msra.mxu0 0.0
    %9209 = vmatprep.subr.mxu0 0.0
    %9210 = vmatpush1.msra.mxu0 0.0
    %9211 = vmatprep.subr.mxu0 0.0
    %9212 = vmatpush1.msra.mxu0 0.0
    %9213 = vmatprep.subr.mxu0 0.0
    %9214 = vmatpush1.msra.mxu0 0.0
    %9215 = vmatprep.subr.mxu0 0.0
    %9216 = vmatpush1.msra.mxu0 0.0
    %9217 = vmatprep.subr.mxu0 0.0
    %9218 = vmatpush1.msra.mxu0 0.0
    %9219 = vmatprep.subr.mxu0 0.0
    %9220 = vmatpush1.msra.mxu0 0.0
    %9221 = vmatprep.subr.mxu0 0.0
    %9222 = vmatpush1.msra.mxu0 0.0
    %9223 = vmatprep.mubr.f32.mxu0 0.0
    %9224 = vmatmul.mubr.f32.gmra.mrb[0].mxu0 %v9152
    %v9225 = vpop.f32.mrb[0].mxu0
    %v9226 = vadd.f32 0.0, %v9225
    %v9227 = vpop.f32.mrb[0].mxu0
    %v9228 = vadd.f32 0.0, %v9227
    %9229 = vdwg.mxu0
    %v9294 = vunpack.c.l.b16 %v9075
    %v9295 = vunpack.c.h.b16 %v9075
    %v9296 = vunpack.c.l.b16 %v9076
    %v9297 = vunpack.c.h.b16 %v9076
    %v9298 = vunpack.c.l.b16 %v9077
    %v9299 = vunpack.c.h.b16 %v9077
    %v9300 = vunpack.c.l.b16 %v9078
    %v9301 = vunpack.c.h.b16 %v9078
    %v9302 = vunpack.c.l.b16 %v9079
    %v9303 = vunpack.c.h.b16 %v9079
    %v9304 = vunpack.c.l.b16 %v9080
    %v9305 = vunpack.c.h.b16 %v9080
    %v9306 = vunpack.c.l.b16 %v9081
    %v9307 = vunpack.c.h.b16 %v9081
    %v9308 = vunpack.c.l.b16 %v9082
    %v9309 = vunpack.c.h.b16 %v9082
    %v9310 = vunpack.c.l.b16 %v9083
    %v9311 = vunpack.c.h.b16 %v9083
    %v9312 = vunpack.c.l.b16 %v9084
    %v9313 = vunpack.c.h.b16 %v9084
    %v9314 = vunpack.c.l.b16 %v9085
    %v9315 = vunpack.c.h.b16 %v9085
    %v9316 = vunpack.c.l.b16 %v9086
    %v9317 = vunpack.c.h.b16 %v9086
    %v9318 = vunpack.c.l.b16 %v9087
    %v9319 = vunpack.c.h.b16 %v9087
    %v9320 = vunpack.c.l.b16 %v9088
    %v9321 = vunpack.c.h.b16 %v9088
    %v9322 = vunpack.c.l.b16 %v9089
    %v9323 = vunpack.c.h.b16 %v9089
    %v9324 = vunpack.c.l.b16 %v9090
    %v9325 = vunpack.c.h.b16 %v9090
    %v9326 = vunpack.c.l.b16 %v9091
    %v9327 = vunpack.c.h.b16 %v9091
    %v9328 = vunpack.c.l.b16 %v9092
    %v9329 = vunpack.c.h.b16 %v9092
    %v9330 = vunpack.c.l.b16 %v9093
    %v9331 = vunpack.c.h.b16 %v9093
    %v9332 = vunpack.c.l.b16 %v9094
    %v9333 = vunpack.c.h.b16 %v9094
    %v9334 = vunpack.c.l.b16 %v9095
    %v9335 = vunpack.c.h.b16 %v9095
    %v9336 = vunpack.c.l.b16 %v9096
    %v9337 = vunpack.c.h.b16 %v9096
    %v9338 = vunpack.c.l.b16 %v9097
    %v9339 = vunpack.c.h.b16 %v9097
    %v9340 = vunpack.c.l.b16 %v9098
    %v9341 = vunpack.c.h.b16 %v9098
    %v9342 = vunpack.c.l.b16 %v9099
    %v9343 = vunpack.c.h.b16 %v9099
    %v9344 = vunpack.c.l.b16 %v9100
    %v9345 = vunpack.c.h.b16 %v9100
    %v9346 = vunpack.c.l.b16 %v9101
    %v9347 = vunpack.c.h.b16 %v9101
    %v9348 = vunpack.c.l.b16 %v9102
    %v9349 = vunpack.c.h.b16 %v9102
    %v9350 = vunpack.c.l.b16 %v9103
    %v9351 = vunpack.c.h.b16 %v9103
    %v9352 = vunpack.c.l.b16 %v9104
    %v9353 = vunpack.c.h.b16 %v9104
    %v9354 = vunpack.c.l.b16 %v9105
    %v9355 = vunpack.c.h.b16 %v9105
    %v9356 = vunpack.c.l.b16 %v9106
    %v9357 = vunpack.c.h.b16 %v9106
    %v9358 = vunpack.c.l.b16 %v9107
    %v9359 = vunpack.c.h.b16 %v9107
    %v9360 = vunpack.c.l.b16 %v9108
    %v9361 = vunpack.c.h.b16 %v9108
    %v9362 = vunpack.c.l.b16 %v9109
    %v9363 = vunpack.c.h.b16 %v9109
    %v9364 = vunpack.c.l.b16 %v9110
    %v9365 = vunpack.c.h.b16 %v9110
    %v9366 = vunpack.c.l.b16 %v9111
    %v9367 = vunpack.c.h.b16 %v9111
    %v9368 = vunpack.c.l.b16 %v9112
    %v9369 = vunpack.c.h.b16 %v9112
    %v9370 = vunpack.c.l.b16 %v9113
    %v9371 = vunpack.c.h.b16 %v9113
    %v9372 = vunpack.c.l.b16 %v9114
    %v9373 = vunpack.c.h.b16 %v9114
    %v9374 = vunpack.c.l.b16 %v9115
    %v9375 = vunpack.c.h.b16 %v9115
    %v9376 = vunpack.c.l.b16 %v9116
    %v9377 = vunpack.c.h.b16 %v9116
    %v9378 = vunpack.c.l.b16 %v9117
    %v9379 = vunpack.c.h.b16 %v9117
    %v9380 = vunpack.c.l.b16 %v9118
    %v9381 = vunpack.c.h.b16 %v9118
    %v9382 = vunpack.c.l.b16 %v9119
    %v9383 = vunpack.c.h.b16 %v9119
    %v9384 = vunpack.c.l.b16 %v9120
    %v9385 = vunpack.c.h.b16 %v9120
    %v9386 = vunpack.c.l.b16 %v9121
    %v9387 = vunpack.c.h.b16 %v9121
    %v9388 = vunpack.c.l.b16 %v9122
    %v9389 = vunpack.c.h.b16 %v9122
    %v9390 = vunpack.c.l.b16 %v9123
    %v9391 = vunpack.c.h.b16 %v9123
    %v9392 = vunpack.c.l.b16 %v9124
    %v9393 = vunpack.c.h.b16 %v9124
    %v9394 = vunpack.c.l.b16 %v9125
    %v9395 = vunpack.c.h.b16 %v9125
    %v9396 = vunpack.c.l.b16 %v9126
    %v9397 = vunpack.c.h.b16 %v9126
    %v9398 = vunpack.c.l.b16 %v9127
    %v9399 = vunpack.c.h.b16 %v9127
    %v9400 = vunpack.c.l.b16 %v9128
    %v9401 = vunpack.c.h.b16 %v9128
    %v9402 = vunpack.c.l.b16 %v9129
    %v9403 = vunpack.c.h.b16 %v9129
    %v9404 = vunpack.c.l.b16 %v9130
    %v9405 = vunpack.c.h.b16 %v9130
    %v9406 = vunpack.c.l.b16 %v9131
    %v9407 = vunpack.c.h.b16 %v9131
    %v9408 = vunpack.c.l.b16 %v9132
    %v9409 = vunpack.c.h.b16 %v9132
    %v9410 = vunpack.c.l.b16 %v9133
    %v9411 = vunpack.c.h.b16 %v9133
    %v9412 = vunpack.c.l.b16 %v9134
    %v9413 = vunpack.c.h.b16 %v9134
    %v9414 = vunpack.c.l.b16 %v9135
    %v9415 = vunpack.c.h.b16 %v9135
    %v9416 = vunpack.c.l.b16 %v9136
    %v9417 = vunpack.c.h.b16 %v9136
    %v9418 = vunpack.c.l.b16 %v9137
    %v9419 = vunpack.c.h.b16 %v9137
    %v9420 = vunpack.c.l.b16 %v9138
    %v9421 = vunpack.c.h.b16 %v9138
    %v9422 = vpack.c.b16 %v9296, %v9294
    %v9423 = vpack.c.b16 %v9297, %v9295
    %v9424 = vpack.c.b16 %v9300, %v9298
    %v9425 = vpack.c.b16 %v9301, %v9299
    %v9426 = vpack.c.b16 %v9304, %v9302
    %v9427 = vpack.c.b16 %v9305, %v9303
    %v9428 = vpack.c.b16 %v9308, %v9306
    %v9429 = vpack.c.b16 %v9309, %v9307
    %v9430 = vpack.c.b16 %v9312, %v9310
    %v9431 = vpack.c.b16 %v9313, %v9311
    %v9432 = vpack.c.b16 %v9316, %v9314
    %v9433 = vpack.c.b16 %v9317, %v9315
    %v9434 = vpack.c.b16 %v9320, %v9318
    %v9435 = vpack.c.b16 %v9321, %v9319
    %v9436 = vpack.c.b16 %v9324, %v9322
    %v9437 = vpack.c.b16 %v9325, %v9323
    %v9438 = vpack.c.b16 %v9328, %v9326
    %v9439 = vpack.c.b16 %v9329, %v9327
    %v9440 = vpack.c.b16 %v9332, %v9330
    %v9441 = vpack.c.b16 %v9333, %v9331
    %v9442 = vpack.c.b16 %v9336, %v9334
    %v9443 = vpack.c.b16 %v9337, %v9335
    %v9444 = vpack.c.b16 %v9340, %v9338
    %v9445 = vpack.c.b16 %v9341, %v9339
    %v9446 = vpack.c.b16 %v9344, %v9342
    %v9447 = vpack.c.b16 %v9345, %v9343
    %v9448 = vpack.c.b16 %v9348, %v9346
    %v9449 = vpack.c.b16 %v9349, %v9347
    %v9450 = vpack.c.b16 %v9352, %v9350
    %v9451 = vpack.c.b16 %v9353, %v9351
    %v9452 = vpack.c.b16 %v9356, %v9354
    %v9453 = vpack.c.b16 %v9357, %v9355
    %v9454 = vpack.c.b16 %v9360, %v9358
    %v9455 = vpack.c.b16 %v9361, %v9359
    %v9456 = vpack.c.b16 %v9364, %v9362
    %v9457 = vpack.c.b16 %v9365, %v9363
    %v9458 = vpack.c.b16 %v9368, %v9366
    %v9459 = vpack.c.b16 %v9369, %v9367
    %v9460 = vpack.c.b16 %v9372, %v9370
    %v9461 = vpack.c.b16 %v9373, %v9371
    %v9462 = vpack.c.b16 %v9376, %v9374
    %v9463 = vpack.c.b16 %v9377, %v9375
    %v9464 = vpack.c.b16 %v9380, %v9378
    %v9465 = vpack.c.b16 %v9381, %v9379
    %v9466 = vpack.c.b16 %v9384, %v9382
    %v9467 = vpack.c.b16 %v9385, %v9383
    %v9468 = vpack.c.b16 %v9388, %v9386
    %v9469 = vpack.c.b16 %v9389, %v9387
    %v9470 = vpack.c.b16 %v9392, %v9390
    %v9471 = vpack.c.b16 %v9393, %v9391
    %v9472 = vpack.c.b16 %v9396, %v9394
    %v9473 = vpack.c.b16 %v9397, %v9395
    %v9474 = vpack.c.b16 %v9400, %v9398
    %v9475 = vpack.c.b16 %v9401, %v9399
    %v9476 = vpack.c.b16 %v9404, %v9402
    %v9477 = vpack.c.b16 %v9405, %v9403
    %v9478 = vpack.c.b16 %v9408, %v9406
    %v9479 = vpack.c.b16 %v9409, %v9407
    %v9480 = vpack.c.b16 %v9412, %v9410
    %v9481 = vpack.c.b16 %v9413, %v9411
    %v9482 = vpack.c.b16 %v9416, %v9414
    %v9483 = vpack.c.b16 %v9417, %v9415
    %v9484 = vpack.c.b16 %v9420, %v9418
    %v9485 = vpack.c.b16 %v9421, %v9419
    %9550 = vmatprep.subr.bf16.mxu0 %v9423
    %9551 = vmatpush1.bf16.msra.mxu0 %v9422
    %9552 = vmatprep.subr.bf16.mxu0 %v9425
    %9553 = vmatpush1.bf16.msra.mxu0 %v9424
    %9554 = vmatprep.subr.bf16.mxu0 %v9427
    %9555 = vmatpush1.bf16.msra.mxu0 %v9426
    %9556 = vmatprep.subr.bf16.mxu0 %v9429
    %9557 = vmatpush1.bf16.msra.mxu0 %v9428
    %9558 = vmatprep.subr.bf16.mxu0 %v9431
    %9559 = vmatpush1.bf16.msra.mxu0 %v9430
    %9560 = vmatprep.subr.bf16.mxu0 %v9433
    %9561 = vmatpush1.bf16.msra.mxu0 %v9432
    %9562 = vmatprep.subr.bf16.mxu0 %v9435
    %9563 = vmatpush1.bf16.msra.mxu0 %v9434
    %9564 = vmatprep.subr.bf16.mxu0 %v9437
    %9565 = vmatpush1.bf16.msra.mxu0 %v9436
    %9566 = vmatprep.subr.bf16.mxu0 %v9439
    %9567 = vmatpush1.bf16.msra.mxu0 %v9438
    %9568 = vmatprep.subr.bf16.mxu0 %v9441
    %9569 = vmatpush1.bf16.msra.mxu0 %v9440
    %9570 = vmatprep.subr.bf16.mxu0 %v9443
    %9571 = vmatpush1.bf16.msra.mxu0 %v9442
    %9572 = vmatprep.subr.bf16.mxu0 %v9445
    %9573 = vmatpush1.bf16.msra.mxu0 %v9444
    %9574 = vmatprep.subr.bf16.mxu0 %v9447
    %9575 = vmatpush1.bf16.msra.mxu0 %v9446
    %9576 = vmatprep.subr.bf16.mxu0 %v9449
    %9577 = vmatpush1.bf16.msra.mxu0 %v9448
    %9578 = vmatprep.subr.bf16.mxu0 %v9451
    %9579 = vmatpush1.bf16.msra.mxu0 %v9450
    %9580 = vmatprep.subr.bf16.mxu0 %v9453
    %9581 = vmatpush1.bf16.msra.mxu0 %v9452
    %9582 = vmatprep.mubr.bf16.mxu0 %v9072
    %9583 = vmatmul.mubr.bf16.gmra.mrb[0].mxu0 %v9071
    %v9584 = vpop.f32.mrb[0].mxu0
    %v9585 = vadd.f32 %v9226, %v9584
    %v9586 = vpop.f32.mrb[0].mxu0
    %v9587 = vadd.f32 %v9228, %v9586
    %v9588 = vpop.f32.mrb[0].mxu0
    %v9589 = vpop.f32.mrb[0].mxu0
    %9590 = vdwg.mxu0
    %9591 = vmatprep.subr.bf16.mxu0 %v9455
    %9592 = vmatpush1.bf16.msra.mxu0 %v9454
    %9593 = vmatprep.subr.bf16.mxu0 %v9457
    %9594 = vmatpush1.bf16.msra.mxu0 %v9456
    %9595 = vmatprep.subr.bf16.mxu0 %v9459
    %9596 = vmatpush1.bf16.msra.mxu0 %v9458
    %9597 = vmatprep.subr.bf16.mxu0 %v9461
    %9598 = vmatpush1.bf16.msra.mxu0 %v9460
    %9599 = vmatprep.subr.bf16.mxu0 %v9463
    %9600 = vmatpush1.bf16.msra.mxu0 %v9462
    %9601 = vmatprep.subr.bf16.mxu0 %v9465
    %9602 = vmatpush1.bf16.msra.mxu0 %v9464
    %9603 = vmatprep.subr.bf16.mxu0 %v9467
    %9604 = vmatpush1.bf16.msra.mxu0 %v9466
    %9605 = vmatprep.subr.bf16.mxu0 %v9469
    %9606 = vmatpush1.bf16.msra.mxu0 %v9468
    %9607 = vmatprep.subr.bf16.mxu0 %v9471
    %9608 = vmatpush1.bf16.msra.mxu0 %v9470
    %9609 = vmatprep.subr.bf16.mxu0 %v9473
    %9610 = vmatpush1.bf16.msra.mxu0 %v9472
    %9611 = vmatprep.subr.bf16.mxu0 %v9475
    %9612 = vmatpush1.bf16.msra.mxu0 %v9474
    %9613 = vmatprep.subr.bf16.mxu0 %v9477
    %9614 = vmatpush1.bf16.msra.mxu0 %v9476
    %9615 = vmatprep.subr.bf16.mxu0 %v9479
    %9616 = vmatpush1.bf16.msra.mxu0 %v9478
    %9617 = vmatprep.subr.bf16.mxu0 %v9481
    %9618 = vmatpush1.bf16.msra.mxu0 %v9480
    %9619 = vmatprep.subr.bf16.mxu0 %v9483
    %9620 = vmatpush1.bf16.msra.mxu0 %v9482
    %9621 = vmatprep.subr.bf16.mxu0 %v9485
    %9622 = vmatpush1.bf16.msra.mxu0 %v9484
    %9623 = vmatprep.mubr.bf16.mxu0 %v9074
    %9624 = vmatmul.mubr.bf16.gmra.mrb[0].mxu0 %v9073
    %v9625 = vpop.f32.mrb[0].mxu0
    %v9626 = vadd.f32 %v9585, %v9625
    %v9627 = vpop.f32.mrb[0].mxu0
    %v9628 = vadd.f32 %v9587, %v9627
    %v9629 = vpop.f32.mrb[0].mxu0
    %v9630 = vpop.f32.mrb[0].mxu0
    %9631 = vdwg.mxu0
    %v9632 = vld [vmem:[#allocation20] sm:$0x3]
    %v9634 = vlaneseq
    %v9635 = vshrl.u32 %v9634, 7
    %v9636 = vsub.s32 0, %v9635
    %v9637 = vrot.slane %v9632, %v9636
    %v9638 = vlaneseq
    %v9639 = vshrl.u32 %v9638, 7
    %v9640 = vsub.s32 1, %v9639
    %v9641 = vrot.slane %v9632, %v9640
    %v9644 = vadd.f32 %v9626, %v9637
    %v9645 = vadd.f32 %v9628, %v9641
    %v9646 = vmax.f32 %v9644, 0.0
    %v9647 = vmax.f32 %v9645, 0.0
    %v9648 = vpack.c.bf16 %v9646, %v9646
    %v9649 = vpack.c.bf16 %v9647, %v9647
    %v9650 = vld [vmem:[#allocation22] sm:$0xf]
    %v9651 = vld [vmem:[#allocation22 + $0x4] sm:$0xf]
    %v9652 = vld [vmem:[#allocation22 + $0x8] sm:$0xf]
    %v9653 = vld [vmem:[#allocation22 + $0xc] sm:$0xf]
    %v9654 = vld [vmem:[#allocation22 + $0x10] sm:$0xf]
    %v9655 = vld [vmem:[#allocation22 + $0x14] sm:$0xf]
    %v9656 = vld [vmem:[#allocation22 + $0x18] sm:$0xf]
    %v9657 = vld [vmem:[#allocation22 + $0x1c] sm:$0xf]
    %v9658 = vld [vmem:[#allocation22 + $0x20] sm:$0xf]
    %v9659 = vld [vmem:[#allocation22 + $0x24] sm:$0xf]
    %v9660 = vld [vmem:[#allocation22 + $0x28] sm:$0xf]
    %v9661 = vld [vmem:[#allocation22 + $0x2c] sm:$0xf]
    %v9662 = vld [vmem:[#allocation22 + $0x30] sm:$0xf]
    %v9663 = vld [vmem:[#allocation22 + $0x34] sm:$0xf]
    %v9664 = vld [vmem:[#allocation22 + $0x38] sm:$0xf]
    %v9665 = vld [vmem:[#allocation22 + $0x3c] sm:$0xf]
    %v9666 = vld [vmem:[#allocation22 + $0x40] sm:$0xf]
    %v9667 = vld [vmem:[#allocation22 + $0x44] sm:$0xf]
    %v9668 = vld [vmem:[#allocation22 + $0x48] sm:$0xf]
    %v9669 = vld [vmem:[#allocation22 + $0x4c] sm:$0xf]
    %v9670 = vld [vmem:[#allocation22 + $0x50] sm:$0xf]
    %v9671 = vld [vmem:[#allocation22 + $0x54] sm:$0xf]
    %v9672 = vld [vmem:[#allocation22 + $0x58] sm:$0xf]
    %v9673 = vld [vmem:[#allocation22 + $0x5c] sm:$0xf]
    %v9674 = vld [vmem:[#allocation22 + $0x60] sm:$0xf]
    %v9675 = vld [vmem:[#allocation22 + $0x64] sm:$0xf]
    %v9676 = vld [vmem:[#allocation22 + $0x68] sm:$0xf]
    %v9677 = vld [vmem:[#allocation22 + $0x6c] sm:$0xf]
    %v9678 = vld [vmem:[#allocation22 + $0x70] sm:$0xf]
    %v9679 = vld [vmem:[#allocation22 + $0x74] sm:$0xf]
    %v9680 = vld [vmem:[#allocation22 + $0x78] sm:$0xf]
    %v9681 = vld [vmem:[#allocation22 + $0x7c] sm:$0xf]
    %v9682 = vld [vmem:[#allocation23] sm:$0x1]
    %v9715 = vunpack.c.l.b16 %v9650
    %v9716 = vunpack.c.l.b16 %v9651
    %v9717 = vunpack.c.l.b16 %v9652
    %v9718 = vunpack.c.l.b16 %v9653
    %v9719 = vunpack.c.l.b16 %v9654
    %v9720 = vunpack.c.l.b16 %v9655
    %v9721 = vunpack.c.l.b16 %v9656
    %v9722 = vunpack.c.l.b16 %v9657
    %v9723 = vunpack.c.l.b16 %v9658
    %v9724 = vunpack.c.l.b16 %v9659
    %v9725 = vunpack.c.l.b16 %v9660
    %v9726 = vunpack.c.l.b16 %v9661
    %v9727 = vunpack.c.l.b16 %v9662
    %v9728 = vunpack.c.l.b16 %v9663
    %v9729 = vunpack.c.l.b16 %v9664
    %v9730 = vunpack.c.l.b16 %v9665
    %v9731 = vunpack.c.l.b16 %v9666
    %v9732 = vunpack.c.l.b16 %v9667
    %v9733 = vunpack.c.l.b16 %v9668
    %v9734 = vunpack.c.l.b16 %v9669
    %v9735 = vunpack.c.l.b16 %v9670
    %v9736 = vunpack.c.l.b16 %v9671
    %v9737 = vunpack.c.l.b16 %v9672
    %v9738 = vunpack.c.l.b16 %v9673
    %v9739 = vunpack.c.l.b16 %v9674
    %v9740 = vunpack.c.l.b16 %v9675
    %v9741 = vunpack.c.l.b16 %v9676
    %v9742 = vunpack.c.l.b16 %v9677
    %v9743 = vunpack.c.l.b16 %v9678
    %v9744 = vunpack.c.l.b16 %v9679
    %v9745 = vunpack.c.l.b16 %v9680
    %v9746 = vunpack.c.l.b16 %v9681
    %v9747 = vpack.c.b16 %v9716, %v9715
    %v9748 = vpack.c.b16 %v9718, %v9717
    %v9749 = vpack.c.b16 %v9720, %v9719
    %v9750 = vpack.c.b16 %v9722, %v9721
    %v9751 = vpack.c.b16 %v9724, %v9723
    %v9752 = vpack.c.b16 %v9726, %v9725
    %v9753 = vpack.c.b16 %v9728, %v9727
    %v9754 = vpack.c.b16 %v9730, %v9729
    %v9755 = vpack.c.b16 %v9732, %v9731
    %v9756 = vpack.c.b16 %v9734, %v9733
    %v9757 = vpack.c.b16 %v9736, %v9735
    %v9758 = vpack.c.b16 %v9738, %v9737
    %v9759 = vpack.c.b16 %v9740, %v9739
    %v9760 = vpack.c.b16 %v9742, %v9741
    %v9761 = vpack.c.b16 %v9744, %v9743
    %v9762 = vpack.c.b16 %v9746, %v9745
    %9779 = vmatprep.subr.bf16.mxu0 0
    %9780 = vmatpush1.bf16.msra.mxu0 %v9747
    %9781 = vmatprep.subr.bf16.mxu0 0
    %9782 = vmatpush1.bf16.msra.mxu0 %v9748
    %9783 = vmatprep.subr.bf16.mxu0 0
    %9784 = vmatpush1.bf16.msra.mxu0 %v9749
    %9785 = vmatprep.subr.bf16.mxu0 0
    %9786 = vmatpush1.bf16.msra.mxu0 %v9750
    %9787 = vmatprep.subr.bf16.mxu0 0
    %9788 = vmatpush1.bf16.msra.mxu0 %v9751
    %9789 = vmatprep.subr.bf16.mxu0 0
    %9790 = vmatpush1.bf16.msra.mxu0 %v9752
    %9791 = vmatprep.subr.bf16.mxu0 0
    %9792 = vmatpush1.bf16.msra.mxu0 %v9753
    %9793 = vmatprep.subr.bf16.mxu0 0
    %9794 = vmatpush1.bf16.msra.mxu0 %v9754
    %9795 = vmatprep.subr.bf16.mxu0 0
    %9796 = vmatpush1.bf16.msra.mxu0 %v9755
    %9797 = vmatprep.subr.bf16.mxu0 0
    %9798 = vmatpush1.bf16.msra.mxu0 %v9756
    %9799 = vmatprep.subr.bf16.mxu0 0
    %9800 = vmatpush1.bf16.msra.mxu0 %v9757
    %9801 = vmatprep.subr.bf16.mxu0 0
    %9802 = vmatpush1.bf16.msra.mxu0 %v9758
    %9803 = vmatprep.subr.bf16.mxu0 0
    %9804 = vmatpush1.bf16.msra.mxu0 %v9759
    %9805 = vmatprep.subr.bf16.mxu0 0
    %9806 = vmatpush1.bf16.msra.mxu0 %v9760
    %9807 = vmatprep.subr.bf16.mxu0 0
    %9808 = vmatpush1.bf16.msra.mxu0 %v9761
    %9809 = vmatprep.subr.bf16.mxu0 0
    %9810 = vmatpush1.bf16.msra.mxu0 %v9762
    %9811 = vmatprep.mubr.bf16.mxu0 %v9649
    %9812 = vmatmul.mubr.bf16.gmra.mrb[0].mxu0 %v9648
    %v9813 = vpop.f32.mrb[0].mxu0
    %v9814 = vadd.f32 %v9682, %v9813
    %v9815 = vpop.f32.mrb[0].mxu0
    %v9816 = vpop.f32.mrb[0].mxu0
    %v9817 = vpop.f32.mrb[0].mxu0
    %9818 = vdwg.mxu0
    %v9819 = vmax.f32 %v9814, 0.0
    %v9820 = vld [vmem:[#allocation8] sm:$0x1]
    %v9821 = vld [vmem:[#allocation10] sm:$0x1]
    %v9822 = vpack.c.bf16 %v9819, %v9819
    %v9823 = vld [vmem:[#allocation25] sm:$0xff]
    %v9824 = vld [vmem:[#allocation25 + $0x8] sm:$0xff]
    %v9825 = vld [vmem:[#allocation25 + $0x10] sm:$0xff]
    %v9826 = vld [vmem:[#allocation25 + $0x18] sm:$0xff]
    %v9827 = vld [vmem:[#allocation25 + $0x20] sm:$0xff]
    %v9828 = vld [vmem:[#allocation25 + $0x28] sm:$0xff]
    %v9829 = vld [vmem:[#allocation25 + $0x30] sm:$0xff]
    %v9830 = vld [vmem:[#allocation25 + $0x38] sm:$0xff]
    %v9831 = vld [vmem:[#allocation25 + $0x40] sm:$0xff]
    %v9832 = vld [vmem:[#allocation25 + $0x48] sm:$0xff]
    %v9833 = vld [vmem:[#allocation25 + $0x50] sm:$0xff]
    %v9834 = vld [vmem:[#allocation25 + $0x58] sm:$0xff]
    %v9835 = vld [vmem:[#allocation25 + $0x60] sm:$0xff]
    %v9836 = vld [vmem:[#allocation25 + $0x68] sm:$0xff]
    %v9837 = vld [vmem:[#allocation25 + $0x70] sm:$0xff]
    %v9838 = vld [vmem:[#allocation25 + $0x78] sm:$0xff]
    %v9839 = vld [vmem:[#allocation25 + $0x80] sm:$0xff]
    %v9840 = vld [vmem:[#allocation25 + $0x88] sm:$0xff]
    %v9841 = vld [vmem:[#allocation25 + $0x90] sm:$0xff]
    %v9842 = vld [vmem:[#allocation25 + $0x98] sm:$0xff]
    %v9843 = vld [vmem:[#allocation25 + $0xa0] sm:$0xff]
    %v9844 = vld [vmem:[#allocation25 + $0xa8] sm:$0xff]
    %v9845 = vld [vmem:[#allocation25 + $0xb0] sm:$0xff]
    %v9846 = vld [vmem:[#allocation25 + $0xb8] sm:$0xff]
    %v9847 = vld [vmem:[#allocation25 + $0xc0] sm:$0xff]
    %v9848 = vld [vmem:[#allocation25 + $0xc8] sm:$0xff]
    %v9849 = vld [vmem:[#allocation25 + $0xd0] sm:$0xff]
    %v9850 = vld [vmem:[#allocation25 + $0xd8] sm:$0xff]
    %v9851 = vld [vmem:[#allocation25 + $0xe0] sm:$0xff]
    %v9852 = vld [vmem:[#allocation25 + $0xe8] sm:$0xff]
    %v9853 = vld [vmem:[#allocation25 + $0xf0] sm:$0xff]
    %v9854 = vld [vmem:[#allocation25 + $0xf8] sm:$0xff]
    %v9855 = vpack.c.bf16 %v9820, %v9820
    %v9856 = vld [vmem:[#allocation26] sm:$0xff]
    %v9857 = vld [vmem:[#allocation26 + $0x8] sm:$0xff]
    %v9858 = vld [vmem:[#allocation26 + $0x10] sm:$0xff]
    %v9859 = vld [vmem:[#allocation26 + $0x18] sm:$0xff]
    %v9860 = vld [vmem:[#allocation26 + $0x20] sm:$0xff]
    %v9861 = vld [vmem:[#allocation26 + $0x28] sm:$0xff]
    %v9862 = vld [vmem:[#allocation26 + $0x30] sm:$0xff]
    %v9863 = vld [vmem:[#allocation26 + $0x38] sm:$0xff]
    %v9864 = vld [vmem:[#allocation26 + $0x40] sm:$0xff]
    %v9865 = vld [vmem:[#allocation26 + $0x48] sm:$0xff]
    %v9866 = vld [vmem:[#allocation26 + $0x50] sm:$0xff]
    %v9867 = vld [vmem:[#allocation26 + $0x58] sm:$0xff]
    %v9868 = vld [vmem:[#allocation26 + $0x60] sm:$0xff]
    %v9869 = vld [vmem:[#allocation26 + $0x68] sm:$0xff]
    %v9870 = vld [vmem:[#allocation26 + $0x70] sm:$0xff]
    %v9871 = vld [vmem:[#allocation26 + $0x78] sm:$0xff]
    %v9872 = vld [vmem:[#allocation26 + $0x80] sm:$0xff]
    %v9873 = vld [vmem:[#allocation26 + $0x88] sm:$0xff]
    %v9874 = vld [vmem:[#allocation26 + $0x90] sm:$0xff]
    %v9875 = vld [vmem:[#allocation26 + $0x98] sm:$0xff]
    %v9876 = vld [vmem:[#allocation26 + $0xa0] sm:$0xff]
    %v9877 = vld [vmem:[#allocation26 + $0xa8] sm:$0xff]
    %v9878 = vld [vmem:[#allocation26 + $0xb0] sm:$0xff]
    %v9879 = vld [vmem:[#allocation26 + $0xb8] sm:$0xff]
    %v9880 = vld [vmem:[#allocation26 + $0xc0] sm:$0xff]
    %v9881 = vld [vmem:[#allocation26 + $0xc8] sm:$0xff]
    %v9882 = vld [vmem:[#allocation26 + $0xd0] sm:$0xff]
    %v9883 = vld [vmem:[#allocation26 + $0xd8] sm:$0xff]
    %v9884 = vld [vmem:[#allocation26 + $0xe0] sm:$0xff]
    %v9885 = vld [vmem:[#allocation26 + $0xe8] sm:$0xff]
    %v9886 = vld [vmem:[#allocation26 + $0xf0] sm:$0xff]
    %v9887 = vld [vmem:[#allocation26 + $0xf8] sm:$0xff]
    %v9920 = vunpack.c.l.b16 %v9856
    %v9921 = vunpack.c.h.b16 %v9856
    %v9922 = vunpack.c.l.b16 %v9857
    %v9923 = vunpack.c.h.b16 %v9857
    %v9924 = vunpack.c.l.b16 %v9858
    %v9925 = vunpack.c.h.b16 %v9858
    %v9926 = vunpack.c.l.b16 %v9859
    %v9927 = vunpack.c.h.b16 %v9859
    %v9928 = vunpack.c.l.b16 %v9860
    %v9929 = vunpack.c.h.b16 %v9860
    %v9930 = vunpack.c.l.b16 %v9861
    %v9931 = vunpack.c.h.b16 %v9861
    %v9932 = vunpack.c.l.b16 %v9862
    %v9933 = vunpack.c.h.b16 %v9862
    %v9934 = vunpack.c.l.b16 %v9863
    %v9935 = vunpack.c.h.b16 %v9863
    %v9936 = vunpack.c.l.b16 %v9864
    %v9937 = vunpack.c.h.b16 %v9864
    %v9938 = vunpack.c.l.b16 %v9865
    %v9939 = vunpack.c.h.b16 %v9865
    %v9940 = vunpack.c.l.b16 %v9866
    %v9941 = vunpack.c.h.b16 %v9866
    %v9942 = vunpack.c.l.b16 %v9867
    %v9943 = vunpack.c.h.b16 %v9867
    %v9944 = vunpack.c.l.b16 %v9868
    %v9945 = vunpack.c.h.b16 %v9868
    %v9946 = vunpack.c.l.b16 %v9869
    %v9947 = vunpack.c.h.b16 %v9869
    %v9948 = vunpack.c.l.b16 %v9870
    %v9949 = vunpack.c.h.b16 %v9870
    %v9950 = vunpack.c.l.b16 %v9871
    %v9951 = vunpack.c.h.b16 %v9871
    %v9952 = vunpack.c.l.b16 %v9872
    %v9953 = vunpack.c.h.b16 %v9872
    %v9954 = vunpack.c.l.b16 %v9873
    %v9955 = vunpack.c.h.b16 %v9873
    %v9956 = vunpack.c.l.b16 %v9874
    %v9957 = vunpack.c.h.b16 %v9874
    %v9958 = vunpack.c.l.b16 %v9875
    %v9959 = vunpack.c.h.b16 %v9875
    %v9960 = vunpack.c.l.b16 %v9876
    %v9961 = vunpack.c.h.b16 %v9876
    %v9962 = vunpack.c.l.b16 %v9877
    %v9963 = vunpack.c.h.b16 %v9877
    %v9964 = vunpack.c.l.b16 %v9878
    %v9965 = vunpack.c.h.b16 %v9878
    %v9966 = vunpack.c.l.b16 %v9879
    %v9967 = vunpack.c.h.b16 %v9879
    %v9968 = vunpack.c.l.b16 %v9880
    %v9969 = vunpack.c.h.b16 %v9880
    %v9970 = vunpack.c.l.b16 %v9881
    %v9971 = vunpack.c.h.b16 %v9881
    %v9972 = vunpack.c.l.b16 %v9882
    %v9973 = vunpack.c.h.b16 %v9882
    %v9974 = vunpack.c.l.b16 %v9883
    %v9975 = vunpack.c.h.b16 %v9883
    %v9976 = vunpack.c.l.b16 %v9884
    %v9977 = vunpack.c.h.b16 %v9884
    %v9978 = vunpack.c.l.b16 %v9885
    %v9979 = vunpack.c.h.b16 %v9885
    %v9980 = vunpack.c.l.b16 %v9886
    %v9981 = vunpack.c.h.b16 %v9886
    %v9982 = vunpack.c.l.b16 %v9887
    %v9983 = vunpack.c.h.b16 %v9887
    %v9984 = vpack.c.b16 %v9924, %v9920
    %v9985 = vpack.c.b16 %v9925, %v9921
    %v9986 = vpack.c.b16 %v9926, %v9922
    %v9987 = vpack.c.b16 %v9927, %v9923
    %v9988 = vpack.c.b16 %v9932, %v9928
    %v9989 = vpack.c.b16 %v9933, %v9929
    %v9990 = vpack.c.b16 %v9934, %v9930
    %v9991 = vpack.c.b16 %v9935, %v9931
    %v9992 = vpack.c.b16 %v9940, %v9936
    %v9993 = vpack.c.b16 %v9941, %v9937
    %v9994 = vpack.c.b16 %v9942, %v9938
    %v9995 = vpack.c.b16 %v9943, %v9939
    %v9996 = vpack.c.b16 %v9948, %v9944
    %v9997 = vpack.c.b16 %v9949, %v9945
    %v9998 = vpack.c.b16 %v9950, %v9946
    %v9999 = vpack.c.b16 %v9951, %v9947
    %v10000 = vpack.c.b16 %v9956, %v9952
    %v10001 = vpack.c.b16 %v9957, %v9953
    %v10002 = vpack.c.b16 %v9958, %v9954
    %v10003 = vpack.c.b16 %v9959, %v9955
    %v10004 = vpack.c.b16 %v9964, %v9960
    %v10005 = vpack.c.b16 %v9965, %v9961
    %v10006 = vpack.c.b16 %v9966, %v9962
    %v10007 = vpack.c.b16 %v9967, %v9963
    %v10008 = vpack.c.b16 %v9972, %v9968
    %v10009 = vpack.c.b16 %v9973, %v9969
    %v10010 = vpack.c.b16 %v9974, %v9970
    %v10011 = vpack.c.b16 %v9975, %v9971
    %v10012 = vpack.c.b16 %v9980, %v9976
    %v10013 = vpack.c.b16 %v9981, %v9977
    %v10014 = vpack.c.b16 %v9982, %v9978
    %v10015 = vpack.c.b16 %v9983, %v9979
    %10048 = vmatprep.subr.bf16.mxu0 %v9985
    %10049 = vmatpush1.bf16.msra.mxu0 %v9984
    %10050 = vmatprep.subr.bf16.mxu0 %v9989
    %10051 = vmatpush1.bf16.msra.mxu0 %v9988
    %10052 = vmatprep.subr.bf16.mxu0 %v9993
    %10053 = vmatpush1.bf16.msra.mxu0 %v9992
    %10054 = vmatprep.subr.bf16.mxu0 %v9997
    %10055 = vmatpush1.bf16.msra.mxu0 %v9996
    %10056 = vmatprep.subr.bf16.mxu0 %v10001
    %10057 = vmatpush1.bf16.msra.mxu0 %v10000
    %10058 = vmatprep.subr.bf16.mxu0 %v10005
    %10059 = vmatpush1.bf16.msra.mxu0 %v10004
    %10060 = vmatprep.subr.bf16.mxu0 %v10009
    %10061 = vmatpush1.bf16.msra.mxu0 %v10008
    %10062 = vmatprep.subr.bf16.mxu0 %v10013
    %10063 = vmatpush1.bf16.msra.mxu0 %v10012
    %10064 = vmatprep.subr.bf16.mxu0 0
    %10065 = vmatpush1.bf16.msra.mxu0 0
    %10066 = vmatprep.subr.bf16.mxu0 0
    %10067 = vmatpush1.bf16.msra.mxu0 0
    %10068 = vmatprep.subr.bf16.mxu0 0
    %10069 = vmatpush1.bf16.msra.mxu0 0
    %10070 = vmatprep.subr.bf16.mxu0 0
    %10071 = vmatpush1.bf16.msra.mxu0 0
    %10072 = vmatprep.subr.bf16.mxu0 0
    %10073 = vmatpush1.bf16.msra.mxu0 0
    %10074 = vmatprep.subr.bf16.mxu0 0
    %10075 = vmatpush1.bf16.msra.mxu0 0
    %10076 = vmatprep.subr.bf16.mxu0 0
    %10077 = vmatpush1.bf16.msra.mxu0 0
    %10078 = vmatprep.subr.bf16.mxu0 0
    %10079 = vmatpush1.bf16.msra.mxu0 0
    %10080 = vmatprep.mubr.bf16.mxu0 0
    %10081 = vmatmul.mubr.bf16.gmra.mrb[0].mxu0 %v9855
    %v10082 = vpop.f32.mrb[0].mxu0
    %v10083 = vadd.f32 0.0, %v10082
    %v10084 = vpop.f32.mrb[0].mxu0
    %v10085 = vadd.f32 0.0, %v10084
    %v10086 = vpop.f32.mrb[0].mxu0
    %v10087 = vpop.f32.mrb[0].mxu0
    %10088 = vdwg.mxu0
    %10089 = vmatprep.subr.bf16.mxu0 %v9987
    %10090 = vmatpush1.bf16.msra.mxu0 %v9986
    %10091 = vmatprep.subr.bf16.mxu0 %v9991
    %10092 = vmatpush1.bf16.msra.mxu0 %v9990
    %10093 = vmatprep.subr.bf16.mxu0 %v9995
    %10094 = vmatpush1.bf16.msra.mxu0 %v9994
    %10095 = vmatprep.subr.bf16.mxu0 %v9999
    %10096 = vmatpush1.bf16.msra.mxu0 %v9998
    %10097 = vmatprep.subr.bf16.mxu0 %v10003
    %10098 = vmatpush1.bf16.msra.mxu0 %v10002
    %10099 = vmatprep.subr.bf16.mxu0 %v10007
    %10100 = vmatpush1.bf16.msra.mxu0 %v10006
    %10101 = vmatprep.subr.bf16.mxu0 %v10011
    %10102 = vmatpush1.bf16.msra.mxu0 %v10010
    %10103 = vmatprep.subr.bf16.mxu0 %v10015
    %10104 = vmatpush1.bf16.msra.mxu0 %v10014
    %10105 = vmatprep.subr.bf16.mxu0 0
    %10106 = vmatpush1.bf16.msra.mxu0 0
    %10107 = vmatprep.subr.bf16.mxu0 0
    %10108 = vmatpush1.bf16.msra.mxu0 0
    %10109 = vmatprep.subr.bf16.mxu0 0
    %10110 = vmatpush1.bf16.msra.mxu0 0
    %10111 = vmatprep.subr.bf16.mxu0 0
    %10112 = vmatpush1.bf16.msra.mxu0 0
    %10113 = vmatprep.subr.bf16.mxu0 0
    %10114 = vmatpush1.bf16.msra.mxu0 0
    %10115 = vmatprep.subr.bf16.mxu0 0
    %10116 = vmatpush1.bf16.msra.mxu0 0
    %10117 = vmatprep.subr.bf16.mxu0 0
    %10118 = vmatpush1.bf16.msra.mxu0 0
    %10119 = vmatprep.subr.bf16.mxu0 0
    %10120 = vmatpush1.bf16.msra.mxu0 0
    %10121 = vmatprep.mubr.bf16.mxu0 0
    %10122 = vmatmul.mubr.bf16.gmra.mrb[0].mxu0 %v9855
    %v10123 = vpop.f32.mrb[0].mxu0
    %v10124 = vadd.f32 0.0, %v10123
    %v10125 = vpop.f32.mrb[0].mxu0
    %v10126 = vadd.f32 0.0, %v10125
    %v10127 = vpop.f32.mrb[0].mxu0
    %v10128 = vpop.f32.mrb[0].mxu0
    %10129 = vdwg.mxu0
    %v10162 = vunpack.c.l.b16 %v9823
    %v10163 = vunpack.c.h.b16 %v9823
    %v10164 = vunpack.c.l.b16 %v9824
    %v10165 = vunpack.c.h.b16 %v9824
    %v10166 = vunpack.c.l.b16 %v9825
    %v10167 = vunpack.c.h.b16 %v9825
    %v10168 = vunpack.c.l.b16 %v9826
    %v10169 = vunpack.c.h.b16 %v9826
    %v10170 = vunpack.c.l.b16 %v9827
    %v10171 = vunpack.c.h.b16 %v9827
    %v10172 = vunpack.c.l.b16 %v9828
    %v10173 = vunpack.c.h.b16 %v9828
    %v10174 = vunpack.c.l.b16 %v9829
    %v10175 = vunpack.c.h.b16 %v9829
    %v10176 = vunpack.c.l.b16 %v9830
    %v10177 = vunpack.c.h.b16 %v9830
    %v10178 = vunpack.c.l.b16 %v9831
    %v10179 = vunpack.c.h.b16 %v9831
    %v10180 = vunpack.c.l.b16 %v9832
    %v10181 = vunpack.c.h.b16 %v9832
    %v10182 = vunpack.c.l.b16 %v9833
    %v10183 = vunpack.c.h.b16 %v9833
    %v10184 = vunpack.c.l.b16 %v9834
    %v10185 = vunpack.c.h.b16 %v9834
    %v10186 = vunpack.c.l.b16 %v9835
    %v10187 = vunpack.c.h.b16 %v9835
    %v10188 = vunpack.c.l.b16 %v9836
    %v10189 = vunpack.c.h.b16 %v9836
    %v10190 = vunpack.c.l.b16 %v9837
    %v10191 = vunpack.c.h.b16 %v9837
    %v10192 = vunpack.c.l.b16 %v9838
    %v10193 = vunpack.c.h.b16 %v9838
    %v10194 = vunpack.c.l.b16 %v9839
    %v10195 = vunpack.c.h.b16 %v9839
    %v10196 = vunpack.c.l.b16 %v9840
    %v10197 = vunpack.c.h.b16 %v9840
    %v10198 = vunpack.c.l.b16 %v9841
    %v10199 = vunpack.c.h.b16 %v9841
    %v10200 = vunpack.c.l.b16 %v9842
    %v10201 = vunpack.c.h.b16 %v9842
    %v10202 = vunpack.c.l.b16 %v9843
    %v10203 = vunpack.c.h.b16 %v9843
    %v10204 = vunpack.c.l.b16 %v9844
    %v10205 = vunpack.c.h.b16 %v9844
    %v10206 = vunpack.c.l.b16 %v9845
    %v10207 = vunpack.c.h.b16 %v9845
    %v10208 = vunpack.c.l.b16 %v9846
    %v10209 = vunpack.c.h.b16 %v9846
    %v10210 = vunpack.c.l.b16 %v9847
    %v10211 = vunpack.c.h.b16 %v9847
    %v10212 = vunpack.c.l.b16 %v9848
    %v10213 = vunpack.c.h.b16 %v9848
    %v10214 = vunpack.c.l.b16 %v9849
    %v10215 = vunpack.c.h.b16 %v9849
    %v10216 = vunpack.c.l.b16 %v9850
    %v10217 = vunpack.c.h.b16 %v9850
    %v10218 = vunpack.c.l.b16 %v9851
    %v10219 = vunpack.c.h.b16 %v9851
    %v10220 = vunpack.c.l.b16 %v9852
    %v10221 = vunpack.c.h.b16 %v9852
    %v10222 = vunpack.c.l.b16 %v9853
    %v10223 = vunpack.c.h.b16 %v9853
    %v10224 = vunpack.c.l.b16 %v9854
    %v10225 = vunpack.c.h.b16 %v9854
    %v10226 = vpack.c.b16 %v10166, %v10162
    %v10227 = vpack.c.b16 %v10167, %v10163
    %v10228 = vpack.c.b16 %v10168, %v10164
    %v10229 = vpack.c.b16 %v10169, %v10165
    %v10230 = vpack.c.b16 %v10174, %v10170
    %v10231 = vpack.c.b16 %v10175, %v10171
    %v10232 = vpack.c.b16 %v10176, %v10172
    %v10233 = vpack.c.b16 %v10177, %v10173
    %v10234 = vpack.c.b16 %v10182, %v10178
    %v10235 = vpack.c.b16 %v10183, %v10179
    %v10236 = vpack.c.b16 %v10184, %v10180
    %v10237 = vpack.c.b16 %v10185, %v10181
    %v10238 = vpack.c.b16 %v10190, %v10186
    %v10239 = vpack.c.b16 %v10191, %v10187
    %v10240 = vpack.c.b16 %v10192, %v10188
    %v10241 = vpack.c.b16 %v10193, %v10189
    %v10242 = vpack.c.b16 %v10198, %v10194
    %v10243 = vpack.c.b16 %v10199, %v10195
    %v10244 = vpack.c.b16 %v10200, %v10196
    %v10245 = vpack.c.b16 %v10201, %v10197
    %v10246 = vpack.c.b16 %v10206, %v10202
    %v10247 = vpack.c.b16 %v10207, %v10203
    %v10248 = vpack.c.b16 %v10208, %v10204
    %v10249 = vpack.c.b16 %v10209, %v10205
    %v10250 = vpack.c.b16 %v10214, %v10210
    %v10251 = vpack.c.b16 %v10215, %v10211
    %v10252 = vpack.c.b16 %v10216, %v10212
    %v10253 = vpack.c.b16 %v10217, %v10213
    %v10254 = vpack.c.b16 %v10222, %v10218
    %v10255 = vpack.c.b16 %v10223, %v10219
    %v10256 = vpack.c.b16 %v10224, %v10220
    %v10257 = vpack.c.b16 %v10225, %v10221
    %10290 = vmatprep.subr.bf16.mxu0 %v10227
    %10291 = vmatpush1.bf16.msra.mxu0 %v10226
    %10292 = vmatprep.subr.bf16.mxu0 %v10231
    %10293 = vmatpush1.bf16.msra.mxu0 %v10230
    %10294 = vmatprep.subr.bf16.mxu0 %v10235
    %10295 = vmatpush1.bf16.msra.mxu0 %v10234
    %10296 = vmatprep.subr.bf16.mxu0 %v10239
    %10297 = vmatpush1.bf16.msra.mxu0 %v10238
    %10298 = vmatprep.subr.bf16.mxu0 %v10243
    %10299 = vmatpush1.bf16.msra.mxu0 %v10242
    %10300 = vmatprep.subr.bf16.mxu0 %v10247
    %10301 = vmatpush1.bf16.msra.mxu0 %v10246
    %10302 = vmatprep.subr.bf16.mxu0 %v10251
    %10303 = vmatpush1.bf16.msra.mxu0 %v10250
    %10304 = vmatprep.subr.bf16.mxu0 %v10255
    %10305 = vmatpush1.bf16.msra.mxu0 %v10254
    %10306 = vmatprep.subr.bf16.mxu0 0
    %10307 = vmatpush1.bf16.msra.mxu0 0
    %10308 = vmatprep.subr.bf16.mxu0 0
    %10309 = vmatpush1.bf16.msra.mxu0 0
    %10310 = vmatprep.subr.bf16.mxu0 0
    %10311 = vmatpush1.bf16.msra.mxu0 0
    %10312 = vmatprep.subr.bf16.mxu0 0
    %10313 = vmatpush1.bf16.msra.mxu0 0
    %10314 = vmatprep.subr.bf16.mxu0 0
    %10315 = vmatpush1.bf16.msra.mxu0 0
    %10316 = vmatprep.subr.bf16.mxu0 0
    %10317 = vmatpush1.bf16.msra.mxu0 0
    %10318 = vmatprep.subr.bf16.mxu0 0
    %10319 = vmatpush1.bf16.msra.mxu0 0
    %10320 = vmatprep.subr.bf16.mxu0 0
    %10321 = vmatpush1.bf16.msra.mxu0 0
    %10322 = vmatprep.mubr.bf16.mxu0 0
    %10323 = vmatmul.mubr.bf16.gmra.mrb[0].mxu0 %v9822
    %v10324 = vpop.f32.mrb[0].mxu0
    %v10325 = vadd.f32 %v10083, %v10324
    %v10326 = vpop.f32.mrb[0].mxu0
    %v10327 = vadd.f32 %v10085, %v10326
    %v10328 = vpop.f32.mrb[0].mxu0
    %v10329 = vpop.f32.mrb[0].mxu0
    %10330 = vdwg.mxu0
    %10331 = vmatprep.subr.bf16.mxu0 %v10229
    %10332 = vmatpush1.bf16.msra.mxu0 %v10228
    %10333 = vmatprep.subr.bf16.mxu0 %v10233
    %10334 = vmatpush1.bf16.msra.mxu0 %v10232
    %10335 = vmatprep.subr.bf16.mxu0 %v10237
    %10336 = vmatpush1.bf16.msra.mxu0 %v10236
    %10337 = vmatprep.subr.bf16.mxu0 %v10241
    %10338 = vmatpush1.bf16.msra.mxu0 %v10240
    %10339 = vmatprep.subr.bf16.mxu0 %v10245
    %10340 = vmatpush1.bf16.msra.mxu0 %v10244
    %10341 = vmatprep.subr.bf16.mxu0 %v10249
    %10342 = vmatpush1.bf16.msra.mxu0 %v10248
    %10343 = vmatprep.subr.bf16.mxu0 %v10253
    %10344 = vmatpush1.bf16.msra.mxu0 %v10252
    %10345 = vmatprep.subr.bf16.mxu0 %v10257
    %10346 = vmatpush1.bf16.msra.mxu0 %v10256
    %10347 = vmatprep.subr.bf16.mxu0 0
    %10348 = vmatpush1.bf16.msra.mxu0 0
    %10349 = vmatprep.subr.bf16.mxu0 0
    %10350 = vmatpush1.bf16.msra.mxu0 0
    %10351 = vmatprep.subr.bf16.mxu0 0
    %10352 = vmatpush1.bf16.msra.mxu0 0
    %10353 = vmatprep.subr.bf16.mxu0 0
    %10354 = vmatpush1.bf16.msra.mxu0 0
    %10355 = vmatprep.subr.bf16.mxu0 0
    %10356 = vmatpush1.bf16.msra.mxu0 0
    %10357 = vmatprep.subr.bf16.mxu0 0
    %10358 = vmatpush1.bf16.msra.mxu0 0
    %10359 = vmatprep.subr.bf16.mxu0 0
    %10360 = vmatpush1.bf16.msra.mxu0 0
    %10361 = vmatprep.subr.bf16.mxu0 0
    %10362 = vmatpush1.bf16.msra.mxu0 0
    %10363 = vmatprep.mubr.bf16.mxu0 0
    %10364 = vmatmul.mubr.bf16.gmra.mrb[0].mxu0 %v9822
    %v10365 = vpop.f32.mrb[0].mxu0
    %v10366 = vadd.f32 %v10124, %v10365
    %v10367 = vpop.f32.mrb[0].mxu0
    %v10368 = vadd.f32 %v10126, %v10367
    %v10369 = vpop.f32.mrb[0].mxu0
    %v10370 = vpop.f32.mrb[0].mxu0
    %10371 = vdwg.mxu0
    %v10372 = vld [vmem:[#allocation28] sm:$0xf]
    %v10374 = vlaneseq
    %v10375 = vshrl.u32 %v10374, 7
    %v10376 = vsub.s32 0, %v10375
    %v10377 = vrot.slane %v10372, %v10376
    %v10378 = vlaneseq
    %v10379 = vshrl.u32 %v10378, 7
    %v10380 = vsub.s32 1, %v10379
    %v10381 = vrot.slane %v10372, %v10380
    %v10382 = vlaneseq
    %v10383 = vshrl.u32 %v10382, 7
    %v10384 = vsub.s32 2, %v10383
    %v10385 = vrot.slane %v10372, %v10384
    %v10386 = vlaneseq
    %v10387 = vshrl.u32 %v10386, 7
    %v10388 = vsub.s32 3, %v10387
    %v10389 = vrot.slane %v10372, %v10388
    %v10394 = vadd.f32 %v10325, %v10377
    %v10395 = vadd.f32 %v10327, %v10381
    %v10396 = vadd.f32 %v10366, %v10385
    %v10397 = vadd.f32 %v10368, %v10389
    %v10398 = vxor.u32 %v10394, 2147483648
    %v10399 = vmul.f32 %v10398, 1.442695
    %v10400 = vpow.pop %v10399
    %v10401 = vadd.f32 %v10400, 1.0
    %v10402 = vrcp.pop %v10401
    %v10403 = vmul.f32 1.0, %v10402
    %v10404 = vxor.u32 %v10395, 2147483648
    %v10405 = vmul.f32 %v10404, 1.442695
    %v10406 = vpow.pop %v10405
    %v10407 = vadd.f32 %v10406, 1.0
    %v10408 = vrcp.pop %v10407
    %v10409 = vmul.f32 1.0, %v10408
    %v10410 = vtanh.pop %v10396
    %v10411 = vxor.u32 %v10397, 2147483648
    %v10412 = vmul.f32 %v10411, 1.442695
    %v10413 = vpow.pop %v10412
    %v10414 = vadd.f32 %v10413, 1.0
    %v10415 = vrcp.pop %v10414
    %v10416 = vmul.f32 1.0, %v10415
    %v10417 = vmul.f32 %v10409, %v9821
    %v10418 = vmul.f32 %v10403, %v10410
    %v10419 = vadd.f32 %v10417, %v10418
    %v10420 = vtanh.pop %v10419
    %v10421 = vmul.f32 %v10416, %v10420
    %v10422 = vld [vmem:[%s18] sm:$0xff]
    %v10423 = vld [vmem:[%s18 + $0x8] sm:$0xff]
    %v10424 = vld [vmem:[%s18 + $0x10] sm:$0xff]
    %v10425 = vld [vmem:[%s18 + $0x18] sm:$0xff]
    %v10426 = vld [vmem:[%s18 + $0x20] sm:$0xff]
    %v10427 = vld [vmem:[%s18 + $0x28] sm:$0xff]
    %v10428 = vld [vmem:[%s18 + $0x30] sm:$0xff]
    %v10429 = vld [vmem:[%s18 + $0x38] sm:$0xff]
    %v10430 = vld [vmem:[%s18 + $0x40] sm:$0xff]
    %v10431 = vld [vmem:[%s18 + $0x48] sm:$0xff]
    %v10432 = vld [vmem:[%s18 + $0x50] sm:$0xff]
    %v10433 = vld [vmem:[%s18 + $0x58] sm:$0xff]
    %v10434 = vld [vmem:[%s18 + $0x60] sm:$0xff]
    %v10435 = vld [vmem:[%s18 + $0x68] sm:$0xff]
    %v10436 = vld [vmem:[%s18 + $0x70] sm:$0xff]
    %v10437 = vld [vmem:[%s18 + $0x78] sm:$0xff]
    %v10438 = vld [vmem:[#allocation29] sm:$0x1]
    %10439 = vmatprep.subr.mxu0 0.0
    %10440 = vmatpush1.msra.mxu0 %v10422
    %10441 = vmatprep.subr.mxu0 0.0
    %10442 = vmatpush1.msra.mxu0 %v10423
    %10443 = vmatprep.subr.mxu0 0.0
    %10444 = vmatpush1.msra.mxu0 %v10424
    %10445 = vmatprep.subr.mxu0 0.0
    %10446 = vmatpush1.msra.mxu0 %v10425
    %10447 = vmatprep.subr.mxu0 0.0
    %10448 = vmatpush1.msra.mxu0 %v10426
    %10449 = vmatprep.subr.mxu0 0.0
    %10450 = vmatpush1.msra.mxu0 %v10427
    %10451 = vmatprep.subr.mxu0 0.0
    %10452 = vmatpush1.msra.mxu0 %v10428
    %10453 = vmatprep.subr.mxu0 0.0
    %10454 = vmatpush1.msra.mxu0 %v10429
    %10455 = vmatprep.subr.mxu0 0.0
    %10456 = vmatpush1.msra.mxu0 %v10430
    %10457 = vmatprep.subr.mxu0 0.0
    %10458 = vmatpush1.msra.mxu0 %v10431
    %10459 = vmatprep.subr.mxu0 0.0
    %10460 = vmatpush1.msra.mxu0 %v10432
    %10461 = vmatprep.subr.mxu0 0.0
    %10462 = vmatpush1.msra.mxu0 %v10433
    %10463 = vmatprep.subr.mxu0 0.0
    %10464 = vmatpush1.msra.mxu0 %v10434
    %10465 = vmatprep.subr.mxu0 0.0
    %10466 = vmatpush1.msra.mxu0 %v10435
    %10467 = vmatprep.subr.mxu0 0.0
    %10468 = vmatpush1.msra.mxu0 %v10436
    %10469 = vmatprep.subr.mxu0 0.0
    %10470 = vmatpush1.msra.mxu0 %v10437
    %10471 = vmatprep.subr.mxu0 0.0
    %10472 = vmatpush1.msra.mxu0 0.0
    %10473 = vmatprep.subr.mxu0 0.0
    %10474 = vmatpush1.msra.mxu0 0.0
    %10475 = vmatprep.subr.mxu0 0.0
    %10476 = vmatpush1.msra.mxu0 0.0
    %10477 = vmatprep.subr.mxu0 0.0
    %10478 = vmatpush1.msra.mxu0 0.0
    %10479 = vmatprep.subr.mxu0 0.0
    %10480 = vmatpush1.msra.mxu0 0.0
    %10481 = vmatprep.subr.mxu0 0.0
    %10482 = vmatpush1.msra.mxu0 0.0
    %10483 = vmatprep.subr.mxu0 0.0
    %10484 = vmatpush1.msra.mxu0 0.0
    %10485 = vmatprep.subr.mxu0 0.0
    %10486 = vmatpush1.msra.mxu0 0.0
    %10487 = vmatprep.subr.mxu0 0.0
    %10488 = vmatpush1.msra.mxu0 0.0
    %10489 = vmatprep.subr.mxu0 0.0
    %10490 = vmatpush1.msra.mxu0 0.0
    %10491 = vmatprep.subr.mxu0 0.0
    %10492 = vmatpush1.msra.mxu0 0.0
    %10493 = vmatprep.subr.mxu0 0.0
    %10494 = vmatpush1.msra.mxu0 0.0
    %10495 = vmatprep.subr.mxu0 0.0
    %10496 = vmatpush1.msra.mxu0 0.0
    %10497 = vmatprep.subr.mxu0 0.0
    %10498 = vmatpush1.msra.mxu0 0.0
    %10499 = vmatprep.subr.mxu0 0.0
    %10500 = vmatpush1.msra.mxu0 0.0
    %10501 = vmatprep.subr.mxu0 0.0
    %10502 = vmatpush1.msra.mxu0 0.0
    %10503 = vmatprep.mubr.f32.mxu0 0.0
    %10504 = vmatmul.mubr.f32.gmra.mrb[0].mxu0 %v10421
    %v10505 = vpop.f32.mrb[0].mxu0
    %v10506 = vadd.f32 %v10438, %v10505
    %v10507 = vpop.f32.mrb[0].mxu0
    %10508 = vdwg.mxu0
    %v10509 = vxor.u32 %v10506, 2147483648
    %v10510 = vmul.f32 %v10509, 1.442695
    %v10511 = vpow.pop %v10510
    %v10512 = vadd.f32 %v10511, 1.0
    %v10513 = vrcp.pop %v10512
    %v10514 = vmul.f32 1.0, %v10513
    %v10515 = vtanh.pop %v10506
    %vm10516 = vcmask 7168
    %v10517 = vsel %vm10516, %v10514, %v10515
    %vm10518 = vcmask 8192
    %10519 = vst.msk [vmem:[#allocation31] sm:$0x1] %vm10518, %v10517
    %10520 = vst [vmem:[#allocation32] sm:$0x1] %v10421
    %10521 = vst [vmem:[#allocation34] sm:$0x1] %v10419
    // Predicated region
    $region142: #{actor_radar_forward.1} parent=1 // pred_check
      _
    $region143: #{actor_radar_forward.1} parent=1 // pred_check_branch
      %10523 = sbr.rel (0) target = $region145
    $region144: #{actor_radar_forward.1} parent=1 // pred_region
      %s10525 = ssub.s32 16, 16
      %10526 = vsyncadd [#allocation7], %s10525
      %s10528 = sshll.u32 [#allocation31], 4
      %s10529 = int_to_ptr.vmem [resolvable:$true] %s10528
      %10531 = dma.vmem_to_hbm [thread:$0]  %s10529, 16, %s20, [#allocation7]
    $region145: #{actor_radar_forward.1} parent=1 // pred_fallthru
      _
    // Predicated region
    $region146: #{actor_radar_forward.1} parent=1 // pred_check
      _
    $region147: #{actor_radar_forward.1} parent=1 // pred_check_branch
      %10533 = sbr.rel (0) target = $region149
    $region148: #{actor_radar_forward.1} parent=1 // pred_region
      %s10535 = ssub.s32 16, 16
      %10536 = vsyncadd [#allocation33], %s10535
      %s10538 = sshll.u32 [#allocation32], 4
      %s10539 = int_to_ptr.vmem [resolvable:$true] %s10538
      %10541 = dma.vmem_to_hbm [thread:$0]  %s10539, 16, %s21, [#allocation33]
    $region149: #{actor_radar_forward.1} parent=1 // pred_fallthru
      _
    // Predicated region
    $region150: #{actor_radar_forward.1} parent=1 // pred_check
      _
    $region151: #{actor_radar_forward.1} parent=1 // pred_check_branch
      %10543 = sbr.rel (0) target = $region153
    $region152: #{actor_radar_forward.1} parent=1 // pred_region
      %s10545 = ssub.s32 16, 16
      %10546 = vsyncadd [#allocation33], %s10545
      %s10548 = sshll.u32 [#allocation34], 4
      %s10549 = int_to_ptr.vmem [resolvable:$true] %s10548
      %10551 = dma.vmem_to_hbm [thread:$0]  %s10549, 16, %s22, [#allocation33]
    $region153: #{actor_radar_forward.1} parent=1 // pred_fallthru
      _
    // Predicated region
    $region154: #{actor_radar_forward.1} parent=1 // pred_check
      _
    $region155: #{actor_radar_forward.1} parent=1 // pred_check_branch
      %10553 = sbr.rel (0) target = $region157
    $region156: #{actor_radar_forward.1} parent=1 // pred_region
      %10554 = dma.done [#allocation7], 16
    $region157: #{actor_radar_forward.1} parent=1 // pred_fallthru
      _
    // Predicated region
    $region158: #{actor_radar_forward.1} parent=1 // pred_check
      _
    $region159: #{actor_radar_forward.1} parent=1 // pred_check_branch
      %10556 = sbr.rel (0) target = $region161
    $region160: #{actor_radar_forward.1} parent=1 // pred_region
      %10557 = dma.done [#allocation33], 16
    $region161: #{actor_radar_forward.1} parent=1 // pred_fallthru
      _
    // Predicated region
    $region162: #{actor_radar_forward.1} parent=1 // pred_check
      _
    $region163: #{actor_radar_forward.1} parent=1 // pred_check_branch
      %10559 = sbr.rel (0) target = $region165
    $region164: #{actor_radar_forward.1} parent=1 // pred_region
      %10560 = dma.done [#allocation33], 16
    $region165: #{actor_radar_forward.1} parent=1 // pred_fallthru
      _
    %10561 = vsyncpa [#allocation6], 1
    %10562 = vsyncpa [#allocation9], 1
    %10563 = vsyncpa [#allocation12], 1
    %10564 = vsyncpa [#allocation15], 1
    %10565 = vsyncpa [#allocation18], 1
    %10566 = vsyncpa [#allocation21], 1
    %10567 = vsyncpa [#allocation24], 1
    %10568 = vsyncpa [#allocation27], 1
    %10569 = vsyncpa [#allocation30], 1
    %10570 = vsyncpa [#allocation7], 1
    %10571 = vsyncpa [#allocation33], 1
  %10572 = vsyncmov [#allocation4]
  %s10573 = vpop.sfrf %10572
  %p10574 = scmp.eq.s32.totalorder %s10573, 0
  %p10575 = pneg %p10574
  %10577 = shalt.err (%p10575)

</llo_original>
